<compile_context>
chip_gen: v7x
topology: tpu7x:2x2x1
jax: 0.10.0
libtpu: 0.0.40
codegen_flags: <defaults>
</compile_context>

<pallas_src>
import functools

import jax
import jax.numpy as jnp
import numpy as np
from jax.experimental import pallas as pl
from jax.experimental.pallas import tpu as pltpu

# Model hyper-parameters (DqnModel defaults)
H, W, C_IN, N_ACT = 9, 9, 10, 3
C1, C2, C3 = 16, 32, 32
C_IN_PAD = 16                  # zero-pad Cin 10 -> 16 (exact; aligned weight rows)
BN_EPS = 1e-5                  # nn.BatchNorm2d default eps
GRID = H * W                   # 81: per-sample row stride of the flat layout
OFF_PAD = 24                   # >= max tap row offset (2*W + 2 = 20), mult of 8

# Packed-weight row offsets (tap-major: tap t = di*3+dj occupies cin rows).
W1_BASE = 0
W2_BASE = W1_BASE + 9 * C_IN_PAD     # 144
W3_BASE = W2_BASE + 9 * C1           # 288
HD_BASE = W3_BASE + 9 * C2           # 576
W_ROWS = HD_BASE + 9 * C3            # 864
W_LANES = 32


# ------------------------- in-kernel math helpers -------------------------
def _conv3x3_acc(x, w_ref, w_base, cin, cout, rows_out):
    """3x3 valid conv on the flat 9x9-grid row layout.

    x: (rows_in, cin) value, rows_in >= rows_out + 20.  Nine accumulated
    per-tap MXU matmuls; tap = row-offset slice (no lane concatenate).
    """
    acc = None
    for di in range(3):
        for dj in range(3):
            t = di * 3 + dj
            off = di * W + dj
            tap = x[off:off + rows_out, :cin]
            wt = w_ref[w_base + t * cin: w_base + (t + 1) * cin, :cout]
            y = jnp.dot(tap, wt, preferred_element_type=jnp.float32)
            acc = y if acc is None else acc + y
    return acc


def _bn_relu(x, mask, n_valid, gamma, beta):
    """Training-mode BatchNorm2d (batch stats over valid rows, biased var) + ReLU.

    Two-pass statistics (numerically safe); both row reductions go to the idle
    MXU as (1,R)x(R,C) matmuls against the 0/1 valid-row mask, keeping the XLU
    free.  Affine folded: y = max((x - mean) * (gamma*rsqrt(var+eps)) + beta, 0).
    """
    inv_n = 1.0 / float(n_valid)
    mean = jnp.dot(mask, x, preferred_element_type=jnp.float32) * inv_n   # (1,C)
    xc = x - mean
    var = jnp.dot(mask, xc * xc, preferred_element_type=jnp.float32) * inv_n
    scale = gamma * jax.lax.rsqrt(var + BN_EPS)
    return jnp.maximum(xc * scale + beta, 0.0)


# ------------------------------ Pallas kernel ------------------------------
def dqn_kernel(x_ref, w_ref, sp_ref, out_ref, *, B, rows):
    R0, R1, R2, R3, RH = rows

    # Packed small params (one DMA): BN masks, gammas/betas, head bias, selector.
    mask1 = sp_ref[0:1, :R1]
    mask2 = sp_ref[1:2, :R2]
    mask3 = sp_ref[2:3, :R3]
    g1, be1 = sp_ref[3:4, :C1], sp_ref[4:5, :C1]
    g2, be2 = sp_ref[5:6, :C2], sp_ref[6:7, :C2]
    g3, be3 = sp_ref[7:8, :C3], sp_ref[8:9, :C3]
    hb = sp_ref[9:10, :N_ACT]
    sel = sp_ref[10:10 + B, :RH]          # (B, RH) one-hot head row selector

    x0 = x_ref[...]                        # (R0, 16) f32, flat 9x9-grid rows

    # conv1 + bn1 + relu   (conv bias omitted: cancelled by BN mean subtraction)
    y = _conv3x3_acc(x0, w_ref, W1_BASE, C_IN_PAD, C1, R1)    # (R1, 16)
    y = _bn_relu(y, mask1, B * 49, g1, be1)

    # conv2 + bn2 + relu
    y = _conv3x3_acc(y, w_ref, W2_BASE, C1, C2, R2)           # (R2, 32)
    y = _bn_relu(y, mask2, B * 25, g2, be2)

    # conv3 + bn3 + relu
    y = _conv3x3_acc(y, w_ref, W3_BASE, C2, C3, R3)           # (R3, 32)
    y = _bn_relu(y, mask3, B * 9, g3, be3)

    # Linear head: same per-tap accumulation (9 tiny matmuls), then a one-hot
    # selection matmul extracts row b*81 for each sample -- no lane concat,
    # no reshapes.  (B, 3) output is a single masked store; negligible at B=2.
    hfull = _conv3x3_acc(y, w_ref, HD_BASE, C3, N_ACT, RH)    # (RH, 3)
    out_ref[...] = jnp.dot(sel, hfull, preferred_element_type=jnp.float32) + hb


# ------------------------------ host wrapper -------------------------------
def _round_up(n, m):
    return ((n + m - 1) // m) * m


def _row_sizes(B):
    R3 = _round_up(B * GRID, 8)           # conv3 output rows
    R2 = R3 + OFF_PAD                     # conv2 output rows
    R1 = R2 + OFF_PAD                     # conv1 output rows
    R0 = R1 + OFF_PAD                     # (padded) input rows
    RH = _round_up((B - 1) * GRID + 1, 8)  # head accumulation rows
    return R0, R1, R2, R3, RH


def _taps_block(w, cout_pad=W_LANES):
    """(3,3,cin,cout) HWIO -> tap-major (9*cin, 32); tap t rows [t*cin,(t+1)*cin)."""
    kh, kw, cin, cout = w.shape
    w2d = w.reshape(kh * kw * cin, cout)
    return jnp.pad(w2d, ((0, 0), (0, cout_pad - cout)))


def _pack_weights(w1, w2, w3, hw):
    w1p = jnp.pad(w1, ((0, 0), (0, 0), (0, C_IN_PAD - C_IN), (0, 0)))
    return jnp.concatenate(
        [_taps_block(w1p), _taps_block(w2), _taps_block(w3), _taps_block(hw)],
        axis=0)                                                # (864, 32)


def _pack_small(B, rows, g1, be1, g2, be2, g3, be3, hb):
    """BN masks + head selector (np constants) and per-channel params, one array."""
    R0, R1, R2, R3, RH = rows
    n_rows = _round_up(10 + B, 8)
    n_lanes = _round_up(max(R1, 128), 128)
    base = np.zeros((n_rows, n_lanes), np.float32)

    def valid_mask(extent, R):
        m = np.zeros((R,), np.float32)
        for b in range(B):
            for oi in range(extent):
                s = b * GRID + oi * W
                m[s:s + extent] = 1.0
        return m

    base[0, :R1] = valid_mask(7, R1)       # conv1 valid 7x7
    base[1, :R2] = valid_mask(5, R2)       # conv2 valid 5x5
    base[2, :R3] = valid_mask(3, R3)       # conv3 valid 3x3
    for b in range(B):
        base[10 + b, b * GRID] = 1.0       # head row selector (one-hot)

    sp = jnp.asarray(base)
    sp = sp.at[3, :C1].set(g1.reshape(-1))
    sp = sp.at[4, :C1].set(be1.reshape(-1))
    sp = sp.at[5, :C2].set(g2.reshape(-1))
    sp = sp.at[6, :C2].set(be2.reshape(-1))
    sp = sp.at[7, :C3].set(g3.reshape(-1))
    sp = sp.at[8, :C3].set(be3.reshape(-1))
    sp = sp.at[9, :N_ACT].set(hb.reshape(-1))
    return sp


def dqn_forward(x, params):
    """x: (B, H, W, C_IN) float32 (NHWC)  ->  (B, N_ACT) float32."""
    (w1, _b1, g1, be1, w2, _b2, g2, be2, w3, _b3, g3, be3, hw, hb) = params
    B = x.shape[0]
    rows = _row_sizes(B)
    R0 = rows[0]

    # Host-side prep (cheap): flat row layout + zero row/lane padding; weights
    # packed tap-major into one array; tiny params/masks packed into another.
    xf = x.astype(jnp.float32).reshape(B * GRID, C_IN)
    xf = jnp.pad(xf, ((0, R0 - B * GRID), (0, C_IN_PAD - C_IN)))
    wp = _pack_weights(w1, w2, w3, hw)
    sp = _pack_small(B, rows, g1, be1, g2, be2, g3, be3, hb)

    kernel = functools.partial(dqn_kernel, B=B, rows=rows)
    args = (xf, wp, sp)
    return pl.pallas_call(
        kernel,
        out_shape=jax.ShapeDtypeStruct((B, N_ACT), jnp.float32),
        grid=(1,),
        in_specs=[pl.BlockSpec(a.shape, lambda i, _nd=a.ndim: (0,) * _nd)
                  for a in args],
        out_specs=pl.BlockSpec((B, N_ACT), lambda i: (0, 0)),
        compiler_params=pltpu.CompilerParams(
            dimension_semantics=("arbitrary",)),
    )(*args)


# ----------------------- deterministic parameter init ----------------------
def init_params(key):
    ks = jax.random.split(key, 8)

    def u(k, shape, fan_in):
        bound = 1.0 / float(np.sqrt(fan_in))
        return jax.random.uniform(k, shape, jnp.float32, -bound, bound)

    w1 = u(ks[0], (3, 3, C_IN, C1), C_IN * 9)       # HWIO
    b1 = u(ks[1], (1, C1), C_IN * 9)
    w2 = u(ks[2], (3, 3, C1, C2), C1 * 9)
    b2 = u(ks[3], (1, C2), C1 * 9)
    w3 = u(ks[4], (3, 3, C2, C3), C2 * 9)
    b3 = u(ks[5], (1, C3), C2 * 9)
    # Head weight in (Ho, Wo, C3, N_ACT) layout; equivalent to a PyTorch
    # Linear(288, 3) weight via W_pt.reshape(3,32,3,3).transpose(2,3,1,0).
    hw = u(ks[6], (3, 3, C3, N_ACT), 3 * 3 * C3)
    hb = u(ks[7], (1, N_ACT), 3 * 3 * C3)
    # BatchNorm2d default affine init: gamma=1, beta=0.
    g1, be1 = jnp.ones((1, C1), jnp.float32), jnp.zeros((1, C1), jnp.float32)
    g2, be2 = jnp.ones((1, C2), jnp.float32), jnp.zeros((1, C2), jnp.float32)
    g3, be3 = jnp.ones((1, C3), jnp.float32), jnp.zeros((1, C3), jnp.float32)
    return (w1, b1, g1, be1, w2, b2, g2, be2, w3, b3, g3, be3, hw, hb)


# --------------------------- pure-JAX reference ----------------------------
def dqn_reference(x, params):
    (w1, b1, g1, be1, w2, b2, g2, be2, w3, b3, g3, be3, hw, hb) = params

    def conv(xx, w, b):
        y = jax.lax.conv_general_dilated(
            xx, w, window_strides=(1, 1), padding="VALID",
            dimension_numbers=("NHWC", "HWIO", "NHWC"))
        return y + b.reshape(1, 1, 1, -1)

    def bn_relu(xx, g, be):
        m = jnp.mean(xx, axis=(0, 1, 2), keepdims=True)
        v = jnp.mean(jnp.square(xx - m), axis=(0, 1, 2), keepdims=True)
        y = (xx - m) * jax.lax.rsqrt(v + BN_EPS)
        return jnp.maximum(y * g.reshape(1, 1, 1, -1) + be.reshape(1, 1, 1, -1), 0.0)

    y = bn_relu(conv(x, w1, b1), g1, be1)
    y = bn_relu(conv(y, w2, b2), g2, be2)
    y = bn_relu(conv(y, w3, b3), g3, be3)
    return jnp.einsum("bhwc,hwco->bo", y, hw) + hb


# ----------------------------------- main ----------------------------------
if __name__ == "__main__":
    key = jax.random.PRNGKey(0)
    kx, kp = jax.random.split(key)
    B = 2
    x = jax.random.uniform(kx, (B, H, W, C_IN), jnp.float32)   # NHWC input
    params = init_params(kp)

    out = jax.block_until_ready(dqn_forward(x, params))
    ref = jax.block_until_ready(dqn_reference(x, params))

    assert out.shape == (B, N_ACT)
    np.testing.assert_allclose(np.asarray(out), np.asarray(ref),
                               rtol=1e-4, atol=1e-4)
    print("KERNEL_OK")
</pallas_src>

<mosaic_0001>
module attributes {stable_mosaic.version = 11 : i64} {
  func.func @dqn_kernel(%arg0: i32, %arg1: memref<240x16xf32, #tpu.memory_space<vmem>>, %arg2: memref<864x32xf32, #tpu.memory_space<vmem>>, %arg3: memref<16x256xf32, #tpu.memory_space<vmem>>, %arg4: memref<2x3xf32, #tpu.memory_space<vmem>>) attributes {dimension_semantics = [#tpu.dimension_semantics<arbitrary>], iteration_bounds = array<i64: 1>, scalar_prefetch = 0 : i64, scratch_operands = 0 : i64, tpu.core_type = #tpu.core_type<tc>, window_params = [{pipeline_mode = #tpu.pipeline_mode<synchronous>, transform_indices = @transform_0, window_bounds = array<i64: 240, 16>}, {pipeline_mode = #tpu.pipeline_mode<synchronous>, transform_indices = @transform_1, window_bounds = array<i64: 864, 32>}, {pipeline_mode = #tpu.pipeline_mode<synchronous>, transform_indices = @transform_2, window_bounds = array<i64: 16, 256>}, {pipeline_mode = #tpu.pipeline_mode<synchronous>, transform_indices = @transform_3, window_bounds = array<i64: 2, 3>}]} {
    %c0 = arith.constant 0 : index
    %c0_0 = arith.constant 0 : index
    %0 = vector.load %arg3[%c0, %c0_0] : memref<16x256xf32, #tpu.memory_space<vmem>>, vector<1x216xf32>
    %c1 = arith.constant 1 : index
    %c0_1 = arith.constant 0 : index
    %1 = vector.load %arg3[%c1, %c0_1] : memref<16x256xf32, #tpu.memory_space<vmem>>, vector<1x192xf32>
    %c2 = arith.constant 2 : index
    %c0_2 = arith.constant 0 : index
    %2 = vector.load %arg3[%c2, %c0_2] : memref<16x256xf32, #tpu.memory_space<vmem>>, vector<1x168xf32>
    %c3 = arith.constant 3 : index
    %c0_3 = arith.constant 0 : index
    %3 = vector.load %arg3[%c3, %c0_3] : memref<16x256xf32, #tpu.memory_space<vmem>>, vector<1x16xf32>
    %c4 = arith.constant 4 : index
    %c0_4 = arith.constant 0 : index
    %4 = vector.load %arg3[%c4, %c0_4] : memref<16x256xf32, #tpu.memory_space<vmem>>, vector<1x16xf32>
    %c5 = arith.constant 5 : index
    %c0_5 = arith.constant 0 : index
    %5 = vector.load %arg3[%c5, %c0_5] : memref<16x256xf32, #tpu.memory_space<vmem>>, vector<1x32xf32>
    %c6 = arith.constant 6 : index
    %c0_6 = arith.constant 0 : index
    %6 = vector.load %arg3[%c6, %c0_6] : memref<16x256xf32, #tpu.memory_space<vmem>>, vector<1x32xf32>
    %c7 = arith.constant 7 : index
    %c0_7 = arith.constant 0 : index
    %7 = vector.load %arg3[%c7, %c0_7] : memref<16x256xf32, #tpu.memory_space<vmem>>, vector<1x32xf32>
    %c8 = arith.constant 8 : index
    %c0_8 = arith.constant 0 : index
    %8 = vector.load %arg3[%c8, %c0_8] : memref<16x256xf32, #tpu.memory_space<vmem>>, vector<1x32xf32>
    %c9 = arith.constant 9 : index
    %c0_9 = arith.constant 0 : index
    %9 = vector.load %arg3[%c9, %c0_9] : memref<16x256xf32, #tpu.memory_space<vmem>>, vector<1x3xf32>
    %c10 = arith.constant 10 : index
    %c0_10 = arith.constant 0 : index
    %10 = vector.load %arg3[%c10, %c0_10] : memref<16x256xf32, #tpu.memory_space<vmem>>, vector<2x88xf32>
    %c0_11 = arith.constant 0 : index
    %c0_12 = arith.constant 0 : index
    %11 = vector.load %arg1[%c0_11, %c0_12] : memref<240x16xf32, #tpu.memory_space<vmem>>, vector<240x16xf32>
    %12 = vector.extract_strided_slice %11 {offsets = [0, 0], sizes = [216, 16], strides = [1, 1]} : vector<240x16xf32> to vector<216x16xf32>
    %c0_13 = arith.constant 0 : index
    %c0_14 = arith.constant 0 : index
    %13 = vector.load %arg2[%c0_13, %c0_14] : memref<864x32xf32, #tpu.memory_space<vmem>>, vector<16x16xf32>
    %cst = arith.constant dense<0.000000e+00> : vector<216x16xf32>
    %14 = tpu.matmul %12, %13, %cst {dimension_numbers = #tpu.dot_dimension_numbers<[1], [0], [0], [1], [0, 0, 1, 1], [], []>} : vector<216x16xf32>, vector<16x16xf32>, vector<216x16xf32> -> vector<216x16xf32>
    %15 = vector.extract_strided_slice %11 {offsets = [1, 0], sizes = [216, 16], strides = [1, 1]} : vector<240x16xf32> to vector<216x16xf32>
    %c16 = arith.constant 16 : index
    %c0_15 = arith.constant 0 : index
    %16 = vector.load %arg2[%c16, %c0_15] : memref<864x32xf32, #tpu.memory_space<vmem>>, vector<16x16xf32>
    %cst_16 = arith.constant dense<0.000000e+00> : vector<216x16xf32>
    %17 = tpu.matmul %15, %16, %cst_16 {dimension_numbers = #tpu.dot_dimension_numbers<[1], [0], [0], [1], [0, 0, 1, 1], [], []>} : vector<216x16xf32>, vector<16x16xf32>, vector<216x16xf32> -> vector<216x16xf32>
    %18 = arith.addf %14, %17 : vector<216x16xf32>
    %19 = vector.extract_strided_slice %11 {offsets = [2, 0], sizes = [216, 16], strides = [1, 1]} : vector<240x16xf32> to vector<216x16xf32>
    %c32 = arith.constant 32 : index
    %c0_17 = arith.constant 0 : index
    %20 = vector.load %arg2[%c32, %c0_17] : memref<864x32xf32, #tpu.memory_space<vmem>>, vector<16x16xf32>
    %cst_18 = arith.constant dense<0.000000e+00> : vector<216x16xf32>
    %21 = tpu.matmul %19, %20, %cst_18 {dimension_numbers = #tpu.dot_dimension_numbers<[1], [0], [0], [1], [0, 0, 1, 1], [], []>} : vector<216x16xf32>, vector<16x16xf32>, vector<216x16xf32> -> vector<216x16xf32>
    %22 = arith.addf %18, %21 : vector<216x16xf32>
    %23 = vector.extract_strided_slice %11 {offsets = [9, 0], sizes = [216, 16], strides = [1, 1]} : vector<240x16xf32> to vector<216x16xf32>
    %c48 = arith.constant 48 : index
    %c0_19 = arith.constant 0 : index
    %24 = vector.load %arg2[%c48, %c0_19] : memref<864x32xf32, #tpu.memory_space<vmem>>, vector<16x16xf32>
    %cst_20 = arith.constant dense<0.000000e+00> : vector<216x16xf32>
    %25 = tpu.matmul %23, %24, %cst_20 {dimension_numbers = #tpu.dot_dimension_numbers<[1], [0], [0], [1], [0, 0, 1, 1], [], []>} : vector<216x16xf32>, vector<16x16xf32>, vector<216x16xf32> -> vector<216x16xf32>
    %26 = arith.addf %22, %25 : vector<216x16xf32>
    %27 = vector.extract_strided_slice %11 {offsets = [10, 0], sizes = [216, 16], strides = [1, 1]} : vector<240x16xf32> to vector<216x16xf32>
    %c64 = arith.constant 64 : index
    %c0_21 = arith.constant 0 : index
    %28 = vector.load %arg2[%c64, %c0_21] : memref<864x32xf32, #tpu.memory_space<vmem>>, vector<16x16xf32>
    %cst_22 = arith.constant dense<0.000000e+00> : vector<216x16xf32>
    %29 = tpu.matmul %27, %28, %cst_22 {dimension_numbers = #tpu.dot_dimension_numbers<[1], [0], [0], [1], [0, 0, 1, 1], [], []>} : vector<216x16xf32>, vector<16x16xf32>, vector<216x16xf32> -> vector<216x16xf32>
    %30 = arith.addf %26, %29 : vector<216x16xf32>
    %31 = vector.extract_strided_slice %11 {offsets = [11, 0], sizes = [216, 16], strides = [1, 1]} : vector<240x16xf32> to vector<216x16xf32>
    %c80 = arith.constant 80 : index
    %c0_23 = arith.constant 0 : index
    %32 = vector.load %arg2[%c80, %c0_23] : memref<864x32xf32, #tpu.memory_space<vmem>>, vector<16x16xf32>
    %cst_24 = arith.constant dense<0.000000e+00> : vector<216x16xf32>
    %33 = tpu.matmul %31, %32, %cst_24 {dimension_numbers = #tpu.dot_dimension_numbers<[1], [0], [0], [1], [0, 0, 1, 1], [], []>} : vector<216x16xf32>, vector<16x16xf32>, vector<216x16xf32> -> vector<216x16xf32>
    %34 = arith.addf %30, %33 : vector<216x16xf32>
    %35 = vector.extract_strided_slice %11 {offsets = [18, 0], sizes = [216, 16], strides = [1, 1]} : vector<240x16xf32> to vector<216x16xf32>
    %c96 = arith.constant 96 : index
    %c0_25 = arith.constant 0 : index
    %36 = vector.load %arg2[%c96, %c0_25] : memref<864x32xf32, #tpu.memory_space<vmem>>, vector<16x16xf32>
    %cst_26 = arith.constant dense<0.000000e+00> : vector<216x16xf32>
    %37 = tpu.matmul %35, %36, %cst_26 {dimension_numbers = #tpu.dot_dimension_numbers<[1], [0], [0], [1], [0, 0, 1, 1], [], []>} : vector<216x16xf32>, vector<16x16xf32>, vector<216x16xf32> -> vector<216x16xf32>
    %38 = arith.addf %34, %37 : vector<216x16xf32>
    %39 = vector.extract_strided_slice %11 {offsets = [19, 0], sizes = [216, 16], strides = [1, 1]} : vector<240x16xf32> to vector<216x16xf32>
    %c112 = arith.constant 112 : index
    %c0_27 = arith.constant 0 : index
    %40 = vector.load %arg2[%c112, %c0_27] : memref<864x32xf32, #tpu.memory_space<vmem>>, vector<16x16xf32>
    %cst_28 = arith.constant dense<0.000000e+00> : vector<216x16xf32>
    %41 = tpu.matmul %39, %40, %cst_28 {dimension_numbers = #tpu.dot_dimension_numbers<[1], [0], [0], [1], [0, 0, 1, 1], [], []>} : vector<216x16xf32>, vector<16x16xf32>, vector<216x16xf32> -> vector<216x16xf32>
    %42 = arith.addf %38, %41 : vector<216x16xf32>
    %43 = vector.extract_strided_slice %11 {offsets = [20, 0], sizes = [216, 16], strides = [1, 1]} : vector<240x16xf32> to vector<216x16xf32>
    %c128 = arith.constant 128 : index
    %c0_29 = arith.constant 0 : index
    %44 = vector.load %arg2[%c128, %c0_29] : memref<864x32xf32, #tpu.memory_space<vmem>>, vector<16x16xf32>
    %cst_30 = arith.constant dense<0.000000e+00> : vector<216x16xf32>
    %45 = tpu.matmul %43, %44, %cst_30 {dimension_numbers = #tpu.dot_dimension_numbers<[1], [0], [0], [1], [0, 0, 1, 1], [], []>} : vector<216x16xf32>, vector<16x16xf32>, vector<216x16xf32> -> vector<216x16xf32>
    %46 = arith.addf %42, %45 : vector<216x16xf32>
    %cst_31 = arith.constant dense<0.000000e+00> : vector<1x16xf32>
    %47 = tpu.matmul %0, %46, %cst_31 {dimension_numbers = #tpu.dot_dimension_numbers<[1], [0], [0], [1], [0, 0, 1, 1], [], []>} : vector<1x216xf32>, vector<216x16xf32>, vector<1x16xf32> -> vector<1x16xf32>
    %cst_32 = arith.constant 0.0102040814 : f32
    %48 = vector.broadcast %cst_32 : f32 to vector<1x16xf32>
    %49 = arith.mulf %47, %48 : vector<1x16xf32>
    %50 = vector.broadcast %49 : vector<1x16xf32> to vector<216x16xf32>
    %51 = arith.subf %46, %50 : vector<216x16xf32>
    %52 = arith.mulf %51, %51 : vector<216x16xf32>
    %cst_33 = arith.constant dense<0.000000e+00> : vector<1x16xf32>
    %53 = tpu.matmul %0, %52, %cst_33 {dimension_numbers = #tpu.dot_dimension_numbers<[1], [0], [0], [1], [0, 0, 1, 1], [], []>} : vector<1x216xf32>, vector<216x16xf32>, vector<1x16xf32> -> vector<1x16xf32>
    %cst_34 = arith.constant 0.0102040814 : f32
    %54 = vector.broadcast %cst_34 : f32 to vector<1x16xf32>
    %55 = arith.mulf %53, %54 : vector<1x16xf32>
    %cst_35 = arith.constant 9.99999974E-6 : f32
    %56 = vector.broadcast %cst_35 : f32 to vector<1x16xf32>
    %57 = arith.addf %55, %56 : vector<1x16xf32>
    %58 = math.rsqrt %57 : vector<1x16xf32>
    %59 = arith.mulf %3, %58 : vector<1x16xf32>
    %60 = vector.broadcast %59 : vector<1x16xf32> to vector<216x16xf32>
    %61 = arith.mulf %51, %60 : vector<216x16xf32>
    %62 = vector.broadcast %4 : vector<1x16xf32> to vector<216x16xf32>
    %63 = arith.addf %61, %62 : vector<216x16xf32>
    %cst_36 = arith.constant 0.000000e+00 : f32
    %64 = vector.broadcast %cst_36 : f32 to vector<216x16xf32>
    %65 = arith.maximumf %63, %64 : vector<216x16xf32>
    %66 = vector.extract_strided_slice %65 {offsets = [0, 0], sizes = [192, 16], strides = [1, 1]} : vector<216x16xf32> to vector<192x16xf32>
    %c144 = arith.constant 144 : index
    %c0_37 = arith.constant 0 : index
    %67 = vector.load %arg2[%c144, %c0_37] : memref<864x32xf32, #tpu.memory_space<vmem>>, vector<16x32xf32>
    %cst_38 = arith.constant dense<0.000000e+00> : vector<192x32xf32>
    %68 = tpu.matmul %66, %67, %cst_38 {dimension_numbers = #tpu.dot_dimension_numbers<[1], [0], [0], [1], [0, 0, 1, 1], [], []>} : vector<192x16xf32>, vector<16x32xf32>, vector<192x32xf32> -> vector<192x32xf32>
    %69 = vector.extract_strided_slice %65 {offsets = [1, 0], sizes = [192, 16], strides = [1, 1]} : vector<216x16xf32> to vector<192x16xf32>
    %c160 = arith.constant 160 : index
    %c0_39 = arith.constant 0 : index
    %70 = vector.load %arg2[%c160, %c0_39] : memref<864x32xf32, #tpu.memory_space<vmem>>, vector<16x32xf32>
    %cst_40 = arith.constant dense<0.000000e+00> : vector<192x32xf32>
    %71 = tpu.matmul %69, %70, %cst_40 {dimension_numbers = #tpu.dot_dimension_numbers<[1], [0], [0], [1], [0, 0, 1, 1], [], []>} : vector<192x16xf32>, vector<16x32xf32>, vector<192x32xf32> -> vector<192x32xf32>
    %72 = arith.addf %68, %71 : vector<192x32xf32>
    %73 = vector.extract_strided_slice %65 {offsets = [2, 0], sizes = [192, 16], strides = [1, 1]} : vector<216x16xf32> to vector<192x16xf32>
    %c176 = arith.constant 176 : index
    %c0_41 = arith.constant 0 : index
    %74 = vector.load %arg2[%c176, %c0_41] : memref<864x32xf32, #tpu.memory_space<vmem>>, vector<16x32xf32>
    %cst_42 = arith.constant dense<0.000000e+00> : vector<192x32xf32>
    %75 = tpu.matmul %73, %74, %cst_42 {dimension_numbers = #tpu.dot_dimension_numbers<[1], [0], [0], [1], [0, 0, 1, 1], [], []>} : vector<192x16xf32>, vector<16x32xf32>, vector<192x32xf32> -> vector<192x32xf32>
    %76 = arith.addf %72, %75 : vector<192x32xf32>
    %77 = vector.extract_strided_slice %65 {offsets = [9, 0], sizes = [192, 16], strides = [1, 1]} : vector<216x16xf32> to vector<192x16xf32>
    %c192 = arith.constant 192 : index
    %c0_43 = arith.constant 0 : index
    %78 = vector.load %arg2[%c192, %c0_43] : memref<864x32xf32, #tpu.memory_space<vmem>>, vector<16x32xf32>
    %cst_44 = arith.constant dense<0.000000e+00> : vector<192x32xf32>
    %79 = tpu.matmul %77, %78, %cst_44 {dimension_numbers = #tpu.dot_dimension_numbers<[1], [0], [0], [1], [0, 0, 1, 1], [], []>} : vector<192x16xf32>, vector<16x32xf32>, vector<192x32xf32> -> vector<192x32xf32>
    %80 = arith.addf %76, %79 : vector<192x32xf32>
    %81 = vector.extract_strided_slice %65 {offsets = [10, 0], sizes = [192, 16], strides = [1, 1]} : vector<216x16xf32> to vector<192x16xf32>
    %c208 = arith.constant 208 : index
    %c0_45 = arith.constant 0 : index
    %82 = vector.load %arg2[%c208, %c0_45] : memref<864x32xf32, #tpu.memory_space<vmem>>, vector<16x32xf32>
    %cst_46 = arith.constant dense<0.000000e+00> : vector<192x32xf32>
    %83 = tpu.matmul %81, %82, %cst_46 {dimension_numbers = #tpu.dot_dimension_numbers<[1], [0], [0], [1], [0, 0, 1, 1], [], []>} : vector<192x16xf32>, vector<16x32xf32>, vector<192x32xf32> -> vector<192x32xf32>
    %84 = arith.addf %80, %83 : vector<192x32xf32>
    %85 = vector.extract_strided_slice %65 {offsets = [11, 0], sizes = [192, 16], strides = [1, 1]} : vector<216x16xf32> to vector<192x16xf32>
    %c224 = arith.constant 224 : index
    %c0_47 = arith.constant 0 : index
    %86 = vector.load %arg2[%c224, %c0_47] : memref<864x32xf32, #tpu.memory_space<vmem>>, vector<16x32xf32>
    %cst_48 = arith.constant dense<0.000000e+00> : vector<192x32xf32>
    %87 = tpu.matmul %85, %86, %cst_48 {dimension_numbers = #tpu.dot_dimension_numbers<[1], [0], [0], [1], [0, 0, 1, 1], [], []>} : vector<192x16xf32>, vector<16x32xf32>, vector<192x32xf32> -> vector<192x32xf32>
    %88 = arith.addf %84, %87 : vector<192x32xf32>
    %89 = vector.extract_strided_slice %65 {offsets = [18, 0], sizes = [192, 16], strides = [1, 1]} : vector<216x16xf32> to vector<192x16xf32>
    %c240 = arith.constant 240 : index
    %c0_49 = arith.constant 0 : index
    %90 = vector.load %arg2[%c240, %c0_49] : memref<864x32xf32, #tpu.memory_space<vmem>>, vector<16x32xf32>
    %cst_50 = arith.constant dense<0.000000e+00> : vector<192x32xf32>
    %91 = tpu.matmul %89, %90, %cst_50 {dimension_numbers = #tpu.dot_dimension_numbers<[1], [0], [0], [1], [0, 0, 1, 1], [], []>} : vector<192x16xf32>, vector<16x32xf32>, vector<192x32xf32> -> vector<192x32xf32>
    %92 = arith.addf %88, %91 : vector<192x32xf32>
    %93 = vector.extract_strided_slice %65 {offsets = [19, 0], sizes = [192, 16], strides = [1, 1]} : vector<216x16xf32> to vector<192x16xf32>
    %c256 = arith.constant 256 : index
    %c0_51 = arith.constant 0 : index
    %94 = vector.load %arg2[%c256, %c0_51] : memref<864x32xf32, #tpu.memory_space<vmem>>, vector<16x32xf32>
    %cst_52 = arith.constant dense<0.000000e+00> : vector<192x32xf32>
    %95 = tpu.matmul %93, %94, %cst_52 {dimension_numbers = #tpu.dot_dimension_numbers<[1], [0], [0], [1], [0, 0, 1, 1], [], []>} : vector<192x16xf32>, vector<16x32xf32>, vector<192x32xf32> -> vector<192x32xf32>
    %96 = arith.addf %92, %95 : vector<192x32xf32>
    %97 = vector.extract_strided_slice %65 {offsets = [20, 0], sizes = [192, 16], strides = [1, 1]} : vector<216x16xf32> to vector<192x16xf32>
    %c272 = arith.constant 272 : index
    %c0_53 = arith.constant 0 : index
    %98 = vector.load %arg2[%c272, %c0_53] : memref<864x32xf32, #tpu.memory_space<vmem>>, vector<16x32xf32>
    %cst_54 = arith.constant dense<0.000000e+00> : vector<192x32xf32>
    %99 = tpu.matmul %97, %98, %cst_54 {dimension_numbers = #tpu.dot_dimension_numbers<[1], [0], [0], [1], [0, 0, 1, 1], [], []>} : vector<192x16xf32>, vector<16x32xf32>, vector<192x32xf32> -> vector<192x32xf32>
    %100 = arith.addf %96, %99 : vector<192x32xf32>
    %cst_55 = arith.constant dense<0.000000e+00> : vector<1x32xf32>
    %101 = tpu.matmul %1, %100, %cst_55 {dimension_numbers = #tpu.dot_dimension_numbers<[1], [0], [0], [1], [0, 0, 1, 1], [], []>} : vector<1x192xf32>, vector<192x32xf32>, vector<1x32xf32> -> vector<1x32xf32>
    %cst_56 = arith.constant 2.000000e-02 : f32
    %102 = vector.broadcast %cst_56 : f32 to vector<1x32xf32>
    %103 = arith.mulf %101, %102 : vector<1x32xf32>
    %104 = vector.broadcast %103 : vector<1x32xf32> to vector<192x32xf32>
    %105 = arith.subf %100, %104 : vector<192x32xf32>
    %106 = arith.mulf %105, %105 : vector<192x32xf32>
    %cst_57 = arith.constant dense<0.000000e+00> : vector<1x32xf32>
    %107 = tpu.matmul %1, %106, %cst_57 {dimension_numbers = #tpu.dot_dimension_numbers<[1], [0], [0], [1], [0, 0, 1, 1], [], []>} : vector<1x192xf32>, vector<192x32xf32>, vector<1x32xf32> -> vector<1x32xf32>
    %cst_58 = arith.constant 2.000000e-02 : f32
    %108 = vector.broadcast %cst_58 : f32 to vector<1x32xf32>
    %109 = arith.mulf %107, %108 : vector<1x32xf32>
    %cst_59 = arith.constant 9.99999974E-6 : f32
    %110 = vector.broadcast %cst_59 : f32 to vector<1x32xf32>
    %111 = arith.addf %109, %110 : vector<1x32xf32>
    %112 = math.rsqrt %111 : vector<1x32xf32>
    %113 = arith.mulf %5, %112 : vector<1x32xf32>
    %114 = vector.broadcast %113 : vector<1x32xf32> to vector<192x32xf32>
    %115 = arith.mulf %105, %114 : vector<192x32xf32>
    %116 = vector.broadcast %6 : vector<1x32xf32> to vector<192x32xf32>
    %117 = arith.addf %115, %116 : vector<192x32xf32>
    %cst_60 = arith.constant 0.000000e+00 : f32
    %118 = vector.broadcast %cst_60 : f32 to vector<192x32xf32>
    %119 = arith.maximumf %117, %118 : vector<192x32xf32>
    %120 = vector.extract_strided_slice %119 {offsets = [0, 0], sizes = [168, 32], strides = [1, 1]} : vector<192x32xf32> to vector<168x32xf32>
    %c288 = arith.constant 288 : index
    %c0_61 = arith.constant 0 : index
    %121 = vector.load %arg2[%c288, %c0_61] : memref<864x32xf32, #tpu.memory_space<vmem>>, vector<32x32xf32>
    %cst_62 = arith.constant dense<0.000000e+00> : vector<168x32xf32>
    %122 = tpu.matmul %120, %121, %cst_62 {dimension_numbers = #tpu.dot_dimension_numbers<[1], [0], [0], [1], [0, 0, 1, 1], [], []>} : vector<168x32xf32>, vector<32x32xf32>, vector<168x32xf32> -> vector<168x32xf32>
    %123 = vector.extract_strided_slice %119 {offsets = [1, 0], sizes = [168, 32], strides = [1, 1]} : vector<192x32xf32> to vector<168x32xf32>
    %c320 = arith.constant 320 : index
    %c0_63 = arith.constant 0 : index
    %124 = vector.load %arg2[%c320, %c0_63] : memref<864x32xf32, #tpu.memory_space<vmem>>, vector<32x32xf32>
    %cst_64 = arith.constant dense<0.000000e+00> : vector<168x32xf32>
    %125 = tpu.matmul %123, %124, %cst_64 {dimension_numbers = #tpu.dot_dimension_numbers<[1], [0], [0], [1], [0, 0, 1, 1], [], []>} : vector<168x32xf32>, vector<32x32xf32>, vector<168x32xf32> -> vector<168x32xf32>
    %126 = arith.addf %122, %125 : vector<168x32xf32>
    %127 = vector.extract_strided_slice %119 {offsets = [2, 0], sizes = [168, 32], strides = [1, 1]} : vector<192x32xf32> to vector<168x32xf32>
    %c352 = arith.constant 352 : index
    %c0_65 = arith.constant 0 : index
    %128 = vector.load %arg2[%c352, %c0_65] : memref<864x32xf32, #tpu.memory_space<vmem>>, vector<32x32xf32>
    %cst_66 = arith.constant dense<0.000000e+00> : vector<168x32xf32>
    %129 = tpu.matmul %127, %128, %cst_66 {dimension_numbers = #tpu.dot_dimension_numbers<[1], [0], [0], [1], [0, 0, 1, 1], [], []>} : vector<168x32xf32>, vector<32x32xf32>, vector<168x32xf32> -> vector<168x32xf32>
    %130 = arith.addf %126, %129 : vector<168x32xf32>
    %131 = vector.extract_strided_slice %119 {offsets = [9, 0], sizes = [168, 32], strides = [1, 1]} : vector<192x32xf32> to vector<168x32xf32>
    %c384 = arith.constant 384 : index
    %c0_67 = arith.constant 0 : index
    %132 = vector.load %arg2[%c384, %c0_67] : memref<864x32xf32, #tpu.memory_space<vmem>>, vector<32x32xf32>
    %cst_68 = arith.constant dense<0.000000e+00> : vector<168x32xf32>
    %133 = tpu.matmul %131, %132, %cst_68 {dimension_numbers = #tpu.dot_dimension_numbers<[1], [0], [0], [1], [0, 0, 1, 1], [], []>} : vector<168x32xf32>, vector<32x32xf32>, vector<168x32xf32> -> vector<168x32xf32>
    %134 = arith.addf %130, %133 : vector<168x32xf32>
    %135 = vector.extract_strided_slice %119 {offsets = [10, 0], sizes = [168, 32], strides = [1, 1]} : vector<192x32xf32> to vector<168x32xf32>
    %c416 = arith.constant 416 : index
    %c0_69 = arith.constant 0 : index
    %136 = vector.load %arg2[%c416, %c0_69] : memref<864x32xf32, #tpu.memory_space<vmem>>, vector<32x32xf32>
    %cst_70 = arith.constant dense<0.000000e+00> : vector<168x32xf32>
    %137 = tpu.matmul %135, %136, %cst_70 {dimension_numbers = #tpu.dot_dimension_numbers<[1], [0], [0], [1], [0, 0, 1, 1], [], []>} : vector<168x32xf32>, vector<32x32xf32>, vector<168x32xf32> -> vector<168x32xf32>
    %138 = arith.addf %134, %137 : vector<168x32xf32>
    %139 = vector.extract_strided_slice %119 {offsets = [11, 0], sizes = [168, 32], strides = [1, 1]} : vector<192x32xf32> to vector<168x32xf32>
    %c448 = arith.constant 448 : index
    %c0_71 = arith.constant 0 : index
    %140 = vector.load %arg2[%c448, %c0_71] : memref<864x32xf32, #tpu.memory_space<vmem>>, vector<32x32xf32>
    %cst_72 = arith.constant dense<0.000000e+00> : vector<168x32xf32>
    %141 = tpu.matmul %139, %140, %cst_72 {dimension_numbers = #tpu.dot_dimension_numbers<[1], [0], [0], [1], [0, 0, 1, 1], [], []>} : vector<168x32xf32>, vector<32x32xf32>, vector<168x32xf32> -> vector<168x32xf32>
    %142 = arith.addf %138, %141 : vector<168x32xf32>
    %143 = vector.extract_strided_slice %119 {offsets = [18, 0], sizes = [168, 32], strides = [1, 1]} : vector<192x32xf32> to vector<168x32xf32>
    %c480 = arith.constant 480 : index
    %c0_73 = arith.constant 0 : index
    %144 = vector.load %arg2[%c480, %c0_73] : memref<864x32xf32, #tpu.memory_space<vmem>>, vector<32x32xf32>
    %cst_74 = arith.constant dense<0.000000e+00> : vector<168x32xf32>
    %145 = tpu.matmul %143, %144, %cst_74 {dimension_numbers = #tpu.dot_dimension_numbers<[1], [0], [0], [1], [0, 0, 1, 1], [], []>} : vector<168x32xf32>, vector<32x32xf32>, vector<168x32xf32> -> vector<168x32xf32>
    %146 = arith.addf %142, %145 : vector<168x32xf32>
    %147 = vector.extract_strided_slice %119 {offsets = [19, 0], sizes = [168, 32], strides = [1, 1]} : vector<192x32xf32> to vector<168x32xf32>
    %c512 = arith.constant 512 : index
    %c0_75 = arith.constant 0 : index
    %148 = vector.load %arg2[%c512, %c0_75] : memref<864x32xf32, #tpu.memory_space<vmem>>, vector<32x32xf32>
    %cst_76 = arith.constant dense<0.000000e+00> : vector<168x32xf32>
    %149 = tpu.matmul %147, %148, %cst_76 {dimension_numbers = #tpu.dot_dimension_numbers<[1], [0], [0], [1], [0, 0, 1, 1], [], []>} : vector<168x32xf32>, vector<32x32xf32>, vector<168x32xf32> -> vector<168x32xf32>
    %150 = arith.addf %146, %149 : vector<168x32xf32>
    %151 = vector.extract_strided_slice %119 {offsets = [20, 0], sizes = [168, 32], strides = [1, 1]} : vector<192x32xf32> to vector<168x32xf32>
    %c544 = arith.constant 544 : index
    %c0_77 = arith.constant 0 : index
    %152 = vector.load %arg2[%c544, %c0_77] : memref<864x32xf32, #tpu.memory_space<vmem>>, vector<32x32xf32>
    %cst_78 = arith.constant dense<0.000000e+00> : vector<168x32xf32>
    %153 = tpu.matmul %151, %152, %cst_78 {dimension_numbers = #tpu.dot_dimension_numbers<[1], [0], [0], [1], [0, 0, 1, 1], [], []>} : vector<168x32xf32>, vector<32x32xf32>, vector<168x32xf32> -> vector<168x32xf32>
    %154 = arith.addf %150, %153 : vector<168x32xf32>
    %cst_79 = arith.constant dense<0.000000e+00> : vector<1x32xf32>
    %155 = tpu.matmul %2, %154, %cst_79 {dimension_numbers = #tpu.dot_dimension_numbers<[1], [0], [0], [1], [0, 0, 1, 1], [], []>} : vector<1x168xf32>, vector<168x32xf32>, vector<1x32xf32> -> vector<1x32xf32>
    %cst_80 = arith.constant 0.055555556 : f32
    %156 = vector.broadcast %cst_80 : f32 to vector<1x32xf32>
    %157 = arith.mulf %155, %156 : vector<1x32xf32>
    %158 = vector.broadcast %157 : vector<1x32xf32> to vector<168x32xf32>
    %159 = arith.subf %154, %158 : vector<168x32xf32>
    %160 = arith.mulf %159, %159 : vector<168x32xf32>
    %cst_81 = arith.constant dense<0.000000e+00> : vector<1x32xf32>
    %161 = tpu.matmul %2, %160, %cst_81 {dimension_numbers = #tpu.dot_dimension_numbers<[1], [0], [0], [1], [0, 0, 1, 1], [], []>} : vector<1x168xf32>, vector<168x32xf32>, vector<1x32xf32> -> vector<1x32xf32>
    %cst_82 = arith.constant 0.055555556 : f32
    %162 = vector.broadcast %cst_82 : f32 to vector<1x32xf32>
    %163 = arith.mulf %161, %162 : vector<1x32xf32>
    %cst_83 = arith.constant 9.99999974E-6 : f32
    %164 = vector.broadcast %cst_83 : f32 to vector<1x32xf32>
    %165 = arith.addf %163, %164 : vector<1x32xf32>
    %166 = math.rsqrt %165 : vector<1x32xf32>
    %167 = arith.mulf %7, %166 : vector<1x32xf32>
    %168 = vector.broadcast %167 : vector<1x32xf32> to vector<168x32xf32>
    %169 = arith.mulf %159, %168 : vector<168x32xf32>
    %170 = vector.broadcast %8 : vector<1x32xf32> to vector<168x32xf32>
    %171 = arith.addf %169, %170 : vector<168x32xf32>
    %cst_84 = arith.constant 0.000000e+00 : f32
    %172 = vector.broadcast %cst_84 : f32 to vector<168x32xf32>
    %173 = arith.maximumf %171, %172 : vector<168x32xf32>
    %174 = vector.extract_strided_slice %173 {offsets = [0, 0], sizes = [88, 32], strides = [1, 1]} : vector<168x32xf32> to vector<88x32xf32>
    %c576 = arith.constant 576 : index
    %c0_85 = arith.constant 0 : index
    %175 = vector.load %arg2[%c576, %c0_85] : memref<864x32xf32, #tpu.memory_space<vmem>>, vector<32x3xf32>
    %cst_86 = arith.constant dense<0.000000e+00> : vector<88x3xf32>
    %176 = tpu.matmul %174, %175, %cst_86 {dimension_numbers = #tpu.dot_dimension_numbers<[1], [0], [0], [1], [0, 0, 1, 1], [], []>} : vector<88x32xf32>, vector<32x3xf32>, vector<88x3xf32> -> vector<88x3xf32>
    %177 = vector.extract_strided_slice %173 {offsets = [1, 0], sizes = [88, 32], strides = [1, 1]} : vector<168x32xf32> to vector<88x32xf32>
    %c608 = arith.constant 608 : index
    %c0_87 = arith.constant 0 : index
    %178 = vector.load %arg2[%c608, %c0_87] : memref<864x32xf32, #tpu.memory_space<vmem>>, vector<32x3xf32>
    %cst_88 = arith.constant dense<0.000000e+00> : vector<88x3xf32>
    %179 = tpu.matmul %177, %178, %cst_88 {dimension_numbers = #tpu.dot_dimension_numbers<[1], [0], [0], [1], [0, 0, 1, 1], [], []>} : vector<88x32xf32>, vector<32x3xf32>, vector<88x3xf32> -> vector<88x3xf32>
    %180 = arith.addf %176, %179 : vector<88x3xf32>
    %181 = vector.extract_strided_slice %173 {offsets = [2, 0], sizes = [88, 32], strides = [1, 1]} : vector<168x32xf32> to vector<88x32xf32>
    %c640 = arith.constant 640 : index
    %c0_89 = arith.constant 0 : index
    %182 = vector.load %arg2[%c640, %c0_89] : memref<864x32xf32, #tpu.memory_space<vmem>>, vector<32x3xf32>
    %cst_90 = arith.constant dense<0.000000e+00> : vector<88x3xf32>
    %183 = tpu.matmul %181, %182, %cst_90 {dimension_numbers = #tpu.dot_dimension_numbers<[1], [0], [0], [1], [0, 0, 1, 1], [], []>} : vector<88x32xf32>, vector<32x3xf32>, vector<88x3xf32> -> vector<88x3xf32>
    %184 = arith.addf %180, %183 : vector<88x3xf32>
    %185 = vector.extract_strided_slice %173 {offsets = [9, 0], sizes = [88, 32], strides = [1, 1]} : vector<168x32xf32> to vector<88x32xf32>
    %c672 = arith.constant 672 : index
    %c0_91 = arith.constant 0 : index
    %186 = vector.load %arg2[%c672, %c0_91] : memref<864x32xf32, #tpu.memory_space<vmem>>, vector<32x3xf32>
    %cst_92 = arith.constant dense<0.000000e+00> : vector<88x3xf32>
    %187 = tpu.matmul %185, %186, %cst_92 {dimension_numbers = #tpu.dot_dimension_numbers<[1], [0], [0], [1], [0, 0, 1, 1], [], []>} : vector<88x32xf32>, vector<32x3xf32>, vector<88x3xf32> -> vector<88x3xf32>
    %188 = arith.addf %184, %187 : vector<88x3xf32>
    %189 = vector.extract_strided_slice %173 {offsets = [10, 0], sizes = [88, 32], strides = [1, 1]} : vector<168x32xf32> to vector<88x32xf32>
    %c704 = arith.constant 704 : index
    %c0_93 = arith.constant 0 : index
    %190 = vector.load %arg2[%c704, %c0_93] : memref<864x32xf32, #tpu.memory_space<vmem>>, vector<32x3xf32>
    %cst_94 = arith.constant dense<0.000000e+00> : vector<88x3xf32>
    %191 = tpu.matmul %189, %190, %cst_94 {dimension_numbers = #tpu.dot_dimension_numbers<[1], [0], [0], [1], [0, 0, 1, 1], [], []>} : vector<88x32xf32>, vector<32x3xf32>, vector<88x3xf32> -> vector<88x3xf32>
    %192 = arith.addf %188, %191 : vector<88x3xf32>
    %193 = vector.extract_strided_slice %173 {offsets = [11, 0], sizes = [88, 32], strides = [1, 1]} : vector<168x32xf32> to vector<88x32xf32>
    %c736 = arith.constant 736 : index
    %c0_95 = arith.constant 0 : index
    %194 = vector.load %arg2[%c736, %c0_95] : memref<864x32xf32, #tpu.memory_space<vmem>>, vector<32x3xf32>
    %cst_96 = arith.constant dense<0.000000e+00> : vector<88x3xf32>
    %195 = tpu.matmul %193, %194, %cst_96 {dimension_numbers = #tpu.dot_dimension_numbers<[1], [0], [0], [1], [0, 0, 1, 1], [], []>} : vector<88x32xf32>, vector<32x3xf32>, vector<88x3xf32> -> vector<88x3xf32>
    %196 = arith.addf %192, %195 : vector<88x3xf32>
    %197 = vector.extract_strided_slice %173 {offsets = [18, 0], sizes = [88, 32], strides = [1, 1]} : vector<168x32xf32> to vector<88x32xf32>
    %c768 = arith.constant 768 : index
    %c0_97 = arith.constant 0 : index
    %198 = vector.load %arg2[%c768, %c0_97] : memref<864x32xf32, #tpu.memory_space<vmem>>, vector<32x3xf32>
    %cst_98 = arith.constant dense<0.000000e+00> : vector<88x3xf32>
    %199 = tpu.matmul %197, %198, %cst_98 {dimension_numbers = #tpu.dot_dimension_numbers<[1], [0], [0], [1], [0, 0, 1, 1], [], []>} : vector<88x32xf32>, vector<32x3xf32>, vector<88x3xf32> -> vector<88x3xf32>
    %200 = arith.addf %196, %199 : vector<88x3xf32>
    %201 = vector.extract_strided_slice %173 {offsets = [19, 0], sizes = [88, 32], strides = [1, 1]} : vector<168x32xf32> to vector<88x32xf32>
    %c800 = arith.constant 800 : index
    %c0_99 = arith.constant 0 : index
    %202 = vector.load %arg2[%c800, %c0_99] : memref<864x32xf32, #tpu.memory_space<vmem>>, vector<32x3xf32>
    %cst_100 = arith.constant dense<0.000000e+00> : vector<88x3xf32>
    %203 = tpu.matmul %201, %202, %cst_100 {dimension_numbers = #tpu.dot_dimension_numbers<[1], [0], [0], [1], [0, 0, 1, 1], [], []>} : vector<88x32xf32>, vector<32x3xf32>, vector<88x3xf32> -> vector<88x3xf32>
    %204 = arith.addf %200, %203 : vector<88x3xf32>
    %205 = vector.extract_strided_slice %173 {offsets = [20, 0], sizes = [88, 32], strides = [1, 1]} : vector<168x32xf32> to vector<88x32xf32>
    %c832 = arith.constant 832 : index
    %c0_101 = arith.constant 0 : index
    %206 = vector.load %arg2[%c832, %c0_101] : memref<864x32xf32, #tpu.memory_space<vmem>>, vector<32x3xf32>
    %cst_102 = arith.constant dense<0.000000e+00> : vector<88x3xf32>
    %207 = tpu.matmul %205, %206, %cst_102 {dimension_numbers = #tpu.dot_dimension_numbers<[1], [0], [0], [1], [0, 0, 1, 1], [], []>} : vector<88x32xf32>, vector<32x3xf32>, vector<88x3xf32> -> vector<88x3xf32>
    %208 = arith.addf %204, %207 : vector<88x3xf32>
    %cst_103 = arith.constant dense<0.000000e+00> : vector<2x3xf32>
    %209 = tpu.matmul %10, %208, %cst_103 {dimension_numbers = #tpu.dot_dimension_numbers<[1], [0], [0], [1], [0, 0, 1, 1], [], []>} : vector<2x88xf32>, vector<88x3xf32>, vector<2x3xf32> -> vector<2x3xf32>
    %210 = vector.broadcast %9 : vector<1x3xf32> to vector<2x3xf32>
    %211 = arith.addf %209, %210 : vector<2x3xf32>
    %c0_104 = arith.constant 0 : index
    %c0_105 = arith.constant 0 : index
    %212 = vector.load %arg4[%c0_104, %c0_105] : memref<2x3xf32, #tpu.memory_space<vmem>>, vector<2x3xf32>
    tpu.vector_store %arg4[%c0_104, %c0_105], %211 {strides = array<i32>} : memref<2x3xf32, #tpu.memory_space<vmem>>, vector<2x3xf32>,
    return
  }
  func.func @transform_0(%arg0: i32) -> (i32, i32) {
    %c0_i32 = arith.constant 0 : i32
    %c0_i32_0 = arith.constant 0 : i32
    %c0_i32_1 = arith.constant 0 : i32
    return %c0_i32, %c0_i32_0 : i32, i32
  }
  func.func @transform_1(%arg0: i32) -> (i32, i32) {
    %c0_i32 = arith.constant 0 : i32
    %c0_i32_0 = arith.constant 0 : i32
    %c0_i32_1 = arith.constant 0 : i32
    return %c0_i32, %c0_i32_0 : i32, i32
  }
  func.func @transform_2(%arg0: i32) -> (i32, i32) {
    %c0_i32 = arith.constant 0 : i32
    %c0_i32_0 = arith.constant 0 : i32
    %c0_i32_1 = arith.constant 0 : i32
    return %c0_i32, %c0_i32_0 : i32, i32
  }
  func.func @transform_3(%arg0: i32) -> (i32, i32) {
    %c0_i32 = arith.constant 0 : i32
    %c0_i32_0 = arith.constant 0 : i32
    %c0_i32_1 = arith.constant 0 : i32
    return %c0_i32, %c0_i32_0 : i32, i32
  }
}

</mosaic_0001>

<llo_original>
// kernel: tpu_custom_call.1
$region0: #{tpu_custom_call.1}
  #allocation0 [shape = 'u32[]', space=smem, size = 0x4, offset = 0x4, fixed_abs, tag = 'smem constant byte address 0x4 - core index']
  #allocation1 [shape = 'u32[144,128]{1,0:T(1,128)}', space=vmem, size = 0x12000, scoped, tag = 'internal scratch']
  %s0 = inlined_call_operand.vmem [shape: f32[240,16], index: 0, kind: input, shape index: {}]
  %s1 = inlined_call_operand.vmem [shape: f32[864,32], index: 1, kind: input, shape index: {}]
  %s2 = inlined_call_operand.vmem [shape: f32[16,256], index: 2, kind: input, shape index: {}]
  %s3 = inlined_call_operand.hbm [shape: f32[2,3], index: 3, kind: output, shape index: {}]
  %s4 = sld [smem:[#allocation0]]
  $region22: #{tpu_custom_call.1} parent=0
    _
  %s6 = ssub.s32 1, %s4
  %s7 = scalar_select 0, %s6, %s4
  $region1: #{tpu_custom_call.1} parent=0
    #allocation2 [shape = 'u8[1024]{0}', space=vmem, size = 0x400, scoped, tag = 'output window, operand 0, single buffered']
    #allocation3 [shape = 's32[1]{0}', space=sflag, size = 0x4, scoped, tag = 'scoped memory for tpu_custom_call.1']
    %8 = vsyncpa [#allocation3], 0
    // Predicated region
    $region2: #{tpu_custom_call.1} parent=1 // pred_check
      _
    $region3: #{tpu_custom_call.1} parent=1 // pred_check_branch
      %10 = sbr.rel (0) target = $region5
    $region4: #{tpu_custom_call.1} parent=1 // pred_region
      _
    $region5: #{tpu_custom_call.1} parent=1 // pred_fallthru
      _
    // Predicated region
    $region6: #{tpu_custom_call.1} parent=1 // pred_check
      _
    $region7: #{tpu_custom_call.1} parent=1 // pred_check_branch
      %12 = sbr.rel (0) target = $region9
    $region8: #{tpu_custom_call.1} parent=1 // pred_region
      _
    $region9: #{tpu_custom_call.1} parent=1 // pred_fallthru
      _
    // Predicated region
    $region10: #{tpu_custom_call.1} parent=1 // pred_check
      _
    $region11: #{tpu_custom_call.1} parent=1 // pred_check_branch
      %14 = sbr.rel (0) target = $region13
    $region12: #{tpu_custom_call.1} parent=1 // pred_region
      _
    $region13: #{tpu_custom_call.1} parent=1 // pred_fallthru
      _
    %v15 = vld [vmem:[%s2] ss:$8 sm:$0x3]
    %s16 = scalar_lea.vmem %s2, 1
    %v17 = vld [vmem:[%s16] ss:$8 sm:$0x3]
    %s18 = scalar_lea.vmem %s2, 2
    %v19 = vld [vmem:[%s18] ss:$8 sm:$0x3]
    %v20 = vld [vmem:[%s2 + $0x3] ss:$0 sm:$0xff]
    %v21 = vld [vmem:[%s2 + $0x4] ss:$0 sm:$0xff]
    %v22 = vld [vmem:[%s2 + $0x5] ss:$0 sm:$0xff]
    %v23 = vld [vmem:[%s2 + $0x6] ss:$0 sm:$0xff]
    %v24 = vld [vmem:[%s2 + $0x7] ss:$0 sm:$0xff]
    %v25 = vld [vmem:[%s2 + $0x10] ss:$0 sm:$0xff]
    %v26 = vld [vmem:[%s2 + $0x11] ss:$0 sm:$0xff]
    %v27 = vld [vmem:[%s2 + $0x10] sm:$0xc]
    %v28 = vld [vmem:[%s0] sm:$0xff]
    %v29 = vld [vmem:[%s0 + $0x8] sm:$0xff]
    %v30 = vld [vmem:[%s0 + $0x10] sm:$0xff]
    %v31 = vld [vmem:[%s0 + $0x18] sm:$0xff]
    %v32 = vld [vmem:[%s0 + $0x20] sm:$0xff]
    %v33 = vld [vmem:[%s0 + $0x28] sm:$0xff]
    %v34 = vld [vmem:[%s0 + $0x30] sm:$0xff]
    %v35 = vld [vmem:[%s0 + $0x38] sm:$0xff]
    %v36 = vld [vmem:[%s0 + $0x40] sm:$0xff]
    %v37 = vld [vmem:[%s0 + $0x48] sm:$0xff]
    %v38 = vld [vmem:[%s0 + $0x50] sm:$0xff]
    %v39 = vld [vmem:[%s0 + $0x58] sm:$0xff]
    %v40 = vld [vmem:[%s0 + $0x60] sm:$0xff]
    %v41 = vld [vmem:[%s0 + $0x68] sm:$0xff]
    %v42 = vld [vmem:[%s0 + $0x70] sm:$0xff]
    %v43 = vld [vmem:[%s0 + $0x78] sm:$0xff]
    %v44 = vld [vmem:[%s0 + $0x80] sm:$0xff]
    %v45 = vld [vmem:[%s0 + $0x88] sm:$0xff]
    %v46 = vld [vmem:[%s0 + $0x90] sm:$0xff]
    %v47 = vld [vmem:[%s0 + $0x98] sm:$0xff]
    %v48 = vld [vmem:[%s0 + $0xa0] sm:$0xff]
    %v49 = vld [vmem:[%s0 + $0xa8] sm:$0xff]
    %v50 = vld [vmem:[%s0 + $0xb0] sm:$0xff]
    %v51 = vld [vmem:[%s0 + $0xb8] sm:$0xff]
    %v52 = vld [vmem:[%s0 + $0xc0] sm:$0xff]
    %v53 = vld [vmem:[%s0 + $0xc8] sm:$0xff]
    %v54 = vld [vmem:[%s0 + $0xd0] sm:$0xff]
    %v55 = vld [vmem:[%s0 + $0xd8] sm:$0xff]
    %v56 = vld [vmem:[%s0 + $0xe0] sm:$0xff]
    %v57 = vld [vmem:[%s0 + $0xe8] sm:$0xff]
    %v58 = vld [vmem:[%s1] sm:$0xff]
    %v59 = vld [vmem:[%s1 + $0x8] sm:$0xff]
    %v60 = vld [vmem:[%s1 + $0x10] sm:$0xff]
    %v61 = vld [vmem:[%s1 + $0x18] sm:$0xff]
    %vm90 = vcmask 1046528
    %v91 = vrot.slane %v28, 1
    %v92 = vrot.slane %v29, 1
    %v93 = vsel %vm90, %v91, %v92
    %v94 = vrot.slane %v30, 1
    %v95 = vsel %vm90, %v92, %v94
    %v96 = vrot.slane %v31, 1
    %v97 = vsel %vm90, %v94, %v96
    %v98 = vrot.slane %v32, 1
    %v99 = vsel %vm90, %v96, %v98
    %v100 = vrot.slane %v33, 1
    %v101 = vsel %vm90, %v98, %v100
    %v102 = vrot.slane %v34, 1
    %v103 = vsel %vm90, %v100, %v102
    %v104 = vrot.slane %v35, 1
    %v105 = vsel %vm90, %v102, %v104
    %v106 = vrot.slane %v36, 1
    %v107 = vsel %vm90, %v104, %v106
    %v108 = vrot.slane %v37, 1
    %v109 = vsel %vm90, %v106, %v108
    %v110 = vrot.slane %v38, 1
    %v111 = vsel %vm90, %v108, %v110
    %v112 = vrot.slane %v39, 1
    %v113 = vsel %vm90, %v110, %v112
    %v114 = vrot.slane %v40, 1
    %v115 = vsel %vm90, %v112, %v114
    %v116 = vrot.slane %v41, 1
    %v117 = vsel %vm90, %v114, %v116
    %v118 = vrot.slane %v42, 1
    %v119 = vsel %vm90, %v116, %v118
    %v120 = vrot.slane %v43, 1
    %v121 = vsel %vm90, %v118, %v120
    %v122 = vrot.slane %v44, 1
    %v123 = vsel %vm90, %v120, %v122
    %v124 = vrot.slane %v45, 1
    %v125 = vsel %vm90, %v122, %v124
    %v126 = vrot.slane %v46, 1
    %v127 = vsel %vm90, %v124, %v126
    %v128 = vrot.slane %v47, 1
    %v129 = vsel %vm90, %v126, %v128
    %v130 = vrot.slane %v48, 1
    %v131 = vsel %vm90, %v128, %v130
    %v132 = vrot.slane %v49, 1
    %v133 = vsel %vm90, %v130, %v132
    %v134 = vrot.slane %v50, 1
    %v135 = vsel %vm90, %v132, %v134
    %v136 = vrot.slane %v51, 1
    %v137 = vsel %vm90, %v134, %v136
    %v138 = vrot.slane %v52, 1
    %v139 = vsel %vm90, %v136, %v138
    %v140 = vrot.slane %v53, 1
    %v141 = vsel %vm90, %v138, %v140
    %v142 = vrot.slane %v54, 1
    %v143 = vsel %vm90, %v140, %v142
    %v144 = vrot.slane %v55, 1
    %v145 = vsel %vm90, %v142, %v144
    %vm146 = vcmask 130048
    %v147 = vsel %vm146, %v93, 0
    %v149 = vsel %vm146, %v95, 0
    %v151 = vsel %vm146, %v97, 0
    %v153 = vsel %vm146, %v99, 0
    %v155 = vsel %vm146, %v101, 0
    %v157 = vsel %vm146, %v103, 0
    %v159 = vsel %vm146, %v105, 0
    %v161 = vsel %vm146, %v107, 0
    %v163 = vsel %vm146, %v109, 0
    %v165 = vsel %vm146, %v111, 0
    %v167 = vsel %vm146, %v113, 0
    %v169 = vsel %vm146, %v115, 0
    %v171 = vsel %vm146, %v117, 0
    %v173 = vsel %vm146, %v119, 0
    %v175 = vsel %vm146, %v121, 0
    %v177 = vsel %vm146, %v123, 0
    %v179 = vsel %vm146, %v125, 0
    %v181 = vsel %vm146, %v127, 0
    %v183 = vsel %vm146, %v129, 0
    %v185 = vsel %vm146, %v131, 0
    %v187 = vsel %vm146, %v133, 0
    %v189 = vsel %vm146, %v135, 0
    %v191 = vsel %vm146, %v137, 0
    %v193 = vsel %vm146, %v139, 0
    %v195 = vsel %vm146, %v141, 0
    %v197 = vsel %vm146, %v143, 0
    %v199 = vsel %vm146, %v145, 0
    %201 = vmatprep.subr.mxu0 0.0
    %202 = vmatpush1.msra.mxu0 %v60
    %203 = vmatprep.subr.mxu0 0.0
    %204 = vmatpush1.msra.mxu0 %v61
    %205 = vmatprep.subr.mxu0 0.0
    %206 = vmatpush1.msra.mxu0 0.0
    %207 = vmatprep.subr.mxu0 0.0
    %208 = vmatpush1.msra.mxu0 0.0
    %209 = vmatprep.subr.mxu0 0.0
    %210 = vmatpush1.msra.mxu0 0.0
    %211 = vmatprep.subr.mxu0 0.0
    %212 = vmatpush1.msra.mxu0 0.0
    %213 = vmatprep.subr.mxu0 0.0
    %214 = vmatpush1.msra.mxu0 0.0
    %215 = vmatprep.subr.mxu0 0.0
    %216 = vmatpush1.msra.mxu0 0.0
    %217 = vmatprep.subr.mxu0 0.0
    %218 = vmatpush1.msra.mxu0 0.0
    %219 = vmatprep.subr.mxu0 0.0
    %220 = vmatpush1.msra.mxu0 0.0
    %221 = vmatprep.subr.mxu0 0.0
    %222 = vmatpush1.msra.mxu0 0.0
    %223 = vmatprep.subr.mxu0 0.0
    %224 = vmatpush1.msra.mxu0 0.0
    %225 = vmatprep.subr.mxu0 0.0
    %226 = vmatpush1.msra.mxu0 0.0
    %227 = vmatprep.subr.mxu0 0.0
    %228 = vmatpush1.msra.mxu0 0.0
    %229 = vmatprep.subr.mxu0 0.0
    %230 = vmatpush1.msra.mxu0 0.0
    %231 = vmatprep.subr.mxu0 0.0
    %232 = vmatpush1.msra.mxu0 0.0
    %233 = vmatprep.subr.mxu0 0.0
    %234 = vmatpush1.msra.mxu0 0.0
    %235 = vmatprep.subr.mxu0 0.0
    %236 = vmatpush1.msra.mxu0 0.0
    %237 = vmatprep.subr.mxu0 0.0
    %238 = vmatpush1.msra.mxu0 0.0
    %239 = vmatprep.subr.mxu0 0.0
    %240 = vmatpush1.msra.mxu0 0.0
    %241 = vmatprep.subr.mxu0 0.0
    %242 = vmatpush1.msra.mxu0 0.0
    %243 = vmatprep.subr.mxu0 0.0
    %244 = vmatpush1.msra.mxu0 0.0
    %245 = vmatprep.subr.mxu0 0.0
    %246 = vmatpush1.msra.mxu0 0.0
    %247 = vmatprep.subr.mxu0 0.0
    %248 = vmatpush1.msra.mxu0 0.0
    %249 = vmatprep.subr.mxu0 0.0
    %250 = vmatpush1.msra.mxu0 0.0
    %251 = vmatprep.subr.mxu0 0.0
    %252 = vmatpush1.msra.mxu0 0.0
    %253 = vmatprep.subr.mxu0 0.0
    %254 = vmatpush1.msra.mxu0 0.0
    %255 = vmatprep.subr.mxu0 0.0
    %256 = vmatpush1.msra.mxu0 0.0
    %257 = vmatprep.subr.mxu0 0.0
    %258 = vmatpush1.msra.mxu0 0.0
    %259 = vmatprep.subr.mxu0 0.0
    %260 = vmatpush1.msra.mxu0 0.0
    %261 = vmatprep.subr.mxu0 0.0
    %262 = vmatpush1.msra.mxu0 0.0
    %263 = vmatprep.subr.mxu0 0.0
    %264 = vmatpush1.msra.mxu0 0.0
    %265 = vmatprep.mubr.f32.mxu0 0.0
    %266 = vmatmul.mubr.f32.gmra.mrb[0].mxu0 %v147
    %v267 = vpop.f32.mrb[0].mxu0
    %v268 = vadd.f32 0.0, %v267
    %v269 = vpop.f32.mrb[0].mxu0
    %270 = vmatprep.mubr.f32.mxu0 0.0
    %271 = vmatmul.mubr.f32.gmra.mrb[0].mxu0 %v149
    %v272 = vpop.f32.mrb[0].mxu0
    %v273 = vadd.f32 0.0, %v272
    %v274 = vpop.f32.mrb[0].mxu0
    %275 = vmatprep.mubr.f32.mxu0 0.0
    %276 = vmatmul.mubr.f32.gmra.mrb[0].mxu0 %v151
    %v277 = vpop.f32.mrb[0].mxu0
    %v278 = vadd.f32 0.0, %v277
    %v279 = vpop.f32.mrb[0].mxu0
    %280 = vmatprep.mubr.f32.mxu0 0.0
    %281 = vmatmul.mubr.f32.gmra.mrb[0].mxu0 %v153
    %v282 = vpop.f32.mrb[0].mxu0
    %v283 = vadd.f32 0.0, %v282
    %v284 = vpop.f32.mrb[0].mxu0
    %285 = vmatprep.mubr.f32.mxu0 0.0
    %286 = vmatmul.mubr.f32.gmra.mrb[0].mxu0 %v155
    %v287 = vpop.f32.mrb[0].mxu0
    %v288 = vadd.f32 0.0, %v287
    %v289 = vpop.f32.mrb[0].mxu0
    %290 = vmatprep.mubr.f32.mxu0 0.0
    %291 = vmatmul.mubr.f32.gmra.mrb[0].mxu0 %v157
    %v292 = vpop.f32.mrb[0].mxu0
    %v293 = vadd.f32 0.0, %v292
    %v294 = vpop.f32.mrb[0].mxu0
    %295 = vmatprep.mubr.f32.mxu0 0.0
    %296 = vmatmul.mubr.f32.gmra.mrb[0].mxu0 %v159
    %v297 = vpop.f32.mrb[0].mxu0
    %v298 = vadd.f32 0.0, %v297
    %v299 = vpop.f32.mrb[0].mxu0
    %300 = vmatprep.mubr.f32.mxu0 0.0
    %301 = vmatmul.mubr.f32.gmra.mrb[0].mxu0 %v161
    %v302 = vpop.f32.mrb[0].mxu0
    %v303 = vadd.f32 0.0, %v302
    %v304 = vpop.f32.mrb[0].mxu0
    %305 = vmatprep.mubr.f32.mxu0 0.0
    %306 = vmatmul.mubr.f32.gmra.mrb[0].mxu0 %v163
    %v307 = vpop.f32.mrb[0].mxu0
    %v308 = vadd.f32 0.0, %v307
    %v309 = vpop.f32.mrb[0].mxu0
    %310 = vmatprep.mubr.f32.mxu0 0.0
    %311 = vmatmul.mubr.f32.gmra.mrb[0].mxu0 %v165
    %v312 = vpop.f32.mrb[0].mxu0
    %v313 = vadd.f32 0.0, %v312
    %v314 = vpop.f32.mrb[0].mxu0
    %315 = vmatprep.mubr.f32.mxu0 0.0
    %316 = vmatmul.mubr.f32.gmra.mrb[0].mxu0 %v167
    %v317 = vpop.f32.mrb[0].mxu0
    %v318 = vadd.f32 0.0, %v317
    %v319 = vpop.f32.mrb[0].mxu0
    %320 = vmatprep.mubr.f32.mxu0 0.0
    %321 = vmatmul.mubr.f32.gmra.mrb[0].mxu0 %v169
    %v322 = vpop.f32.mrb[0].mxu0
    %v323 = vadd.f32 0.0, %v322
    %v324 = vpop.f32.mrb[0].mxu0
    %325 = vmatprep.mubr.f32.mxu0 0.0
    %326 = vmatmul.mubr.f32.gmra.mrb[0].mxu0 %v171
    %v327 = vpop.f32.mrb[0].mxu0
    %v328 = vadd.f32 0.0, %v327
    %v329 = vpop.f32.mrb[0].mxu0
    %330 = vmatprep.mubr.f32.mxu0 0.0
    %331 = vmatmul.mubr.f32.gmra.mrb[0].mxu0 %v173
    %v332 = vpop.f32.mrb[0].mxu0
    %v333 = vadd.f32 0.0, %v332
    %v334 = vpop.f32.mrb[0].mxu0
    %335 = vmatprep.mubr.f32.mxu0 0.0
    %336 = vmatmul.mubr.f32.gmra.mrb[0].mxu0 %v175
    %v337 = vpop.f32.mrb[0].mxu0
    %v338 = vadd.f32 0.0, %v337
    %v339 = vpop.f32.mrb[0].mxu0
    %340 = vmatprep.mubr.f32.mxu0 0.0
    %341 = vmatmul.mubr.f32.gmra.mrb[0].mxu0 %v177
    %v342 = vpop.f32.mrb[0].mxu0
    %v343 = vadd.f32 0.0, %v342
    %v344 = vpop.f32.mrb[0].mxu0
    %345 = vmatprep.mubr.f32.mxu0 0.0
    %346 = vmatmul.mubr.f32.gmra.mrb[0].mxu0 %v179
    %v347 = vpop.f32.mrb[0].mxu0
    %v348 = vadd.f32 0.0, %v347
    %v349 = vpop.f32.mrb[0].mxu0
    %350 = vmatprep.mubr.f32.mxu0 0.0
    %351 = vmatmul.mubr.f32.gmra.mrb[0].mxu0 %v181
    %v352 = vpop.f32.mrb[0].mxu0
    %v353 = vadd.f32 0.0, %v352
    %v354 = vpop.f32.mrb[0].mxu0
    %355 = vmatprep.mubr.f32.mxu0 0.0
    %356 = vmatmul.mubr.f32.gmra.mrb[0].mxu0 %v183
    %v357 = vpop.f32.mrb[0].mxu0
    %v358 = vadd.f32 0.0, %v357
    %v359 = vpop.f32.mrb[0].mxu0
    %360 = vmatprep.mubr.f32.mxu0 0.0
    %361 = vmatmul.mubr.f32.gmra.mrb[0].mxu0 %v185
    %v362 = vpop.f32.mrb[0].mxu0
    %v363 = vadd.f32 0.0, %v362
    %v364 = vpop.f32.mrb[0].mxu0
    %365 = vmatprep.mubr.f32.mxu0 0.0
    %366 = vmatmul.mubr.f32.gmra.mrb[0].mxu0 %v187
    %v367 = vpop.f32.mrb[0].mxu0
    %v368 = vadd.f32 0.0, %v367
    %v369 = vpop.f32.mrb[0].mxu0
    %370 = vmatprep.mubr.f32.mxu0 0.0
    %371 = vmatmul.mubr.f32.gmra.mrb[0].mxu0 %v189
    %v372 = vpop.f32.mrb[0].mxu0
    %v373 = vadd.f32 0.0, %v372
    %v374 = vpop.f32.mrb[0].mxu0
    %375 = vmatprep.mubr.f32.mxu0 0.0
    %376 = vmatmul.mubr.f32.gmra.mrb[0].mxu0 %v191
    %v377 = vpop.f32.mrb[0].mxu0
    %v378 = vadd.f32 0.0, %v377
    %v379 = vpop.f32.mrb[0].mxu0
    %380 = vmatprep.mubr.f32.mxu0 0.0
    %381 = vmatmul.mubr.f32.gmra.mrb[0].mxu0 %v193
    %v382 = vpop.f32.mrb[0].mxu0
    %v383 = vadd.f32 0.0, %v382
    %v384 = vpop.f32.mrb[0].mxu0
    %385 = vmatprep.mubr.f32.mxu0 0.0
    %386 = vmatmul.mubr.f32.gmra.mrb[0].mxu0 %v195
    %v387 = vpop.f32.mrb[0].mxu0
    %v388 = vadd.f32 0.0, %v387
    %v389 = vpop.f32.mrb[0].mxu0
    %390 = vmatprep.mubr.f32.mxu0 0.0
    %391 = vmatmul.mubr.f32.gmra.mrb[0].mxu0 %v197
    %v392 = vpop.f32.mrb[0].mxu0
    %v393 = vadd.f32 0.0, %v392
    %v394 = vpop.f32.mrb[0].mxu0
    %395 = vmatprep.mubr.f32.mxu0 0.0
    %396 = vmatmul.mubr.f32.gmra.mrb[0].mxu0 %v199
    %v397 = vpop.f32.mrb[0].mxu0
    %v398 = vadd.f32 0.0, %v397
    %v399 = vpop.f32.mrb[0].mxu0
    %400 = vdwg.mxu0
    %v401 = vsel %vm146, %v28, 0
    %v403 = vsel %vm146, %v29, 0
    %v405 = vsel %vm146, %v30, 0
    %v407 = vsel %vm146, %v31, 0
    %v409 = vsel %vm146, %v32, 0
    %v411 = vsel %vm146, %v33, 0
    %v413 = vsel %vm146, %v34, 0
    %v415 = vsel %vm146, %v35, 0
    %v417 = vsel %vm146, %v36, 0
    %v419 = vsel %vm146, %v37, 0
    %v421 = vsel %vm146, %v38, 0
    %v423 = vsel %vm146, %v39, 0
    %v425 = vsel %vm146, %v40, 0
    %v427 = vsel %vm146, %v41, 0
    %v429 = vsel %vm146, %v42, 0
    %v431 = vsel %vm146, %v43, 0
    %v433 = vsel %vm146, %v44, 0
    %v435 = vsel %vm146, %v45, 0
    %v437 = vsel %vm146, %v46, 0
    %v439 = vsel %vm146, %v47, 0
    %v441 = vsel %vm146, %v48, 0
    %v443 = vsel %vm146, %v49, 0
    %v445 = vsel %vm146, %v50, 0
    %v447 = vsel %vm146, %v51, 0
    %v449 = vsel %vm146, %v52, 0
    %v451 = vsel %vm146, %v53, 0
    %v453 = vsel %vm146, %v54, 0
    %455 = vmatprep.subr.mxu0 0.0
    %456 = vmatpush1.msra.mxu0 %v58
    %457 = vmatprep.subr.mxu0 0.0
    %458 = vmatpush1.msra.mxu0 %v59
    %459 = vmatprep.subr.mxu0 0.0
    %460 = vmatpush1.msra.mxu0 0.0
    %461 = vmatprep.subr.mxu0 0.0
    %462 = vmatpush1.msra.mxu0 0.0
    %463 = vmatprep.subr.mxu0 0.0
    %464 = vmatpush1.msra.mxu0 0.0
    %465 = vmatprep.subr.mxu0 0.0
    %466 = vmatpush1.msra.mxu0 0.0
    %467 = vmatprep.subr.mxu0 0.0
    %468 = vmatpush1.msra.mxu0 0.0
    %469 = vmatprep.subr.mxu0 0.0
    %470 = vmatpush1.msra.mxu0 0.0
    %471 = vmatprep.subr.mxu0 0.0
    %472 = vmatpush1.msra.mxu0 0.0
    %473 = vmatprep.subr.mxu0 0.0
    %474 = vmatpush1.msra.mxu0 0.0
    %475 = vmatprep.subr.mxu0 0.0
    %476 = vmatpush1.msra.mxu0 0.0
    %477 = vmatprep.subr.mxu0 0.0
    %478 = vmatpush1.msra.mxu0 0.0
    %479 = vmatprep.subr.mxu0 0.0
    %480 = vmatpush1.msra.mxu0 0.0
    %481 = vmatprep.subr.mxu0 0.0
    %482 = vmatpush1.msra.mxu0 0.0
    %483 = vmatprep.subr.mxu0 0.0
    %484 = vmatpush1.msra.mxu0 0.0
    %485 = vmatprep.subr.mxu0 0.0
    %486 = vmatpush1.msra.mxu0 0.0
    %487 = vmatprep.subr.mxu0 0.0
    %488 = vmatpush1.msra.mxu0 0.0
    %489 = vmatprep.subr.mxu0 0.0
    %490 = vmatpush1.msra.mxu0 0.0
    %491 = vmatprep.subr.mxu0 0.0
    %492 = vmatpush1.msra.mxu0 0.0
    %493 = vmatprep.subr.mxu0 0.0
    %494 = vmatpush1.msra.mxu0 0.0
    %495 = vmatprep.subr.mxu0 0.0
    %496 = vmatpush1.msra.mxu0 0.0
    %497 = vmatprep.subr.mxu0 0.0
    %498 = vmatpush1.msra.mxu0 0.0
    %499 = vmatprep.subr.mxu0 0.0
    %500 = vmatpush1.msra.mxu0 0.0
    %501 = vmatprep.subr.mxu0 0.0
    %502 = vmatpush1.msra.mxu0 0.0
    %503 = vmatprep.subr.mxu0 0.0
    %504 = vmatpush1.msra.mxu0 0.0
    %505 = vmatprep.subr.mxu0 0.0
    %506 = vmatpush1.msra.mxu0 0.0
    %507 = vmatprep.subr.mxu0 0.0
    %508 = vmatpush1.msra.mxu0 0.0
    %509 = vmatprep.subr.mxu0 0.0
    %510 = vmatpush1.msra.mxu0 0.0
    %511 = vmatprep.subr.mxu0 0.0
    %512 = vmatpush1.msra.mxu0 0.0
    %513 = vmatprep.subr.mxu0 0.0
    %514 = vmatpush1.msra.mxu0 0.0
    %515 = vmatprep.subr.mxu0 0.0
    %516 = vmatpush1.msra.mxu0 0.0
    %517 = vmatprep.subr.mxu0 0.0
    %518 = vmatpush1.msra.mxu0 0.0
    %519 = vmatprep.mubr.f32.mxu0 0.0
    %520 = vmatmul.mubr.f32.gmra.mrb[0].mxu0 %v401
    %v521 = vpop.f32.mrb[0].mxu0
    %v522 = vadd.f32 %v268, %v521
    %v523 = vpop.f32.mrb[0].mxu0
    %524 = vmatprep.mubr.f32.mxu0 0.0
    %525 = vmatmul.mubr.f32.gmra.mrb[0].mxu0 %v403
    %v526 = vpop.f32.mrb[0].mxu0
    %v527 = vadd.f32 %v273, %v526
    %v528 = vpop.f32.mrb[0].mxu0
    %529 = vmatprep.mubr.f32.mxu0 0.0
    %530 = vmatmul.mubr.f32.gmra.mrb[0].mxu0 %v405
    %v531 = vpop.f32.mrb[0].mxu0
    %v532 = vadd.f32 %v278, %v531
    %v533 = vpop.f32.mrb[0].mxu0
    %534 = vmatprep.mubr.f32.mxu0 0.0
    %535 = vmatmul.mubr.f32.gmra.mrb[0].mxu0 %v407
    %v536 = vpop.f32.mrb[0].mxu0
    %v537 = vadd.f32 %v283, %v536
    %v538 = vpop.f32.mrb[0].mxu0
    %539 = vmatprep.mubr.f32.mxu0 0.0
    %540 = vmatmul.mubr.f32.gmra.mrb[0].mxu0 %v409
    %v541 = vpop.f32.mrb[0].mxu0
    %v542 = vadd.f32 %v288, %v541
    %v543 = vpop.f32.mrb[0].mxu0
    %544 = vmatprep.mubr.f32.mxu0 0.0
    %545 = vmatmul.mubr.f32.gmra.mrb[0].mxu0 %v411
    %v546 = vpop.f32.mrb[0].mxu0
    %v547 = vadd.f32 %v293, %v546
    %v548 = vpop.f32.mrb[0].mxu0
    %549 = vmatprep.mubr.f32.mxu0 0.0
    %550 = vmatmul.mubr.f32.gmra.mrb[0].mxu0 %v413
    %v551 = vpop.f32.mrb[0].mxu0
    %v552 = vadd.f32 %v298, %v551
    %v553 = vpop.f32.mrb[0].mxu0
    %554 = vmatprep.mubr.f32.mxu0 0.0
    %555 = vmatmul.mubr.f32.gmra.mrb[0].mxu0 %v415
    %v556 = vpop.f32.mrb[0].mxu0
    %v557 = vadd.f32 %v303, %v556
    %v558 = vpop.f32.mrb[0].mxu0
    %559 = vmatprep.mubr.f32.mxu0 0.0
    %560 = vmatmul.mubr.f32.gmra.mrb[0].mxu0 %v417
    %v561 = vpop.f32.mrb[0].mxu0
    %v562 = vadd.f32 %v308, %v561
    %v563 = vpop.f32.mrb[0].mxu0
    %564 = vmatprep.mubr.f32.mxu0 0.0
    %565 = vmatmul.mubr.f32.gmra.mrb[0].mxu0 %v419
    %v566 = vpop.f32.mrb[0].mxu0
    %v567 = vadd.f32 %v313, %v566
    %v568 = vpop.f32.mrb[0].mxu0
    %569 = vmatprep.mubr.f32.mxu0 0.0
    %570 = vmatmul.mubr.f32.gmra.mrb[0].mxu0 %v421
    %v571 = vpop.f32.mrb[0].mxu0
    %v572 = vadd.f32 %v318, %v571
    %v573 = vpop.f32.mrb[0].mxu0
    %574 = vmatprep.mubr.f32.mxu0 0.0
    %575 = vmatmul.mubr.f32.gmra.mrb[0].mxu0 %v423
    %v576 = vpop.f32.mrb[0].mxu0
    %v577 = vadd.f32 %v323, %v576
    %v578 = vpop.f32.mrb[0].mxu0
    %579 = vmatprep.mubr.f32.mxu0 0.0
    %580 = vmatmul.mubr.f32.gmra.mrb[0].mxu0 %v425
    %v581 = vpop.f32.mrb[0].mxu0
    %v582 = vadd.f32 %v328, %v581
    %v583 = vpop.f32.mrb[0].mxu0
    %584 = vmatprep.mubr.f32.mxu0 0.0
    %585 = vmatmul.mubr.f32.gmra.mrb[0].mxu0 %v427
    %v586 = vpop.f32.mrb[0].mxu0
    %v587 = vadd.f32 %v333, %v586
    %v588 = vpop.f32.mrb[0].mxu0
    %589 = vmatprep.mubr.f32.mxu0 0.0
    %590 = vmatmul.mubr.f32.gmra.mrb[0].mxu0 %v429
    %v591 = vpop.f32.mrb[0].mxu0
    %v592 = vadd.f32 %v338, %v591
    %v593 = vpop.f32.mrb[0].mxu0
    %594 = vmatprep.mubr.f32.mxu0 0.0
    %595 = vmatmul.mubr.f32.gmra.mrb[0].mxu0 %v431
    %v596 = vpop.f32.mrb[0].mxu0
    %v597 = vadd.f32 %v343, %v596
    %v598 = vpop.f32.mrb[0].mxu0
    %599 = vmatprep.mubr.f32.mxu0 0.0
    %600 = vmatmul.mubr.f32.gmra.mrb[0].mxu0 %v433
    %v601 = vpop.f32.mrb[0].mxu0
    %v602 = vadd.f32 %v348, %v601
    %v603 = vpop.f32.mrb[0].mxu0
    %604 = vmatprep.mubr.f32.mxu0 0.0
    %605 = vmatmul.mubr.f32.gmra.mrb[0].mxu0 %v435
    %v606 = vpop.f32.mrb[0].mxu0
    %v607 = vadd.f32 %v353, %v606
    %v608 = vpop.f32.mrb[0].mxu0
    %609 = vmatprep.mubr.f32.mxu0 0.0
    %610 = vmatmul.mubr.f32.gmra.mrb[0].mxu0 %v437
    %v611 = vpop.f32.mrb[0].mxu0
    %v612 = vadd.f32 %v358, %v611
    %v613 = vpop.f32.mrb[0].mxu0
    %614 = vmatprep.mubr.f32.mxu0 0.0
    %615 = vmatmul.mubr.f32.gmra.mrb[0].mxu0 %v439
    %v616 = vpop.f32.mrb[0].mxu0
    %v617 = vadd.f32 %v363, %v616
    %v618 = vpop.f32.mrb[0].mxu0
    %619 = vmatprep.mubr.f32.mxu0 0.0
    %620 = vmatmul.mubr.f32.gmra.mrb[0].mxu0 %v441
    %v621 = vpop.f32.mrb[0].mxu0
    %v622 = vadd.f32 %v368, %v621
    %v623 = vpop.f32.mrb[0].mxu0
    %624 = vmatprep.mubr.f32.mxu0 0.0
    %625 = vmatmul.mubr.f32.gmra.mrb[0].mxu0 %v443
    %v626 = vpop.f32.mrb[0].mxu0
    %v627 = vadd.f32 %v373, %v626
    %v628 = vpop.f32.mrb[0].mxu0
    %629 = vmatprep.mubr.f32.mxu0 0.0
    %630 = vmatmul.mubr.f32.gmra.mrb[0].mxu0 %v445
    %v631 = vpop.f32.mrb[0].mxu0
    %v632 = vadd.f32 %v378, %v631
    %v633 = vpop.f32.mrb[0].mxu0
    %634 = vmatprep.mubr.f32.mxu0 0.0
    %635 = vmatmul.mubr.f32.gmra.mrb[0].mxu0 %v447
    %v636 = vpop.f32.mrb[0].mxu0
    %v637 = vadd.f32 %v383, %v636
    %v638 = vpop.f32.mrb[0].mxu0
    %639 = vmatprep.mubr.f32.mxu0 0.0
    %640 = vmatmul.mubr.f32.gmra.mrb[0].mxu0 %v449
    %v641 = vpop.f32.mrb[0].mxu0
    %v642 = vadd.f32 %v388, %v641
    %v643 = vpop.f32.mrb[0].mxu0
    %644 = vmatprep.mubr.f32.mxu0 0.0
    %645 = vmatmul.mubr.f32.gmra.mrb[0].mxu0 %v451
    %v646 = vpop.f32.mrb[0].mxu0
    %v647 = vadd.f32 %v393, %v646
    %v648 = vpop.f32.mrb[0].mxu0
    %649 = vmatprep.mubr.f32.mxu0 0.0
    %650 = vmatmul.mubr.f32.gmra.mrb[0].mxu0 %v453
    %v651 = vpop.f32.mrb[0].mxu0
    %v652 = vadd.f32 %v398, %v651
    %v653 = vpop.f32.mrb[0].mxu0
    %654 = vdwg.mxu0
    %v655 = vld [vmem:[%s1 + $0x20] sm:$0xff]
    %v656 = vld [vmem:[%s1 + $0x28] sm:$0xff]
    %vm657 = vcmask 1045504
    %v658 = vrot.slane %v28, 2
    %v659 = vrot.slane %v29, 2
    %v660 = vsel %vm657, %v658, %v659
    %v661 = vrot.slane %v30, 2
    %v662 = vsel %vm657, %v659, %v661
    %v663 = vrot.slane %v31, 2
    %v664 = vsel %vm657, %v661, %v663
    %v665 = vrot.slane %v32, 2
    %v666 = vsel %vm657, %v663, %v665
    %v667 = vrot.slane %v33, 2
    %v668 = vsel %vm657, %v665, %v667
    %v669 = vrot.slane %v34, 2
    %v670 = vsel %vm657, %v667, %v669
    %v671 = vrot.slane %v35, 2
    %v672 = vsel %vm657, %v669, %v671
    %v673 = vrot.slane %v36, 2
    %v674 = vsel %vm657, %v671, %v673
    %v675 = vrot.slane %v37, 2
    %v676 = vsel %vm657, %v673, %v675
    %v677 = vrot.slane %v38, 2
    %v678 = vsel %vm657, %v675, %v677
    %v679 = vrot.slane %v39, 2
    %v680 = vsel %vm657, %v677, %v679
    %v681 = vrot.slane %v40, 2
    %v682 = vsel %vm657, %v679, %v681
    %v683 = vrot.slane %v41, 2
    %v684 = vsel %vm657, %v681, %v683
    %v685 = vrot.slane %v42, 2
    %v686 = vsel %vm657, %v683, %v685
    %v687 = vrot.slane %v43, 2
    %v688 = vsel %vm657, %v685, %v687
    %v689 = vrot.slane %v44, 2
    %v690 = vsel %vm657, %v687, %v689
    %v691 = vrot.slane %v45, 2
    %v692 = vsel %vm657, %v689, %v691
    %v693 = vrot.slane %v46, 2
    %v694 = vsel %vm657, %v691, %v693
    %v695 = vrot.slane %v47, 2
    %v696 = vsel %vm657, %v693, %v695
    %v697 = vrot.slane %v48, 2
    %v698 = vsel %vm657, %v695, %v697
    %v699 = vrot.slane %v49, 2
    %v700 = vsel %vm657, %v697, %v699
    %v701 = vrot.slane %v50, 2
    %v702 = vsel %vm657, %v699, %v701
    %v703 = vrot.slane %v51, 2
    %v704 = vsel %vm657, %v701, %v703
    %v705 = vrot.slane %v52, 2
    %v706 = vsel %vm657, %v703, %v705
    %v707 = vrot.slane %v53, 2
    %v708 = vsel %vm657, %v705, %v707
    %v709 = vrot.slane %v54, 2
    %v710 = vsel %vm657, %v707, %v709
    %v711 = vrot.slane %v55, 2
    %v712 = vsel %vm657, %v709, %v711
    %v713 = vsel %vm146, %v660, 0
    %v715 = vsel %vm146, %v662, 0
    %v717 = vsel %vm146, %v664, 0
    %v719 = vsel %vm146, %v666, 0
    %v721 = vsel %vm146, %v668, 0
    %v723 = vsel %vm146, %v670, 0
    %v725 = vsel %vm146, %v672, 0
    %v727 = vsel %vm146, %v674, 0
    %v729 = vsel %vm146, %v676, 0
    %v731 = vsel %vm146, %v678, 0
    %v733 = vsel %vm146, %v680, 0
    %v735 = vsel %vm146, %v682, 0
    %v737 = vsel %vm146, %v684, 0
    %v739 = vsel %vm146, %v686, 0
    %v741 = vsel %vm146, %v688, 0
    %v743 = vsel %vm146, %v690, 0
    %v745 = vsel %vm146, %v692, 0
    %v747 = vsel %vm146, %v694, 0
    %v749 = vsel %vm146, %v696, 0
    %v751 = vsel %vm146, %v698, 0
    %v753 = vsel %vm146, %v700, 0
    %v755 = vsel %vm146, %v702, 0
    %v757 = vsel %vm146, %v704, 0
    %v759 = vsel %vm146, %v706, 0
    %v761 = vsel %vm146, %v708, 0
    %v763 = vsel %vm146, %v710, 0
    %v765 = vsel %vm146, %v712, 0
    %767 = vmatprep.subr.mxu0 0.0
    %768 = vmatpush1.msra.mxu0 %v655
    %769 = vmatprep.subr.mxu0 0.0
    %770 = vmatpush1.msra.mxu0 %v656
    %771 = vmatprep.subr.mxu0 0.0
    %772 = vmatpush1.msra.mxu0 0.0
    %773 = vmatprep.subr.mxu0 0.0
    %774 = vmatpush1.msra.mxu0 0.0
    %775 = vmatprep.subr.mxu0 0.0
    %776 = vmatpush1.msra.mxu0 0.0
    %777 = vmatprep.subr.mxu0 0.0
    %778 = vmatpush1.msra.mxu0 0.0
    %779 = vmatprep.subr.mxu0 0.0
    %780 = vmatpush1.msra.mxu0 0.0
    %781 = vmatprep.subr.mxu0 0.0
    %782 = vmatpush1.msra.mxu0 0.0
    %783 = vmatprep.subr.mxu0 0.0
    %784 = vmatpush1.msra.mxu0 0.0
    %785 = vmatprep.subr.mxu0 0.0
    %786 = vmatpush1.msra.mxu0 0.0
    %787 = vmatprep.subr.mxu0 0.0
    %788 = vmatpush1.msra.mxu0 0.0
    %789 = vmatprep.subr.mxu0 0.0
    %790 = vmatpush1.msra.mxu0 0.0
    %791 = vmatprep.subr.mxu0 0.0
    %792 = vmatpush1.msra.mxu0 0.0
    %793 = vmatprep.subr.mxu0 0.0
    %794 = vmatpush1.msra.mxu0 0.0
    %795 = vmatprep.subr.mxu0 0.0
    %796 = vmatpush1.msra.mxu0 0.0
    %797 = vmatprep.subr.mxu0 0.0
    %798 = vmatpush1.msra.mxu0 0.0
    %799 = vmatprep.subr.mxu0 0.0
    %800 = vmatpush1.msra.mxu0 0.0
    %801 = vmatprep.subr.mxu0 0.0
    %802 = vmatpush1.msra.mxu0 0.0
    %803 = vmatprep.subr.mxu0 0.0
    %804 = vmatpush1.msra.mxu0 0.0
    %805 = vmatprep.subr.mxu0 0.0
    %806 = vmatpush1.msra.mxu0 0.0
    %807 = vmatprep.subr.mxu0 0.0
    %808 = vmatpush1.msra.mxu0 0.0
    %809 = vmatprep.subr.mxu0 0.0
    %810 = vmatpush1.msra.mxu0 0.0
    %811 = vmatprep.subr.mxu0 0.0
    %812 = vmatpush1.msra.mxu0 0.0
    %813 = vmatprep.subr.mxu0 0.0
    %814 = vmatpush1.msra.mxu0 0.0
    %815 = vmatprep.subr.mxu0 0.0
    %816 = vmatpush1.msra.mxu0 0.0
    %817 = vmatprep.subr.mxu0 0.0
    %818 = vmatpush1.msra.mxu0 0.0
    %819 = vmatprep.subr.mxu0 0.0
    %820 = vmatpush1.msra.mxu0 0.0
    %821 = vmatprep.subr.mxu0 0.0
    %822 = vmatpush1.msra.mxu0 0.0
    %823 = vmatprep.subr.mxu0 0.0
    %824 = vmatpush1.msra.mxu0 0.0
    %825 = vmatprep.subr.mxu0 0.0
    %826 = vmatpush1.msra.mxu0 0.0
    %827 = vmatprep.subr.mxu0 0.0
    %828 = vmatpush1.msra.mxu0 0.0
    %829 = vmatprep.subr.mxu0 0.0
    %830 = vmatpush1.msra.mxu0 0.0
    %831 = vmatprep.mubr.f32.mxu0 0.0
    %832 = vmatmul.mubr.f32.gmra.mrb[0].mxu0 %v713
    %v833 = vpop.f32.mrb[0].mxu0
    %v834 = vadd.f32 0.0, %v833
    %v835 = vpop.f32.mrb[0].mxu0
    %836 = vmatprep.mubr.f32.mxu0 0.0
    %837 = vmatmul.mubr.f32.gmra.mrb[0].mxu0 %v715
    %v838 = vpop.f32.mrb[0].mxu0
    %v839 = vadd.f32 0.0, %v838
    %v840 = vpop.f32.mrb[0].mxu0
    %841 = vmatprep.mubr.f32.mxu0 0.0
    %842 = vmatmul.mubr.f32.gmra.mrb[0].mxu0 %v717
    %v843 = vpop.f32.mrb[0].mxu0
    %v844 = vadd.f32 0.0, %v843
    %v845 = vpop.f32.mrb[0].mxu0
    %846 = vmatprep.mubr.f32.mxu0 0.0
    %847 = vmatmul.mubr.f32.gmra.mrb[0].mxu0 %v719
    %v848 = vpop.f32.mrb[0].mxu0
    %v849 = vadd.f32 0.0, %v848
    %v850 = vpop.f32.mrb[0].mxu0
    %851 = vmatprep.mubr.f32.mxu0 0.0
    %852 = vmatmul.mubr.f32.gmra.mrb[0].mxu0 %v721
    %v853 = vpop.f32.mrb[0].mxu0
    %v854 = vadd.f32 0.0, %v853
    %v855 = vpop.f32.mrb[0].mxu0
    %856 = vmatprep.mubr.f32.mxu0 0.0
    %857 = vmatmul.mubr.f32.gmra.mrb[0].mxu0 %v723
    %v858 = vpop.f32.mrb[0].mxu0
    %v859 = vadd.f32 0.0, %v858
    %v860 = vpop.f32.mrb[0].mxu0
    %861 = vmatprep.mubr.f32.mxu0 0.0
    %862 = vmatmul.mubr.f32.gmra.mrb[0].mxu0 %v725
    %v863 = vpop.f32.mrb[0].mxu0
    %v864 = vadd.f32 0.0, %v863
    %v865 = vpop.f32.mrb[0].mxu0
    %866 = vmatprep.mubr.f32.mxu0 0.0
    %867 = vmatmul.mubr.f32.gmra.mrb[0].mxu0 %v727
    %v868 = vpop.f32.mrb[0].mxu0
    %v869 = vadd.f32 0.0, %v868
    %v870 = vpop.f32.mrb[0].mxu0
    %871 = vmatprep.mubr.f32.mxu0 0.0
    %872 = vmatmul.mubr.f32.gmra.mrb[0].mxu0 %v729
    %v873 = vpop.f32.mrb[0].mxu0
    %v874 = vadd.f32 0.0, %v873
    %v875 = vpop.f32.mrb[0].mxu0
    %876 = vmatprep.mubr.f32.mxu0 0.0
    %877 = vmatmul.mubr.f32.gmra.mrb[0].mxu0 %v731
    %v878 = vpop.f32.mrb[0].mxu0
    %v879 = vadd.f32 0.0, %v878
    %v880 = vpop.f32.mrb[0].mxu0
    %881 = vmatprep.mubr.f32.mxu0 0.0
    %882 = vmatmul.mubr.f32.gmra.mrb[0].mxu0 %v733
    %v883 = vpop.f32.mrb[0].mxu0
    %v884 = vadd.f32 0.0, %v883
    %v885 = vpop.f32.mrb[0].mxu0
    %886 = vmatprep.mubr.f32.mxu0 0.0
    %887 = vmatmul.mubr.f32.gmra.mrb[0].mxu0 %v735
    %v888 = vpop.f32.mrb[0].mxu0
    %v889 = vadd.f32 0.0, %v888
    %v890 = vpop.f32.mrb[0].mxu0
    %891 = vmatprep.mubr.f32.mxu0 0.0
    %892 = vmatmul.mubr.f32.gmra.mrb[0].mxu0 %v737
    %v893 = vpop.f32.mrb[0].mxu0
    %v894 = vadd.f32 0.0, %v893
    %v895 = vpop.f32.mrb[0].mxu0
    %896 = vmatprep.mubr.f32.mxu0 0.0
    %897 = vmatmul.mubr.f32.gmra.mrb[0].mxu0 %v739
    %v898 = vpop.f32.mrb[0].mxu0
    %v899 = vadd.f32 0.0, %v898
    %v900 = vpop.f32.mrb[0].mxu0
    %901 = vmatprep.mubr.f32.mxu0 0.0
    %902 = vmatmul.mubr.f32.gmra.mrb[0].mxu0 %v741
    %v903 = vpop.f32.mrb[0].mxu0
    %v904 = vadd.f32 0.0, %v903
    %v905 = vpop.f32.mrb[0].mxu0
    %906 = vmatprep.mubr.f32.mxu0 0.0
    %907 = vmatmul.mubr.f32.gmra.mrb[0].mxu0 %v743
    %v908 = vpop.f32.mrb[0].mxu0
    %v909 = vadd.f32 0.0, %v908
    %v910 = vpop.f32.mrb[0].mxu0
    %911 = vmatprep.mubr.f32.mxu0 0.0
    %912 = vmatmul.mubr.f32.gmra.mrb[0].mxu0 %v745
    %v913 = vpop.f32.mrb[0].mxu0
    %v914 = vadd.f32 0.0, %v913
    %v915 = vpop.f32.mrb[0].mxu0
    %916 = vmatprep.mubr.f32.mxu0 0.0
    %917 = vmatmul.mubr.f32.gmra.mrb[0].mxu0 %v747
    %v918 = vpop.f32.mrb[0].mxu0
    %v919 = vadd.f32 0.0, %v918
    %v920 = vpop.f32.mrb[0].mxu0
    %921 = vmatprep.mubr.f32.mxu0 0.0
    %922 = vmatmul.mubr.f32.gmra.mrb[0].mxu0 %v749
    %v923 = vpop.f32.mrb[0].mxu0
    %v924 = vadd.f32 0.0, %v923
    %v925 = vpop.f32.mrb[0].mxu0
    %926 = vmatprep.mubr.f32.mxu0 0.0
    %927 = vmatmul.mubr.f32.gmra.mrb[0].mxu0 %v751
    %v928 = vpop.f32.mrb[0].mxu0
    %v929 = vadd.f32 0.0, %v928
    %v930 = vpop.f32.mrb[0].mxu0
    %931 = vmatprep.mubr.f32.mxu0 0.0
    %932 = vmatmul.mubr.f32.gmra.mrb[0].mxu0 %v753
    %v933 = vpop.f32.mrb[0].mxu0
    %v934 = vadd.f32 0.0, %v933
    %v935 = vpop.f32.mrb[0].mxu0
    %936 = vmatprep.mubr.f32.mxu0 0.0
    %937 = vmatmul.mubr.f32.gmra.mrb[0].mxu0 %v755
    %v938 = vpop.f32.mrb[0].mxu0
    %v939 = vadd.f32 0.0, %v938
    %v940 = vpop.f32.mrb[0].mxu0
    %941 = vmatprep.mubr.f32.mxu0 0.0
    %942 = vmatmul.mubr.f32.gmra.mrb[0].mxu0 %v757
    %v943 = vpop.f32.mrb[0].mxu0
    %v944 = vadd.f32 0.0, %v943
    %v945 = vpop.f32.mrb[0].mxu0
    %946 = vmatprep.mubr.f32.mxu0 0.0
    %947 = vmatmul.mubr.f32.gmra.mrb[0].mxu0 %v759
    %v948 = vpop.f32.mrb[0].mxu0
    %v949 = vadd.f32 0.0, %v948
    %v950 = vpop.f32.mrb[0].mxu0
    %951 = vmatprep.mubr.f32.mxu0 0.0
    %952 = vmatmul.mubr.f32.gmra.mrb[0].mxu0 %v761
    %v953 = vpop.f32.mrb[0].mxu0
    %v954 = vadd.f32 0.0, %v953
    %v955 = vpop.f32.mrb[0].mxu0
    %956 = vmatprep.mubr.f32.mxu0 0.0
    %957 = vmatmul.mubr.f32.gmra.mrb[0].mxu0 %v763
    %v958 = vpop.f32.mrb[0].mxu0
    %v959 = vadd.f32 0.0, %v958
    %v960 = vpop.f32.mrb[0].mxu0
    %961 = vmatprep.mubr.f32.mxu0 0.0
    %962 = vmatmul.mubr.f32.gmra.mrb[0].mxu0 %v765
    %v963 = vpop.f32.mrb[0].mxu0
    %v964 = vadd.f32 0.0, %v963
    %v965 = vpop.f32.mrb[0].mxu0
    %966 = vdwg.mxu0
    %v967 = vadd.f32 %v522, %v834
    %v968 = vadd.f32 %v527, %v839
    %v969 = vadd.f32 %v532, %v844
    %v970 = vadd.f32 %v537, %v849
    %v971 = vadd.f32 %v542, %v854
    %v972 = vadd.f32 %v547, %v859
    %v973 = vadd.f32 %v552, %v864
    %v974 = vadd.f32 %v557, %v869
    %v975 = vadd.f32 %v562, %v874
    %v976 = vadd.f32 %v567, %v879
    %v977 = vadd.f32 %v572, %v884
    %v978 = vadd.f32 %v577, %v889
    %v979 = vadd.f32 %v582, %v894
    %v980 = vadd.f32 %v587, %v899
    %v981 = vadd.f32 %v592, %v904
    %v982 = vadd.f32 %v597, %v909
    %v983 = vadd.f32 %v602, %v914
    %v984 = vadd.f32 %v607, %v919
    %v985 = vadd.f32 %v612, %v924
    %v986 = vadd.f32 %v617, %v929
    %v987 = vadd.f32 %v622, %v934
    %v988 = vadd.f32 %v627, %v939
    %v989 = vadd.f32 %v632, %v944
    %v990 = vadd.f32 %v637, %v949
    %v991 = vadd.f32 %v642, %v954
    %v992 = vadd.f32 %v647, %v959
    %v993 = vadd.f32 %v652, %v964
    %v994 = vld [vmem:[%s1 + $0x30] sm:$0xff]
    %v995 = vld [vmem:[%s1 + $0x38] sm:$0xff]
    %v997 = vrot.slane %v56, 1
    %v998 = vsel %vm90, %v144, %v997
    %v999 = vsel %vm146, %v998, 0
    %1001 = vmatprep.subr.mxu0 0.0
    %1002 = vmatpush1.msra.mxu0 %v994
    %1003 = vmatprep.subr.mxu0 0.0
    %1004 = vmatpush1.msra.mxu0 %v995
    %1005 = vmatprep.subr.mxu0 0.0
    %1006 = vmatpush1.msra.mxu0 0.0
    %1007 = vmatprep.subr.mxu0 0.0
    %1008 = vmatpush1.msra.mxu0 0.0
    %1009 = vmatprep.subr.mxu0 0.0
    %1010 = vmatpush1.msra.mxu0 0.0
    %1011 = vmatprep.subr.mxu0 0.0
    %1012 = vmatpush1.msra.mxu0 0.0
    %1013 = vmatprep.subr.mxu0 0.0
    %1014 = vmatpush1.msra.mxu0 0.0
    %1015 = vmatprep.subr.mxu0 0.0
    %1016 = vmatpush1.msra.mxu0 0.0
    %1017 = vmatprep.subr.mxu0 0.0
    %1018 = vmatpush1.msra.mxu0 0.0
    %1019 = vmatprep.subr.mxu0 0.0
    %1020 = vmatpush1.msra.mxu0 0.0
    %1021 = vmatprep.subr.mxu0 0.0
    %1022 = vmatpush1.msra.mxu0 0.0
    %1023 = vmatprep.subr.mxu0 0.0
    %1024 = vmatpush1.msra.mxu0 0.0
    %1025 = vmatprep.subr.mxu0 0.0
    %1026 = vmatpush1.msra.mxu0 0.0
    %1027 = vmatprep.subr.mxu0 0.0
    %1028 = vmatpush1.msra.mxu0 0.0
    %1029 = vmatprep.subr.mxu0 0.0
    %1030 = vmatpush1.msra.mxu0 0.0
    %1031 = vmatprep.subr.mxu0 0.0
    %1032 = vmatpush1.msra.mxu0 0.0
    %1033 = vmatprep.subr.mxu0 0.0
    %1034 = vmatpush1.msra.mxu0 0.0
    %1035 = vmatprep.subr.mxu0 0.0
    %1036 = vmatpush1.msra.mxu0 0.0
    %1037 = vmatprep.subr.mxu0 0.0
    %1038 = vmatpush1.msra.mxu0 0.0
    %1039 = vmatprep.subr.mxu0 0.0
    %1040 = vmatpush1.msra.mxu0 0.0
    %1041 = vmatprep.subr.mxu0 0.0
    %1042 = vmatpush1.msra.mxu0 0.0
    %1043 = vmatprep.subr.mxu0 0.0
    %1044 = vmatpush1.msra.mxu0 0.0
    %1045 = vmatprep.subr.mxu0 0.0
    %1046 = vmatpush1.msra.mxu0 0.0
    %1047 = vmatprep.subr.mxu0 0.0
    %1048 = vmatpush1.msra.mxu0 0.0
    %1049 = vmatprep.subr.mxu0 0.0
    %1050 = vmatpush1.msra.mxu0 0.0
    %1051 = vmatprep.subr.mxu0 0.0
    %1052 = vmatpush1.msra.mxu0 0.0
    %1053 = vmatprep.subr.mxu0 0.0
    %1054 = vmatpush1.msra.mxu0 0.0
    %1055 = vmatprep.subr.mxu0 0.0
    %1056 = vmatpush1.msra.mxu0 0.0
    %1057 = vmatprep.subr.mxu0 0.0
    %1058 = vmatpush1.msra.mxu0 0.0
    %1059 = vmatprep.subr.mxu0 0.0
    %1060 = vmatpush1.msra.mxu0 0.0
    %1061 = vmatprep.subr.mxu0 0.0
    %1062 = vmatpush1.msra.mxu0 0.0
    %1063 = vmatprep.subr.mxu0 0.0
    %1064 = vmatpush1.msra.mxu0 0.0
    %1065 = vmatprep.mubr.f32.mxu0 0.0
    %1066 = vmatmul.mubr.f32.gmra.mrb[0].mxu0 %v149
    %v1067 = vpop.f32.mrb[0].mxu0
    %v1068 = vadd.f32 0.0, %v1067
    %v1069 = vpop.f32.mrb[0].mxu0
    %1070 = vmatprep.mubr.f32.mxu0 0.0
    %1071 = vmatmul.mubr.f32.gmra.mrb[0].mxu0 %v151
    %v1072 = vpop.f32.mrb[0].mxu0
    %v1073 = vadd.f32 0.0, %v1072
    %v1074 = vpop.f32.mrb[0].mxu0
    %1075 = vmatprep.mubr.f32.mxu0 0.0
    %1076 = vmatmul.mubr.f32.gmra.mrb[0].mxu0 %v153
    %v1077 = vpop.f32.mrb[0].mxu0
    %v1078 = vadd.f32 0.0, %v1077
    %v1079 = vpop.f32.mrb[0].mxu0
    %1080 = vmatprep.mubr.f32.mxu0 0.0
    %1081 = vmatmul.mubr.f32.gmra.mrb[0].mxu0 %v155
    %v1082 = vpop.f32.mrb[0].mxu0
    %v1083 = vadd.f32 0.0, %v1082
    %v1084 = vpop.f32.mrb[0].mxu0
    %1085 = vmatprep.mubr.f32.mxu0 0.0
    %1086 = vmatmul.mubr.f32.gmra.mrb[0].mxu0 %v157
    %v1087 = vpop.f32.mrb[0].mxu0
    %v1088 = vadd.f32 0.0, %v1087
    %v1089 = vpop.f32.mrb[0].mxu0
    %1090 = vmatprep.mubr.f32.mxu0 0.0
    %1091 = vmatmul.mubr.f32.gmra.mrb[0].mxu0 %v159
    %v1092 = vpop.f32.mrb[0].mxu0
    %v1093 = vadd.f32 0.0, %v1092
    %v1094 = vpop.f32.mrb[0].mxu0
    %1095 = vmatprep.mubr.f32.mxu0 0.0
    %1096 = vmatmul.mubr.f32.gmra.mrb[0].mxu0 %v161
    %v1097 = vpop.f32.mrb[0].mxu0
    %v1098 = vadd.f32 0.0, %v1097
    %v1099 = vpop.f32.mrb[0].mxu0
    %1100 = vmatprep.mubr.f32.mxu0 0.0
    %1101 = vmatmul.mubr.f32.gmra.mrb[0].mxu0 %v163
    %v1102 = vpop.f32.mrb[0].mxu0
    %v1103 = vadd.f32 0.0, %v1102
    %v1104 = vpop.f32.mrb[0].mxu0
    %1105 = vmatprep.mubr.f32.mxu0 0.0
    %1106 = vmatmul.mubr.f32.gmra.mrb[0].mxu0 %v165
    %v1107 = vpop.f32.mrb[0].mxu0
    %v1108 = vadd.f32 0.0, %v1107
    %v1109 = vpop.f32.mrb[0].mxu0
    %1110 = vmatprep.mubr.f32.mxu0 0.0
    %1111 = vmatmul.mubr.f32.gmra.mrb[0].mxu0 %v167
    %v1112 = vpop.f32.mrb[0].mxu0
    %v1113 = vadd.f32 0.0, %v1112
    %v1114 = vpop.f32.mrb[0].mxu0
    %1115 = vmatprep.mubr.f32.mxu0 0.0
    %1116 = vmatmul.mubr.f32.gmra.mrb[0].mxu0 %v169
    %v1117 = vpop.f32.mrb[0].mxu0
    %v1118 = vadd.f32 0.0, %v1117
    %v1119 = vpop.f32.mrb[0].mxu0
    %1120 = vmatprep.mubr.f32.mxu0 0.0
    %1121 = vmatmul.mubr.f32.gmra.mrb[0].mxu0 %v171
    %v1122 = vpop.f32.mrb[0].mxu0
    %v1123 = vadd.f32 0.0, %v1122
    %v1124 = vpop.f32.mrb[0].mxu0
    %1125 = vmatprep.mubr.f32.mxu0 0.0
    %1126 = vmatmul.mubr.f32.gmra.mrb[0].mxu0 %v173
    %v1127 = vpop.f32.mrb[0].mxu0
    %v1128 = vadd.f32 0.0, %v1127
    %v1129 = vpop.f32.mrb[0].mxu0
    %1130 = vmatprep.mubr.f32.mxu0 0.0
    %1131 = vmatmul.mubr.f32.gmra.mrb[0].mxu0 %v175
    %v1132 = vpop.f32.mrb[0].mxu0
    %v1133 = vadd.f32 0.0, %v1132
    %v1134 = vpop.f32.mrb[0].mxu0
    %1135 = vmatprep.mubr.f32.mxu0 0.0
    %1136 = vmatmul.mubr.f32.gmra.mrb[0].mxu0 %v177
    %v1137 = vpop.f32.mrb[0].mxu0
    %v1138 = vadd.f32 0.0, %v1137
    %v1139 = vpop.f32.mrb[0].mxu0
    %1140 = vmatprep.mubr.f32.mxu0 0.0
    %1141 = vmatmul.mubr.f32.gmra.mrb[0].mxu0 %v179
    %v1142 = vpop.f32.mrb[0].mxu0
    %v1143 = vadd.f32 0.0, %v1142
    %v1144 = vpop.f32.mrb[0].mxu0
    %1145 = vmatprep.mubr.f32.mxu0 0.0
    %1146 = vmatmul.mubr.f32.gmra.mrb[0].mxu0 %v181
    %v1147 = vpop.f32.mrb[0].mxu0
    %v1148 = vadd.f32 0.0, %v1147
    %v1149 = vpop.f32.mrb[0].mxu0
    %1150 = vmatprep.mubr.f32.mxu0 0.0
    %1151 = vmatmul.mubr.f32.gmra.mrb[0].mxu0 %v183
    %v1152 = vpop.f32.mrb[0].mxu0
    %v1153 = vadd.f32 0.0, %v1152
    %v1154 = vpop.f32.mrb[0].mxu0
    %1155 = vmatprep.mubr.f32.mxu0 0.0
    %1156 = vmatmul.mubr.f32.gmra.mrb[0].mxu0 %v185
    %v1157 = vpop.f32.mrb[0].mxu0
    %v1158 = vadd.f32 0.0, %v1157
    %v1159 = vpop.f32.mrb[0].mxu0
    %1160 = vmatprep.mubr.f32.mxu0 0.0
    %1161 = vmatmul.mubr.f32.gmra.mrb[0].mxu0 %v187
    %v1162 = vpop.f32.mrb[0].mxu0
    %v1163 = vadd.f32 0.0, %v1162
    %v1164 = vpop.f32.mrb[0].mxu0
    %1165 = vmatprep.mubr.f32.mxu0 0.0
    %1166 = vmatmul.mubr.f32.gmra.mrb[0].mxu0 %v189
    %v1167 = vpop.f32.mrb[0].mxu0
    %v1168 = vadd.f32 0.0, %v1167
    %v1169 = vpop.f32.mrb[0].mxu0
    %1170 = vmatprep.mubr.f32.mxu0 0.0
    %1171 = vmatmul.mubr.f32.gmra.mrb[0].mxu0 %v191
    %v1172 = vpop.f32.mrb[0].mxu0
    %v1173 = vadd.f32 0.0, %v1172
    %v1174 = vpop.f32.mrb[0].mxu0
    %1175 = vmatprep.mubr.f32.mxu0 0.0
    %1176 = vmatmul.mubr.f32.gmra.mrb[0].mxu0 %v193
    %v1177 = vpop.f32.mrb[0].mxu0
    %v1178 = vadd.f32 0.0, %v1177
    %v1179 = vpop.f32.mrb[0].mxu0
    %1180 = vmatprep.mubr.f32.mxu0 0.0
    %1181 = vmatmul.mubr.f32.gmra.mrb[0].mxu0 %v195
    %v1182 = vpop.f32.mrb[0].mxu0
    %v1183 = vadd.f32 0.0, %v1182
    %v1184 = vpop.f32.mrb[0].mxu0
    %1185 = vmatprep.mubr.f32.mxu0 0.0
    %1186 = vmatmul.mubr.f32.gmra.mrb[0].mxu0 %v197
    %v1187 = vpop.f32.mrb[0].mxu0
    %v1188 = vadd.f32 0.0, %v1187
    %v1189 = vpop.f32.mrb[0].mxu0
    %1190 = vmatprep.mubr.f32.mxu0 0.0
    %1191 = vmatmul.mubr.f32.gmra.mrb[0].mxu0 %v199
    %v1192 = vpop.f32.mrb[0].mxu0
    %v1193 = vadd.f32 0.0, %v1192
    %v1194 = vpop.f32.mrb[0].mxu0
    %1195 = vmatprep.mubr.f32.mxu0 0.0
    %1196 = vmatmul.mubr.f32.gmra.mrb[0].mxu0 %v999
    %v1197 = vpop.f32.mrb[0].mxu0
    %v1198 = vadd.f32 0.0, %v1197
    %v1199 = vpop.f32.mrb[0].mxu0
    %1200 = vdwg.mxu0
    %v1201 = vadd.f32 %v967, %v1068
    %v1202 = vadd.f32 %v968, %v1073
    %v1203 = vadd.f32 %v969, %v1078
    %v1204 = vadd.f32 %v970, %v1083
    %v1205 = vadd.f32 %v971, %v1088
    %v1206 = vadd.f32 %v972, %v1093
    %v1207 = vadd.f32 %v973, %v1098
    %v1208 = vadd.f32 %v974, %v1103
    %v1209 = vadd.f32 %v975, %v1108
    %v1210 = vadd.f32 %v976, %v1113
    %v1211 = vadd.f32 %v977, %v1118
    %v1212 = vadd.f32 %v978, %v1123
    %v1213 = vadd.f32 %v979, %v1128
    %v1214 = vadd.f32 %v980, %v1133
    %v1215 = vadd.f32 %v981, %v1138
    %v1216 = vadd.f32 %v982, %v1143
    %v1217 = vadd.f32 %v983, %v1148
    %v1218 = vadd.f32 %v984, %v1153
    %v1219 = vadd.f32 %v985, %v1158
    %v1220 = vadd.f32 %v986, %v1163
    %v1221 = vadd.f32 %v987, %v1168
    %v1222 = vadd.f32 %v988, %v1173
    %v1223 = vadd.f32 %v989, %v1178
    %v1224 = vadd.f32 %v990, %v1183
    %v1225 = vadd.f32 %v991, %v1188
    %v1226 = vadd.f32 %v992, %v1193
    %v1227 = vadd.f32 %v993, %v1198
    %v1228 = vld [vmem:[%s1 + $0x40] sm:$0xff]
    %v1229 = vld [vmem:[%s1 + $0x48] sm:$0xff]
    %v1230 = vrot.slane %v56, 2
    %v1231 = vsel %vm657, %v711, %v1230
    %v1232 = vsel %vm146, %v1231, 0
    %1234 = vmatprep.subr.mxu0 0.0
    %1235 = vmatpush1.msra.mxu0 %v1228
    %1236 = vmatprep.subr.mxu0 0.0
    %1237 = vmatpush1.msra.mxu0 %v1229
    %1238 = vmatprep.subr.mxu0 0.0
    %1239 = vmatpush1.msra.mxu0 0.0
    %1240 = vmatprep.subr.mxu0 0.0
    %1241 = vmatpush1.msra.mxu0 0.0
    %1242 = vmatprep.subr.mxu0 0.0
    %1243 = vmatpush1.msra.mxu0 0.0
    %1244 = vmatprep.subr.mxu0 0.0
    %1245 = vmatpush1.msra.mxu0 0.0
    %1246 = vmatprep.subr.mxu0 0.0
    %1247 = vmatpush1.msra.mxu0 0.0
    %1248 = vmatprep.subr.mxu0 0.0
    %1249 = vmatpush1.msra.mxu0 0.0
    %1250 = vmatprep.subr.mxu0 0.0
    %1251 = vmatpush1.msra.mxu0 0.0
    %1252 = vmatprep.subr.mxu0 0.0
    %1253 = vmatpush1.msra.mxu0 0.0
    %1254 = vmatprep.subr.mxu0 0.0
    %1255 = vmatpush1.msra.mxu0 0.0
    %1256 = vmatprep.subr.mxu0 0.0
    %1257 = vmatpush1.msra.mxu0 0.0
    %1258 = vmatprep.subr.mxu0 0.0
    %1259 = vmatpush1.msra.mxu0 0.0
    %1260 = vmatprep.subr.mxu0 0.0
    %1261 = vmatpush1.msra.mxu0 0.0
    %1262 = vmatprep.subr.mxu0 0.0
    %1263 = vmatpush1.msra.mxu0 0.0
    %1264 = vmatprep.subr.mxu0 0.0
    %1265 = vmatpush1.msra.mxu0 0.0
    %1266 = vmatprep.subr.mxu0 0.0
    %1267 = vmatpush1.msra.mxu0 0.0
    %1268 = vmatprep.subr.mxu0 0.0
    %1269 = vmatpush1.msra.mxu0 0.0
    %1270 = vmatprep.subr.mxu0 0.0
    %1271 = vmatpush1.msra.mxu0 0.0
    %1272 = vmatprep.subr.mxu0 0.0
    %1273 = vmatpush1.msra.mxu0 0.0
    %1274 = vmatprep.subr.mxu0 0.0
    %1275 = vmatpush1.msra.mxu0 0.0
    %1276 = vmatprep.subr.mxu0 0.0
    %1277 = vmatpush1.msra.mxu0 0.0
    %1278 = vmatprep.subr.mxu0 0.0
    %1279 = vmatpush1.msra.mxu0 0.0
    %1280 = vmatprep.subr.mxu0 0.0
    %1281 = vmatpush1.msra.mxu0 0.0
    %1282 = vmatprep.subr.mxu0 0.0
    %1283 = vmatpush1.msra.mxu0 0.0
    %1284 = vmatprep.subr.mxu0 0.0
    %1285 = vmatpush1.msra.mxu0 0.0
    %1286 = vmatprep.subr.mxu0 0.0
    %1287 = vmatpush1.msra.mxu0 0.0
    %1288 = vmatprep.subr.mxu0 0.0
    %1289 = vmatpush1.msra.mxu0 0.0
    %1290 = vmatprep.subr.mxu0 0.0
    %1291 = vmatpush1.msra.mxu0 0.0
    %1292 = vmatprep.subr.mxu0 0.0
    %1293 = vmatpush1.msra.mxu0 0.0
    %1294 = vmatprep.subr.mxu0 0.0
    %1295 = vmatpush1.msra.mxu0 0.0
    %1296 = vmatprep.subr.mxu0 0.0
    %1297 = vmatpush1.msra.mxu0 0.0
    %1298 = vmatprep.mubr.f32.mxu0 0.0
    %1299 = vmatmul.mubr.f32.gmra.mrb[0].mxu0 %v715
    %v1300 = vpop.f32.mrb[0].mxu0
    %v1301 = vadd.f32 0.0, %v1300
    %v1302 = vpop.f32.mrb[0].mxu0
    %1303 = vmatprep.mubr.f32.mxu0 0.0
    %1304 = vmatmul.mubr.f32.gmra.mrb[0].mxu0 %v717
    %v1305 = vpop.f32.mrb[0].mxu0
    %v1306 = vadd.f32 0.0, %v1305
    %v1307 = vpop.f32.mrb[0].mxu0
    %1308 = vmatprep.mubr.f32.mxu0 0.0
    %1309 = vmatmul.mubr.f32.gmra.mrb[0].mxu0 %v719
    %v1310 = vpop.f32.mrb[0].mxu0
    %v1311 = vadd.f32 0.0, %v1310
    %v1312 = vpop.f32.mrb[0].mxu0
    %1313 = vmatprep.mubr.f32.mxu0 0.0
    %1314 = vmatmul.mubr.f32.gmra.mrb[0].mxu0 %v721
    %v1315 = vpop.f32.mrb[0].mxu0
    %v1316 = vadd.f32 0.0, %v1315
    %v1317 = vpop.f32.mrb[0].mxu0
    %1318 = vmatprep.mubr.f32.mxu0 0.0
    %1319 = vmatmul.mubr.f32.gmra.mrb[0].mxu0 %v723
    %v1320 = vpop.f32.mrb[0].mxu0
    %v1321 = vadd.f32 0.0, %v1320
    %v1322 = vpop.f32.mrb[0].mxu0
    %1323 = vmatprep.mubr.f32.mxu0 0.0
    %1324 = vmatmul.mubr.f32.gmra.mrb[0].mxu0 %v725
    %v1325 = vpop.f32.mrb[0].mxu0
    %v1326 = vadd.f32 0.0, %v1325
    %v1327 = vpop.f32.mrb[0].mxu0
    %1328 = vmatprep.mubr.f32.mxu0 0.0
    %1329 = vmatmul.mubr.f32.gmra.mrb[0].mxu0 %v727
    %v1330 = vpop.f32.mrb[0].mxu0
    %v1331 = vadd.f32 0.0, %v1330
    %v1332 = vpop.f32.mrb[0].mxu0
    %1333 = vmatprep.mubr.f32.mxu0 0.0
    %1334 = vmatmul.mubr.f32.gmra.mrb[0].mxu0 %v729
    %v1335 = vpop.f32.mrb[0].mxu0
    %v1336 = vadd.f32 0.0, %v1335
    %v1337 = vpop.f32.mrb[0].mxu0
    %1338 = vmatprep.mubr.f32.mxu0 0.0
    %1339 = vmatmul.mubr.f32.gmra.mrb[0].mxu0 %v731
    %v1340 = vpop.f32.mrb[0].mxu0
    %v1341 = vadd.f32 0.0, %v1340
    %v1342 = vpop.f32.mrb[0].mxu0
    %1343 = vmatprep.mubr.f32.mxu0 0.0
    %1344 = vmatmul.mubr.f32.gmra.mrb[0].mxu0 %v733
    %v1345 = vpop.f32.mrb[0].mxu0
    %v1346 = vadd.f32 0.0, %v1345
    %v1347 = vpop.f32.mrb[0].mxu0
    %1348 = vmatprep.mubr.f32.mxu0 0.0
    %1349 = vmatmul.mubr.f32.gmra.mrb[0].mxu0 %v735
    %v1350 = vpop.f32.mrb[0].mxu0
    %v1351 = vadd.f32 0.0, %v1350
    %v1352 = vpop.f32.mrb[0].mxu0
    %1353 = vmatprep.mubr.f32.mxu0 0.0
    %1354 = vmatmul.mubr.f32.gmra.mrb[0].mxu0 %v737
    %v1355 = vpop.f32.mrb[0].mxu0
    %v1356 = vadd.f32 0.0, %v1355
    %v1357 = vpop.f32.mrb[0].mxu0
    %1358 = vmatprep.mubr.f32.mxu0 0.0
    %1359 = vmatmul.mubr.f32.gmra.mrb[0].mxu0 %v739
    %v1360 = vpop.f32.mrb[0].mxu0
    %v1361 = vadd.f32 0.0, %v1360
    %v1362 = vpop.f32.mrb[0].mxu0
    %1363 = vmatprep.mubr.f32.mxu0 0.0
    %1364 = vmatmul.mubr.f32.gmra.mrb[0].mxu0 %v741
    %v1365 = vpop.f32.mrb[0].mxu0
    %v1366 = vadd.f32 0.0, %v1365
    %v1367 = vpop.f32.mrb[0].mxu0
    %1368 = vmatprep.mubr.f32.mxu0 0.0
    %1369 = vmatmul.mubr.f32.gmra.mrb[0].mxu0 %v743
    %v1370 = vpop.f32.mrb[0].mxu0
    %v1371 = vadd.f32 0.0, %v1370
    %v1372 = vpop.f32.mrb[0].mxu0
    %1373 = vmatprep.mubr.f32.mxu0 0.0
    %1374 = vmatmul.mubr.f32.gmra.mrb[0].mxu0 %v745
    %v1375 = vpop.f32.mrb[0].mxu0
    %v1376 = vadd.f32 0.0, %v1375
    %v1377 = vpop.f32.mrb[0].mxu0
    %1378 = vmatprep.mubr.f32.mxu0 0.0
    %1379 = vmatmul.mubr.f32.gmra.mrb[0].mxu0 %v747
    %v1380 = vpop.f32.mrb[0].mxu0
    %v1381 = vadd.f32 0.0, %v1380
    %v1382 = vpop.f32.mrb[0].mxu0
    %1383 = vmatprep.mubr.f32.mxu0 0.0
    %1384 = vmatmul.mubr.f32.gmra.mrb[0].mxu0 %v749
    %v1385 = vpop.f32.mrb[0].mxu0
    %v1386 = vadd.f32 0.0, %v1385
    %v1387 = vpop.f32.mrb[0].mxu0
    %1388 = vmatprep.mubr.f32.mxu0 0.0
    %1389 = vmatmul.mubr.f32.gmra.mrb[0].mxu0 %v751
    %v1390 = vpop.f32.mrb[0].mxu0
    %v1391 = vadd.f32 0.0, %v1390
    %v1392 = vpop.f32.mrb[0].mxu0
    %1393 = vmatprep.mubr.f32.mxu0 0.0
    %1394 = vmatmul.mubr.f32.gmra.mrb[0].mxu0 %v753
    %v1395 = vpop.f32.mrb[0].mxu0
    %v1396 = vadd.f32 0.0, %v1395
    %v1397 = vpop.f32.mrb[0].mxu0
    %1398 = vmatprep.mubr.f32.mxu0 0.0
    %1399 = vmatmul.mubr.f32.gmra.mrb[0].mxu0 %v755
    %v1400 = vpop.f32.mrb[0].mxu0
    %v1401 = vadd.f32 0.0, %v1400
    %v1402 = vpop.f32.mrb[0].mxu0
    %1403 = vmatprep.mubr.f32.mxu0 0.0
    %1404 = vmatmul.mubr.f32.gmra.mrb[0].mxu0 %v757
    %v1405 = vpop.f32.mrb[0].mxu0
    %v1406 = vadd.f32 0.0, %v1405
    %v1407 = vpop.f32.mrb[0].mxu0
    %1408 = vmatprep.mubr.f32.mxu0 0.0
    %1409 = vmatmul.mubr.f32.gmra.mrb[0].mxu0 %v759
    %v1410 = vpop.f32.mrb[0].mxu0
    %v1411 = vadd.f32 0.0, %v1410
    %v1412 = vpop.f32.mrb[0].mxu0
    %1413 = vmatprep.mubr.f32.mxu0 0.0
    %1414 = vmatmul.mubr.f32.gmra.mrb[0].mxu0 %v761
    %v1415 = vpop.f32.mrb[0].mxu0
    %v1416 = vadd.f32 0.0, %v1415
    %v1417 = vpop.f32.mrb[0].mxu0
    %1418 = vmatprep.mubr.f32.mxu0 0.0
    %1419 = vmatmul.mubr.f32.gmra.mrb[0].mxu0 %v763
    %v1420 = vpop.f32.mrb[0].mxu0
    %v1421 = vadd.f32 0.0, %v1420
    %v1422 = vpop.f32.mrb[0].mxu0
    %1423 = vmatprep.mubr.f32.mxu0 0.0
    %1424 = vmatmul.mubr.f32.gmra.mrb[0].mxu0 %v765
    %v1425 = vpop.f32.mrb[0].mxu0
    %v1426 = vadd.f32 0.0, %v1425
    %v1427 = vpop.f32.mrb[0].mxu0
    %1428 = vmatprep.mubr.f32.mxu0 0.0
    %1429 = vmatmul.mubr.f32.gmra.mrb[0].mxu0 %v1232
    %v1430 = vpop.f32.mrb[0].mxu0
    %v1431 = vadd.f32 0.0, %v1430
    %v1432 = vpop.f32.mrb[0].mxu0
    %1433 = vdwg.mxu0
    %v1434 = vadd.f32 %v1201, %v1301
    %v1435 = vadd.f32 %v1202, %v1306
    %v1436 = vadd.f32 %v1203, %v1311
    %v1437 = vadd.f32 %v1204, %v1316
    %v1438 = vadd.f32 %v1205, %v1321
    %v1439 = vadd.f32 %v1206, %v1326
    %v1440 = vadd.f32 %v1207, %v1331
    %v1441 = vadd.f32 %v1208, %v1336
    %v1442 = vadd.f32 %v1209, %v1341
    %v1443 = vadd.f32 %v1210, %v1346
    %v1444 = vadd.f32 %v1211, %v1351
    %v1445 = vadd.f32 %v1212, %v1356
    %v1446 = vadd.f32 %v1213, %v1361
    %v1447 = vadd.f32 %v1214, %v1366
    %v1448 = vadd.f32 %v1215, %v1371
    %v1449 = vadd.f32 %v1216, %v1376
    %v1450 = vadd.f32 %v1217, %v1381
    %v1451 = vadd.f32 %v1218, %v1386
    %v1452 = vadd.f32 %v1219, %v1391
    %v1453 = vadd.f32 %v1220, %v1396
    %v1454 = vadd.f32 %v1221, %v1401
    %v1455 = vadd.f32 %v1222, %v1406
    %v1456 = vadd.f32 %v1223, %v1411
    %v1457 = vadd.f32 %v1224, %v1416
    %v1458 = vadd.f32 %v1225, %v1421
    %v1459 = vadd.f32 %v1226, %v1426
    %v1460 = vadd.f32 %v1227, %v1431
    %v1461 = vld [vmem:[%s1 + $0x50] sm:$0xff]
    %v1462 = vld [vmem:[%s1 + $0x58] sm:$0xff]
    %vm1463 = vcmask 1044480
    %v1464 = vrot.slane %v29, 3
    %v1465 = vrot.slane %v30, 3
    %v1466 = vsel %vm1463, %v1464, %v1465
    %v1467 = vrot.slane %v31, 3
    %v1468 = vsel %vm1463, %v1465, %v1467
    %v1469 = vrot.slane %v32, 3
    %v1470 = vsel %vm1463, %v1467, %v1469
    %v1471 = vrot.slane %v33, 3
    %v1472 = vsel %vm1463, %v1469, %v1471
    %v1473 = vrot.slane %v34, 3
    %v1474 = vsel %vm1463, %v1471, %v1473
    %v1475 = vrot.slane %v35, 3
    %v1476 = vsel %vm1463, %v1473, %v1475
    %v1477 = vrot.slane %v36, 3
    %v1478 = vsel %vm1463, %v1475, %v1477
    %v1479 = vrot.slane %v37, 3
    %v1480 = vsel %vm1463, %v1477, %v1479
    %v1481 = vrot.slane %v38, 3
    %v1482 = vsel %vm1463, %v1479, %v1481
    %v1483 = vrot.slane %v39, 3
    %v1484 = vsel %vm1463, %v1481, %v1483
    %v1485 = vrot.slane %v40, 3
    %v1486 = vsel %vm1463, %v1483, %v1485
    %v1487 = vrot.slane %v41, 3
    %v1488 = vsel %vm1463, %v1485, %v1487
    %v1489 = vrot.slane %v42, 3
    %v1490 = vsel %vm1463, %v1487, %v1489
    %v1491 = vrot.slane %v43, 3
    %v1492 = vsel %vm1463, %v1489, %v1491
    %v1493 = vrot.slane %v44, 3
    %v1494 = vsel %vm1463, %v1491, %v1493
    %v1495 = vrot.slane %v45, 3
    %v1496 = vsel %vm1463, %v1493, %v1495
    %v1497 = vrot.slane %v46, 3
    %v1498 = vsel %vm1463, %v1495, %v1497
    %v1499 = vrot.slane %v47, 3
    %v1500 = vsel %vm1463, %v1497, %v1499
    %v1501 = vrot.slane %v48, 3
    %v1502 = vsel %vm1463, %v1499, %v1501
    %v1503 = vrot.slane %v49, 3
    %v1504 = vsel %vm1463, %v1501, %v1503
    %v1505 = vrot.slane %v50, 3
    %v1506 = vsel %vm1463, %v1503, %v1505
    %v1507 = vrot.slane %v51, 3
    %v1508 = vsel %vm1463, %v1505, %v1507
    %v1509 = vrot.slane %v52, 3
    %v1510 = vsel %vm1463, %v1507, %v1509
    %v1511 = vrot.slane %v53, 3
    %v1512 = vsel %vm1463, %v1509, %v1511
    %v1513 = vrot.slane %v54, 3
    %v1514 = vsel %vm1463, %v1511, %v1513
    %v1515 = vrot.slane %v55, 3
    %v1516 = vsel %vm1463, %v1513, %v1515
    %v1517 = vrot.slane %v56, 3
    %v1518 = vsel %vm1463, %v1515, %v1517
    %v1519 = vsel %vm146, %v1466, 0
    %v1521 = vsel %vm146, %v1468, 0
    %v1523 = vsel %vm146, %v1470, 0
    %v1525 = vsel %vm146, %v1472, 0
    %v1527 = vsel %vm146, %v1474, 0
    %v1529 = vsel %vm146, %v1476, 0
    %v1531 = vsel %vm146, %v1478, 0
    %v1533 = vsel %vm146, %v1480, 0
    %v1535 = vsel %vm146, %v1482, 0
    %v1537 = vsel %vm146, %v1484, 0
    %v1539 = vsel %vm146, %v1486, 0
    %v1541 = vsel %vm146, %v1488, 0
    %v1543 = vsel %vm146, %v1490, 0
    %v1545 = vsel %vm146, %v1492, 0
    %v1547 = vsel %vm146, %v1494, 0
    %v1549 = vsel %vm146, %v1496, 0
    %v1551 = vsel %vm146, %v1498, 0
    %v1553 = vsel %vm146, %v1500, 0
    %v1555 = vsel %vm146, %v1502, 0
    %v1557 = vsel %vm146, %v1504, 0
    %v1559 = vsel %vm146, %v1506, 0
    %v1561 = vsel %vm146, %v1508, 0
    %v1563 = vsel %vm146, %v1510, 0
    %v1565 = vsel %vm146, %v1512, 0
    %v1567 = vsel %vm146, %v1514, 0
    %v1569 = vsel %vm146, %v1516, 0
    %v1571 = vsel %vm146, %v1518, 0
    %1573 = vmatprep.subr.mxu0 0.0
    %1574 = vmatpush1.msra.mxu0 %v1461
    %1575 = vmatprep.subr.mxu0 0.0
    %1576 = vmatpush1.msra.mxu0 %v1462
    %1577 = vmatprep.subr.mxu0 0.0
    %1578 = vmatpush1.msra.mxu0 0.0
    %1579 = vmatprep.subr.mxu0 0.0
    %1580 = vmatpush1.msra.mxu0 0.0
    %1581 = vmatprep.subr.mxu0 0.0
    %1582 = vmatpush1.msra.mxu0 0.0
    %1583 = vmatprep.subr.mxu0 0.0
    %1584 = vmatpush1.msra.mxu0 0.0
    %1585 = vmatprep.subr.mxu0 0.0
    %1586 = vmatpush1.msra.mxu0 0.0
    %1587 = vmatprep.subr.mxu0 0.0
    %1588 = vmatpush1.msra.mxu0 0.0
    %1589 = vmatprep.subr.mxu0 0.0
    %1590 = vmatpush1.msra.mxu0 0.0
    %1591 = vmatprep.subr.mxu0 0.0
    %1592 = vmatpush1.msra.mxu0 0.0
    %1593 = vmatprep.subr.mxu0 0.0
    %1594 = vmatpush1.msra.mxu0 0.0
    %1595 = vmatprep.subr.mxu0 0.0
    %1596 = vmatpush1.msra.mxu0 0.0
    %1597 = vmatprep.subr.mxu0 0.0
    %1598 = vmatpush1.msra.mxu0 0.0
    %1599 = vmatprep.subr.mxu0 0.0
    %1600 = vmatpush1.msra.mxu0 0.0
    %1601 = vmatprep.subr.mxu0 0.0
    %1602 = vmatpush1.msra.mxu0 0.0
    %1603 = vmatprep.subr.mxu0 0.0
    %1604 = vmatpush1.msra.mxu0 0.0
    %1605 = vmatprep.subr.mxu0 0.0
    %1606 = vmatpush1.msra.mxu0 0.0
    %1607 = vmatprep.subr.mxu0 0.0
    %1608 = vmatpush1.msra.mxu0 0.0
    %1609 = vmatprep.subr.mxu0 0.0
    %1610 = vmatpush1.msra.mxu0 0.0
    %1611 = vmatprep.subr.mxu0 0.0
    %1612 = vmatpush1.msra.mxu0 0.0
    %1613 = vmatprep.subr.mxu0 0.0
    %1614 = vmatpush1.msra.mxu0 0.0
    %1615 = vmatprep.subr.mxu0 0.0
    %1616 = vmatpush1.msra.mxu0 0.0
    %1617 = vmatprep.subr.mxu0 0.0
    %1618 = vmatpush1.msra.mxu0 0.0
    %1619 = vmatprep.subr.mxu0 0.0
    %1620 = vmatpush1.msra.mxu0 0.0
    %1621 = vmatprep.subr.mxu0 0.0
    %1622 = vmatpush1.msra.mxu0 0.0
    %1623 = vmatprep.subr.mxu0 0.0
    %1624 = vmatpush1.msra.mxu0 0.0
    %1625 = vmatprep.subr.mxu0 0.0
    %1626 = vmatpush1.msra.mxu0 0.0
    %1627 = vmatprep.subr.mxu0 0.0
    %1628 = vmatpush1.msra.mxu0 0.0
    %1629 = vmatprep.subr.mxu0 0.0
    %1630 = vmatpush1.msra.mxu0 0.0
    %1631 = vmatprep.subr.mxu0 0.0
    %1632 = vmatpush1.msra.mxu0 0.0
    %1633 = vmatprep.subr.mxu0 0.0
    %1634 = vmatpush1.msra.mxu0 0.0
    %1635 = vmatprep.subr.mxu0 0.0
    %1636 = vmatpush1.msra.mxu0 0.0
    %1637 = vmatprep.mubr.f32.mxu0 0.0
    %1638 = vmatmul.mubr.f32.gmra.mrb[0].mxu0 %v1519
    %v1639 = vpop.f32.mrb[0].mxu0
    %v1640 = vadd.f32 0.0, %v1639
    %v1641 = vpop.f32.mrb[0].mxu0
    %1642 = vmatprep.mubr.f32.mxu0 0.0
    %1643 = vmatmul.mubr.f32.gmra.mrb[0].mxu0 %v1521
    %v1644 = vpop.f32.mrb[0].mxu0
    %v1645 = vadd.f32 0.0, %v1644
    %v1646 = vpop.f32.mrb[0].mxu0
    %1647 = vmatprep.mubr.f32.mxu0 0.0
    %1648 = vmatmul.mubr.f32.gmra.mrb[0].mxu0 %v1523
    %v1649 = vpop.f32.mrb[0].mxu0
    %v1650 = vadd.f32 0.0, %v1649
    %v1651 = vpop.f32.mrb[0].mxu0
    %1652 = vmatprep.mubr.f32.mxu0 0.0
    %1653 = vmatmul.mubr.f32.gmra.mrb[0].mxu0 %v1525
    %v1654 = vpop.f32.mrb[0].mxu0
    %v1655 = vadd.f32 0.0, %v1654
    %v1656 = vpop.f32.mrb[0].mxu0
    %1657 = vmatprep.mubr.f32.mxu0 0.0
    %1658 = vmatmul.mubr.f32.gmra.mrb[0].mxu0 %v1527
    %v1659 = vpop.f32.mrb[0].mxu0
    %v1660 = vadd.f32 0.0, %v1659
    %v1661 = vpop.f32.mrb[0].mxu0
    %1662 = vmatprep.mubr.f32.mxu0 0.0
    %1663 = vmatmul.mubr.f32.gmra.mrb[0].mxu0 %v1529
    %v1664 = vpop.f32.mrb[0].mxu0
    %v1665 = vadd.f32 0.0, %v1664
    %v1666 = vpop.f32.mrb[0].mxu0
    %1667 = vmatprep.mubr.f32.mxu0 0.0
    %1668 = vmatmul.mubr.f32.gmra.mrb[0].mxu0 %v1531
    %v1669 = vpop.f32.mrb[0].mxu0
    %v1670 = vadd.f32 0.0, %v1669
    %v1671 = vpop.f32.mrb[0].mxu0
    %1672 = vmatprep.mubr.f32.mxu0 0.0
    %1673 = vmatmul.mubr.f32.gmra.mrb[0].mxu0 %v1533
    %v1674 = vpop.f32.mrb[0].mxu0
    %v1675 = vadd.f32 0.0, %v1674
    %v1676 = vpop.f32.mrb[0].mxu0
    %1677 = vmatprep.mubr.f32.mxu0 0.0
    %1678 = vmatmul.mubr.f32.gmra.mrb[0].mxu0 %v1535
    %v1679 = vpop.f32.mrb[0].mxu0
    %v1680 = vadd.f32 0.0, %v1679
    %v1681 = vpop.f32.mrb[0].mxu0
    %1682 = vmatprep.mubr.f32.mxu0 0.0
    %1683 = vmatmul.mubr.f32.gmra.mrb[0].mxu0 %v1537
    %v1684 = vpop.f32.mrb[0].mxu0
    %v1685 = vadd.f32 0.0, %v1684
    %v1686 = vpop.f32.mrb[0].mxu0
    %1687 = vmatprep.mubr.f32.mxu0 0.0
    %1688 = vmatmul.mubr.f32.gmra.mrb[0].mxu0 %v1539
    %v1689 = vpop.f32.mrb[0].mxu0
    %v1690 = vadd.f32 0.0, %v1689
    %v1691 = vpop.f32.mrb[0].mxu0
    %1692 = vmatprep.mubr.f32.mxu0 0.0
    %1693 = vmatmul.mubr.f32.gmra.mrb[0].mxu0 %v1541
    %v1694 = vpop.f32.mrb[0].mxu0
    %v1695 = vadd.f32 0.0, %v1694
    %v1696 = vpop.f32.mrb[0].mxu0
    %1697 = vmatprep.mubr.f32.mxu0 0.0
    %1698 = vmatmul.mubr.f32.gmra.mrb[0].mxu0 %v1543
    %v1699 = vpop.f32.mrb[0].mxu0
    %v1700 = vadd.f32 0.0, %v1699
    %v1701 = vpop.f32.mrb[0].mxu0
    %1702 = vmatprep.mubr.f32.mxu0 0.0
    %1703 = vmatmul.mubr.f32.gmra.mrb[0].mxu0 %v1545
    %v1704 = vpop.f32.mrb[0].mxu0
    %v1705 = vadd.f32 0.0, %v1704
    %v1706 = vpop.f32.mrb[0].mxu0
    %1707 = vmatprep.mubr.f32.mxu0 0.0
    %1708 = vmatmul.mubr.f32.gmra.mrb[0].mxu0 %v1547
    %v1709 = vpop.f32.mrb[0].mxu0
    %v1710 = vadd.f32 0.0, %v1709
    %v1711 = vpop.f32.mrb[0].mxu0
    %1712 = vmatprep.mubr.f32.mxu0 0.0
    %1713 = vmatmul.mubr.f32.gmra.mrb[0].mxu0 %v1549
    %v1714 = vpop.f32.mrb[0].mxu0
    %v1715 = vadd.f32 0.0, %v1714
    %v1716 = vpop.f32.mrb[0].mxu0
    %1717 = vmatprep.mubr.f32.mxu0 0.0
    %1718 = vmatmul.mubr.f32.gmra.mrb[0].mxu0 %v1551
    %v1719 = vpop.f32.mrb[0].mxu0
    %v1720 = vadd.f32 0.0, %v1719
    %v1721 = vpop.f32.mrb[0].mxu0
    %1722 = vmatprep.mubr.f32.mxu0 0.0
    %1723 = vmatmul.mubr.f32.gmra.mrb[0].mxu0 %v1553
    %v1724 = vpop.f32.mrb[0].mxu0
    %v1725 = vadd.f32 0.0, %v1724
    %v1726 = vpop.f32.mrb[0].mxu0
    %1727 = vmatprep.mubr.f32.mxu0 0.0
    %1728 = vmatmul.mubr.f32.gmra.mrb[0].mxu0 %v1555
    %v1729 = vpop.f32.mrb[0].mxu0
    %v1730 = vadd.f32 0.0, %v1729
    %v1731 = vpop.f32.mrb[0].mxu0
    %1732 = vmatprep.mubr.f32.mxu0 0.0
    %1733 = vmatmul.mubr.f32.gmra.mrb[0].mxu0 %v1557
    %v1734 = vpop.f32.mrb[0].mxu0
    %v1735 = vadd.f32 0.0, %v1734
    %v1736 = vpop.f32.mrb[0].mxu0
    %1737 = vmatprep.mubr.f32.mxu0 0.0
    %1738 = vmatmul.mubr.f32.gmra.mrb[0].mxu0 %v1559
    %v1739 = vpop.f32.mrb[0].mxu0
    %v1740 = vadd.f32 0.0, %v1739
    %v1741 = vpop.f32.mrb[0].mxu0
    %1742 = vmatprep.mubr.f32.mxu0 0.0
    %1743 = vmatmul.mubr.f32.gmra.mrb[0].mxu0 %v1561
    %v1744 = vpop.f32.mrb[0].mxu0
    %v1745 = vadd.f32 0.0, %v1744
    %v1746 = vpop.f32.mrb[0].mxu0
    %1747 = vmatprep.mubr.f32.mxu0 0.0
    %1748 = vmatmul.mubr.f32.gmra.mrb[0].mxu0 %v1563
    %v1749 = vpop.f32.mrb[0].mxu0
    %v1750 = vadd.f32 0.0, %v1749
    %v1751 = vpop.f32.mrb[0].mxu0
    %1752 = vmatprep.mubr.f32.mxu0 0.0
    %1753 = vmatmul.mubr.f32.gmra.mrb[0].mxu0 %v1565
    %v1754 = vpop.f32.mrb[0].mxu0
    %v1755 = vadd.f32 0.0, %v1754
    %v1756 = vpop.f32.mrb[0].mxu0
    %1757 = vmatprep.mubr.f32.mxu0 0.0
    %1758 = vmatmul.mubr.f32.gmra.mrb[0].mxu0 %v1567
    %v1759 = vpop.f32.mrb[0].mxu0
    %v1760 = vadd.f32 0.0, %v1759
    %v1761 = vpop.f32.mrb[0].mxu0
    %1762 = vmatprep.mubr.f32.mxu0 0.0
    %1763 = vmatmul.mubr.f32.gmra.mrb[0].mxu0 %v1569
    %v1764 = vpop.f32.mrb[0].mxu0
    %v1765 = vadd.f32 0.0, %v1764
    %v1766 = vpop.f32.mrb[0].mxu0
    %1767 = vmatprep.mubr.f32.mxu0 0.0
    %1768 = vmatmul.mubr.f32.gmra.mrb[0].mxu0 %v1571
    %v1769 = vpop.f32.mrb[0].mxu0
    %v1770 = vadd.f32 0.0, %v1769
    %v1771 = vpop.f32.mrb[0].mxu0
    %1772 = vdwg.mxu0
    %v1773 = vadd.f32 %v1434, %v1640
    %v1774 = vadd.f32 %v1435, %v1645
    %v1775 = vadd.f32 %v1436, %v1650
    %v1776 = vadd.f32 %v1437, %v1655
    %v1777 = vadd.f32 %v1438, %v1660
    %v1778 = vadd.f32 %v1439, %v1665
    %v1779 = vadd.f32 %v1440, %v1670
    %v1780 = vadd.f32 %v1441, %v1675
    %v1781 = vadd.f32 %v1442, %v1680
    %v1782 = vadd.f32 %v1443, %v1685
    %v1783 = vadd.f32 %v1444, %v1690
    %v1784 = vadd.f32 %v1445, %v1695
    %v1785 = vadd.f32 %v1446, %v1700
    %v1786 = vadd.f32 %v1447, %v1705
    %v1787 = vadd.f32 %v1448, %v1710
    %v1788 = vadd.f32 %v1449, %v1715
    %v1789 = vadd.f32 %v1450, %v1720
    %v1790 = vadd.f32 %v1451, %v1725
    %v1791 = vadd.f32 %v1452, %v1730
    %v1792 = vadd.f32 %v1453, %v1735
    %v1793 = vadd.f32 %v1454, %v1740
    %v1794 = vadd.f32 %v1455, %v1745
    %v1795 = vadd.f32 %v1456, %v1750
    %v1796 = vadd.f32 %v1457, %v1755
    %v1797 = vadd.f32 %v1458, %v1760
    %v1798 = vadd.f32 %v1459, %v1765
    %v1799 = vadd.f32 %v1460, %v1770
    %v1800 = vld [vmem:[%s1 + $0x60] sm:$0xff]
    %v1801 = vld [vmem:[%s1 + $0x68] sm:$0xff]
    %v1803 = vrot.slane %v57, 2
    %v1804 = vsel %vm657, %v1230, %v1803
    %v1805 = vsel %vm146, %v1804, 0
    %1807 = vmatprep.subr.mxu0 0.0
    %1808 = vmatpush1.msra.mxu0 %v1800
    %1809 = vmatprep.subr.mxu0 0.0
    %1810 = vmatpush1.msra.mxu0 %v1801
    %1811 = vmatprep.subr.mxu0 0.0
    %1812 = vmatpush1.msra.mxu0 0.0
    %1813 = vmatprep.subr.mxu0 0.0
    %1814 = vmatpush1.msra.mxu0 0.0
    %1815 = vmatprep.subr.mxu0 0.0
    %1816 = vmatpush1.msra.mxu0 0.0
    %1817 = vmatprep.subr.mxu0 0.0
    %1818 = vmatpush1.msra.mxu0 0.0
    %1819 = vmatprep.subr.mxu0 0.0
    %1820 = vmatpush1.msra.mxu0 0.0
    %1821 = vmatprep.subr.mxu0 0.0
    %1822 = vmatpush1.msra.mxu0 0.0
    %1823 = vmatprep.subr.mxu0 0.0
    %1824 = vmatpush1.msra.mxu0 0.0
    %1825 = vmatprep.subr.mxu0 0.0
    %1826 = vmatpush1.msra.mxu0 0.0
    %1827 = vmatprep.subr.mxu0 0.0
    %1828 = vmatpush1.msra.mxu0 0.0
    %1829 = vmatprep.subr.mxu0 0.0
    %1830 = vmatpush1.msra.mxu0 0.0
    %1831 = vmatprep.subr.mxu0 0.0
    %1832 = vmatpush1.msra.mxu0 0.0
    %1833 = vmatprep.subr.mxu0 0.0
    %1834 = vmatpush1.msra.mxu0 0.0
    %1835 = vmatprep.subr.mxu0 0.0
    %1836 = vmatpush1.msra.mxu0 0.0
    %1837 = vmatprep.subr.mxu0 0.0
    %1838 = vmatpush1.msra.mxu0 0.0
    %1839 = vmatprep.subr.mxu0 0.0
    %1840 = vmatpush1.msra.mxu0 0.0
    %1841 = vmatprep.subr.mxu0 0.0
    %1842 = vmatpush1.msra.mxu0 0.0
    %1843 = vmatprep.subr.mxu0 0.0
    %1844 = vmatpush1.msra.mxu0 0.0
    %1845 = vmatprep.subr.mxu0 0.0
    %1846 = vmatpush1.msra.mxu0 0.0
    %1847 = vmatprep.subr.mxu0 0.0
    %1848 = vmatpush1.msra.mxu0 0.0
    %1849 = vmatprep.subr.mxu0 0.0
    %1850 = vmatpush1.msra.mxu0 0.0
    %1851 = vmatprep.subr.mxu0 0.0
    %1852 = vmatpush1.msra.mxu0 0.0
    %1853 = vmatprep.subr.mxu0 0.0
    %1854 = vmatpush1.msra.mxu0 0.0
    %1855 = vmatprep.subr.mxu0 0.0
    %1856 = vmatpush1.msra.mxu0 0.0
    %1857 = vmatprep.subr.mxu0 0.0
    %1858 = vmatpush1.msra.mxu0 0.0
    %1859 = vmatprep.subr.mxu0 0.0
    %1860 = vmatpush1.msra.mxu0 0.0
    %1861 = vmatprep.subr.mxu0 0.0
    %1862 = vmatpush1.msra.mxu0 0.0
    %1863 = vmatprep.subr.mxu0 0.0
    %1864 = vmatpush1.msra.mxu0 0.0
    %1865 = vmatprep.subr.mxu0 0.0
    %1866 = vmatpush1.msra.mxu0 0.0
    %1867 = vmatprep.subr.mxu0 0.0
    %1868 = vmatpush1.msra.mxu0 0.0
    %1869 = vmatprep.subr.mxu0 0.0
    %1870 = vmatpush1.msra.mxu0 0.0
    %1871 = vmatprep.mubr.f32.mxu0 0.0
    %1872 = vmatmul.mubr.f32.gmra.mrb[0].mxu0 %v717
    %v1873 = vpop.f32.mrb[0].mxu0
    %v1874 = vadd.f32 0.0, %v1873
    %v1875 = vpop.f32.mrb[0].mxu0
    %1876 = vmatprep.mubr.f32.mxu0 0.0
    %1877 = vmatmul.mubr.f32.gmra.mrb[0].mxu0 %v719
    %v1878 = vpop.f32.mrb[0].mxu0
    %v1879 = vadd.f32 0.0, %v1878
    %v1880 = vpop.f32.mrb[0].mxu0
    %1881 = vmatprep.mubr.f32.mxu0 0.0
    %1882 = vmatmul.mubr.f32.gmra.mrb[0].mxu0 %v721
    %v1883 = vpop.f32.mrb[0].mxu0
    %v1884 = vadd.f32 0.0, %v1883
    %v1885 = vpop.f32.mrb[0].mxu0
    %1886 = vmatprep.mubr.f32.mxu0 0.0
    %1887 = vmatmul.mubr.f32.gmra.mrb[0].mxu0 %v723
    %v1888 = vpop.f32.mrb[0].mxu0
    %v1889 = vadd.f32 0.0, %v1888
    %v1890 = vpop.f32.mrb[0].mxu0
    %1891 = vmatprep.mubr.f32.mxu0 0.0
    %1892 = vmatmul.mubr.f32.gmra.mrb[0].mxu0 %v725
    %v1893 = vpop.f32.mrb[0].mxu0
    %v1894 = vadd.f32 0.0, %v1893
    %v1895 = vpop.f32.mrb[0].mxu0
    %1896 = vmatprep.mubr.f32.mxu0 0.0
    %1897 = vmatmul.mubr.f32.gmra.mrb[0].mxu0 %v727
    %v1898 = vpop.f32.mrb[0].mxu0
    %v1899 = vadd.f32 0.0, %v1898
    %v1900 = vpop.f32.mrb[0].mxu0
    %1901 = vmatprep.mubr.f32.mxu0 0.0
    %1902 = vmatmul.mubr.f32.gmra.mrb[0].mxu0 %v729
    %v1903 = vpop.f32.mrb[0].mxu0
    %v1904 = vadd.f32 0.0, %v1903
    %v1905 = vpop.f32.mrb[0].mxu0
    %1906 = vmatprep.mubr.f32.mxu0 0.0
    %1907 = vmatmul.mubr.f32.gmra.mrb[0].mxu0 %v731
    %v1908 = vpop.f32.mrb[0].mxu0
    %v1909 = vadd.f32 0.0, %v1908
    %v1910 = vpop.f32.mrb[0].mxu0
    %1911 = vmatprep.mubr.f32.mxu0 0.0
    %1912 = vmatmul.mubr.f32.gmra.mrb[0].mxu0 %v733
    %v1913 = vpop.f32.mrb[0].mxu0
    %v1914 = vadd.f32 0.0, %v1913
    %v1915 = vpop.f32.mrb[0].mxu0
    %1916 = vmatprep.mubr.f32.mxu0 0.0
    %1917 = vmatmul.mubr.f32.gmra.mrb[0].mxu0 %v735
    %v1918 = vpop.f32.mrb[0].mxu0
    %v1919 = vadd.f32 0.0, %v1918
    %v1920 = vpop.f32.mrb[0].mxu0
    %1921 = vmatprep.mubr.f32.mxu0 0.0
    %1922 = vmatmul.mubr.f32.gmra.mrb[0].mxu0 %v737
    %v1923 = vpop.f32.mrb[0].mxu0
    %v1924 = vadd.f32 0.0, %v1923
    %v1925 = vpop.f32.mrb[0].mxu0
    %1926 = vmatprep.mubr.f32.mxu0 0.0
    %1927 = vmatmul.mubr.f32.gmra.mrb[0].mxu0 %v739
    %v1928 = vpop.f32.mrb[0].mxu0
    %v1929 = vadd.f32 0.0, %v1928
    %v1930 = vpop.f32.mrb[0].mxu0
    %1931 = vmatprep.mubr.f32.mxu0 0.0
    %1932 = vmatmul.mubr.f32.gmra.mrb[0].mxu0 %v741
    %v1933 = vpop.f32.mrb[0].mxu0
    %v1934 = vadd.f32 0.0, %v1933
    %v1935 = vpop.f32.mrb[0].mxu0
    %1936 = vmatprep.mubr.f32.mxu0 0.0
    %1937 = vmatmul.mubr.f32.gmra.mrb[0].mxu0 %v743
    %v1938 = vpop.f32.mrb[0].mxu0
    %v1939 = vadd.f32 0.0, %v1938
    %v1940 = vpop.f32.mrb[0].mxu0
    %1941 = vmatprep.mubr.f32.mxu0 0.0
    %1942 = vmatmul.mubr.f32.gmra.mrb[0].mxu0 %v745
    %v1943 = vpop.f32.mrb[0].mxu0
    %v1944 = vadd.f32 0.0, %v1943
    %v1945 = vpop.f32.mrb[0].mxu0
    %1946 = vmatprep.mubr.f32.mxu0 0.0
    %1947 = vmatmul.mubr.f32.gmra.mrb[0].mxu0 %v747
    %v1948 = vpop.f32.mrb[0].mxu0
    %v1949 = vadd.f32 0.0, %v1948
    %v1950 = vpop.f32.mrb[0].mxu0
    %1951 = vmatprep.mubr.f32.mxu0 0.0
    %1952 = vmatmul.mubr.f32.gmra.mrb[0].mxu0 %v749
    %v1953 = vpop.f32.mrb[0].mxu0
    %v1954 = vadd.f32 0.0, %v1953
    %v1955 = vpop.f32.mrb[0].mxu0
    %1956 = vmatprep.mubr.f32.mxu0 0.0
    %1957 = vmatmul.mubr.f32.gmra.mrb[0].mxu0 %v751
    %v1958 = vpop.f32.mrb[0].mxu0
    %v1959 = vadd.f32 0.0, %v1958
    %v1960 = vpop.f32.mrb[0].mxu0
    %1961 = vmatprep.mubr.f32.mxu0 0.0
    %1962 = vmatmul.mubr.f32.gmra.mrb[0].mxu0 %v753
    %v1963 = vpop.f32.mrb[0].mxu0
    %v1964 = vadd.f32 0.0, %v1963
    %v1965 = vpop.f32.mrb[0].mxu0
    %1966 = vmatprep.mubr.f32.mxu0 0.0
    %1967 = vmatmul.mubr.f32.gmra.mrb[0].mxu0 %v755
    %v1968 = vpop.f32.mrb[0].mxu0
    %v1969 = vadd.f32 0.0, %v1968
    %v1970 = vpop.f32.mrb[0].mxu0
    %1971 = vmatprep.mubr.f32.mxu0 0.0
    %1972 = vmatmul.mubr.f32.gmra.mrb[0].mxu0 %v757
    %v1973 = vpop.f32.mrb[0].mxu0
    %v1974 = vadd.f32 0.0, %v1973
    %v1975 = vpop.f32.mrb[0].mxu0
    %1976 = vmatprep.mubr.f32.mxu0 0.0
    %1977 = vmatmul.mubr.f32.gmra.mrb[0].mxu0 %v759
    %v1978 = vpop.f32.mrb[0].mxu0
    %v1979 = vadd.f32 0.0, %v1978
    %v1980 = vpop.f32.mrb[0].mxu0
    %1981 = vmatprep.mubr.f32.mxu0 0.0
    %1982 = vmatmul.mubr.f32.gmra.mrb[0].mxu0 %v761
    %v1983 = vpop.f32.mrb[0].mxu0
    %v1984 = vadd.f32 0.0, %v1983
    %v1985 = vpop.f32.mrb[0].mxu0
    %1986 = vmatprep.mubr.f32.mxu0 0.0
    %1987 = vmatmul.mubr.f32.gmra.mrb[0].mxu0 %v763
    %v1988 = vpop.f32.mrb[0].mxu0
    %v1989 = vadd.f32 0.0, %v1988
    %v1990 = vpop.f32.mrb[0].mxu0
    %1991 = vmatprep.mubr.f32.mxu0 0.0
    %1992 = vmatmul.mubr.f32.gmra.mrb[0].mxu0 %v765
    %v1993 = vpop.f32.mrb[0].mxu0
    %v1994 = vadd.f32 0.0, %v1993
    %v1995 = vpop.f32.mrb[0].mxu0
    %1996 = vmatprep.mubr.f32.mxu0 0.0
    %1997 = vmatmul.mubr.f32.gmra.mrb[0].mxu0 %v1232
    %v1998 = vpop.f32.mrb[0].mxu0
    %v1999 = vadd.f32 0.0, %v1998
    %v2000 = vpop.f32.mrb[0].mxu0
    %2001 = vmatprep.mubr.f32.mxu0 0.0
    %2002 = vmatmul.mubr.f32.gmra.mrb[0].mxu0 %v1805
    %v2003 = vpop.f32.mrb[0].mxu0
    %v2004 = vadd.f32 0.0, %v2003
    %v2005 = vpop.f32.mrb[0].mxu0
    %2006 = vdwg.mxu0
    %v2007 = vadd.f32 %v1773, %v1874
    %v2008 = vadd.f32 %v1774, %v1879
    %v2009 = vadd.f32 %v1775, %v1884
    %v2010 = vadd.f32 %v1776, %v1889
    %v2011 = vadd.f32 %v1777, %v1894
    %v2012 = vadd.f32 %v1778, %v1899
    %v2013 = vadd.f32 %v1779, %v1904
    %v2014 = vadd.f32 %v1780, %v1909
    %v2015 = vadd.f32 %v1781, %v1914
    %v2016 = vadd.f32 %v1782, %v1919
    %v2017 = vadd.f32 %v1783, %v1924
    %v2018 = vadd.f32 %v1784, %v1929
    %v2019 = vadd.f32 %v1785, %v1934
    %v2020 = vadd.f32 %v1786, %v1939
    %v2021 = vadd.f32 %v1787, %v1944
    %v2022 = vadd.f32 %v1788, %v1949
    %v2023 = vadd.f32 %v1789, %v1954
    %v2024 = vadd.f32 %v1790, %v1959
    %v2025 = vadd.f32 %v1791, %v1964
    %v2026 = vadd.f32 %v1792, %v1969
    %v2027 = vadd.f32 %v1793, %v1974
    %v2028 = vadd.f32 %v1794, %v1979
    %v2029 = vadd.f32 %v1795, %v1984
    %v2030 = vadd.f32 %v1796, %v1989
    %v2031 = vadd.f32 %v1797, %v1994
    %v2032 = vadd.f32 %v1798, %v1999
    %v2033 = vadd.f32 %v1799, %v2004
    %v2034 = vld [vmem:[%s1 + $0x70] sm:$0xff]
    %v2035 = vld [vmem:[%s1 + $0x78] sm:$0xff]
    %v2036 = vrot.slane %v57, 3
    %v2037 = vsel %vm1463, %v1517, %v2036
    %v2038 = vsel %vm146, %v2037, 0
    %2040 = vmatprep.subr.mxu0 0.0
    %2041 = vmatpush1.msra.mxu0 %v2034
    %2042 = vmatprep.subr.mxu0 0.0
    %2043 = vmatpush1.msra.mxu0 %v2035
    %2044 = vmatprep.subr.mxu0 0.0
    %2045 = vmatpush1.msra.mxu0 0.0
    %2046 = vmatprep.subr.mxu0 0.0
    %2047 = vmatpush1.msra.mxu0 0.0
    %2048 = vmatprep.subr.mxu0 0.0
    %2049 = vmatpush1.msra.mxu0 0.0
    %2050 = vmatprep.subr.mxu0 0.0
    %2051 = vmatpush1.msra.mxu0 0.0
    %2052 = vmatprep.subr.mxu0 0.0
    %2053 = vmatpush1.msra.mxu0 0.0
    %2054 = vmatprep.subr.mxu0 0.0
    %2055 = vmatpush1.msra.mxu0 0.0
    %2056 = vmatprep.subr.mxu0 0.0
    %2057 = vmatpush1.msra.mxu0 0.0
    %2058 = vmatprep.subr.mxu0 0.0
    %2059 = vmatpush1.msra.mxu0 0.0
    %2060 = vmatprep.subr.mxu0 0.0
    %2061 = vmatpush1.msra.mxu0 0.0
    %2062 = vmatprep.subr.mxu0 0.0
    %2063 = vmatpush1.msra.mxu0 0.0
    %2064 = vmatprep.subr.mxu0 0.0
    %2065 = vmatpush1.msra.mxu0 0.0
    %2066 = vmatprep.subr.mxu0 0.0
    %2067 = vmatpush1.msra.mxu0 0.0
    %2068 = vmatprep.subr.mxu0 0.0
    %2069 = vmatpush1.msra.mxu0 0.0
    %2070 = vmatprep.subr.mxu0 0.0
    %2071 = vmatpush1.msra.mxu0 0.0
    %2072 = vmatprep.subr.mxu0 0.0
    %2073 = vmatpush1.msra.mxu0 0.0
    %2074 = vmatprep.subr.mxu0 0.0
    %2075 = vmatpush1.msra.mxu0 0.0
    %2076 = vmatprep.subr.mxu0 0.0
    %2077 = vmatpush1.msra.mxu0 0.0
    %2078 = vmatprep.subr.mxu0 0.0
    %2079 = vmatpush1.msra.mxu0 0.0
    %2080 = vmatprep.subr.mxu0 0.0
    %2081 = vmatpush1.msra.mxu0 0.0
    %2082 = vmatprep.subr.mxu0 0.0
    %2083 = vmatpush1.msra.mxu0 0.0
    %2084 = vmatprep.subr.mxu0 0.0
    %2085 = vmatpush1.msra.mxu0 0.0
    %2086 = vmatprep.subr.mxu0 0.0
    %2087 = vmatpush1.msra.mxu0 0.0
    %2088 = vmatprep.subr.mxu0 0.0
    %2089 = vmatpush1.msra.mxu0 0.0
    %2090 = vmatprep.subr.mxu0 0.0
    %2091 = vmatpush1.msra.mxu0 0.0
    %2092 = vmatprep.subr.mxu0 0.0
    %2093 = vmatpush1.msra.mxu0 0.0
    %2094 = vmatprep.subr.mxu0 0.0
    %2095 = vmatpush1.msra.mxu0 0.0
    %2096 = vmatprep.subr.mxu0 0.0
    %2097 = vmatpush1.msra.mxu0 0.0
    %2098 = vmatprep.subr.mxu0 0.0
    %2099 = vmatpush1.msra.mxu0 0.0
    %2100 = vmatprep.subr.mxu0 0.0
    %2101 = vmatpush1.msra.mxu0 0.0
    %2102 = vmatprep.subr.mxu0 0.0
    %2103 = vmatpush1.msra.mxu0 0.0
    %2104 = vmatprep.mubr.f32.mxu0 0.0
    %2105 = vmatmul.mubr.f32.gmra.mrb[0].mxu0 %v1521
    %v2106 = vpop.f32.mrb[0].mxu0
    %v2107 = vadd.f32 0.0, %v2106
    %v2108 = vpop.f32.mrb[0].mxu0
    %2109 = vmatprep.mubr.f32.mxu0 0.0
    %2110 = vmatmul.mubr.f32.gmra.mrb[0].mxu0 %v1523
    %v2111 = vpop.f32.mrb[0].mxu0
    %v2112 = vadd.f32 0.0, %v2111
    %v2113 = vpop.f32.mrb[0].mxu0
    %2114 = vmatprep.mubr.f32.mxu0 0.0
    %2115 = vmatmul.mubr.f32.gmra.mrb[0].mxu0 %v1525
    %v2116 = vpop.f32.mrb[0].mxu0
    %v2117 = vadd.f32 0.0, %v2116
    %v2118 = vpop.f32.mrb[0].mxu0
    %2119 = vmatprep.mubr.f32.mxu0 0.0
    %2120 = vmatmul.mubr.f32.gmra.mrb[0].mxu0 %v1527
    %v2121 = vpop.f32.mrb[0].mxu0
    %v2122 = vadd.f32 0.0, %v2121
    %v2123 = vpop.f32.mrb[0].mxu0
    %2124 = vmatprep.mubr.f32.mxu0 0.0
    %2125 = vmatmul.mubr.f32.gmra.mrb[0].mxu0 %v1529
    %v2126 = vpop.f32.mrb[0].mxu0
    %v2127 = vadd.f32 0.0, %v2126
    %v2128 = vpop.f32.mrb[0].mxu0
    %2129 = vmatprep.mubr.f32.mxu0 0.0
    %2130 = vmatmul.mubr.f32.gmra.mrb[0].mxu0 %v1531
    %v2131 = vpop.f32.mrb[0].mxu0
    %v2132 = vadd.f32 0.0, %v2131
    %v2133 = vpop.f32.mrb[0].mxu0
    %2134 = vmatprep.mubr.f32.mxu0 0.0
    %2135 = vmatmul.mubr.f32.gmra.mrb[0].mxu0 %v1533
    %v2136 = vpop.f32.mrb[0].mxu0
    %v2137 = vadd.f32 0.0, %v2136
    %v2138 = vpop.f32.mrb[0].mxu0
    %2139 = vmatprep.mubr.f32.mxu0 0.0
    %2140 = vmatmul.mubr.f32.gmra.mrb[0].mxu0 %v1535
    %v2141 = vpop.f32.mrb[0].mxu0
    %v2142 = vadd.f32 0.0, %v2141
    %v2143 = vpop.f32.mrb[0].mxu0
    %2144 = vmatprep.mubr.f32.mxu0 0.0
    %2145 = vmatmul.mubr.f32.gmra.mrb[0].mxu0 %v1537
    %v2146 = vpop.f32.mrb[0].mxu0
    %v2147 = vadd.f32 0.0, %v2146
    %v2148 = vpop.f32.mrb[0].mxu0
    %2149 = vmatprep.mubr.f32.mxu0 0.0
    %2150 = vmatmul.mubr.f32.gmra.mrb[0].mxu0 %v1539
    %v2151 = vpop.f32.mrb[0].mxu0
    %v2152 = vadd.f32 0.0, %v2151
    %v2153 = vpop.f32.mrb[0].mxu0
    %2154 = vmatprep.mubr.f32.mxu0 0.0
    %2155 = vmatmul.mubr.f32.gmra.mrb[0].mxu0 %v1541
    %v2156 = vpop.f32.mrb[0].mxu0
    %v2157 = vadd.f32 0.0, %v2156
    %v2158 = vpop.f32.mrb[0].mxu0
    %2159 = vmatprep.mubr.f32.mxu0 0.0
    %2160 = vmatmul.mubr.f32.gmra.mrb[0].mxu0 %v1543
    %v2161 = vpop.f32.mrb[0].mxu0
    %v2162 = vadd.f32 0.0, %v2161
    %v2163 = vpop.f32.mrb[0].mxu0
    %2164 = vmatprep.mubr.f32.mxu0 0.0
    %2165 = vmatmul.mubr.f32.gmra.mrb[0].mxu0 %v1545
    %v2166 = vpop.f32.mrb[0].mxu0
    %v2167 = vadd.f32 0.0, %v2166
    %v2168 = vpop.f32.mrb[0].mxu0
    %2169 = vmatprep.mubr.f32.mxu0 0.0
    %2170 = vmatmul.mubr.f32.gmra.mrb[0].mxu0 %v1547
    %v2171 = vpop.f32.mrb[0].mxu0
    %v2172 = vadd.f32 0.0, %v2171
    %v2173 = vpop.f32.mrb[0].mxu0
    %2174 = vmatprep.mubr.f32.mxu0 0.0
    %2175 = vmatmul.mubr.f32.gmra.mrb[0].mxu0 %v1549
    %v2176 = vpop.f32.mrb[0].mxu0
    %v2177 = vadd.f32 0.0, %v2176
    %v2178 = vpop.f32.mrb[0].mxu0
    %2179 = vmatprep.mubr.f32.mxu0 0.0
    %2180 = vmatmul.mubr.f32.gmra.mrb[0].mxu0 %v1551
    %v2181 = vpop.f32.mrb[0].mxu0
    %v2182 = vadd.f32 0.0, %v2181
    %v2183 = vpop.f32.mrb[0].mxu0
    %2184 = vmatprep.mubr.f32.mxu0 0.0
    %2185 = vmatmul.mubr.f32.gmra.mrb[0].mxu0 %v1553
    %v2186 = vpop.f32.mrb[0].mxu0
    %v2187 = vadd.f32 0.0, %v2186
    %v2188 = vpop.f32.mrb[0].mxu0
    %2189 = vmatprep.mubr.f32.mxu0 0.0
    %2190 = vmatmul.mubr.f32.gmra.mrb[0].mxu0 %v1555
    %v2191 = vpop.f32.mrb[0].mxu0
    %v2192 = vadd.f32 0.0, %v2191
    %v2193 = vpop.f32.mrb[0].mxu0
    %2194 = vmatprep.mubr.f32.mxu0 0.0
    %2195 = vmatmul.mubr.f32.gmra.mrb[0].mxu0 %v1557
    %v2196 = vpop.f32.mrb[0].mxu0
    %v2197 = vadd.f32 0.0, %v2196
    %v2198 = vpop.f32.mrb[0].mxu0
    %2199 = vmatprep.mubr.f32.mxu0 0.0
    %2200 = vmatmul.mubr.f32.gmra.mrb[0].mxu0 %v1559
    %v2201 = vpop.f32.mrb[0].mxu0
    %v2202 = vadd.f32 0.0, %v2201
    %v2203 = vpop.f32.mrb[0].mxu0
    %2204 = vmatprep.mubr.f32.mxu0 0.0
    %2205 = vmatmul.mubr.f32.gmra.mrb[0].mxu0 %v1561
    %v2206 = vpop.f32.mrb[0].mxu0
    %v2207 = vadd.f32 0.0, %v2206
    %v2208 = vpop.f32.mrb[0].mxu0
    %2209 = vmatprep.mubr.f32.mxu0 0.0
    %2210 = vmatmul.mubr.f32.gmra.mrb[0].mxu0 %v1563
    %v2211 = vpop.f32.mrb[0].mxu0
    %v2212 = vadd.f32 0.0, %v2211
    %v2213 = vpop.f32.mrb[0].mxu0
    %2214 = vmatprep.mubr.f32.mxu0 0.0
    %2215 = vmatmul.mubr.f32.gmra.mrb[0].mxu0 %v1565
    %v2216 = vpop.f32.mrb[0].mxu0
    %v2217 = vadd.f32 0.0, %v2216
    %v2218 = vpop.f32.mrb[0].mxu0
    %2219 = vmatprep.mubr.f32.mxu0 0.0
    %2220 = vmatmul.mubr.f32.gmra.mrb[0].mxu0 %v1567
    %v2221 = vpop.f32.mrb[0].mxu0
    %v2222 = vadd.f32 0.0, %v2221
    %v2223 = vpop.f32.mrb[0].mxu0
    %2224 = vmatprep.mubr.f32.mxu0 0.0
    %2225 = vmatmul.mubr.f32.gmra.mrb[0].mxu0 %v1569
    %v2226 = vpop.f32.mrb[0].mxu0
    %v2227 = vadd.f32 0.0, %v2226
    %v2228 = vpop.f32.mrb[0].mxu0
    %2229 = vmatprep.mubr.f32.mxu0 0.0
    %2230 = vmatmul.mubr.f32.gmra.mrb[0].mxu0 %v1571
    %v2231 = vpop.f32.mrb[0].mxu0
    %v2232 = vadd.f32 0.0, %v2231
    %v2233 = vpop.f32.mrb[0].mxu0
    %2234 = vmatprep.mubr.f32.mxu0 0.0
    %2235 = vmatmul.mubr.f32.gmra.mrb[0].mxu0 %v2038
    %v2236 = vpop.f32.mrb[0].mxu0
    %v2237 = vadd.f32 0.0, %v2236
    %v2238 = vpop.f32.mrb[0].mxu0
    %2239 = vdwg.mxu0
    %v2240 = vadd.f32 %v2007, %v2107
    %v2241 = vadd.f32 %v2008, %v2112
    %v2242 = vadd.f32 %v2009, %v2117
    %v2243 = vadd.f32 %v2010, %v2122
    %v2244 = vadd.f32 %v2011, %v2127
    %v2245 = vadd.f32 %v2012, %v2132
    %v2246 = vadd.f32 %v2013, %v2137
    %v2247 = vadd.f32 %v2014, %v2142
    %v2248 = vadd.f32 %v2015, %v2147
    %v2249 = vadd.f32 %v2016, %v2152
    %v2250 = vadd.f32 %v2017, %v2157
    %v2251 = vadd.f32 %v2018, %v2162
    %v2252 = vadd.f32 %v2019, %v2167
    %v2253 = vadd.f32 %v2020, %v2172
    %v2254 = vadd.f32 %v2021, %v2177
    %v2255 = vadd.f32 %v2022, %v2182
    %v2256 = vadd.f32 %v2023, %v2187
    %v2257 = vadd.f32 %v2024, %v2192
    %v2258 = vadd.f32 %v2025, %v2197
    %v2259 = vadd.f32 %v2026, %v2202
    %v2260 = vadd.f32 %v2027, %v2207
    %v2261 = vadd.f32 %v2028, %v2212
    %v2262 = vadd.f32 %v2029, %v2217
    %v2263 = vadd.f32 %v2030, %v2222
    %v2264 = vadd.f32 %v2031, %v2227
    %v2265 = vadd.f32 %v2032, %v2232
    %v2266 = vadd.f32 %v2033, %v2237
    %v2267 = vld [vmem:[%s1 + $0x80] sm:$0xff]
    %v2268 = vld [vmem:[%s1 + $0x88] sm:$0xff]
    %vm2269 = vcmask 1043456
    %v2270 = vrot.slane %v30, 4
    %v2271 = vrot.slane %v31, 4
    %v2272 = vsel %vm2269, %v2270, %v2271
    %v2273 = vrot.slane %v32, 4
    %v2274 = vsel %vm2269, %v2271, %v2273
    %v2275 = vrot.slane %v33, 4
    %v2276 = vsel %vm2269, %v2273, %v2275
    %v2277 = vrot.slane %v34, 4
    %v2278 = vsel %vm2269, %v2275, %v2277
    %v2279 = vrot.slane %v35, 4
    %v2280 = vsel %vm2269, %v2277, %v2279
    %v2281 = vrot.slane %v36, 4
    %v2282 = vsel %vm2269, %v2279, %v2281
    %v2283 = vrot.slane %v37, 4
    %v2284 = vsel %vm2269, %v2281, %v2283
    %v2285 = vrot.slane %v38, 4
    %v2286 = vsel %vm2269, %v2283, %v2285
    %v2287 = vrot.slane %v39, 4
    %v2288 = vsel %vm2269, %v2285, %v2287
    %v2289 = vrot.slane %v40, 4
    %v2290 = vsel %vm2269, %v2287, %v2289
    %v2291 = vrot.slane %v41, 4
    %v2292 = vsel %vm2269, %v2289, %v2291
    %v2293 = vrot.slane %v42, 4
    %v2294 = vsel %vm2269, %v2291, %v2293
    %v2295 = vrot.slane %v43, 4
    %v2296 = vsel %vm2269, %v2293, %v2295
    %v2297 = vrot.slane %v44, 4
    %v2298 = vsel %vm2269, %v2295, %v2297
    %v2299 = vrot.slane %v45, 4
    %v2300 = vsel %vm2269, %v2297, %v2299
    %v2301 = vrot.slane %v46, 4
    %v2302 = vsel %vm2269, %v2299, %v2301
    %v2303 = vrot.slane %v47, 4
    %v2304 = vsel %vm2269, %v2301, %v2303
    %v2305 = vrot.slane %v48, 4
    %v2306 = vsel %vm2269, %v2303, %v2305
    %v2307 = vrot.slane %v49, 4
    %v2308 = vsel %vm2269, %v2305, %v2307
    %v2309 = vrot.slane %v50, 4
    %v2310 = vsel %vm2269, %v2307, %v2309
    %v2311 = vrot.slane %v51, 4
    %v2312 = vsel %vm2269, %v2309, %v2311
    %v2313 = vrot.slane %v52, 4
    %v2314 = vsel %vm2269, %v2311, %v2313
    %v2315 = vrot.slane %v53, 4
    %v2316 = vsel %vm2269, %v2313, %v2315
    %v2317 = vrot.slane %v54, 4
    %v2318 = vsel %vm2269, %v2315, %v2317
    %v2319 = vrot.slane %v55, 4
    %v2320 = vsel %vm2269, %v2317, %v2319
    %v2321 = vrot.slane %v56, 4
    %v2322 = vsel %vm2269, %v2319, %v2321
    %v2323 = vrot.slane %v57, 4
    %v2324 = vsel %vm2269, %v2321, %v2323
    %v2325 = vsel %vm146, %v2272, 0
    %v2327 = vsel %vm146, %v2274, 0
    %v2329 = vsel %vm146, %v2276, 0
    %v2331 = vsel %vm146, %v2278, 0
    %v2333 = vsel %vm146, %v2280, 0
    %v2335 = vsel %vm146, %v2282, 0
    %v2337 = vsel %vm146, %v2284, 0
    %v2339 = vsel %vm146, %v2286, 0
    %v2341 = vsel %vm146, %v2288, 0
    %v2343 = vsel %vm146, %v2290, 0
    %v2345 = vsel %vm146, %v2292, 0
    %v2347 = vsel %vm146, %v2294, 0
    %v2349 = vsel %vm146, %v2296, 0
    %v2351 = vsel %vm146, %v2298, 0
    %v2353 = vsel %vm146, %v2300, 0
    %v2355 = vsel %vm146, %v2302, 0
    %v2357 = vsel %vm146, %v2304, 0
    %v2359 = vsel %vm146, %v2306, 0
    %v2361 = vsel %vm146, %v2308, 0
    %v2363 = vsel %vm146, %v2310, 0
    %v2365 = vsel %vm146, %v2312, 0
    %v2367 = vsel %vm146, %v2314, 0
    %v2369 = vsel %vm146, %v2316, 0
    %v2371 = vsel %vm146, %v2318, 0
    %v2373 = vsel %vm146, %v2320, 0
    %v2375 = vsel %vm146, %v2322, 0
    %v2377 = vsel %vm146, %v2324, 0
    %2379 = vmatprep.subr.mxu0 0.0
    %2380 = vmatpush1.msra.mxu0 %v2267
    %2381 = vmatprep.subr.mxu0 0.0
    %2382 = vmatpush1.msra.mxu0 %v2268
    %2383 = vmatprep.subr.mxu0 0.0
    %2384 = vmatpush1.msra.mxu0 0.0
    %2385 = vmatprep.subr.mxu0 0.0
    %2386 = vmatpush1.msra.mxu0 0.0
    %2387 = vmatprep.subr.mxu0 0.0
    %2388 = vmatpush1.msra.mxu0 0.0
    %2389 = vmatprep.subr.mxu0 0.0
    %2390 = vmatpush1.msra.mxu0 0.0
    %2391 = vmatprep.subr.mxu0 0.0
    %2392 = vmatpush1.msra.mxu0 0.0
    %2393 = vmatprep.subr.mxu0 0.0
    %2394 = vmatpush1.msra.mxu0 0.0
    %2395 = vmatprep.subr.mxu0 0.0
    %2396 = vmatpush1.msra.mxu0 0.0
    %2397 = vmatprep.subr.mxu0 0.0
    %2398 = vmatpush1.msra.mxu0 0.0
    %2399 = vmatprep.subr.mxu0 0.0
    %2400 = vmatpush1.msra.mxu0 0.0
    %2401 = vmatprep.subr.mxu0 0.0
    %2402 = vmatpush1.msra.mxu0 0.0
    %2403 = vmatprep.subr.mxu0 0.0
    %2404 = vmatpush1.msra.mxu0 0.0
    %2405 = vmatprep.subr.mxu0 0.0
    %2406 = vmatpush1.msra.mxu0 0.0
    %2407 = vmatprep.subr.mxu0 0.0
    %2408 = vmatpush1.msra.mxu0 0.0
    %2409 = vmatprep.subr.mxu0 0.0
    %2410 = vmatpush1.msra.mxu0 0.0
    %2411 = vmatprep.subr.mxu0 0.0
    %2412 = vmatpush1.msra.mxu0 0.0
    %2413 = vmatprep.subr.mxu0 0.0
    %2414 = vmatpush1.msra.mxu0 0.0
    %2415 = vmatprep.subr.mxu0 0.0
    %2416 = vmatpush1.msra.mxu0 0.0
    %2417 = vmatprep.subr.mxu0 0.0
    %2418 = vmatpush1.msra.mxu0 0.0
    %2419 = vmatprep.subr.mxu0 0.0
    %2420 = vmatpush1.msra.mxu0 0.0
    %2421 = vmatprep.subr.mxu0 0.0
    %2422 = vmatpush1.msra.mxu0 0.0
    %2423 = vmatprep.subr.mxu0 0.0
    %2424 = vmatpush1.msra.mxu0 0.0
    %2425 = vmatprep.subr.mxu0 0.0
    %2426 = vmatpush1.msra.mxu0 0.0
    %2427 = vmatprep.subr.mxu0 0.0
    %2428 = vmatpush1.msra.mxu0 0.0
    %2429 = vmatprep.subr.mxu0 0.0
    %2430 = vmatpush1.msra.mxu0 0.0
    %2431 = vmatprep.subr.mxu0 0.0
    %2432 = vmatpush1.msra.mxu0 0.0
    %2433 = vmatprep.subr.mxu0 0.0
    %2434 = vmatpush1.msra.mxu0 0.0
    %2435 = vmatprep.subr.mxu0 0.0
    %2436 = vmatpush1.msra.mxu0 0.0
    %2437 = vmatprep.subr.mxu0 0.0
    %2438 = vmatpush1.msra.mxu0 0.0
    %2439 = vmatprep.subr.mxu0 0.0
    %2440 = vmatpush1.msra.mxu0 0.0
    %2441 = vmatprep.subr.mxu0 0.0
    %2442 = vmatpush1.msra.mxu0 0.0
    %2443 = vmatprep.mubr.f32.mxu0 0.0
    %2444 = vmatmul.mubr.f32.gmra.mrb[0].mxu0 %v2325
    %v2445 = vpop.f32.mrb[0].mxu0
    %v2446 = vadd.f32 0.0, %v2445
    %v2447 = vpop.f32.mrb[0].mxu0
    %2448 = vmatprep.mubr.f32.mxu0 0.0
    %2449 = vmatmul.mubr.f32.gmra.mrb[0].mxu0 %v2327
    %v2450 = vpop.f32.mrb[0].mxu0
    %v2451 = vadd.f32 0.0, %v2450
    %v2452 = vpop.f32.mrb[0].mxu0
    %2453 = vmatprep.mubr.f32.mxu0 0.0
    %2454 = vmatmul.mubr.f32.gmra.mrb[0].mxu0 %v2329
    %v2455 = vpop.f32.mrb[0].mxu0
    %v2456 = vadd.f32 0.0, %v2455
    %v2457 = vpop.f32.mrb[0].mxu0
    %2458 = vmatprep.mubr.f32.mxu0 0.0
    %2459 = vmatmul.mubr.f32.gmra.mrb[0].mxu0 %v2331
    %v2460 = vpop.f32.mrb[0].mxu0
    %v2461 = vadd.f32 0.0, %v2460
    %v2462 = vpop.f32.mrb[0].mxu0
    %2463 = vmatprep.mubr.f32.mxu0 0.0
    %2464 = vmatmul.mubr.f32.gmra.mrb[0].mxu0 %v2333
    %v2465 = vpop.f32.mrb[0].mxu0
    %v2466 = vadd.f32 0.0, %v2465
    %v2467 = vpop.f32.mrb[0].mxu0
    %2468 = vmatprep.mubr.f32.mxu0 0.0
    %2469 = vmatmul.mubr.f32.gmra.mrb[0].mxu0 %v2335
    %v2470 = vpop.f32.mrb[0].mxu0
    %v2471 = vadd.f32 0.0, %v2470
    %v2472 = vpop.f32.mrb[0].mxu0
    %2473 = vmatprep.mubr.f32.mxu0 0.0
    %2474 = vmatmul.mubr.f32.gmra.mrb[0].mxu0 %v2337
    %v2475 = vpop.f32.mrb[0].mxu0
    %v2476 = vadd.f32 0.0, %v2475
    %v2477 = vpop.f32.mrb[0].mxu0
    %2478 = vmatprep.mubr.f32.mxu0 0.0
    %2479 = vmatmul.mubr.f32.gmra.mrb[0].mxu0 %v2339
    %v2480 = vpop.f32.mrb[0].mxu0
    %v2481 = vadd.f32 0.0, %v2480
    %v2482 = vpop.f32.mrb[0].mxu0
    %2483 = vmatprep.mubr.f32.mxu0 0.0
    %2484 = vmatmul.mubr.f32.gmra.mrb[0].mxu0 %v2341
    %v2485 = vpop.f32.mrb[0].mxu0
    %v2486 = vadd.f32 0.0, %v2485
    %v2487 = vpop.f32.mrb[0].mxu0
    %2488 = vmatprep.mubr.f32.mxu0 0.0
    %2489 = vmatmul.mubr.f32.gmra.mrb[0].mxu0 %v2343
    %v2490 = vpop.f32.mrb[0].mxu0
    %v2491 = vadd.f32 0.0, %v2490
    %v2492 = vpop.f32.mrb[0].mxu0
    %2493 = vmatprep.mubr.f32.mxu0 0.0
    %2494 = vmatmul.mubr.f32.gmra.mrb[0].mxu0 %v2345
    %v2495 = vpop.f32.mrb[0].mxu0
    %v2496 = vadd.f32 0.0, %v2495
    %v2497 = vpop.f32.mrb[0].mxu0
    %2498 = vmatprep.mubr.f32.mxu0 0.0
    %2499 = vmatmul.mubr.f32.gmra.mrb[0].mxu0 %v2347
    %v2500 = vpop.f32.mrb[0].mxu0
    %v2501 = vadd.f32 0.0, %v2500
    %v2502 = vpop.f32.mrb[0].mxu0
    %2503 = vmatprep.mubr.f32.mxu0 0.0
    %2504 = vmatmul.mubr.f32.gmra.mrb[0].mxu0 %v2349
    %v2505 = vpop.f32.mrb[0].mxu0
    %v2506 = vadd.f32 0.0, %v2505
    %v2507 = vpop.f32.mrb[0].mxu0
    %2508 = vmatprep.mubr.f32.mxu0 0.0
    %2509 = vmatmul.mubr.f32.gmra.mrb[0].mxu0 %v2351
    %v2510 = vpop.f32.mrb[0].mxu0
    %v2511 = vadd.f32 0.0, %v2510
    %v2512 = vpop.f32.mrb[0].mxu0
    %2513 = vmatprep.mubr.f32.mxu0 0.0
    %2514 = vmatmul.mubr.f32.gmra.mrb[0].mxu0 %v2353
    %v2515 = vpop.f32.mrb[0].mxu0
    %v2516 = vadd.f32 0.0, %v2515
    %v2517 = vpop.f32.mrb[0].mxu0
    %2518 = vmatprep.mubr.f32.mxu0 0.0
    %2519 = vmatmul.mubr.f32.gmra.mrb[0].mxu0 %v2355
    %v2520 = vpop.f32.mrb[0].mxu0
    %v2521 = vadd.f32 0.0, %v2520
    %v2522 = vpop.f32.mrb[0].mxu0
    %2523 = vmatprep.mubr.f32.mxu0 0.0
    %2524 = vmatmul.mubr.f32.gmra.mrb[0].mxu0 %v2357
    %v2525 = vpop.f32.mrb[0].mxu0
    %v2526 = vadd.f32 0.0, %v2525
    %v2527 = vpop.f32.mrb[0].mxu0
    %2528 = vmatprep.mubr.f32.mxu0 0.0
    %2529 = vmatmul.mubr.f32.gmra.mrb[0].mxu0 %v2359
    %v2530 = vpop.f32.mrb[0].mxu0
    %v2531 = vadd.f32 0.0, %v2530
    %v2532 = vpop.f32.mrb[0].mxu0
    %2533 = vmatprep.mubr.f32.mxu0 0.0
    %2534 = vmatmul.mubr.f32.gmra.mrb[0].mxu0 %v2361
    %v2535 = vpop.f32.mrb[0].mxu0
    %v2536 = vadd.f32 0.0, %v2535
    %v2537 = vpop.f32.mrb[0].mxu0
    %2538 = vmatprep.mubr.f32.mxu0 0.0
    %2539 = vmatmul.mubr.f32.gmra.mrb[0].mxu0 %v2363
    %v2540 = vpop.f32.mrb[0].mxu0
    %v2541 = vadd.f32 0.0, %v2540
    %v2542 = vpop.f32.mrb[0].mxu0
    %2543 = vmatprep.mubr.f32.mxu0 0.0
    %2544 = vmatmul.mubr.f32.gmra.mrb[0].mxu0 %v2365
    %v2545 = vpop.f32.mrb[0].mxu0
    %v2546 = vadd.f32 0.0, %v2545
    %v2547 = vpop.f32.mrb[0].mxu0
    %2548 = vmatprep.mubr.f32.mxu0 0.0
    %2549 = vmatmul.mubr.f32.gmra.mrb[0].mxu0 %v2367
    %v2550 = vpop.f32.mrb[0].mxu0
    %v2551 = vadd.f32 0.0, %v2550
    %v2552 = vpop.f32.mrb[0].mxu0
    %2553 = vmatprep.mubr.f32.mxu0 0.0
    %2554 = vmatmul.mubr.f32.gmra.mrb[0].mxu0 %v2369
    %v2555 = vpop.f32.mrb[0].mxu0
    %v2556 = vadd.f32 0.0, %v2555
    %v2557 = vpop.f32.mrb[0].mxu0
    %2558 = vmatprep.mubr.f32.mxu0 0.0
    %2559 = vmatmul.mubr.f32.gmra.mrb[0].mxu0 %v2371
    %v2560 = vpop.f32.mrb[0].mxu0
    %v2561 = vadd.f32 0.0, %v2560
    %v2562 = vpop.f32.mrb[0].mxu0
    %2563 = vmatprep.mubr.f32.mxu0 0.0
    %2564 = vmatmul.mubr.f32.gmra.mrb[0].mxu0 %v2373
    %v2565 = vpop.f32.mrb[0].mxu0
    %v2566 = vadd.f32 0.0, %v2565
    %v2567 = vpop.f32.mrb[0].mxu0
    %2568 = vmatprep.mubr.f32.mxu0 0.0
    %2569 = vmatmul.mubr.f32.gmra.mrb[0].mxu0 %v2375
    %v2570 = vpop.f32.mrb[0].mxu0
    %v2571 = vadd.f32 0.0, %v2570
    %v2572 = vpop.f32.mrb[0].mxu0
    %2573 = vmatprep.mubr.f32.mxu0 0.0
    %2574 = vmatmul.mubr.f32.gmra.mrb[0].mxu0 %v2377
    %v2575 = vpop.f32.mrb[0].mxu0
    %v2576 = vadd.f32 0.0, %v2575
    %v2577 = vpop.f32.mrb[0].mxu0
    %2578 = vdwg.mxu0
    %v2579 = vadd.f32 %v2240, %v2446
    %v2580 = vadd.f32 %v2241, %v2451
    %v2581 = vadd.f32 %v2242, %v2456
    %v2582 = vadd.f32 %v2243, %v2461
    %v2583 = vadd.f32 %v2244, %v2466
    %v2584 = vadd.f32 %v2245, %v2471
    %v2585 = vadd.f32 %v2246, %v2476
    %v2586 = vadd.f32 %v2247, %v2481
    %v2587 = vadd.f32 %v2248, %v2486
    %v2588 = vadd.f32 %v2249, %v2491
    %v2589 = vadd.f32 %v2250, %v2496
    %v2590 = vadd.f32 %v2251, %v2501
    %v2591 = vadd.f32 %v2252, %v2506
    %v2592 = vadd.f32 %v2253, %v2511
    %v2593 = vadd.f32 %v2254, %v2516
    %v2594 = vadd.f32 %v2255, %v2521
    %v2595 = vadd.f32 %v2256, %v2526
    %v2596 = vadd.f32 %v2257, %v2531
    %v2597 = vadd.f32 %v2258, %v2536
    %v2598 = vadd.f32 %v2259, %v2541
    %v2599 = vadd.f32 %v2260, %v2546
    %v2600 = vadd.f32 %v2261, %v2551
    %v2601 = vadd.f32 %v2262, %v2556
    %v2602 = vadd.f32 %v2263, %v2561
    %v2603 = vadd.f32 %v2264, %v2566
    %v2604 = vadd.f32 %v2265, %v2571
    %v2605 = vadd.f32 %v2266, %v2576
    %v2607 = vlaneseq
    %v2608 = vshrl.u32 %v2607, 7
    %v2609 = vsub.s32 0, %v2608
    %v2610 = vrot.slane %v15, %v2609
    %v2611 = vlaneseq
    %v2612 = vshrl.u32 %v2611, 7
    %v2613 = vsub.s32 1, %v2612
    %v2614 = vrot.slane %v15, %v2613
    %vm2616 = vcmask 719872
    %v2617 = vsel %vm2616, %v2614, 0
    %2619 = vmatprep.subr.mxu0 0.0
    %2620 = vmatpush1.msra.mxu0 %v2579
    %2621 = vmatprep.subr.mxu0 0.0
    %2622 = vmatpush1.msra.mxu0 %v2580
    %2623 = vmatprep.subr.mxu0 0.0
    %2624 = vmatpush1.msra.mxu0 %v2581
    %2625 = vmatprep.subr.mxu0 0.0
    %2626 = vmatpush1.msra.mxu0 %v2582
    %2627 = vmatprep.subr.mxu0 0.0
    %2628 = vmatpush1.msra.mxu0 %v2583
    %2629 = vmatprep.subr.mxu0 0.0
    %2630 = vmatpush1.msra.mxu0 %v2584
    %2631 = vmatprep.subr.mxu0 0.0
    %2632 = vmatpush1.msra.mxu0 %v2585
    %2633 = vmatprep.subr.mxu0 0.0
    %2634 = vmatpush1.msra.mxu0 %v2586
    %2635 = vmatprep.subr.mxu0 0.0
    %2636 = vmatpush1.msra.mxu0 %v2587
    %2637 = vmatprep.subr.mxu0 0.0
    %2638 = vmatpush1.msra.mxu0 %v2588
    %2639 = vmatprep.subr.mxu0 0.0
    %2640 = vmatpush1.msra.mxu0 %v2589
    %2641 = vmatprep.subr.mxu0 0.0
    %2642 = vmatpush1.msra.mxu0 %v2590
    %2643 = vmatprep.subr.mxu0 0.0
    %2644 = vmatpush1.msra.mxu0 %v2591
    %2645 = vmatprep.subr.mxu0 0.0
    %2646 = vmatpush1.msra.mxu0 %v2592
    %2647 = vmatprep.subr.mxu0 0.0
    %2648 = vmatpush1.msra.mxu0 %v2593
    %2649 = vmatprep.subr.mxu0 0.0
    %2650 = vmatpush1.msra.mxu0 %v2594
    %2651 = vmatprep.subr.mxu0 0.0
    %2652 = vmatpush1.msra.mxu0 %v2595
    %2653 = vmatprep.subr.mxu0 0.0
    %2654 = vmatpush1.msra.mxu0 %v2596
    %2655 = vmatprep.subr.mxu0 0.0
    %2656 = vmatpush1.msra.mxu0 %v2597
    %2657 = vmatprep.subr.mxu0 0.0
    %2658 = vmatpush1.msra.mxu0 %v2598
    %2659 = vmatprep.subr.mxu0 0.0
    %2660 = vmatpush1.msra.mxu0 %v2599
    %2661 = vmatprep.subr.mxu0 0.0
    %2662 = vmatpush1.msra.mxu0 %v2600
    %2663 = vmatprep.subr.mxu0 0.0
    %2664 = vmatpush1.msra.mxu0 %v2601
    %2665 = vmatprep.subr.mxu0 0.0
    %2666 = vmatpush1.msra.mxu0 %v2602
    %2667 = vmatprep.subr.mxu0 0.0
    %2668 = vmatpush1.msra.mxu0 %v2603
    %2669 = vmatprep.subr.mxu0 0.0
    %2670 = vmatpush1.msra.mxu0 %v2604
    %2671 = vmatprep.subr.mxu0 0.0
    %2672 = vmatpush1.msra.mxu0 %v2605
    %2673 = vmatprep.subr.mxu0 0.0
    %2674 = vmatpush1.msra.mxu0 0.0
    %2675 = vmatprep.subr.mxu0 0.0
    %2676 = vmatpush1.msra.mxu0 0.0
    %2677 = vmatprep.subr.mxu0 0.0
    %2678 = vmatpush1.msra.mxu0 0.0
    %2679 = vmatprep.subr.mxu0 0.0
    %2680 = vmatpush1.msra.mxu0 0.0
    %2681 = vmatprep.subr.mxu0 0.0
    %2682 = vmatpush1.msra.mxu0 0.0
    %2683 = vmatprep.mubr.f32.mxu0 %v2617
    %2684 = vmatmul.mubr.f32.gmra.mrb[0].mxu0 %v2610
    %v2685 = vpop.f32.mrb[0].mxu0
    %v2686 = vadd.f32 0.0, %v2685
    %v2687 = vpop.f32.mrb[0].mxu0
    %2688 = vdwg.mxu0
    %v2689 = vmul.f32 %v2686, 0.010204081
    %v2690 = vlaneseq
    %v2691 = vshrl.u32 %v2690, 7
    %v2692 = vsub.s32 0, %v2691
    %v2693 = vrot.slane %v2689, %v2692
    %v2694 = vsub.f32 %v2579, %v2693
    %v2695 = vsub.f32 %v2580, %v2693
    %v2696 = vsub.f32 %v2581, %v2693
    %v2697 = vsub.f32 %v2582, %v2693
    %v2698 = vsub.f32 %v2583, %v2693
    %v2699 = vsub.f32 %v2584, %v2693
    %v2700 = vsub.f32 %v2585, %v2693
    %v2701 = vsub.f32 %v2586, %v2693
    %v2702 = vsub.f32 %v2587, %v2693
    %v2703 = vsub.f32 %v2588, %v2693
    %v2704 = vsub.f32 %v2589, %v2693
    %v2705 = vsub.f32 %v2590, %v2693
    %v2706 = vsub.f32 %v2591, %v2693
    %v2707 = vsub.f32 %v2592, %v2693
    %v2708 = vsub.f32 %v2593, %v2693
    %v2709 = vsub.f32 %v2594, %v2693
    %v2710 = vsub.f32 %v2595, %v2693
    %v2711 = vsub.f32 %v2596, %v2693
    %v2712 = vsub.f32 %v2597, %v2693
    %v2713 = vsub.f32 %v2598, %v2693
    %v2714 = vsub.f32 %v2599, %v2693
    %v2715 = vsub.f32 %v2600, %v2693
    %v2716 = vsub.f32 %v2601, %v2693
    %v2717 = vsub.f32 %v2602, %v2693
    %v2718 = vsub.f32 %v2603, %v2693
    %v2719 = vsub.f32 %v2604, %v2693
    %v2720 = vsub.f32 %v2605, %v2693
    %v2721 = vmul.f32 %v2694, %v2694
    %v2722 = vmul.f32 %v2695, %v2695
    %v2723 = vmul.f32 %v2696, %v2696
    %v2724 = vmul.f32 %v2697, %v2697
    %v2725 = vmul.f32 %v2698, %v2698
    %v2726 = vmul.f32 %v2699, %v2699
    %v2727 = vmul.f32 %v2700, %v2700
    %v2728 = vmul.f32 %v2701, %v2701
    %v2729 = vmul.f32 %v2702, %v2702
    %v2730 = vmul.f32 %v2703, %v2703
    %v2731 = vmul.f32 %v2704, %v2704
    %v2732 = vmul.f32 %v2705, %v2705
    %v2733 = vmul.f32 %v2706, %v2706
    %v2734 = vmul.f32 %v2707, %v2707
    %v2735 = vmul.f32 %v2708, %v2708
    %v2736 = vmul.f32 %v2709, %v2709
    %v2737 = vmul.f32 %v2710, %v2710
    %v2738 = vmul.f32 %v2711, %v2711
    %v2739 = vmul.f32 %v2712, %v2712
    %v2740 = vmul.f32 %v2713, %v2713
    %v2741 = vmul.f32 %v2714, %v2714
    %v2742 = vmul.f32 %v2715, %v2715
    %v2743 = vmul.f32 %v2716, %v2716
    %v2744 = vmul.f32 %v2717, %v2717
    %v2745 = vmul.f32 %v2718, %v2718
    %v2746 = vmul.f32 %v2719, %v2719
    %v2747 = vmul.f32 %v2720, %v2720
    %2748 = vmatprep.subr.mxu0 0.0
    %2749 = vmatpush1.msra.mxu0 %v2721
    %2750 = vmatprep.subr.mxu0 0.0
    %2751 = vmatpush1.msra.mxu0 %v2722
    %2752 = vmatprep.subr.mxu0 0.0
    %2753 = vmatpush1.msra.mxu0 %v2723
    %2754 = vmatprep.subr.mxu0 0.0
    %2755 = vmatpush1.msra.mxu0 %v2724
    %2756 = vmatprep.subr.mxu0 0.0
    %2757 = vmatpush1.msra.mxu0 %v2725
    %2758 = vmatprep.subr.mxu0 0.0
    %2759 = vmatpush1.msra.mxu0 %v2726
    %2760 = vmatprep.subr.mxu0 0.0
    %2761 = vmatpush1.msra.mxu0 %v2727
    %2762 = vmatprep.subr.mxu0 0.0
    %2763 = vmatpush1.msra.mxu0 %v2728
    %2764 = vmatprep.subr.mxu0 0.0
    %2765 = vmatpush1.msra.mxu0 %v2729
    %2766 = vmatprep.subr.mxu0 0.0
    %2767 = vmatpush1.msra.mxu0 %v2730
    %2768 = vmatprep.subr.mxu0 0.0
    %2769 = vmatpush1.msra.mxu0 %v2731
    %2770 = vmatprep.subr.mxu0 0.0
    %2771 = vmatpush1.msra.mxu0 %v2732
    %2772 = vmatprep.subr.mxu0 0.0
    %2773 = vmatpush1.msra.mxu0 %v2733
    %2774 = vmatprep.subr.mxu0 0.0
    %2775 = vmatpush1.msra.mxu0 %v2734
    %2776 = vmatprep.subr.mxu0 0.0
    %2777 = vmatpush1.msra.mxu0 %v2735
    %2778 = vmatprep.subr.mxu0 0.0
    %2779 = vmatpush1.msra.mxu0 %v2736
    %2780 = vmatprep.subr.mxu0 0.0
    %2781 = vmatpush1.msra.mxu0 %v2737
    %2782 = vmatprep.subr.mxu0 0.0
    %2783 = vmatpush1.msra.mxu0 %v2738
    %2784 = vmatprep.subr.mxu0 0.0
    %2785 = vmatpush1.msra.mxu0 %v2739
    %2786 = vmatprep.subr.mxu0 0.0
    %2787 = vmatpush1.msra.mxu0 %v2740
    %2788 = vmatprep.subr.mxu0 0.0
    %2789 = vmatpush1.msra.mxu0 %v2741
    %2790 = vmatprep.subr.mxu0 0.0
    %2791 = vmatpush1.msra.mxu0 %v2742
    %2792 = vmatprep.subr.mxu0 0.0
    %2793 = vmatpush1.msra.mxu0 %v2743
    %2794 = vmatprep.subr.mxu0 0.0
    %2795 = vmatpush1.msra.mxu0 %v2744
    %2796 = vmatprep.subr.mxu0 0.0
    %2797 = vmatpush1.msra.mxu0 %v2745
    %2798 = vmatprep.subr.mxu0 0.0
    %2799 = vmatpush1.msra.mxu0 %v2746
    %2800 = vmatprep.subr.mxu0 0.0
    %2801 = vmatpush1.msra.mxu0 %v2747
    %2802 = vmatprep.subr.mxu0 0.0
    %2803 = vmatpush1.msra.mxu0 0.0
    %2804 = vmatprep.subr.mxu0 0.0
    %2805 = vmatpush1.msra.mxu0 0.0
    %2806 = vmatprep.subr.mxu0 0.0
    %2807 = vmatpush1.msra.mxu0 0.0
    %2808 = vmatprep.subr.mxu0 0.0
    %2809 = vmatpush1.msra.mxu0 0.0
    %2810 = vmatprep.subr.mxu0 0.0
    %2811 = vmatpush1.msra.mxu0 0.0
    %2812 = vmatprep.mubr.f32.mxu0 %v2617
    %2813 = vmatmul.mubr.f32.gmra.mrb[0].mxu0 %v2610
    %v2814 = vpop.f32.mrb[0].mxu0
    %v2815 = vadd.f32 0.0, %v2814
    %v2816 = vpop.f32.mrb[0].mxu0
    %2817 = vdwg.mxu0
    %v2818 = vmul.f32 %v2815, 0.010204081
    %v2819 = vadd.f32 %v2818, 1e-05
    %v2820 = vrsqrt.pop %v2819
    %v2821 = vmul.f32 %v20, %v2820
    %v2822 = vlaneseq
    %v2823 = vshrl.u32 %v2822, 7
    %v2824 = vsub.s32 0, %v2823
    %v2825 = vrot.slane %v2821, %v2824
    %v2826 = vmul.f32 %v2694, %v2825
    %v2827 = vmul.f32 %v2695, %v2825
    %v2828 = vmul.f32 %v2696, %v2825
    %v2829 = vmul.f32 %v2697, %v2825
    %v2830 = vmul.f32 %v2698, %v2825
    %v2831 = vmul.f32 %v2699, %v2825
    %v2832 = vmul.f32 %v2700, %v2825
    %v2833 = vmul.f32 %v2701, %v2825
    %v2834 = vmul.f32 %v2702, %v2825
    %v2835 = vmul.f32 %v2703, %v2825
    %v2836 = vmul.f32 %v2704, %v2825
    %v2837 = vmul.f32 %v2705, %v2825
    %v2838 = vmul.f32 %v2706, %v2825
    %v2839 = vmul.f32 %v2707, %v2825
    %v2840 = vmul.f32 %v2708, %v2825
    %v2841 = vmul.f32 %v2709, %v2825
    %v2842 = vmul.f32 %v2710, %v2825
    %v2843 = vmul.f32 %v2711, %v2825
    %v2844 = vmul.f32 %v2712, %v2825
    %v2845 = vmul.f32 %v2713, %v2825
    %v2846 = vmul.f32 %v2714, %v2825
    %v2847 = vmul.f32 %v2715, %v2825
    %v2848 = vmul.f32 %v2716, %v2825
    %v2849 = vmul.f32 %v2717, %v2825
    %v2850 = vmul.f32 %v2718, %v2825
    %v2851 = vmul.f32 %v2719, %v2825
    %v2852 = vmul.f32 %v2720, %v2825
    %v2853 = vadd.f32 %v2826, %v21
    %v2854 = vadd.f32 %v2827, %v21
    %v2855 = vadd.f32 %v2828, %v21
    %v2856 = vadd.f32 %v2829, %v21
    %v2857 = vadd.f32 %v2830, %v21
    %v2858 = vadd.f32 %v2831, %v21
    %v2859 = vadd.f32 %v2832, %v21
    %v2860 = vadd.f32 %v2833, %v21
    %v2861 = vadd.f32 %v2834, %v21
    %v2862 = vadd.f32 %v2835, %v21
    %v2863 = vadd.f32 %v2836, %v21
    %v2864 = vadd.f32 %v2837, %v21
    %v2865 = vadd.f32 %v2838, %v21
    %v2866 = vadd.f32 %v2839, %v21
    %v2867 = vadd.f32 %v2840, %v21
    %v2868 = vadd.f32 %v2841, %v21
    %v2869 = vadd.f32 %v2842, %v21
    %v2870 = vadd.f32 %v2843, %v21
    %v2871 = vadd.f32 %v2844, %v21
    %v2872 = vadd.f32 %v2845, %v21
    %v2873 = vadd.f32 %v2846, %v21
    %v2874 = vadd.f32 %v2847, %v21
    %v2875 = vadd.f32 %v2848, %v21
    %v2876 = vadd.f32 %v2849, %v21
    %v2877 = vadd.f32 %v2850, %v21
    %v2878 = vadd.f32 %v2851, %v21
    %v2879 = vadd.f32 %v2852, %v21
    %v2880 = vmax.f32 %v2853, 0.0
    %v2881 = vmax.f32 %v2854, 0.0
    %v2882 = vmax.f32 %v2855, 0.0
    %v2883 = vmax.f32 %v2856, 0.0
    %v2884 = vmax.f32 %v2857, 0.0
    %v2885 = vmax.f32 %v2858, 0.0
    %v2886 = vmax.f32 %v2859, 0.0
    %v2887 = vmax.f32 %v2860, 0.0
    %v2888 = vmax.f32 %v2861, 0.0
    %v2889 = vmax.f32 %v2862, 0.0
    %v2890 = vmax.f32 %v2863, 0.0
    %v2891 = vmax.f32 %v2864, 0.0
    %v2892 = vmax.f32 %v2865, 0.0
    %v2893 = vmax.f32 %v2866, 0.0
    %v2894 = vmax.f32 %v2867, 0.0
    %v2895 = vmax.f32 %v2868, 0.0
    %v2896 = vmax.f32 %v2869, 0.0
    %v2897 = vmax.f32 %v2870, 0.0
    %v2898 = vmax.f32 %v2871, 0.0
    %v2899 = vmax.f32 %v2872, 0.0
    %v2900 = vmax.f32 %v2873, 0.0
    %v2901 = vmax.f32 %v2874, 0.0
    %v2902 = vmax.f32 %v2875, 0.0
    %v2903 = vmax.f32 %v2876, 0.0
    %v2904 = vmax.f32 %v2877, 0.0
    %v2905 = vmax.f32 %v2878, 0.0
    %v2906 = vmax.f32 %v2879, 0.0
    %v2907 = vld [vmem:[%s1 + $0x90] sm:$0xff]
    %v2908 = vld [vmem:[%s1 + $0x98] sm:$0xff]
    %v2909 = vld [vmem:[%s1 + $0xa0] sm:$0xff]
    %v2910 = vld [vmem:[%s1 + $0xa8] sm:$0xff]
    %v2936 = vrot.slane %v2880, 1
    %v2937 = vrot.slane %v2881, 1
    %v2938 = vsel %vm90, %v2936, %v2937
    %v2939 = vrot.slane %v2882, 1
    %v2940 = vsel %vm90, %v2937, %v2939
    %v2941 = vrot.slane %v2883, 1
    %v2942 = vsel %vm90, %v2939, %v2941
    %v2943 = vrot.slane %v2884, 1
    %v2944 = vsel %vm90, %v2941, %v2943
    %v2945 = vrot.slane %v2885, 1
    %v2946 = vsel %vm90, %v2943, %v2945
    %v2947 = vrot.slane %v2886, 1
    %v2948 = vsel %vm90, %v2945, %v2947
    %v2949 = vrot.slane %v2887, 1
    %v2950 = vsel %vm90, %v2947, %v2949
    %v2951 = vrot.slane %v2888, 1
    %v2952 = vsel %vm90, %v2949, %v2951
    %v2953 = vrot.slane %v2889, 1
    %v2954 = vsel %vm90, %v2951, %v2953
    %v2955 = vrot.slane %v2890, 1
    %v2956 = vsel %vm90, %v2953, %v2955
    %v2957 = vrot.slane %v2891, 1
    %v2958 = vsel %vm90, %v2955, %v2957
    %v2959 = vrot.slane %v2892, 1
    %v2960 = vsel %vm90, %v2957, %v2959
    %v2961 = vrot.slane %v2893, 1
    %v2962 = vsel %vm90, %v2959, %v2961
    %v2963 = vrot.slane %v2894, 1
    %v2964 = vsel %vm90, %v2961, %v2963
    %v2965 = vrot.slane %v2895, 1
    %v2966 = vsel %vm90, %v2963, %v2965
    %v2967 = vrot.slane %v2896, 1
    %v2968 = vsel %vm90, %v2965, %v2967
    %v2969 = vrot.slane %v2897, 1
    %v2970 = vsel %vm90, %v2967, %v2969
    %v2971 = vrot.slane %v2898, 1
    %v2972 = vsel %vm90, %v2969, %v2971
    %v2973 = vrot.slane %v2899, 1
    %v2974 = vsel %vm90, %v2971, %v2973
    %v2975 = vrot.slane %v2900, 1
    %v2976 = vsel %vm90, %v2973, %v2975
    %v2977 = vrot.slane %v2901, 1
    %v2978 = vsel %vm90, %v2975, %v2977
    %v2979 = vrot.slane %v2902, 1
    %v2980 = vsel %vm90, %v2977, %v2979
    %v2981 = vrot.slane %v2903, 1
    %v2982 = vsel %vm90, %v2979, %v2981
    %v2983 = vrot.slane %v2904, 1
    %v2984 = vsel %vm90, %v2981, %v2983
    %v2985 = vsel %vm146, %v2938, 0
    %v2987 = vsel %vm146, %v2940, 0
    %v2989 = vsel %vm146, %v2942, 0
    %v2991 = vsel %vm146, %v2944, 0
    %v2993 = vsel %vm146, %v2946, 0
    %v2995 = vsel %vm146, %v2948, 0
    %v2997 = vsel %vm146, %v2950, 0
    %v2999 = vsel %vm146, %v2952, 0
    %v3001 = vsel %vm146, %v2954, 0
    %v3003 = vsel %vm146, %v2956, 0
    %v3005 = vsel %vm146, %v2958, 0
    %v3007 = vsel %vm146, %v2960, 0
    %v3009 = vsel %vm146, %v2962, 0
    %v3011 = vsel %vm146, %v2964, 0
    %v3013 = vsel %vm146, %v2966, 0
    %v3015 = vsel %vm146, %v2968, 0
    %v3017 = vsel %vm146, %v2970, 0
    %v3019 = vsel %vm146, %v2972, 0
    %v3021 = vsel %vm146, %v2974, 0
    %v3023 = vsel %vm146, %v2976, 0
    %v3025 = vsel %vm146, %v2978, 0
    %v3027 = vsel %vm146, %v2980, 0
    %v3029 = vsel %vm146, %v2982, 0
    %v3031 = vsel %vm146, %v2984, 0
    %3033 = vmatprep.subr.mxu0 0.0
    %3034 = vmatpush1.msra.mxu0 %v2909
    %3035 = vmatprep.subr.mxu0 0.0
    %3036 = vmatpush1.msra.mxu0 %v2910
    %3037 = vmatprep.subr.mxu0 0.0
    %3038 = vmatpush1.msra.mxu0 0.0
    %3039 = vmatprep.subr.mxu0 0.0
    %3040 = vmatpush1.msra.mxu0 0.0
    %3041 = vmatprep.subr.mxu0 0.0
    %3042 = vmatpush1.msra.mxu0 0.0
    %3043 = vmatprep.subr.mxu0 0.0
    %3044 = vmatpush1.msra.mxu0 0.0
    %3045 = vmatprep.subr.mxu0 0.0
    %3046 = vmatpush1.msra.mxu0 0.0
    %3047 = vmatprep.subr.mxu0 0.0
    %3048 = vmatpush1.msra.mxu0 0.0
    %3049 = vmatprep.subr.mxu0 0.0
    %3050 = vmatpush1.msra.mxu0 0.0
    %3051 = vmatprep.subr.mxu0 0.0
    %3052 = vmatpush1.msra.mxu0 0.0
    %3053 = vmatprep.subr.mxu0 0.0
    %3054 = vmatpush1.msra.mxu0 0.0
    %3055 = vmatprep.subr.mxu0 0.0
    %3056 = vmatpush1.msra.mxu0 0.0
    %3057 = vmatprep.subr.mxu0 0.0
    %3058 = vmatpush1.msra.mxu0 0.0
    %3059 = vmatprep.subr.mxu0 0.0
    %3060 = vmatpush1.msra.mxu0 0.0
    %3061 = vmatprep.subr.mxu0 0.0
    %3062 = vmatpush1.msra.mxu0 0.0
    %3063 = vmatprep.subr.mxu0 0.0
    %3064 = vmatpush1.msra.mxu0 0.0
    %3065 = vmatprep.subr.mxu0 0.0
    %3066 = vmatpush1.msra.mxu0 0.0
    %3067 = vmatprep.subr.mxu0 0.0
    %3068 = vmatpush1.msra.mxu0 0.0
    %3069 = vmatprep.subr.mxu0 0.0
    %3070 = vmatpush1.msra.mxu0 0.0
    %3071 = vmatprep.subr.mxu0 0.0
    %3072 = vmatpush1.msra.mxu0 0.0
    %3073 = vmatprep.subr.mxu0 0.0
    %3074 = vmatpush1.msra.mxu0 0.0
    %3075 = vmatprep.subr.mxu0 0.0
    %3076 = vmatpush1.msra.mxu0 0.0
    %3077 = vmatprep.subr.mxu0 0.0
    %3078 = vmatpush1.msra.mxu0 0.0
    %3079 = vmatprep.subr.mxu0 0.0
    %3080 = vmatpush1.msra.mxu0 0.0
    %3081 = vmatprep.subr.mxu0 0.0
    %3082 = vmatpush1.msra.mxu0 0.0
    %3083 = vmatprep.subr.mxu0 0.0
    %3084 = vmatpush1.msra.mxu0 0.0
    %3085 = vmatprep.subr.mxu0 0.0
    %3086 = vmatpush1.msra.mxu0 0.0
    %3087 = vmatprep.subr.mxu0 0.0
    %3088 = vmatpush1.msra.mxu0 0.0
    %3089 = vmatprep.subr.mxu0 0.0
    %3090 = vmatpush1.msra.mxu0 0.0
    %3091 = vmatprep.subr.mxu0 0.0
    %3092 = vmatpush1.msra.mxu0 0.0
    %3093 = vmatprep.subr.mxu0 0.0
    %3094 = vmatpush1.msra.mxu0 0.0
    %3095 = vmatprep.subr.mxu0 0.0
    %3096 = vmatpush1.msra.mxu0 0.0
    %3097 = vmatprep.mubr.f32.mxu0 0.0
    %3098 = vmatmul.mubr.f32.gmra.mrb[0].mxu0 %v2985
    %v3099 = vpop.f32.mrb[0].mxu0
    %v3100 = vadd.f32 0.0, %v3099
    %v3101 = vpop.f32.mrb[0].mxu0
    %3102 = vmatprep.mubr.f32.mxu0 0.0
    %3103 = vmatmul.mubr.f32.gmra.mrb[0].mxu0 %v2987
    %v3104 = vpop.f32.mrb[0].mxu0
    %v3105 = vadd.f32 0.0, %v3104
    %v3106 = vpop.f32.mrb[0].mxu0
    %3107 = vmatprep.mubr.f32.mxu0 0.0
    %3108 = vmatmul.mubr.f32.gmra.mrb[0].mxu0 %v2989
    %v3109 = vpop.f32.mrb[0].mxu0
    %v3110 = vadd.f32 0.0, %v3109
    %v3111 = vpop.f32.mrb[0].mxu0
    %3112 = vmatprep.mubr.f32.mxu0 0.0
    %3113 = vmatmul.mubr.f32.gmra.mrb[0].mxu0 %v2991
    %v3114 = vpop.f32.mrb[0].mxu0
    %v3115 = vadd.f32 0.0, %v3114
    %v3116 = vpop.f32.mrb[0].mxu0
    %3117 = vmatprep.mubr.f32.mxu0 0.0
    %3118 = vmatmul.mubr.f32.gmra.mrb[0].mxu0 %v2993
    %v3119 = vpop.f32.mrb[0].mxu0
    %v3120 = vadd.f32 0.0, %v3119
    %v3121 = vpop.f32.mrb[0].mxu0
    %3122 = vmatprep.mubr.f32.mxu0 0.0
    %3123 = vmatmul.mubr.f32.gmra.mrb[0].mxu0 %v2995
    %v3124 = vpop.f32.mrb[0].mxu0
    %v3125 = vadd.f32 0.0, %v3124
    %v3126 = vpop.f32.mrb[0].mxu0
    %3127 = vmatprep.mubr.f32.mxu0 0.0
    %3128 = vmatmul.mubr.f32.gmra.mrb[0].mxu0 %v2997
    %v3129 = vpop.f32.mrb[0].mxu0
    %v3130 = vadd.f32 0.0, %v3129
    %v3131 = vpop.f32.mrb[0].mxu0
    %3132 = vmatprep.mubr.f32.mxu0 0.0
    %3133 = vmatmul.mubr.f32.gmra.mrb[0].mxu0 %v2999
    %v3134 = vpop.f32.mrb[0].mxu0
    %v3135 = vadd.f32 0.0, %v3134
    %v3136 = vpop.f32.mrb[0].mxu0
    %3137 = vmatprep.mubr.f32.mxu0 0.0
    %3138 = vmatmul.mubr.f32.gmra.mrb[0].mxu0 %v3001
    %v3139 = vpop.f32.mrb[0].mxu0
    %v3140 = vadd.f32 0.0, %v3139
    %v3141 = vpop.f32.mrb[0].mxu0
    %3142 = vmatprep.mubr.f32.mxu0 0.0
    %3143 = vmatmul.mubr.f32.gmra.mrb[0].mxu0 %v3003
    %v3144 = vpop.f32.mrb[0].mxu0
    %v3145 = vadd.f32 0.0, %v3144
    %v3146 = vpop.f32.mrb[0].mxu0
    %3147 = vmatprep.mubr.f32.mxu0 0.0
    %3148 = vmatmul.mubr.f32.gmra.mrb[0].mxu0 %v3005
    %v3149 = vpop.f32.mrb[0].mxu0
    %v3150 = vadd.f32 0.0, %v3149
    %v3151 = vpop.f32.mrb[0].mxu0
    %3152 = vmatprep.mubr.f32.mxu0 0.0
    %3153 = vmatmul.mubr.f32.gmra.mrb[0].mxu0 %v3007
    %v3154 = vpop.f32.mrb[0].mxu0
    %v3155 = vadd.f32 0.0, %v3154
    %v3156 = vpop.f32.mrb[0].mxu0
    %3157 = vmatprep.mubr.f32.mxu0 0.0
    %3158 = vmatmul.mubr.f32.gmra.mrb[0].mxu0 %v3009
    %v3159 = vpop.f32.mrb[0].mxu0
    %v3160 = vadd.f32 0.0, %v3159
    %v3161 = vpop.f32.mrb[0].mxu0
    %3162 = vmatprep.mubr.f32.mxu0 0.0
    %3163 = vmatmul.mubr.f32.gmra.mrb[0].mxu0 %v3011
    %v3164 = vpop.f32.mrb[0].mxu0
    %v3165 = vadd.f32 0.0, %v3164
    %v3166 = vpop.f32.mrb[0].mxu0
    %3167 = vmatprep.mubr.f32.mxu0 0.0
    %3168 = vmatmul.mubr.f32.gmra.mrb[0].mxu0 %v3013
    %v3169 = vpop.f32.mrb[0].mxu0
    %v3170 = vadd.f32 0.0, %v3169
    %v3171 = vpop.f32.mrb[0].mxu0
    %3172 = vmatprep.mubr.f32.mxu0 0.0
    %3173 = vmatmul.mubr.f32.gmra.mrb[0].mxu0 %v3015
    %v3174 = vpop.f32.mrb[0].mxu0
    %v3175 = vadd.f32 0.0, %v3174
    %v3176 = vpop.f32.mrb[0].mxu0
    %3177 = vmatprep.mubr.f32.mxu0 0.0
    %3178 = vmatmul.mubr.f32.gmra.mrb[0].mxu0 %v3017
    %v3179 = vpop.f32.mrb[0].mxu0
    %v3180 = vadd.f32 0.0, %v3179
    %v3181 = vpop.f32.mrb[0].mxu0
    %3182 = vmatprep.mubr.f32.mxu0 0.0
    %3183 = vmatmul.mubr.f32.gmra.mrb[0].mxu0 %v3019
    %v3184 = vpop.f32.mrb[0].mxu0
    %v3185 = vadd.f32 0.0, %v3184
    %v3186 = vpop.f32.mrb[0].mxu0
    %3187 = vmatprep.mubr.f32.mxu0 0.0
    %3188 = vmatmul.mubr.f32.gmra.mrb[0].mxu0 %v3021
    %v3189 = vpop.f32.mrb[0].mxu0
    %v3190 = vadd.f32 0.0, %v3189
    %v3191 = vpop.f32.mrb[0].mxu0
    %3192 = vmatprep.mubr.f32.mxu0 0.0
    %3193 = vmatmul.mubr.f32.gmra.mrb[0].mxu0 %v3023
    %v3194 = vpop.f32.mrb[0].mxu0
    %v3195 = vadd.f32 0.0, %v3194
    %v3196 = vpop.f32.mrb[0].mxu0
    %3197 = vmatprep.mubr.f32.mxu0 0.0
    %3198 = vmatmul.mubr.f32.gmra.mrb[0].mxu0 %v3025
    %v3199 = vpop.f32.mrb[0].mxu0
    %v3200 = vadd.f32 0.0, %v3199
    %v3201 = vpop.f32.mrb[0].mxu0
    %3202 = vmatprep.mubr.f32.mxu0 0.0
    %3203 = vmatmul.mubr.f32.gmra.mrb[0].mxu0 %v3027
    %v3204 = vpop.f32.mrb[0].mxu0
    %v3205 = vadd.f32 0.0, %v3204
    %v3206 = vpop.f32.mrb[0].mxu0
    %3207 = vmatprep.mubr.f32.mxu0 0.0
    %3208 = vmatmul.mubr.f32.gmra.mrb[0].mxu0 %v3029
    %v3209 = vpop.f32.mrb[0].mxu0
    %v3210 = vadd.f32 0.0, %v3209
    %v3211 = vpop.f32.mrb[0].mxu0
    %3212 = vmatprep.mubr.f32.mxu0 0.0
    %3213 = vmatmul.mubr.f32.gmra.mrb[0].mxu0 %v3031
    %v3214 = vpop.f32.mrb[0].mxu0
    %v3215 = vadd.f32 0.0, %v3214
    %v3216 = vpop.f32.mrb[0].mxu0
    %3217 = vdwg.mxu0
    %v3218 = vsel %vm146, %v2880, 0
    %v3220 = vsel %vm146, %v2881, 0
    %v3222 = vsel %vm146, %v2882, 0
    %v3224 = vsel %vm146, %v2883, 0
    %v3226 = vsel %vm146, %v2884, 0
    %v3228 = vsel %vm146, %v2885, 0
    %v3230 = vsel %vm146, %v2886, 0
    %v3232 = vsel %vm146, %v2887, 0
    %v3234 = vsel %vm146, %v2888, 0
    %v3236 = vsel %vm146, %v2889, 0
    %v3238 = vsel %vm146, %v2890, 0
    %v3240 = vsel %vm146, %v2891, 0
    %v3242 = vsel %vm146, %v2892, 0
    %v3244 = vsel %vm146, %v2893, 0
    %v3246 = vsel %vm146, %v2894, 0
    %v3248 = vsel %vm146, %v2895, 0
    %v3250 = vsel %vm146, %v2896, 0
    %v3252 = vsel %vm146, %v2897, 0
    %v3254 = vsel %vm146, %v2898, 0
    %v3256 = vsel %vm146, %v2899, 0
    %v3258 = vsel %vm146, %v2900, 0
    %v3260 = vsel %vm146, %v2901, 0
    %v3262 = vsel %vm146, %v2902, 0
    %v3264 = vsel %vm146, %v2903, 0
    %3266 = vmatprep.subr.mxu0 0.0
    %3267 = vmatpush1.msra.mxu0 %v2907
    %3268 = vmatprep.subr.mxu0 0.0
    %3269 = vmatpush1.msra.mxu0 %v2908
    %3270 = vmatprep.subr.mxu0 0.0
    %3271 = vmatpush1.msra.mxu0 0.0
    %3272 = vmatprep.subr.mxu0 0.0
    %3273 = vmatpush1.msra.mxu0 0.0
    %3274 = vmatprep.subr.mxu0 0.0
    %3275 = vmatpush1.msra.mxu0 0.0
    %3276 = vmatprep.subr.mxu0 0.0
    %3277 = vmatpush1.msra.mxu0 0.0
    %3278 = vmatprep.subr.mxu0 0.0
    %3279 = vmatpush1.msra.mxu0 0.0
    %3280 = vmatprep.subr.mxu0 0.0
    %3281 = vmatpush1.msra.mxu0 0.0
    %3282 = vmatprep.subr.mxu0 0.0
    %3283 = vmatpush1.msra.mxu0 0.0
    %3284 = vmatprep.subr.mxu0 0.0
    %3285 = vmatpush1.msra.mxu0 0.0
    %3286 = vmatprep.subr.mxu0 0.0
    %3287 = vmatpush1.msra.mxu0 0.0
    %3288 = vmatprep.subr.mxu0 0.0
    %3289 = vmatpush1.msra.mxu0 0.0
    %3290 = vmatprep.subr.mxu0 0.0
    %3291 = vmatpush1.msra.mxu0 0.0
    %3292 = vmatprep.subr.mxu0 0.0
    %3293 = vmatpush1.msra.mxu0 0.0
    %3294 = vmatprep.subr.mxu0 0.0
    %3295 = vmatpush1.msra.mxu0 0.0
    %3296 = vmatprep.subr.mxu0 0.0
    %3297 = vmatpush1.msra.mxu0 0.0
    %3298 = vmatprep.subr.mxu0 0.0
    %3299 = vmatpush1.msra.mxu0 0.0
    %3300 = vmatprep.subr.mxu0 0.0
    %3301 = vmatpush1.msra.mxu0 0.0
    %3302 = vmatprep.subr.mxu0 0.0
    %3303 = vmatpush1.msra.mxu0 0.0
    %3304 = vmatprep.subr.mxu0 0.0
    %3305 = vmatpush1.msra.mxu0 0.0
    %3306 = vmatprep.subr.mxu0 0.0
    %3307 = vmatpush1.msra.mxu0 0.0
    %3308 = vmatprep.subr.mxu0 0.0
    %3309 = vmatpush1.msra.mxu0 0.0
    %3310 = vmatprep.subr.mxu0 0.0
    %3311 = vmatpush1.msra.mxu0 0.0
    %3312 = vmatprep.subr.mxu0 0.0
    %3313 = vmatpush1.msra.mxu0 0.0
    %3314 = vmatprep.subr.mxu0 0.0
    %3315 = vmatpush1.msra.mxu0 0.0
    %3316 = vmatprep.subr.mxu0 0.0
    %3317 = vmatpush1.msra.mxu0 0.0
    %3318 = vmatprep.subr.mxu0 0.0
    %3319 = vmatpush1.msra.mxu0 0.0
    %3320 = vmatprep.subr.mxu0 0.0
    %3321 = vmatpush1.msra.mxu0 0.0
    %3322 = vmatprep.subr.mxu0 0.0
    %3323 = vmatpush1.msra.mxu0 0.0
    %3324 = vmatprep.subr.mxu0 0.0
    %3325 = vmatpush1.msra.mxu0 0.0
    %3326 = vmatprep.subr.mxu0 0.0
    %3327 = vmatpush1.msra.mxu0 0.0
    %3328 = vmatprep.subr.mxu0 0.0
    %3329 = vmatpush1.msra.mxu0 0.0
    %3330 = vmatprep.mubr.f32.mxu0 0.0
    %3331 = vmatmul.mubr.f32.gmra.mrb[0].mxu0 %v3218
    %v3332 = vpop.f32.mrb[0].mxu0
    %v3333 = vadd.f32 %v3100, %v3332
    %v3334 = vpop.f32.mrb[0].mxu0
    %3335 = vmatprep.mubr.f32.mxu0 0.0
    %3336 = vmatmul.mubr.f32.gmra.mrb[0].mxu0 %v3220
    %v3337 = vpop.f32.mrb[0].mxu0
    %v3338 = vadd.f32 %v3105, %v3337
    %v3339 = vpop.f32.mrb[0].mxu0
    %3340 = vmatprep.mubr.f32.mxu0 0.0
    %3341 = vmatmul.mubr.f32.gmra.mrb[0].mxu0 %v3222
    %v3342 = vpop.f32.mrb[0].mxu0
    %v3343 = vadd.f32 %v3110, %v3342
    %v3344 = vpop.f32.mrb[0].mxu0
    %3345 = vmatprep.mubr.f32.mxu0 0.0
    %3346 = vmatmul.mubr.f32.gmra.mrb[0].mxu0 %v3224
    %v3347 = vpop.f32.mrb[0].mxu0
    %v3348 = vadd.f32 %v3115, %v3347
    %v3349 = vpop.f32.mrb[0].mxu0
    %3350 = vmatprep.mubr.f32.mxu0 0.0
    %3351 = vmatmul.mubr.f32.gmra.mrb[0].mxu0 %v3226
    %v3352 = vpop.f32.mrb[0].mxu0
    %v3353 = vadd.f32 %v3120, %v3352
    %v3354 = vpop.f32.mrb[0].mxu0
    %3355 = vmatprep.mubr.f32.mxu0 0.0
    %3356 = vmatmul.mubr.f32.gmra.mrb[0].mxu0 %v3228
    %v3357 = vpop.f32.mrb[0].mxu0
    %v3358 = vadd.f32 %v3125, %v3357
    %v3359 = vpop.f32.mrb[0].mxu0
    %3360 = vmatprep.mubr.f32.mxu0 0.0
    %3361 = vmatmul.mubr.f32.gmra.mrb[0].mxu0 %v3230
    %v3362 = vpop.f32.mrb[0].mxu0
    %v3363 = vadd.f32 %v3130, %v3362
    %v3364 = vpop.f32.mrb[0].mxu0
    %3365 = vmatprep.mubr.f32.mxu0 0.0
    %3366 = vmatmul.mubr.f32.gmra.mrb[0].mxu0 %v3232
    %v3367 = vpop.f32.mrb[0].mxu0
    %v3368 = vadd.f32 %v3135, %v3367
    %v3369 = vpop.f32.mrb[0].mxu0
    %3370 = vmatprep.mubr.f32.mxu0 0.0
    %3371 = vmatmul.mubr.f32.gmra.mrb[0].mxu0 %v3234
    %v3372 = vpop.f32.mrb[0].mxu0
    %v3373 = vadd.f32 %v3140, %v3372
    %v3374 = vpop.f32.mrb[0].mxu0
    %3375 = vmatprep.mubr.f32.mxu0 0.0
    %3376 = vmatmul.mubr.f32.gmra.mrb[0].mxu0 %v3236
    %v3377 = vpop.f32.mrb[0].mxu0
    %v3378 = vadd.f32 %v3145, %v3377
    %v3379 = vpop.f32.mrb[0].mxu0
    %3380 = vmatprep.mubr.f32.mxu0 0.0
    %3381 = vmatmul.mubr.f32.gmra.mrb[0].mxu0 %v3238
    %v3382 = vpop.f32.mrb[0].mxu0
    %v3383 = vadd.f32 %v3150, %v3382
    %v3384 = vpop.f32.mrb[0].mxu0
    %3385 = vmatprep.mubr.f32.mxu0 0.0
    %3386 = vmatmul.mubr.f32.gmra.mrb[0].mxu0 %v3240
    %v3387 = vpop.f32.mrb[0].mxu0
    %v3388 = vadd.f32 %v3155, %v3387
    %v3389 = vpop.f32.mrb[0].mxu0
    %3390 = vmatprep.mubr.f32.mxu0 0.0
    %3391 = vmatmul.mubr.f32.gmra.mrb[0].mxu0 %v3242
    %v3392 = vpop.f32.mrb[0].mxu0
    %v3393 = vadd.f32 %v3160, %v3392
    %v3394 = vpop.f32.mrb[0].mxu0
    %3395 = vmatprep.mubr.f32.mxu0 0.0
    %3396 = vmatmul.mubr.f32.gmra.mrb[0].mxu0 %v3244
    %v3397 = vpop.f32.mrb[0].mxu0
    %v3398 = vadd.f32 %v3165, %v3397
    %v3399 = vpop.f32.mrb[0].mxu0
    %3400 = vmatprep.mubr.f32.mxu0 0.0
    %3401 = vmatmul.mubr.f32.gmra.mrb[0].mxu0 %v3246
    %v3402 = vpop.f32.mrb[0].mxu0
    %v3403 = vadd.f32 %v3170, %v3402
    %v3404 = vpop.f32.mrb[0].mxu0
    %3405 = vmatprep.mubr.f32.mxu0 0.0
    %3406 = vmatmul.mubr.f32.gmra.mrb[0].mxu0 %v3248
    %v3407 = vpop.f32.mrb[0].mxu0
    %v3408 = vadd.f32 %v3175, %v3407
    %v3409 = vpop.f32.mrb[0].mxu0
    %3410 = vmatprep.mubr.f32.mxu0 0.0
    %3411 = vmatmul.mubr.f32.gmra.mrb[0].mxu0 %v3250
    %v3412 = vpop.f32.mrb[0].mxu0
    %v3413 = vadd.f32 %v3180, %v3412
    %v3414 = vpop.f32.mrb[0].mxu0
    %3415 = vmatprep.mubr.f32.mxu0 0.0
    %3416 = vmatmul.mubr.f32.gmra.mrb[0].mxu0 %v3252
    %v3417 = vpop.f32.mrb[0].mxu0
    %v3418 = vadd.f32 %v3185, %v3417
    %v3419 = vpop.f32.mrb[0].mxu0
    %3420 = vmatprep.mubr.f32.mxu0 0.0
    %3421 = vmatmul.mubr.f32.gmra.mrb[0].mxu0 %v3254
    %v3422 = vpop.f32.mrb[0].mxu0
    %v3423 = vadd.f32 %v3190, %v3422
    %v3424 = vpop.f32.mrb[0].mxu0
    %3425 = vmatprep.mubr.f32.mxu0 0.0
    %3426 = vmatmul.mubr.f32.gmra.mrb[0].mxu0 %v3256
    %v3427 = vpop.f32.mrb[0].mxu0
    %v3428 = vadd.f32 %v3195, %v3427
    %v3429 = vpop.f32.mrb[0].mxu0
    %3430 = vmatprep.mubr.f32.mxu0 0.0
    %3431 = vmatmul.mubr.f32.gmra.mrb[0].mxu0 %v3258
    %v3432 = vpop.f32.mrb[0].mxu0
    %v3433 = vadd.f32 %v3200, %v3432
    %v3434 = vpop.f32.mrb[0].mxu0
    %3435 = vmatprep.mubr.f32.mxu0 0.0
    %3436 = vmatmul.mubr.f32.gmra.mrb[0].mxu0 %v3260
    %v3437 = vpop.f32.mrb[0].mxu0
    %v3438 = vadd.f32 %v3205, %v3437
    %v3439 = vpop.f32.mrb[0].mxu0
    %3440 = vmatprep.mubr.f32.mxu0 0.0
    %3441 = vmatmul.mubr.f32.gmra.mrb[0].mxu0 %v3262
    %v3442 = vpop.f32.mrb[0].mxu0
    %v3443 = vadd.f32 %v3210, %v3442
    %v3444 = vpop.f32.mrb[0].mxu0
    %3445 = vmatprep.mubr.f32.mxu0 0.0
    %3446 = vmatmul.mubr.f32.gmra.mrb[0].mxu0 %v3264
    %v3447 = vpop.f32.mrb[0].mxu0
    %v3448 = vadd.f32 %v3215, %v3447
    %v3449 = vpop.f32.mrb[0].mxu0
    %3450 = vdwg.mxu0
    %v3451 = vld [vmem:[%s1 + $0xb0] sm:$0xff]
    %v3452 = vld [vmem:[%s1 + $0xb8] sm:$0xff]
    %v3453 = vrot.slane %v2880, 2
    %v3454 = vrot.slane %v2881, 2
    %v3455 = vsel %vm657, %v3453, %v3454
    %v3456 = vrot.slane %v2882, 2
    %v3457 = vsel %vm657, %v3454, %v3456
    %v3458 = vrot.slane %v2883, 2
    %v3459 = vsel %vm657, %v3456, %v3458
    %v3460 = vrot.slane %v2884, 2
    %v3461 = vsel %vm657, %v3458, %v3460
    %v3462 = vrot.slane %v2885, 2
    %v3463 = vsel %vm657, %v3460, %v3462
    %v3464 = vrot.slane %v2886, 2
    %v3465 = vsel %vm657, %v3462, %v3464
    %v3466 = vrot.slane %v2887, 2
    %v3467 = vsel %vm657, %v3464, %v3466
    %v3468 = vrot.slane %v2888, 2
    %v3469 = vsel %vm657, %v3466, %v3468
    %v3470 = vrot.slane %v2889, 2
    %v3471 = vsel %vm657, %v3468, %v3470
    %v3472 = vrot.slane %v2890, 2
    %v3473 = vsel %vm657, %v3470, %v3472
    %v3474 = vrot.slane %v2891, 2
    %v3475 = vsel %vm657, %v3472, %v3474
    %v3476 = vrot.slane %v2892, 2
    %v3477 = vsel %vm657, %v3474, %v3476
    %v3478 = vrot.slane %v2893, 2
    %v3479 = vsel %vm657, %v3476, %v3478
    %v3480 = vrot.slane %v2894, 2
    %v3481 = vsel %vm657, %v3478, %v3480
    %v3482 = vrot.slane %v2895, 2
    %v3483 = vsel %vm657, %v3480, %v3482
    %v3484 = vrot.slane %v2896, 2
    %v3485 = vsel %vm657, %v3482, %v3484
    %v3486 = vrot.slane %v2897, 2
    %v3487 = vsel %vm657, %v3484, %v3486
    %v3488 = vrot.slane %v2898, 2
    %v3489 = vsel %vm657, %v3486, %v3488
    %v3490 = vrot.slane %v2899, 2
    %v3491 = vsel %vm657, %v3488, %v3490
    %v3492 = vrot.slane %v2900, 2
    %v3493 = vsel %vm657, %v3490, %v3492
    %v3494 = vrot.slane %v2901, 2
    %v3495 = vsel %vm657, %v3492, %v3494
    %v3496 = vrot.slane %v2902, 2
    %v3497 = vsel %vm657, %v3494, %v3496
    %v3498 = vrot.slane %v2903, 2
    %v3499 = vsel %vm657, %v3496, %v3498
    %v3500 = vrot.slane %v2904, 2
    %v3501 = vsel %vm657, %v3498, %v3500
    %v3502 = vsel %vm146, %v3455, 0
    %v3504 = vsel %vm146, %v3457, 0
    %v3506 = vsel %vm146, %v3459, 0
    %v3508 = vsel %vm146, %v3461, 0
    %v3510 = vsel %vm146, %v3463, 0
    %v3512 = vsel %vm146, %v3465, 0
    %v3514 = vsel %vm146, %v3467, 0
    %v3516 = vsel %vm146, %v3469, 0
    %v3518 = vsel %vm146, %v3471, 0
    %v3520 = vsel %vm146, %v3473, 0
    %v3522 = vsel %vm146, %v3475, 0
    %v3524 = vsel %vm146, %v3477, 0
    %v3526 = vsel %vm146, %v3479, 0
    %v3528 = vsel %vm146, %v3481, 0
    %v3530 = vsel %vm146, %v3483, 0
    %v3532 = vsel %vm146, %v3485, 0
    %v3534 = vsel %vm146, %v3487, 0
    %v3536 = vsel %vm146, %v3489, 0
    %v3538 = vsel %vm146, %v3491, 0
    %v3540 = vsel %vm146, %v3493, 0
    %v3542 = vsel %vm146, %v3495, 0
    %v3544 = vsel %vm146, %v3497, 0
    %v3546 = vsel %vm146, %v3499, 0
    %v3548 = vsel %vm146, %v3501, 0
    %3550 = vmatprep.subr.mxu0 0.0
    %3551 = vmatpush1.msra.mxu0 %v3451
    %3552 = vmatprep.subr.mxu0 0.0
    %3553 = vmatpush1.msra.mxu0 %v3452
    %3554 = vmatprep.subr.mxu0 0.0
    %3555 = vmatpush1.msra.mxu0 0.0
    %3556 = vmatprep.subr.mxu0 0.0
    %3557 = vmatpush1.msra.mxu0 0.0
    %3558 = vmatprep.subr.mxu0 0.0
    %3559 = vmatpush1.msra.mxu0 0.0
    %3560 = vmatprep.subr.mxu0 0.0
    %3561 = vmatpush1.msra.mxu0 0.0
    %3562 = vmatprep.subr.mxu0 0.0
    %3563 = vmatpush1.msra.mxu0 0.0
    %3564 = vmatprep.subr.mxu0 0.0
    %3565 = vmatpush1.msra.mxu0 0.0
    %3566 = vmatprep.subr.mxu0 0.0
    %3567 = vmatpush1.msra.mxu0 0.0
    %3568 = vmatprep.subr.mxu0 0.0
    %3569 = vmatpush1.msra.mxu0 0.0
    %3570 = vmatprep.subr.mxu0 0.0
    %3571 = vmatpush1.msra.mxu0 0.0
    %3572 = vmatprep.subr.mxu0 0.0
    %3573 = vmatpush1.msra.mxu0 0.0
    %3574 = vmatprep.subr.mxu0 0.0
    %3575 = vmatpush1.msra.mxu0 0.0
    %3576 = vmatprep.subr.mxu0 0.0
    %3577 = vmatpush1.msra.mxu0 0.0
    %3578 = vmatprep.subr.mxu0 0.0
    %3579 = vmatpush1.msra.mxu0 0.0
    %3580 = vmatprep.subr.mxu0 0.0
    %3581 = vmatpush1.msra.mxu0 0.0
    %3582 = vmatprep.subr.mxu0 0.0
    %3583 = vmatpush1.msra.mxu0 0.0
    %3584 = vmatprep.subr.mxu0 0.0
    %3585 = vmatpush1.msra.mxu0 0.0
    %3586 = vmatprep.subr.mxu0 0.0
    %3587 = vmatpush1.msra.mxu0 0.0
    %3588 = vmatprep.subr.mxu0 0.0
    %3589 = vmatpush1.msra.mxu0 0.0
    %3590 = vmatprep.subr.mxu0 0.0
    %3591 = vmatpush1.msra.mxu0 0.0
    %3592 = vmatprep.subr.mxu0 0.0
    %3593 = vmatpush1.msra.mxu0 0.0
    %3594 = vmatprep.subr.mxu0 0.0
    %3595 = vmatpush1.msra.mxu0 0.0
    %3596 = vmatprep.subr.mxu0 0.0
    %3597 = vmatpush1.msra.mxu0 0.0
    %3598 = vmatprep.subr.mxu0 0.0
    %3599 = vmatpush1.msra.mxu0 0.0
    %3600 = vmatprep.subr.mxu0 0.0
    %3601 = vmatpush1.msra.mxu0 0.0
    %3602 = vmatprep.subr.mxu0 0.0
    %3603 = vmatpush1.msra.mxu0 0.0
    %3604 = vmatprep.subr.mxu0 0.0
    %3605 = vmatpush1.msra.mxu0 0.0
    %3606 = vmatprep.subr.mxu0 0.0
    %3607 = vmatpush1.msra.mxu0 0.0
    %3608 = vmatprep.subr.mxu0 0.0
    %3609 = vmatpush1.msra.mxu0 0.0
    %3610 = vmatprep.subr.mxu0 0.0
    %3611 = vmatpush1.msra.mxu0 0.0
    %3612 = vmatprep.subr.mxu0 0.0
    %3613 = vmatpush1.msra.mxu0 0.0
    %3614 = vmatprep.mubr.f32.mxu0 0.0
    %3615 = vmatmul.mubr.f32.gmra.mrb[0].mxu0 %v3502
    %v3616 = vpop.f32.mrb[0].mxu0
    %v3617 = vadd.f32 0.0, %v3616
    %v3618 = vpop.f32.mrb[0].mxu0
    %3619 = vmatprep.mubr.f32.mxu0 0.0
    %3620 = vmatmul.mubr.f32.gmra.mrb[0].mxu0 %v3504
    %v3621 = vpop.f32.mrb[0].mxu0
    %v3622 = vadd.f32 0.0, %v3621
    %v3623 = vpop.f32.mrb[0].mxu0
    %3624 = vmatprep.mubr.f32.mxu0 0.0
    %3625 = vmatmul.mubr.f32.gmra.mrb[0].mxu0 %v3506
    %v3626 = vpop.f32.mrb[0].mxu0
    %v3627 = vadd.f32 0.0, %v3626
    %v3628 = vpop.f32.mrb[0].mxu0
    %3629 = vmatprep.mubr.f32.mxu0 0.0
    %3630 = vmatmul.mubr.f32.gmra.mrb[0].mxu0 %v3508
    %v3631 = vpop.f32.mrb[0].mxu0
    %v3632 = vadd.f32 0.0, %v3631
    %v3633 = vpop.f32.mrb[0].mxu0
    %3634 = vmatprep.mubr.f32.mxu0 0.0
    %3635 = vmatmul.mubr.f32.gmra.mrb[0].mxu0 %v3510
    %v3636 = vpop.f32.mrb[0].mxu0
    %v3637 = vadd.f32 0.0, %v3636
    %v3638 = vpop.f32.mrb[0].mxu0
    %3639 = vmatprep.mubr.f32.mxu0 0.0
    %3640 = vmatmul.mubr.f32.gmra.mrb[0].mxu0 %v3512
    %v3641 = vpop.f32.mrb[0].mxu0
    %v3642 = vadd.f32 0.0, %v3641
    %v3643 = vpop.f32.mrb[0].mxu0
    %3644 = vmatprep.mubr.f32.mxu0 0.0
    %3645 = vmatmul.mubr.f32.gmra.mrb[0].mxu0 %v3514
    %v3646 = vpop.f32.mrb[0].mxu0
    %v3647 = vadd.f32 0.0, %v3646
    %v3648 = vpop.f32.mrb[0].mxu0
    %3649 = vmatprep.mubr.f32.mxu0 0.0
    %3650 = vmatmul.mubr.f32.gmra.mrb[0].mxu0 %v3516
    %v3651 = vpop.f32.mrb[0].mxu0
    %v3652 = vadd.f32 0.0, %v3651
    %v3653 = vpop.f32.mrb[0].mxu0
    %3654 = vmatprep.mubr.f32.mxu0 0.0
    %3655 = vmatmul.mubr.f32.gmra.mrb[0].mxu0 %v3518
    %v3656 = vpop.f32.mrb[0].mxu0
    %v3657 = vadd.f32 0.0, %v3656
    %v3658 = vpop.f32.mrb[0].mxu0
    %3659 = vmatprep.mubr.f32.mxu0 0.0
    %3660 = vmatmul.mubr.f32.gmra.mrb[0].mxu0 %v3520
    %v3661 = vpop.f32.mrb[0].mxu0
    %v3662 = vadd.f32 0.0, %v3661
    %v3663 = vpop.f32.mrb[0].mxu0
    %3664 = vmatprep.mubr.f32.mxu0 0.0
    %3665 = vmatmul.mubr.f32.gmra.mrb[0].mxu0 %v3522
    %v3666 = vpop.f32.mrb[0].mxu0
    %v3667 = vadd.f32 0.0, %v3666
    %v3668 = vpop.f32.mrb[0].mxu0
    %3669 = vmatprep.mubr.f32.mxu0 0.0
    %3670 = vmatmul.mubr.f32.gmra.mrb[0].mxu0 %v3524
    %v3671 = vpop.f32.mrb[0].mxu0
    %v3672 = vadd.f32 0.0, %v3671
    %v3673 = vpop.f32.mrb[0].mxu0
    %3674 = vmatprep.mubr.f32.mxu0 0.0
    %3675 = vmatmul.mubr.f32.gmra.mrb[0].mxu0 %v3526
    %v3676 = vpop.f32.mrb[0].mxu0
    %v3677 = vadd.f32 0.0, %v3676
    %v3678 = vpop.f32.mrb[0].mxu0
    %3679 = vmatprep.mubr.f32.mxu0 0.0
    %3680 = vmatmul.mubr.f32.gmra.mrb[0].mxu0 %v3528
    %v3681 = vpop.f32.mrb[0].mxu0
    %v3682 = vadd.f32 0.0, %v3681
    %v3683 = vpop.f32.mrb[0].mxu0
    %3684 = vmatprep.mubr.f32.mxu0 0.0
    %3685 = vmatmul.mubr.f32.gmra.mrb[0].mxu0 %v3530
    %v3686 = vpop.f32.mrb[0].mxu0
    %v3687 = vadd.f32 0.0, %v3686
    %v3688 = vpop.f32.mrb[0].mxu0
    %3689 = vmatprep.mubr.f32.mxu0 0.0
    %3690 = vmatmul.mubr.f32.gmra.mrb[0].mxu0 %v3532
    %v3691 = vpop.f32.mrb[0].mxu0
    %v3692 = vadd.f32 0.0, %v3691
    %v3693 = vpop.f32.mrb[0].mxu0
    %3694 = vmatprep.mubr.f32.mxu0 0.0
    %3695 = vmatmul.mubr.f32.gmra.mrb[0].mxu0 %v3534
    %v3696 = vpop.f32.mrb[0].mxu0
    %v3697 = vadd.f32 0.0, %v3696
    %v3698 = vpop.f32.mrb[0].mxu0
    %3699 = vmatprep.mubr.f32.mxu0 0.0
    %3700 = vmatmul.mubr.f32.gmra.mrb[0].mxu0 %v3536
    %v3701 = vpop.f32.mrb[0].mxu0
    %v3702 = vadd.f32 0.0, %v3701
    %v3703 = vpop.f32.mrb[0].mxu0
    %3704 = vmatprep.mubr.f32.mxu0 0.0
    %3705 = vmatmul.mubr.f32.gmra.mrb[0].mxu0 %v3538
    %v3706 = vpop.f32.mrb[0].mxu0
    %v3707 = vadd.f32 0.0, %v3706
    %v3708 = vpop.f32.mrb[0].mxu0
    %3709 = vmatprep.mubr.f32.mxu0 0.0
    %3710 = vmatmul.mubr.f32.gmra.mrb[0].mxu0 %v3540
    %v3711 = vpop.f32.mrb[0].mxu0
    %v3712 = vadd.f32 0.0, %v3711
    %v3713 = vpop.f32.mrb[0].mxu0
    %3714 = vmatprep.mubr.f32.mxu0 0.0
    %3715 = vmatmul.mubr.f32.gmra.mrb[0].mxu0 %v3542
    %v3716 = vpop.f32.mrb[0].mxu0
    %v3717 = vadd.f32 0.0, %v3716
    %v3718 = vpop.f32.mrb[0].mxu0
    %3719 = vmatprep.mubr.f32.mxu0 0.0
    %3720 = vmatmul.mubr.f32.gmra.mrb[0].mxu0 %v3544
    %v3721 = vpop.f32.mrb[0].mxu0
    %v3722 = vadd.f32 0.0, %v3721
    %v3723 = vpop.f32.mrb[0].mxu0
    %3724 = vmatprep.mubr.f32.mxu0 0.0
    %3725 = vmatmul.mubr.f32.gmra.mrb[0].mxu0 %v3546
    %v3726 = vpop.f32.mrb[0].mxu0
    %v3727 = vadd.f32 0.0, %v3726
    %v3728 = vpop.f32.mrb[0].mxu0
    %3729 = vmatprep.mubr.f32.mxu0 0.0
    %3730 = vmatmul.mubr.f32.gmra.mrb[0].mxu0 %v3548
    %v3731 = vpop.f32.mrb[0].mxu0
    %v3732 = vadd.f32 0.0, %v3731
    %v3733 = vpop.f32.mrb[0].mxu0
    %3734 = vdwg.mxu0
    %v3735 = vadd.f32 %v3333, %v3617
    %v3736 = vadd.f32 %v3338, %v3622
    %v3737 = vadd.f32 %v3343, %v3627
    %v3738 = vadd.f32 %v3348, %v3632
    %v3739 = vadd.f32 %v3353, %v3637
    %v3740 = vadd.f32 %v3358, %v3642
    %v3741 = vadd.f32 %v3363, %v3647
    %v3742 = vadd.f32 %v3368, %v3652
    %v3743 = vadd.f32 %v3373, %v3657
    %v3744 = vadd.f32 %v3378, %v3662
    %v3745 = vadd.f32 %v3383, %v3667
    %v3746 = vadd.f32 %v3388, %v3672
    %v3747 = vadd.f32 %v3393, %v3677
    %v3748 = vadd.f32 %v3398, %v3682
    %v3749 = vadd.f32 %v3403, %v3687
    %v3750 = vadd.f32 %v3408, %v3692
    %v3751 = vadd.f32 %v3413, %v3697
    %v3752 = vadd.f32 %v3418, %v3702
    %v3753 = vadd.f32 %v3423, %v3707
    %v3754 = vadd.f32 %v3428, %v3712
    %v3755 = vadd.f32 %v3433, %v3717
    %v3756 = vadd.f32 %v3438, %v3722
    %v3757 = vadd.f32 %v3443, %v3727
    %v3758 = vadd.f32 %v3448, %v3732
    %v3759 = vld [vmem:[%s1 + $0xc0] sm:$0xff]
    %v3760 = vld [vmem:[%s1 + $0xc8] sm:$0xff]
    %v3762 = vrot.slane %v2905, 1
    %v3763 = vsel %vm90, %v2983, %v3762
    %v3764 = vsel %vm146, %v3763, 0
    %3766 = vmatprep.subr.mxu0 0.0
    %3767 = vmatpush1.msra.mxu0 %v3759
    %3768 = vmatprep.subr.mxu0 0.0
    %3769 = vmatpush1.msra.mxu0 %v3760
    %3770 = vmatprep.subr.mxu0 0.0
    %3771 = vmatpush1.msra.mxu0 0.0
    %3772 = vmatprep.subr.mxu0 0.0
    %3773 = vmatpush1.msra.mxu0 0.0
    %3774 = vmatprep.subr.mxu0 0.0
    %3775 = vmatpush1.msra.mxu0 0.0
    %3776 = vmatprep.subr.mxu0 0.0
    %3777 = vmatpush1.msra.mxu0 0.0
    %3778 = vmatprep.subr.mxu0 0.0
    %3779 = vmatpush1.msra.mxu0 0.0
    %3780 = vmatprep.subr.mxu0 0.0
    %3781 = vmatpush1.msra.mxu0 0.0
    %3782 = vmatprep.subr.mxu0 0.0
    %3783 = vmatpush1.msra.mxu0 0.0
    %3784 = vmatprep.subr.mxu0 0.0
    %3785 = vmatpush1.msra.mxu0 0.0
    %3786 = vmatprep.subr.mxu0 0.0
    %3787 = vmatpush1.msra.mxu0 0.0
    %3788 = vmatprep.subr.mxu0 0.0
    %3789 = vmatpush1.msra.mxu0 0.0
    %3790 = vmatprep.subr.mxu0 0.0
    %3791 = vmatpush1.msra.mxu0 0.0
    %3792 = vmatprep.subr.mxu0 0.0
    %3793 = vmatpush1.msra.mxu0 0.0
    %3794 = vmatprep.subr.mxu0 0.0
    %3795 = vmatpush1.msra.mxu0 0.0
    %3796 = vmatprep.subr.mxu0 0.0
    %3797 = vmatpush1.msra.mxu0 0.0
    %3798 = vmatprep.subr.mxu0 0.0
    %3799 = vmatpush1.msra.mxu0 0.0
    %3800 = vmatprep.subr.mxu0 0.0
    %3801 = vmatpush1.msra.mxu0 0.0
    %3802 = vmatprep.subr.mxu0 0.0
    %3803 = vmatpush1.msra.mxu0 0.0
    %3804 = vmatprep.subr.mxu0 0.0
    %3805 = vmatpush1.msra.mxu0 0.0
    %3806 = vmatprep.subr.mxu0 0.0
    %3807 = vmatpush1.msra.mxu0 0.0
    %3808 = vmatprep.subr.mxu0 0.0
    %3809 = vmatpush1.msra.mxu0 0.0
    %3810 = vmatprep.subr.mxu0 0.0
    %3811 = vmatpush1.msra.mxu0 0.0
    %3812 = vmatprep.subr.mxu0 0.0
    %3813 = vmatpush1.msra.mxu0 0.0
    %3814 = vmatprep.subr.mxu0 0.0
    %3815 = vmatpush1.msra.mxu0 0.0
    %3816 = vmatprep.subr.mxu0 0.0
    %3817 = vmatpush1.msra.mxu0 0.0
    %3818 = vmatprep.subr.mxu0 0.0
    %3819 = vmatpush1.msra.mxu0 0.0
    %3820 = vmatprep.subr.mxu0 0.0
    %3821 = vmatpush1.msra.mxu0 0.0
    %3822 = vmatprep.subr.mxu0 0.0
    %3823 = vmatpush1.msra.mxu0 0.0
    %3824 = vmatprep.subr.mxu0 0.0
    %3825 = vmatpush1.msra.mxu0 0.0
    %3826 = vmatprep.subr.mxu0 0.0
    %3827 = vmatpush1.msra.mxu0 0.0
    %3828 = vmatprep.subr.mxu0 0.0
    %3829 = vmatpush1.msra.mxu0 0.0
    %3830 = vmatprep.mubr.f32.mxu0 0.0
    %3831 = vmatmul.mubr.f32.gmra.mrb[0].mxu0 %v2987
    %v3832 = vpop.f32.mrb[0].mxu0
    %v3833 = vadd.f32 0.0, %v3832
    %v3834 = vpop.f32.mrb[0].mxu0
    %3835 = vmatprep.mubr.f32.mxu0 0.0
    %3836 = vmatmul.mubr.f32.gmra.mrb[0].mxu0 %v2989
    %v3837 = vpop.f32.mrb[0].mxu0
    %v3838 = vadd.f32 0.0, %v3837
    %v3839 = vpop.f32.mrb[0].mxu0
    %3840 = vmatprep.mubr.f32.mxu0 0.0
    %3841 = vmatmul.mubr.f32.gmra.mrb[0].mxu0 %v2991
    %v3842 = vpop.f32.mrb[0].mxu0
    %v3843 = vadd.f32 0.0, %v3842
    %v3844 = vpop.f32.mrb[0].mxu0
    %3845 = vmatprep.mubr.f32.mxu0 0.0
    %3846 = vmatmul.mubr.f32.gmra.mrb[0].mxu0 %v2993
    %v3847 = vpop.f32.mrb[0].mxu0
    %v3848 = vadd.f32 0.0, %v3847
    %v3849 = vpop.f32.mrb[0].mxu0
    %3850 = vmatprep.mubr.f32.mxu0 0.0
    %3851 = vmatmul.mubr.f32.gmra.mrb[0].mxu0 %v2995
    %v3852 = vpop.f32.mrb[0].mxu0
    %v3853 = vadd.f32 0.0, %v3852
    %v3854 = vpop.f32.mrb[0].mxu0
    %3855 = vmatprep.mubr.f32.mxu0 0.0
    %3856 = vmatmul.mubr.f32.gmra.mrb[0].mxu0 %v2997
    %v3857 = vpop.f32.mrb[0].mxu0
    %v3858 = vadd.f32 0.0, %v3857
    %v3859 = vpop.f32.mrb[0].mxu0
    %3860 = vmatprep.mubr.f32.mxu0 0.0
    %3861 = vmatmul.mubr.f32.gmra.mrb[0].mxu0 %v2999
    %v3862 = vpop.f32.mrb[0].mxu0
    %v3863 = vadd.f32 0.0, %v3862
    %v3864 = vpop.f32.mrb[0].mxu0
    %3865 = vmatprep.mubr.f32.mxu0 0.0
    %3866 = vmatmul.mubr.f32.gmra.mrb[0].mxu0 %v3001
    %v3867 = vpop.f32.mrb[0].mxu0
    %v3868 = vadd.f32 0.0, %v3867
    %v3869 = vpop.f32.mrb[0].mxu0
    %3870 = vmatprep.mubr.f32.mxu0 0.0
    %3871 = vmatmul.mubr.f32.gmra.mrb[0].mxu0 %v3003
    %v3872 = vpop.f32.mrb[0].mxu0
    %v3873 = vadd.f32 0.0, %v3872
    %v3874 = vpop.f32.mrb[0].mxu0
    %3875 = vmatprep.mubr.f32.mxu0 0.0
    %3876 = vmatmul.mubr.f32.gmra.mrb[0].mxu0 %v3005
    %v3877 = vpop.f32.mrb[0].mxu0
    %v3878 = vadd.f32 0.0, %v3877
    %v3879 = vpop.f32.mrb[0].mxu0
    %3880 = vmatprep.mubr.f32.mxu0 0.0
    %3881 = vmatmul.mubr.f32.gmra.mrb[0].mxu0 %v3007
    %v3882 = vpop.f32.mrb[0].mxu0
    %v3883 = vadd.f32 0.0, %v3882
    %v3884 = vpop.f32.mrb[0].mxu0
    %3885 = vmatprep.mubr.f32.mxu0 0.0
    %3886 = vmatmul.mubr.f32.gmra.mrb[0].mxu0 %v3009
    %v3887 = vpop.f32.mrb[0].mxu0
    %v3888 = vadd.f32 0.0, %v3887
    %v3889 = vpop.f32.mrb[0].mxu0
    %3890 = vmatprep.mubr.f32.mxu0 0.0
    %3891 = vmatmul.mubr.f32.gmra.mrb[0].mxu0 %v3011
    %v3892 = vpop.f32.mrb[0].mxu0
    %v3893 = vadd.f32 0.0, %v3892
    %v3894 = vpop.f32.mrb[0].mxu0
    %3895 = vmatprep.mubr.f32.mxu0 0.0
    %3896 = vmatmul.mubr.f32.gmra.mrb[0].mxu0 %v3013
    %v3897 = vpop.f32.mrb[0].mxu0
    %v3898 = vadd.f32 0.0, %v3897
    %v3899 = vpop.f32.mrb[0].mxu0
    %3900 = vmatprep.mubr.f32.mxu0 0.0
    %3901 = vmatmul.mubr.f32.gmra.mrb[0].mxu0 %v3015
    %v3902 = vpop.f32.mrb[0].mxu0
    %v3903 = vadd.f32 0.0, %v3902
    %v3904 = vpop.f32.mrb[0].mxu0
    %3905 = vmatprep.mubr.f32.mxu0 0.0
    %3906 = vmatmul.mubr.f32.gmra.mrb[0].mxu0 %v3017
    %v3907 = vpop.f32.mrb[0].mxu0
    %v3908 = vadd.f32 0.0, %v3907
    %v3909 = vpop.f32.mrb[0].mxu0
    %3910 = vmatprep.mubr.f32.mxu0 0.0
    %3911 = vmatmul.mubr.f32.gmra.mrb[0].mxu0 %v3019
    %v3912 = vpop.f32.mrb[0].mxu0
    %v3913 = vadd.f32 0.0, %v3912
    %v3914 = vpop.f32.mrb[0].mxu0
    %3915 = vmatprep.mubr.f32.mxu0 0.0
    %3916 = vmatmul.mubr.f32.gmra.mrb[0].mxu0 %v3021
    %v3917 = vpop.f32.mrb[0].mxu0
    %v3918 = vadd.f32 0.0, %v3917
    %v3919 = vpop.f32.mrb[0].mxu0
    %3920 = vmatprep.mubr.f32.mxu0 0.0
    %3921 = vmatmul.mubr.f32.gmra.mrb[0].mxu0 %v3023
    %v3922 = vpop.f32.mrb[0].mxu0
    %v3923 = vadd.f32 0.0, %v3922
    %v3924 = vpop.f32.mrb[0].mxu0
    %3925 = vmatprep.mubr.f32.mxu0 0.0
    %3926 = vmatmul.mubr.f32.gmra.mrb[0].mxu0 %v3025
    %v3927 = vpop.f32.mrb[0].mxu0
    %v3928 = vadd.f32 0.0, %v3927
    %v3929 = vpop.f32.mrb[0].mxu0
    %3930 = vmatprep.mubr.f32.mxu0 0.0
    %3931 = vmatmul.mubr.f32.gmra.mrb[0].mxu0 %v3027
    %v3932 = vpop.f32.mrb[0].mxu0
    %v3933 = vadd.f32 0.0, %v3932
    %v3934 = vpop.f32.mrb[0].mxu0
    %3935 = vmatprep.mubr.f32.mxu0 0.0
    %3936 = vmatmul.mubr.f32.gmra.mrb[0].mxu0 %v3029
    %v3937 = vpop.f32.mrb[0].mxu0
    %v3938 = vadd.f32 0.0, %v3937
    %v3939 = vpop.f32.mrb[0].mxu0
    %3940 = vmatprep.mubr.f32.mxu0 0.0
    %3941 = vmatmul.mubr.f32.gmra.mrb[0].mxu0 %v3031
    %v3942 = vpop.f32.mrb[0].mxu0
    %v3943 = vadd.f32 0.0, %v3942
    %v3944 = vpop.f32.mrb[0].mxu0
    %3945 = vmatprep.mubr.f32.mxu0 0.0
    %3946 = vmatmul.mubr.f32.gmra.mrb[0].mxu0 %v3764
    %v3947 = vpop.f32.mrb[0].mxu0
    %v3948 = vadd.f32 0.0, %v3947
    %v3949 = vpop.f32.mrb[0].mxu0
    %3950 = vdwg.mxu0
    %v3951 = vadd.f32 %v3735, %v3833
    %v3952 = vadd.f32 %v3736, %v3838
    %v3953 = vadd.f32 %v3737, %v3843
    %v3954 = vadd.f32 %v3738, %v3848
    %v3955 = vadd.f32 %v3739, %v3853
    %v3956 = vadd.f32 %v3740, %v3858
    %v3957 = vadd.f32 %v3741, %v3863
    %v3958 = vadd.f32 %v3742, %v3868
    %v3959 = vadd.f32 %v3743, %v3873
    %v3960 = vadd.f32 %v3744, %v3878
    %v3961 = vadd.f32 %v3745, %v3883
    %v3962 = vadd.f32 %v3746, %v3888
    %v3963 = vadd.f32 %v3747, %v3893
    %v3964 = vadd.f32 %v3748, %v3898
    %v3965 = vadd.f32 %v3749, %v3903
    %v3966 = vadd.f32 %v3750, %v3908
    %v3967 = vadd.f32 %v3751, %v3913
    %v3968 = vadd.f32 %v3752, %v3918
    %v3969 = vadd.f32 %v3753, %v3923
    %v3970 = vadd.f32 %v3754, %v3928
    %v3971 = vadd.f32 %v3755, %v3933
    %v3972 = vadd.f32 %v3756, %v3938
    %v3973 = vadd.f32 %v3757, %v3943
    %v3974 = vadd.f32 %v3758, %v3948
    %v3975 = vld [vmem:[%s1 + $0xd0] sm:$0xff]
    %v3976 = vld [vmem:[%s1 + $0xd8] sm:$0xff]
    %v3977 = vrot.slane %v2905, 2
    %v3978 = vsel %vm657, %v3500, %v3977
    %v3979 = vsel %vm146, %v3978, 0
    %3981 = vmatprep.subr.mxu0 0.0
    %3982 = vmatpush1.msra.mxu0 %v3975
    %3983 = vmatprep.subr.mxu0 0.0
    %3984 = vmatpush1.msra.mxu0 %v3976
    %3985 = vmatprep.subr.mxu0 0.0
    %3986 = vmatpush1.msra.mxu0 0.0
    %3987 = vmatprep.subr.mxu0 0.0
    %3988 = vmatpush1.msra.mxu0 0.0
    %3989 = vmatprep.subr.mxu0 0.0
    %3990 = vmatpush1.msra.mxu0 0.0
    %3991 = vmatprep.subr.mxu0 0.0
    %3992 = vmatpush1.msra.mxu0 0.0
    %3993 = vmatprep.subr.mxu0 0.0
    %3994 = vmatpush1.msra.mxu0 0.0
    %3995 = vmatprep.subr.mxu0 0.0
    %3996 = vmatpush1.msra.mxu0 0.0
    %3997 = vmatprep.subr.mxu0 0.0
    %3998 = vmatpush1.msra.mxu0 0.0
    %3999 = vmatprep.subr.mxu0 0.0
    %4000 = vmatpush1.msra.mxu0 0.0
    %4001 = vmatprep.subr.mxu0 0.0
    %4002 = vmatpush1.msra.mxu0 0.0
    %4003 = vmatprep.subr.mxu0 0.0
    %4004 = vmatpush1.msra.mxu0 0.0
    %4005 = vmatprep.subr.mxu0 0.0
    %4006 = vmatpush1.msra.mxu0 0.0
    %4007 = vmatprep.subr.mxu0 0.0
    %4008 = vmatpush1.msra.mxu0 0.0
    %4009 = vmatprep.subr.mxu0 0.0
    %4010 = vmatpush1.msra.mxu0 0.0
    %4011 = vmatprep.subr.mxu0 0.0
    %4012 = vmatpush1.msra.mxu0 0.0
    %4013 = vmatprep.subr.mxu0 0.0
    %4014 = vmatpush1.msra.mxu0 0.0
    %4015 = vmatprep.subr.mxu0 0.0
    %4016 = vmatpush1.msra.mxu0 0.0
    %4017 = vmatprep.subr.mxu0 0.0
    %4018 = vmatpush1.msra.mxu0 0.0
    %4019 = vmatprep.subr.mxu0 0.0
    %4020 = vmatpush1.msra.mxu0 0.0
    %4021 = vmatprep.subr.mxu0 0.0
    %4022 = vmatpush1.msra.mxu0 0.0
    %4023 = vmatprep.subr.mxu0 0.0
    %4024 = vmatpush1.msra.mxu0 0.0
    %4025 = vmatprep.subr.mxu0 0.0
    %4026 = vmatpush1.msra.mxu0 0.0
    %4027 = vmatprep.subr.mxu0 0.0
    %4028 = vmatpush1.msra.mxu0 0.0
    %4029 = vmatprep.subr.mxu0 0.0
    %4030 = vmatpush1.msra.mxu0 0.0
    %4031 = vmatprep.subr.mxu0 0.0
    %4032 = vmatpush1.msra.mxu0 0.0
    %4033 = vmatprep.subr.mxu0 0.0
    %4034 = vmatpush1.msra.mxu0 0.0
    %4035 = vmatprep.subr.mxu0 0.0
    %4036 = vmatpush1.msra.mxu0 0.0
    %4037 = vmatprep.subr.mxu0 0.0
    %4038 = vmatpush1.msra.mxu0 0.0
    %4039 = vmatprep.subr.mxu0 0.0
    %4040 = vmatpush1.msra.mxu0 0.0
    %4041 = vmatprep.subr.mxu0 0.0
    %4042 = vmatpush1.msra.mxu0 0.0
    %4043 = vmatprep.subr.mxu0 0.0
    %4044 = vmatpush1.msra.mxu0 0.0
    %4045 = vmatprep.mubr.f32.mxu0 0.0
    %4046 = vmatmul.mubr.f32.gmra.mrb[0].mxu0 %v3504
    %v4047 = vpop.f32.mrb[0].mxu0
    %v4048 = vadd.f32 0.0, %v4047
    %v4049 = vpop.f32.mrb[0].mxu0
    %4050 = vmatprep.mubr.f32.mxu0 0.0
    %4051 = vmatmul.mubr.f32.gmra.mrb[0].mxu0 %v3506
    %v4052 = vpop.f32.mrb[0].mxu0
    %v4053 = vadd.f32 0.0, %v4052
    %v4054 = vpop.f32.mrb[0].mxu0
    %4055 = vmatprep.mubr.f32.mxu0 0.0
    %4056 = vmatmul.mubr.f32.gmra.mrb[0].mxu0 %v3508
    %v4057 = vpop.f32.mrb[0].mxu0
    %v4058 = vadd.f32 0.0, %v4057
    %v4059 = vpop.f32.mrb[0].mxu0
    %4060 = vmatprep.mubr.f32.mxu0 0.0
    %4061 = vmatmul.mubr.f32.gmra.mrb[0].mxu0 %v3510
    %v4062 = vpop.f32.mrb[0].mxu0
    %v4063 = vadd.f32 0.0, %v4062
    %v4064 = vpop.f32.mrb[0].mxu0
    %4065 = vmatprep.mubr.f32.mxu0 0.0
    %4066 = vmatmul.mubr.f32.gmra.mrb[0].mxu0 %v3512
    %v4067 = vpop.f32.mrb[0].mxu0
    %v4068 = vadd.f32 0.0, %v4067
    %v4069 = vpop.f32.mrb[0].mxu0
    %4070 = vmatprep.mubr.f32.mxu0 0.0
    %4071 = vmatmul.mubr.f32.gmra.mrb[0].mxu0 %v3514
    %v4072 = vpop.f32.mrb[0].mxu0
    %v4073 = vadd.f32 0.0, %v4072
    %v4074 = vpop.f32.mrb[0].mxu0
    %4075 = vmatprep.mubr.f32.mxu0 0.0
    %4076 = vmatmul.mubr.f32.gmra.mrb[0].mxu0 %v3516
    %v4077 = vpop.f32.mrb[0].mxu0
    %v4078 = vadd.f32 0.0, %v4077
    %v4079 = vpop.f32.mrb[0].mxu0
    %4080 = vmatprep.mubr.f32.mxu0 0.0
    %4081 = vmatmul.mubr.f32.gmra.mrb[0].mxu0 %v3518
    %v4082 = vpop.f32.mrb[0].mxu0
    %v4083 = vadd.f32 0.0, %v4082
    %v4084 = vpop.f32.mrb[0].mxu0
    %4085 = vmatprep.mubr.f32.mxu0 0.0
    %4086 = vmatmul.mubr.f32.gmra.mrb[0].mxu0 %v3520
    %v4087 = vpop.f32.mrb[0].mxu0
    %v4088 = vadd.f32 0.0, %v4087
    %v4089 = vpop.f32.mrb[0].mxu0
    %4090 = vmatprep.mubr.f32.mxu0 0.0
    %4091 = vmatmul.mubr.f32.gmra.mrb[0].mxu0 %v3522
    %v4092 = vpop.f32.mrb[0].mxu0
    %v4093 = vadd.f32 0.0, %v4092
    %v4094 = vpop.f32.mrb[0].mxu0
    %4095 = vmatprep.mubr.f32.mxu0 0.0
    %4096 = vmatmul.mubr.f32.gmra.mrb[0].mxu0 %v3524
    %v4097 = vpop.f32.mrb[0].mxu0
    %v4098 = vadd.f32 0.0, %v4097
    %v4099 = vpop.f32.mrb[0].mxu0
    %4100 = vmatprep.mubr.f32.mxu0 0.0
    %4101 = vmatmul.mubr.f32.gmra.mrb[0].mxu0 %v3526
    %v4102 = vpop.f32.mrb[0].mxu0
    %v4103 = vadd.f32 0.0, %v4102
    %v4104 = vpop.f32.mrb[0].mxu0
    %4105 = vmatprep.mubr.f32.mxu0 0.0
    %4106 = vmatmul.mubr.f32.gmra.mrb[0].mxu0 %v3528
    %v4107 = vpop.f32.mrb[0].mxu0
    %v4108 = vadd.f32 0.0, %v4107
    %v4109 = vpop.f32.mrb[0].mxu0
    %4110 = vmatprep.mubr.f32.mxu0 0.0
    %4111 = vmatmul.mubr.f32.gmra.mrb[0].mxu0 %v3530
    %v4112 = vpop.f32.mrb[0].mxu0
    %v4113 = vadd.f32 0.0, %v4112
    %v4114 = vpop.f32.mrb[0].mxu0
    %4115 = vmatprep.mubr.f32.mxu0 0.0
    %4116 = vmatmul.mubr.f32.gmra.mrb[0].mxu0 %v3532
    %v4117 = vpop.f32.mrb[0].mxu0
    %v4118 = vadd.f32 0.0, %v4117
    %v4119 = vpop.f32.mrb[0].mxu0
    %4120 = vmatprep.mubr.f32.mxu0 0.0
    %4121 = vmatmul.mubr.f32.gmra.mrb[0].mxu0 %v3534
    %v4122 = vpop.f32.mrb[0].mxu0
    %v4123 = vadd.f32 0.0, %v4122
    %v4124 = vpop.f32.mrb[0].mxu0
    %4125 = vmatprep.mubr.f32.mxu0 0.0
    %4126 = vmatmul.mubr.f32.gmra.mrb[0].mxu0 %v3536
    %v4127 = vpop.f32.mrb[0].mxu0
    %v4128 = vadd.f32 0.0, %v4127
    %v4129 = vpop.f32.mrb[0].mxu0
    %4130 = vmatprep.mubr.f32.mxu0 0.0
    %4131 = vmatmul.mubr.f32.gmra.mrb[0].mxu0 %v3538
    %v4132 = vpop.f32.mrb[0].mxu0
    %v4133 = vadd.f32 0.0, %v4132
    %v4134 = vpop.f32.mrb[0].mxu0
    %4135 = vmatprep.mubr.f32.mxu0 0.0
    %4136 = vmatmul.mubr.f32.gmra.mrb[0].mxu0 %v3540
    %v4137 = vpop.f32.mrb[0].mxu0
    %v4138 = vadd.f32 0.0, %v4137
    %v4139 = vpop.f32.mrb[0].mxu0
    %4140 = vmatprep.mubr.f32.mxu0 0.0
    %4141 = vmatmul.mubr.f32.gmra.mrb[0].mxu0 %v3542
    %v4142 = vpop.f32.mrb[0].mxu0
    %v4143 = vadd.f32 0.0, %v4142
    %v4144 = vpop.f32.mrb[0].mxu0
    %4145 = vmatprep.mubr.f32.mxu0 0.0
    %4146 = vmatmul.mubr.f32.gmra.mrb[0].mxu0 %v3544
    %v4147 = vpop.f32.mrb[0].mxu0
    %v4148 = vadd.f32 0.0, %v4147
    %v4149 = vpop.f32.mrb[0].mxu0
    %4150 = vmatprep.mubr.f32.mxu0 0.0
    %4151 = vmatmul.mubr.f32.gmra.mrb[0].mxu0 %v3546
    %v4152 = vpop.f32.mrb[0].mxu0
    %v4153 = vadd.f32 0.0, %v4152
    %v4154 = vpop.f32.mrb[0].mxu0
    %4155 = vmatprep.mubr.f32.mxu0 0.0
    %4156 = vmatmul.mubr.f32.gmra.mrb[0].mxu0 %v3548
    %v4157 = vpop.f32.mrb[0].mxu0
    %v4158 = vadd.f32 0.0, %v4157
    %v4159 = vpop.f32.mrb[0].mxu0
    %4160 = vmatprep.mubr.f32.mxu0 0.0
    %4161 = vmatmul.mubr.f32.gmra.mrb[0].mxu0 %v3979
    %v4162 = vpop.f32.mrb[0].mxu0
    %v4163 = vadd.f32 0.0, %v4162
    %v4164 = vpop.f32.mrb[0].mxu0
    %4165 = vdwg.mxu0
    %v4166 = vadd.f32 %v3951, %v4048
    %v4167 = vadd.f32 %v3952, %v4053
    %v4168 = vadd.f32 %v3953, %v4058
    %v4169 = vadd.f32 %v3954, %v4063
    %v4170 = vadd.f32 %v3955, %v4068
    %v4171 = vadd.f32 %v3956, %v4073
    %v4172 = vadd.f32 %v3957, %v4078
    %v4173 = vadd.f32 %v3958, %v4083
    %v4174 = vadd.f32 %v3959, %v4088
    %v4175 = vadd.f32 %v3960, %v4093
    %v4176 = vadd.f32 %v3961, %v4098
    %v4177 = vadd.f32 %v3962, %v4103
    %v4178 = vadd.f32 %v3963, %v4108
    %v4179 = vadd.f32 %v3964, %v4113
    %v4180 = vadd.f32 %v3965, %v4118
    %v4181 = vadd.f32 %v3966, %v4123
    %v4182 = vadd.f32 %v3967, %v4128
    %v4183 = vadd.f32 %v3968, %v4133
    %v4184 = vadd.f32 %v3969, %v4138
    %v4185 = vadd.f32 %v3970, %v4143
    %v4186 = vadd.f32 %v3971, %v4148
    %v4187 = vadd.f32 %v3972, %v4153
    %v4188 = vadd.f32 %v3973, %v4158
    %v4189 = vadd.f32 %v3974, %v4163
    %v4190 = vld [vmem:[%s1 + $0xe0] sm:$0xff]
    %v4191 = vld [vmem:[%s1 + $0xe8] sm:$0xff]
    %v4192 = vrot.slane %v2881, 3
    %v4193 = vrot.slane %v2882, 3
    %v4194 = vsel %vm1463, %v4192, %v4193
    %v4195 = vrot.slane %v2883, 3
    %v4196 = vsel %vm1463, %v4193, %v4195
    %v4197 = vrot.slane %v2884, 3
    %v4198 = vsel %vm1463, %v4195, %v4197
    %v4199 = vrot.slane %v2885, 3
    %v4200 = vsel %vm1463, %v4197, %v4199
    %v4201 = vrot.slane %v2886, 3
    %v4202 = vsel %vm1463, %v4199, %v4201
    %v4203 = vrot.slane %v2887, 3
    %v4204 = vsel %vm1463, %v4201, %v4203
    %v4205 = vrot.slane %v2888, 3
    %v4206 = vsel %vm1463, %v4203, %v4205
    %v4207 = vrot.slane %v2889, 3
    %v4208 = vsel %vm1463, %v4205, %v4207
    %v4209 = vrot.slane %v2890, 3
    %v4210 = vsel %vm1463, %v4207, %v4209
    %v4211 = vrot.slane %v2891, 3
    %v4212 = vsel %vm1463, %v4209, %v4211
    %v4213 = vrot.slane %v2892, 3
    %v4214 = vsel %vm1463, %v4211, %v4213
    %v4215 = vrot.slane %v2893, 3
    %v4216 = vsel %vm1463, %v4213, %v4215
    %v4217 = vrot.slane %v2894, 3
    %v4218 = vsel %vm1463, %v4215, %v4217
    %v4219 = vrot.slane %v2895, 3
    %v4220 = vsel %vm1463, %v4217, %v4219
    %v4221 = vrot.slane %v2896, 3
    %v4222 = vsel %vm1463, %v4219, %v4221
    %v4223 = vrot.slane %v2897, 3
    %v4224 = vsel %vm1463, %v4221, %v4223
    %v4225 = vrot.slane %v2898, 3
    %v4226 = vsel %vm1463, %v4223, %v4225
    %v4227 = vrot.slane %v2899, 3
    %v4228 = vsel %vm1463, %v4225, %v4227
    %v4229 = vrot.slane %v2900, 3
    %v4230 = vsel %vm1463, %v4227, %v4229
    %v4231 = vrot.slane %v2901, 3
    %v4232 = vsel %vm1463, %v4229, %v4231
    %v4233 = vrot.slane %v2902, 3
    %v4234 = vsel %vm1463, %v4231, %v4233
    %v4235 = vrot.slane %v2903, 3
    %v4236 = vsel %vm1463, %v4233, %v4235
    %v4237 = vrot.slane %v2904, 3
    %v4238 = vsel %vm1463, %v4235, %v4237
    %v4239 = vrot.slane %v2905, 3
    %v4240 = vsel %vm1463, %v4237, %v4239
    %v4241 = vsel %vm146, %v4194, 0
    %v4243 = vsel %vm146, %v4196, 0
    %v4245 = vsel %vm146, %v4198, 0
    %v4247 = vsel %vm146, %v4200, 0
    %v4249 = vsel %vm146, %v4202, 0
    %v4251 = vsel %vm146, %v4204, 0
    %v4253 = vsel %vm146, %v4206, 0
    %v4255 = vsel %vm146, %v4208, 0
    %v4257 = vsel %vm146, %v4210, 0
    %v4259 = vsel %vm146, %v4212, 0
    %v4261 = vsel %vm146, %v4214, 0
    %v4263 = vsel %vm146, %v4216, 0
    %v4265 = vsel %vm146, %v4218, 0
    %v4267 = vsel %vm146, %v4220, 0
    %v4269 = vsel %vm146, %v4222, 0
    %v4271 = vsel %vm146, %v4224, 0
    %v4273 = vsel %vm146, %v4226, 0
    %v4275 = vsel %vm146, %v4228, 0
    %v4277 = vsel %vm146, %v4230, 0
    %v4279 = vsel %vm146, %v4232, 0
    %v4281 = vsel %vm146, %v4234, 0
    %v4283 = vsel %vm146, %v4236, 0
    %v4285 = vsel %vm146, %v4238, 0
    %v4287 = vsel %vm146, %v4240, 0
    %4289 = vmatprep.subr.mxu0 0.0
    %4290 = vmatpush1.msra.mxu0 %v4190
    %4291 = vmatprep.subr.mxu0 0.0
    %4292 = vmatpush1.msra.mxu0 %v4191
    %4293 = vmatprep.subr.mxu0 0.0
    %4294 = vmatpush1.msra.mxu0 0.0
    %4295 = vmatprep.subr.mxu0 0.0
    %4296 = vmatpush1.msra.mxu0 0.0
    %4297 = vmatprep.subr.mxu0 0.0
    %4298 = vmatpush1.msra.mxu0 0.0
    %4299 = vmatprep.subr.mxu0 0.0
    %4300 = vmatpush1.msra.mxu0 0.0
    %4301 = vmatprep.subr.mxu0 0.0
    %4302 = vmatpush1.msra.mxu0 0.0
    %4303 = vmatprep.subr.mxu0 0.0
    %4304 = vmatpush1.msra.mxu0 0.0
    %4305 = vmatprep.subr.mxu0 0.0
    %4306 = vmatpush1.msra.mxu0 0.0
    %4307 = vmatprep.subr.mxu0 0.0
    %4308 = vmatpush1.msra.mxu0 0.0
    %4309 = vmatprep.subr.mxu0 0.0
    %4310 = vmatpush1.msra.mxu0 0.0
    %4311 = vmatprep.subr.mxu0 0.0
    %4312 = vmatpush1.msra.mxu0 0.0
    %4313 = vmatprep.subr.mxu0 0.0
    %4314 = vmatpush1.msra.mxu0 0.0
    %4315 = vmatprep.subr.mxu0 0.0
    %4316 = vmatpush1.msra.mxu0 0.0
    %4317 = vmatprep.subr.mxu0 0.0
    %4318 = vmatpush1.msra.mxu0 0.0
    %4319 = vmatprep.subr.mxu0 0.0
    %4320 = vmatpush1.msra.mxu0 0.0
    %4321 = vmatprep.subr.mxu0 0.0
    %4322 = vmatpush1.msra.mxu0 0.0
    %4323 = vmatprep.subr.mxu0 0.0
    %4324 = vmatpush1.msra.mxu0 0.0
    %4325 = vmatprep.subr.mxu0 0.0
    %4326 = vmatpush1.msra.mxu0 0.0
    %4327 = vmatprep.subr.mxu0 0.0
    %4328 = vmatpush1.msra.mxu0 0.0
    %4329 = vmatprep.subr.mxu0 0.0
    %4330 = vmatpush1.msra.mxu0 0.0
    %4331 = vmatprep.subr.mxu0 0.0
    %4332 = vmatpush1.msra.mxu0 0.0
    %4333 = vmatprep.subr.mxu0 0.0
    %4334 = vmatpush1.msra.mxu0 0.0
    %4335 = vmatprep.subr.mxu0 0.0
    %4336 = vmatpush1.msra.mxu0 0.0
    %4337 = vmatprep.subr.mxu0 0.0
    %4338 = vmatpush1.msra.mxu0 0.0
    %4339 = vmatprep.subr.mxu0 0.0
    %4340 = vmatpush1.msra.mxu0 0.0
    %4341 = vmatprep.subr.mxu0 0.0
    %4342 = vmatpush1.msra.mxu0 0.0
    %4343 = vmatprep.subr.mxu0 0.0
    %4344 = vmatpush1.msra.mxu0 0.0
    %4345 = vmatprep.subr.mxu0 0.0
    %4346 = vmatpush1.msra.mxu0 0.0
    %4347 = vmatprep.subr.mxu0 0.0
    %4348 = vmatpush1.msra.mxu0 0.0
    %4349 = vmatprep.subr.mxu0 0.0
    %4350 = vmatpush1.msra.mxu0 0.0
    %4351 = vmatprep.subr.mxu0 0.0
    %4352 = vmatpush1.msra.mxu0 0.0
    %4353 = vmatprep.mubr.f32.mxu0 0.0
    %4354 = vmatmul.mubr.f32.gmra.mrb[0].mxu0 %v4241
    %v4355 = vpop.f32.mrb[0].mxu0
    %v4356 = vadd.f32 0.0, %v4355
    %v4357 = vpop.f32.mrb[0].mxu0
    %4358 = vmatprep.mubr.f32.mxu0 0.0
    %4359 = vmatmul.mubr.f32.gmra.mrb[0].mxu0 %v4243
    %v4360 = vpop.f32.mrb[0].mxu0
    %v4361 = vadd.f32 0.0, %v4360
    %v4362 = vpop.f32.mrb[0].mxu0
    %4363 = vmatprep.mubr.f32.mxu0 0.0
    %4364 = vmatmul.mubr.f32.gmra.mrb[0].mxu0 %v4245
    %v4365 = vpop.f32.mrb[0].mxu0
    %v4366 = vadd.f32 0.0, %v4365
    %v4367 = vpop.f32.mrb[0].mxu0
    %4368 = vmatprep.mubr.f32.mxu0 0.0
    %4369 = vmatmul.mubr.f32.gmra.mrb[0].mxu0 %v4247
    %v4370 = vpop.f32.mrb[0].mxu0
    %v4371 = vadd.f32 0.0, %v4370
    %v4372 = vpop.f32.mrb[0].mxu0
    %4373 = vmatprep.mubr.f32.mxu0 0.0
    %4374 = vmatmul.mubr.f32.gmra.mrb[0].mxu0 %v4249
    %v4375 = vpop.f32.mrb[0].mxu0
    %v4376 = vadd.f32 0.0, %v4375
    %v4377 = vpop.f32.mrb[0].mxu0
    %4378 = vmatprep.mubr.f32.mxu0 0.0
    %4379 = vmatmul.mubr.f32.gmra.mrb[0].mxu0 %v4251
    %v4380 = vpop.f32.mrb[0].mxu0
    %v4381 = vadd.f32 0.0, %v4380
    %v4382 = vpop.f32.mrb[0].mxu0
    %4383 = vmatprep.mubr.f32.mxu0 0.0
    %4384 = vmatmul.mubr.f32.gmra.mrb[0].mxu0 %v4253
    %v4385 = vpop.f32.mrb[0].mxu0
    %v4386 = vadd.f32 0.0, %v4385
    %v4387 = vpop.f32.mrb[0].mxu0
    %4388 = vmatprep.mubr.f32.mxu0 0.0
    %4389 = vmatmul.mubr.f32.gmra.mrb[0].mxu0 %v4255
    %v4390 = vpop.f32.mrb[0].mxu0
    %v4391 = vadd.f32 0.0, %v4390
    %v4392 = vpop.f32.mrb[0].mxu0
    %4393 = vmatprep.mubr.f32.mxu0 0.0
    %4394 = vmatmul.mubr.f32.gmra.mrb[0].mxu0 %v4257
    %v4395 = vpop.f32.mrb[0].mxu0
    %v4396 = vadd.f32 0.0, %v4395
    %v4397 = vpop.f32.mrb[0].mxu0
    %4398 = vmatprep.mubr.f32.mxu0 0.0
    %4399 = vmatmul.mubr.f32.gmra.mrb[0].mxu0 %v4259
    %v4400 = vpop.f32.mrb[0].mxu0
    %v4401 = vadd.f32 0.0, %v4400
    %v4402 = vpop.f32.mrb[0].mxu0
    %4403 = vmatprep.mubr.f32.mxu0 0.0
    %4404 = vmatmul.mubr.f32.gmra.mrb[0].mxu0 %v4261
    %v4405 = vpop.f32.mrb[0].mxu0
    %v4406 = vadd.f32 0.0, %v4405
    %v4407 = vpop.f32.mrb[0].mxu0
    %4408 = vmatprep.mubr.f32.mxu0 0.0
    %4409 = vmatmul.mubr.f32.gmra.mrb[0].mxu0 %v4263
    %v4410 = vpop.f32.mrb[0].mxu0
    %v4411 = vadd.f32 0.0, %v4410
    %v4412 = vpop.f32.mrb[0].mxu0
    %4413 = vmatprep.mubr.f32.mxu0 0.0
    %4414 = vmatmul.mubr.f32.gmra.mrb[0].mxu0 %v4265
    %v4415 = vpop.f32.mrb[0].mxu0
    %v4416 = vadd.f32 0.0, %v4415
    %v4417 = vpop.f32.mrb[0].mxu0
    %4418 = vmatprep.mubr.f32.mxu0 0.0
    %4419 = vmatmul.mubr.f32.gmra.mrb[0].mxu0 %v4267
    %v4420 = vpop.f32.mrb[0].mxu0
    %v4421 = vadd.f32 0.0, %v4420
    %v4422 = vpop.f32.mrb[0].mxu0
    %4423 = vmatprep.mubr.f32.mxu0 0.0
    %4424 = vmatmul.mubr.f32.gmra.mrb[0].mxu0 %v4269
    %v4425 = vpop.f32.mrb[0].mxu0
    %v4426 = vadd.f32 0.0, %v4425
    %v4427 = vpop.f32.mrb[0].mxu0
    %4428 = vmatprep.mubr.f32.mxu0 0.0
    %4429 = vmatmul.mubr.f32.gmra.mrb[0].mxu0 %v4271
    %v4430 = vpop.f32.mrb[0].mxu0
    %v4431 = vadd.f32 0.0, %v4430
    %v4432 = vpop.f32.mrb[0].mxu0
    %4433 = vmatprep.mubr.f32.mxu0 0.0
    %4434 = vmatmul.mubr.f32.gmra.mrb[0].mxu0 %v4273
    %v4435 = vpop.f32.mrb[0].mxu0
    %v4436 = vadd.f32 0.0, %v4435
    %v4437 = vpop.f32.mrb[0].mxu0
    %4438 = vmatprep.mubr.f32.mxu0 0.0
    %4439 = vmatmul.mubr.f32.gmra.mrb[0].mxu0 %v4275
    %v4440 = vpop.f32.mrb[0].mxu0
    %v4441 = vadd.f32 0.0, %v4440
    %v4442 = vpop.f32.mrb[0].mxu0
    %4443 = vmatprep.mubr.f32.mxu0 0.0
    %4444 = vmatmul.mubr.f32.gmra.mrb[0].mxu0 %v4277
    %v4445 = vpop.f32.mrb[0].mxu0
    %v4446 = vadd.f32 0.0, %v4445
    %v4447 = vpop.f32.mrb[0].mxu0
    %4448 = vmatprep.mubr.f32.mxu0 0.0
    %4449 = vmatmul.mubr.f32.gmra.mrb[0].mxu0 %v4279
    %v4450 = vpop.f32.mrb[0].mxu0
    %v4451 = vadd.f32 0.0, %v4450
    %v4452 = vpop.f32.mrb[0].mxu0
    %4453 = vmatprep.mubr.f32.mxu0 0.0
    %4454 = vmatmul.mubr.f32.gmra.mrb[0].mxu0 %v4281
    %v4455 = vpop.f32.mrb[0].mxu0
    %v4456 = vadd.f32 0.0, %v4455
    %v4457 = vpop.f32.mrb[0].mxu0
    %4458 = vmatprep.mubr.f32.mxu0 0.0
    %4459 = vmatmul.mubr.f32.gmra.mrb[0].mxu0 %v4283
    %v4460 = vpop.f32.mrb[0].mxu0
    %v4461 = vadd.f32 0.0, %v4460
    %v4462 = vpop.f32.mrb[0].mxu0
    %4463 = vmatprep.mubr.f32.mxu0 0.0
    %4464 = vmatmul.mubr.f32.gmra.mrb[0].mxu0 %v4285
    %v4465 = vpop.f32.mrb[0].mxu0
    %v4466 = vadd.f32 0.0, %v4465
    %v4467 = vpop.f32.mrb[0].mxu0
    %4468 = vmatprep.mubr.f32.mxu0 0.0
    %4469 = vmatmul.mubr.f32.gmra.mrb[0].mxu0 %v4287
    %v4470 = vpop.f32.mrb[0].mxu0
    %v4471 = vadd.f32 0.0, %v4470
    %v4472 = vpop.f32.mrb[0].mxu0
    %4473 = vdwg.mxu0
    %v4474 = vadd.f32 %v4166, %v4356
    %v4475 = vadd.f32 %v4167, %v4361
    %v4476 = vadd.f32 %v4168, %v4366
    %v4477 = vadd.f32 %v4169, %v4371
    %v4478 = vadd.f32 %v4170, %v4376
    %v4479 = vadd.f32 %v4171, %v4381
    %v4480 = vadd.f32 %v4172, %v4386
    %v4481 = vadd.f32 %v4173, %v4391
    %v4482 = vadd.f32 %v4174, %v4396
    %v4483 = vadd.f32 %v4175, %v4401
    %v4484 = vadd.f32 %v4176, %v4406
    %v4485 = vadd.f32 %v4177, %v4411
    %v4486 = vadd.f32 %v4178, %v4416
    %v4487 = vadd.f32 %v4179, %v4421
    %v4488 = vadd.f32 %v4180, %v4426
    %v4489 = vadd.f32 %v4181, %v4431
    %v4490 = vadd.f32 %v4182, %v4436
    %v4491 = vadd.f32 %v4183, %v4441
    %v4492 = vadd.f32 %v4184, %v4446
    %v4493 = vadd.f32 %v4185, %v4451
    %v4494 = vadd.f32 %v4186, %v4456
    %v4495 = vadd.f32 %v4187, %v4461
    %v4496 = vadd.f32 %v4188, %v4466
    %v4497 = vadd.f32 %v4189, %v4471
    %v4498 = vld [vmem:[%s1 + $0xf0] sm:$0xff]
    %v4499 = vld [vmem:[%s1 + $0xf8] sm:$0xff]
    %v4501 = vrot.slane %v2906, 2
    %v4502 = vsel %vm657, %v3977, %v4501
    %v4503 = vsel %vm146, %v4502, 0
    %4505 = vmatprep.subr.mxu0 0.0
    %4506 = vmatpush1.msra.mxu0 %v4498
    %4507 = vmatprep.subr.mxu0 0.0
    %4508 = vmatpush1.msra.mxu0 %v4499
    %4509 = vmatprep.subr.mxu0 0.0
    %4510 = vmatpush1.msra.mxu0 0.0
    %4511 = vmatprep.subr.mxu0 0.0
    %4512 = vmatpush1.msra.mxu0 0.0
    %4513 = vmatprep.subr.mxu0 0.0
    %4514 = vmatpush1.msra.mxu0 0.0
    %4515 = vmatprep.subr.mxu0 0.0
    %4516 = vmatpush1.msra.mxu0 0.0
    %4517 = vmatprep.subr.mxu0 0.0
    %4518 = vmatpush1.msra.mxu0 0.0
    %4519 = vmatprep.subr.mxu0 0.0
    %4520 = vmatpush1.msra.mxu0 0.0
    %4521 = vmatprep.subr.mxu0 0.0
    %4522 = vmatpush1.msra.mxu0 0.0
    %4523 = vmatprep.subr.mxu0 0.0
    %4524 = vmatpush1.msra.mxu0 0.0
    %4525 = vmatprep.subr.mxu0 0.0
    %4526 = vmatpush1.msra.mxu0 0.0
    %4527 = vmatprep.subr.mxu0 0.0
    %4528 = vmatpush1.msra.mxu0 0.0
    %4529 = vmatprep.subr.mxu0 0.0
    %4530 = vmatpush1.msra.mxu0 0.0
    %4531 = vmatprep.subr.mxu0 0.0
    %4532 = vmatpush1.msra.mxu0 0.0
    %4533 = vmatprep.subr.mxu0 0.0
    %4534 = vmatpush1.msra.mxu0 0.0
    %4535 = vmatprep.subr.mxu0 0.0
    %4536 = vmatpush1.msra.mxu0 0.0
    %4537 = vmatprep.subr.mxu0 0.0
    %4538 = vmatpush1.msra.mxu0 0.0
    %4539 = vmatprep.subr.mxu0 0.0
    %4540 = vmatpush1.msra.mxu0 0.0
    %4541 = vmatprep.subr.mxu0 0.0
    %4542 = vmatpush1.msra.mxu0 0.0
    %4543 = vmatprep.subr.mxu0 0.0
    %4544 = vmatpush1.msra.mxu0 0.0
    %4545 = vmatprep.subr.mxu0 0.0
    %4546 = vmatpush1.msra.mxu0 0.0
    %4547 = vmatprep.subr.mxu0 0.0
    %4548 = vmatpush1.msra.mxu0 0.0
    %4549 = vmatprep.subr.mxu0 0.0
    %4550 = vmatpush1.msra.mxu0 0.0
    %4551 = vmatprep.subr.mxu0 0.0
    %4552 = vmatpush1.msra.mxu0 0.0
    %4553 = vmatprep.subr.mxu0 0.0
    %4554 = vmatpush1.msra.mxu0 0.0
    %4555 = vmatprep.subr.mxu0 0.0
    %4556 = vmatpush1.msra.mxu0 0.0
    %4557 = vmatprep.subr.mxu0 0.0
    %4558 = vmatpush1.msra.mxu0 0.0
    %4559 = vmatprep.subr.mxu0 0.0
    %4560 = vmatpush1.msra.mxu0 0.0
    %4561 = vmatprep.subr.mxu0 0.0
    %4562 = vmatpush1.msra.mxu0 0.0
    %4563 = vmatprep.subr.mxu0 0.0
    %4564 = vmatpush1.msra.mxu0 0.0
    %4565 = vmatprep.subr.mxu0 0.0
    %4566 = vmatpush1.msra.mxu0 0.0
    %4567 = vmatprep.subr.mxu0 0.0
    %4568 = vmatpush1.msra.mxu0 0.0
    %4569 = vmatprep.mubr.f32.mxu0 0.0
    %4570 = vmatmul.mubr.f32.gmra.mrb[0].mxu0 %v3506
    %v4571 = vpop.f32.mrb[0].mxu0
    %v4572 = vadd.f32 0.0, %v4571
    %v4573 = vpop.f32.mrb[0].mxu0
    %4574 = vmatprep.mubr.f32.mxu0 0.0
    %4575 = vmatmul.mubr.f32.gmra.mrb[0].mxu0 %v3508
    %v4576 = vpop.f32.mrb[0].mxu0
    %v4577 = vadd.f32 0.0, %v4576
    %v4578 = vpop.f32.mrb[0].mxu0
    %4579 = vmatprep.mubr.f32.mxu0 0.0
    %4580 = vmatmul.mubr.f32.gmra.mrb[0].mxu0 %v3510
    %v4581 = vpop.f32.mrb[0].mxu0
    %v4582 = vadd.f32 0.0, %v4581
    %v4583 = vpop.f32.mrb[0].mxu0
    %4584 = vmatprep.mubr.f32.mxu0 0.0
    %4585 = vmatmul.mubr.f32.gmra.mrb[0].mxu0 %v3512
    %v4586 = vpop.f32.mrb[0].mxu0
    %v4587 = vadd.f32 0.0, %v4586
    %v4588 = vpop.f32.mrb[0].mxu0
    %4589 = vmatprep.mubr.f32.mxu0 0.0
    %4590 = vmatmul.mubr.f32.gmra.mrb[0].mxu0 %v3514
    %v4591 = vpop.f32.mrb[0].mxu0
    %v4592 = vadd.f32 0.0, %v4591
    %v4593 = vpop.f32.mrb[0].mxu0
    %4594 = vmatprep.mubr.f32.mxu0 0.0
    %4595 = vmatmul.mubr.f32.gmra.mrb[0].mxu0 %v3516
    %v4596 = vpop.f32.mrb[0].mxu0
    %v4597 = vadd.f32 0.0, %v4596
    %v4598 = vpop.f32.mrb[0].mxu0
    %4599 = vmatprep.mubr.f32.mxu0 0.0
    %4600 = vmatmul.mubr.f32.gmra.mrb[0].mxu0 %v3518
    %v4601 = vpop.f32.mrb[0].mxu0
    %v4602 = vadd.f32 0.0, %v4601
    %v4603 = vpop.f32.mrb[0].mxu0
    %4604 = vmatprep.mubr.f32.mxu0 0.0
    %4605 = vmatmul.mubr.f32.gmra.mrb[0].mxu0 %v3520
    %v4606 = vpop.f32.mrb[0].mxu0
    %v4607 = vadd.f32 0.0, %v4606
    %v4608 = vpop.f32.mrb[0].mxu0
    %4609 = vmatprep.mubr.f32.mxu0 0.0
    %4610 = vmatmul.mubr.f32.gmra.mrb[0].mxu0 %v3522
    %v4611 = vpop.f32.mrb[0].mxu0
    %v4612 = vadd.f32 0.0, %v4611
    %v4613 = vpop.f32.mrb[0].mxu0
    %4614 = vmatprep.mubr.f32.mxu0 0.0
    %4615 = vmatmul.mubr.f32.gmra.mrb[0].mxu0 %v3524
    %v4616 = vpop.f32.mrb[0].mxu0
    %v4617 = vadd.f32 0.0, %v4616
    %v4618 = vpop.f32.mrb[0].mxu0
    %4619 = vmatprep.mubr.f32.mxu0 0.0
    %4620 = vmatmul.mubr.f32.gmra.mrb[0].mxu0 %v3526
    %v4621 = vpop.f32.mrb[0].mxu0
    %v4622 = vadd.f32 0.0, %v4621
    %v4623 = vpop.f32.mrb[0].mxu0
    %4624 = vmatprep.mubr.f32.mxu0 0.0
    %4625 = vmatmul.mubr.f32.gmra.mrb[0].mxu0 %v3528
    %v4626 = vpop.f32.mrb[0].mxu0
    %v4627 = vadd.f32 0.0, %v4626
    %v4628 = vpop.f32.mrb[0].mxu0
    %4629 = vmatprep.mubr.f32.mxu0 0.0
    %4630 = vmatmul.mubr.f32.gmra.mrb[0].mxu0 %v3530
    %v4631 = vpop.f32.mrb[0].mxu0
    %v4632 = vadd.f32 0.0, %v4631
    %v4633 = vpop.f32.mrb[0].mxu0
    %4634 = vmatprep.mubr.f32.mxu0 0.0
    %4635 = vmatmul.mubr.f32.gmra.mrb[0].mxu0 %v3532
    %v4636 = vpop.f32.mrb[0].mxu0
    %v4637 = vadd.f32 0.0, %v4636
    %v4638 = vpop.f32.mrb[0].mxu0
    %4639 = vmatprep.mubr.f32.mxu0 0.0
    %4640 = vmatmul.mubr.f32.gmra.mrb[0].mxu0 %v3534
    %v4641 = vpop.f32.mrb[0].mxu0
    %v4642 = vadd.f32 0.0, %v4641
    %v4643 = vpop.f32.mrb[0].mxu0
    %4644 = vmatprep.mubr.f32.mxu0 0.0
    %4645 = vmatmul.mubr.f32.gmra.mrb[0].mxu0 %v3536
    %v4646 = vpop.f32.mrb[0].mxu0
    %v4647 = vadd.f32 0.0, %v4646
    %v4648 = vpop.f32.mrb[0].mxu0
    %4649 = vmatprep.mubr.f32.mxu0 0.0
    %4650 = vmatmul.mubr.f32.gmra.mrb[0].mxu0 %v3538
    %v4651 = vpop.f32.mrb[0].mxu0
    %v4652 = vadd.f32 0.0, %v4651
    %v4653 = vpop.f32.mrb[0].mxu0
    %4654 = vmatprep.mubr.f32.mxu0 0.0
    %4655 = vmatmul.mubr.f32.gmra.mrb[0].mxu0 %v3540
    %v4656 = vpop.f32.mrb[0].mxu0
    %v4657 = vadd.f32 0.0, %v4656
    %v4658 = vpop.f32.mrb[0].mxu0
    %4659 = vmatprep.mubr.f32.mxu0 0.0
    %4660 = vmatmul.mubr.f32.gmra.mrb[0].mxu0 %v3542
    %v4661 = vpop.f32.mrb[0].mxu0
    %v4662 = vadd.f32 0.0, %v4661
    %v4663 = vpop.f32.mrb[0].mxu0
    %4664 = vmatprep.mubr.f32.mxu0 0.0
    %4665 = vmatmul.mubr.f32.gmra.mrb[0].mxu0 %v3544
    %v4666 = vpop.f32.mrb[0].mxu0
    %v4667 = vadd.f32 0.0, %v4666
    %v4668 = vpop.f32.mrb[0].mxu0
    %4669 = vmatprep.mubr.f32.mxu0 0.0
    %4670 = vmatmul.mubr.f32.gmra.mrb[0].mxu0 %v3546
    %v4671 = vpop.f32.mrb[0].mxu0
    %v4672 = vadd.f32 0.0, %v4671
    %v4673 = vpop.f32.mrb[0].mxu0
    %4674 = vmatprep.mubr.f32.mxu0 0.0
    %4675 = vmatmul.mubr.f32.gmra.mrb[0].mxu0 %v3548
    %v4676 = vpop.f32.mrb[0].mxu0
    %v4677 = vadd.f32 0.0, %v4676
    %v4678 = vpop.f32.mrb[0].mxu0
    %4679 = vmatprep.mubr.f32.mxu0 0.0
    %4680 = vmatmul.mubr.f32.gmra.mrb[0].mxu0 %v3979
    %v4681 = vpop.f32.mrb[0].mxu0
    %v4682 = vadd.f32 0.0, %v4681
    %v4683 = vpop.f32.mrb[0].mxu0
    %4684 = vmatprep.mubr.f32.mxu0 0.0
    %4685 = vmatmul.mubr.f32.gmra.mrb[0].mxu0 %v4503
    %v4686 = vpop.f32.mrb[0].mxu0
    %v4687 = vadd.f32 0.0, %v4686
    %v4688 = vpop.f32.mrb[0].mxu0
    %4689 = vdwg.mxu0
    %v4690 = vadd.f32 %v4474, %v4572
    %v4691 = vadd.f32 %v4475, %v4577
    %v4692 = vadd.f32 %v4476, %v4582
    %v4693 = vadd.f32 %v4477, %v4587
    %v4694 = vadd.f32 %v4478, %v4592
    %v4695 = vadd.f32 %v4479, %v4597
    %v4696 = vadd.f32 %v4480, %v4602
    %v4697 = vadd.f32 %v4481, %v4607
    %v4698 = vadd.f32 %v4482, %v4612
    %v4699 = vadd.f32 %v4483, %v4617
    %v4700 = vadd.f32 %v4484, %v4622
    %v4701 = vadd.f32 %v4485, %v4627
    %v4702 = vadd.f32 %v4486, %v4632
    %v4703 = vadd.f32 %v4487, %v4637
    %v4704 = vadd.f32 %v4488, %v4642
    %v4705 = vadd.f32 %v4489, %v4647
    %v4706 = vadd.f32 %v4490, %v4652
    %v4707 = vadd.f32 %v4491, %v4657
    %v4708 = vadd.f32 %v4492, %v4662
    %v4709 = vadd.f32 %v4493, %v4667
    %v4710 = vadd.f32 %v4494, %v4672
    %v4711 = vadd.f32 %v4495, %v4677
    %v4712 = vadd.f32 %v4496, %v4682
    %v4713 = vadd.f32 %v4497, %v4687
    %v4714 = vld [vmem:[%s1 + $0x100] sm:$0xff]
    %v4715 = vld [vmem:[%s1 + $0x108] sm:$0xff]
    %v4716 = vrot.slane %v2906, 3
    %v4717 = vsel %vm1463, %v4239, %v4716
    %v4718 = vsel %vm146, %v4717, 0
    %4720 = vmatprep.subr.mxu0 0.0
    %4721 = vmatpush1.msra.mxu0 %v4714
    %4722 = vmatprep.subr.mxu0 0.0
    %4723 = vmatpush1.msra.mxu0 %v4715
    %4724 = vmatprep.subr.mxu0 0.0
    %4725 = vmatpush1.msra.mxu0 0.0
    %4726 = vmatprep.subr.mxu0 0.0
    %4727 = vmatpush1.msra.mxu0 0.0
    %4728 = vmatprep.subr.mxu0 0.0
    %4729 = vmatpush1.msra.mxu0 0.0
    %4730 = vmatprep.subr.mxu0 0.0
    %4731 = vmatpush1.msra.mxu0 0.0
    %4732 = vmatprep.subr.mxu0 0.0
    %4733 = vmatpush1.msra.mxu0 0.0
    %4734 = vmatprep.subr.mxu0 0.0
    %4735 = vmatpush1.msra.mxu0 0.0
    %4736 = vmatprep.subr.mxu0 0.0
    %4737 = vmatpush1.msra.mxu0 0.0
    %4738 = vmatprep.subr.mxu0 0.0
    %4739 = vmatpush1.msra.mxu0 0.0
    %4740 = vmatprep.subr.mxu0 0.0
    %4741 = vmatpush1.msra.mxu0 0.0
    %4742 = vmatprep.subr.mxu0 0.0
    %4743 = vmatpush1.msra.mxu0 0.0
    %4744 = vmatprep.subr.mxu0 0.0
    %4745 = vmatpush1.msra.mxu0 0.0
    %4746 = vmatprep.subr.mxu0 0.0
    %4747 = vmatpush1.msra.mxu0 0.0
    %4748 = vmatprep.subr.mxu0 0.0
    %4749 = vmatpush1.msra.mxu0 0.0
    %4750 = vmatprep.subr.mxu0 0.0
    %4751 = vmatpush1.msra.mxu0 0.0
    %4752 = vmatprep.subr.mxu0 0.0
    %4753 = vmatpush1.msra.mxu0 0.0
    %4754 = vmatprep.subr.mxu0 0.0
    %4755 = vmatpush1.msra.mxu0 0.0
    %4756 = vmatprep.subr.mxu0 0.0
    %4757 = vmatpush1.msra.mxu0 0.0
    %4758 = vmatprep.subr.mxu0 0.0
    %4759 = vmatpush1.msra.mxu0 0.0
    %4760 = vmatprep.subr.mxu0 0.0
    %4761 = vmatpush1.msra.mxu0 0.0
    %4762 = vmatprep.subr.mxu0 0.0
    %4763 = vmatpush1.msra.mxu0 0.0
    %4764 = vmatprep.subr.mxu0 0.0
    %4765 = vmatpush1.msra.mxu0 0.0
    %4766 = vmatprep.subr.mxu0 0.0
    %4767 = vmatpush1.msra.mxu0 0.0
    %4768 = vmatprep.subr.mxu0 0.0
    %4769 = vmatpush1.msra.mxu0 0.0
    %4770 = vmatprep.subr.mxu0 0.0
    %4771 = vmatpush1.msra.mxu0 0.0
    %4772 = vmatprep.subr.mxu0 0.0
    %4773 = vmatpush1.msra.mxu0 0.0
    %4774 = vmatprep.subr.mxu0 0.0
    %4775 = vmatpush1.msra.mxu0 0.0
    %4776 = vmatprep.subr.mxu0 0.0
    %4777 = vmatpush1.msra.mxu0 0.0
    %4778 = vmatprep.subr.mxu0 0.0
    %4779 = vmatpush1.msra.mxu0 0.0
    %4780 = vmatprep.subr.mxu0 0.0
    %4781 = vmatpush1.msra.mxu0 0.0
    %4782 = vmatprep.subr.mxu0 0.0
    %4783 = vmatpush1.msra.mxu0 0.0
    %4784 = vmatprep.mubr.f32.mxu0 0.0
    %4785 = vmatmul.mubr.f32.gmra.mrb[0].mxu0 %v4243
    %v4786 = vpop.f32.mrb[0].mxu0
    %v4787 = vadd.f32 0.0, %v4786
    %v4788 = vpop.f32.mrb[0].mxu0
    %4789 = vmatprep.mubr.f32.mxu0 0.0
    %4790 = vmatmul.mubr.f32.gmra.mrb[0].mxu0 %v4245
    %v4791 = vpop.f32.mrb[0].mxu0
    %v4792 = vadd.f32 0.0, %v4791
    %v4793 = vpop.f32.mrb[0].mxu0
    %4794 = vmatprep.mubr.f32.mxu0 0.0
    %4795 = vmatmul.mubr.f32.gmra.mrb[0].mxu0 %v4247
    %v4796 = vpop.f32.mrb[0].mxu0
    %v4797 = vadd.f32 0.0, %v4796
    %v4798 = vpop.f32.mrb[0].mxu0
    %4799 = vmatprep.mubr.f32.mxu0 0.0
    %4800 = vmatmul.mubr.f32.gmra.mrb[0].mxu0 %v4249
    %v4801 = vpop.f32.mrb[0].mxu0
    %v4802 = vadd.f32 0.0, %v4801
    %v4803 = vpop.f32.mrb[0].mxu0
    %4804 = vmatprep.mubr.f32.mxu0 0.0
    %4805 = vmatmul.mubr.f32.gmra.mrb[0].mxu0 %v4251
    %v4806 = vpop.f32.mrb[0].mxu0
    %v4807 = vadd.f32 0.0, %v4806
    %v4808 = vpop.f32.mrb[0].mxu0
    %4809 = vmatprep.mubr.f32.mxu0 0.0
    %4810 = vmatmul.mubr.f32.gmra.mrb[0].mxu0 %v4253
    %v4811 = vpop.f32.mrb[0].mxu0
    %v4812 = vadd.f32 0.0, %v4811
    %v4813 = vpop.f32.mrb[0].mxu0
    %4814 = vmatprep.mubr.f32.mxu0 0.0
    %4815 = vmatmul.mubr.f32.gmra.mrb[0].mxu0 %v4255
    %v4816 = vpop.f32.mrb[0].mxu0
    %v4817 = vadd.f32 0.0, %v4816
    %v4818 = vpop.f32.mrb[0].mxu0
    %4819 = vmatprep.mubr.f32.mxu0 0.0
    %4820 = vmatmul.mubr.f32.gmra.mrb[0].mxu0 %v4257
    %v4821 = vpop.f32.mrb[0].mxu0
    %v4822 = vadd.f32 0.0, %v4821
    %v4823 = vpop.f32.mrb[0].mxu0
    %4824 = vmatprep.mubr.f32.mxu0 0.0
    %4825 = vmatmul.mubr.f32.gmra.mrb[0].mxu0 %v4259
    %v4826 = vpop.f32.mrb[0].mxu0
    %v4827 = vadd.f32 0.0, %v4826
    %v4828 = vpop.f32.mrb[0].mxu0
    %4829 = vmatprep.mubr.f32.mxu0 0.0
    %4830 = vmatmul.mubr.f32.gmra.mrb[0].mxu0 %v4261
    %v4831 = vpop.f32.mrb[0].mxu0
    %v4832 = vadd.f32 0.0, %v4831
    %v4833 = vpop.f32.mrb[0].mxu0
    %4834 = vmatprep.mubr.f32.mxu0 0.0
    %4835 = vmatmul.mubr.f32.gmra.mrb[0].mxu0 %v4263
    %v4836 = vpop.f32.mrb[0].mxu0
    %v4837 = vadd.f32 0.0, %v4836
    %v4838 = vpop.f32.mrb[0].mxu0
    %4839 = vmatprep.mubr.f32.mxu0 0.0
    %4840 = vmatmul.mubr.f32.gmra.mrb[0].mxu0 %v4265
    %v4841 = vpop.f32.mrb[0].mxu0
    %v4842 = vadd.f32 0.0, %v4841
    %v4843 = vpop.f32.mrb[0].mxu0
    %4844 = vmatprep.mubr.f32.mxu0 0.0
    %4845 = vmatmul.mubr.f32.gmra.mrb[0].mxu0 %v4267
    %v4846 = vpop.f32.mrb[0].mxu0
    %v4847 = vadd.f32 0.0, %v4846
    %v4848 = vpop.f32.mrb[0].mxu0
    %4849 = vmatprep.mubr.f32.mxu0 0.0
    %4850 = vmatmul.mubr.f32.gmra.mrb[0].mxu0 %v4269
    %v4851 = vpop.f32.mrb[0].mxu0
    %v4852 = vadd.f32 0.0, %v4851
    %v4853 = vpop.f32.mrb[0].mxu0
    %4854 = vmatprep.mubr.f32.mxu0 0.0
    %4855 = vmatmul.mubr.f32.gmra.mrb[0].mxu0 %v4271
    %v4856 = vpop.f32.mrb[0].mxu0
    %v4857 = vadd.f32 0.0, %v4856
    %v4858 = vpop.f32.mrb[0].mxu0
    %4859 = vmatprep.mubr.f32.mxu0 0.0
    %4860 = vmatmul.mubr.f32.gmra.mrb[0].mxu0 %v4273
    %v4861 = vpop.f32.mrb[0].mxu0
    %v4862 = vadd.f32 0.0, %v4861
    %v4863 = vpop.f32.mrb[0].mxu0
    %4864 = vmatprep.mubr.f32.mxu0 0.0
    %4865 = vmatmul.mubr.f32.gmra.mrb[0].mxu0 %v4275
    %v4866 = vpop.f32.mrb[0].mxu0
    %v4867 = vadd.f32 0.0, %v4866
    %v4868 = vpop.f32.mrb[0].mxu0
    %4869 = vmatprep.mubr.f32.mxu0 0.0
    %4870 = vmatmul.mubr.f32.gmra.mrb[0].mxu0 %v4277
    %v4871 = vpop.f32.mrb[0].mxu0
    %v4872 = vadd.f32 0.0, %v4871
    %v4873 = vpop.f32.mrb[0].mxu0
    %4874 = vmatprep.mubr.f32.mxu0 0.0
    %4875 = vmatmul.mubr.f32.gmra.mrb[0].mxu0 %v4279
    %v4876 = vpop.f32.mrb[0].mxu0
    %v4877 = vadd.f32 0.0, %v4876
    %v4878 = vpop.f32.mrb[0].mxu0
    %4879 = vmatprep.mubr.f32.mxu0 0.0
    %4880 = vmatmul.mubr.f32.gmra.mrb[0].mxu0 %v4281
    %v4881 = vpop.f32.mrb[0].mxu0
    %v4882 = vadd.f32 0.0, %v4881
    %v4883 = vpop.f32.mrb[0].mxu0
    %4884 = vmatprep.mubr.f32.mxu0 0.0
    %4885 = vmatmul.mubr.f32.gmra.mrb[0].mxu0 %v4283
    %v4886 = vpop.f32.mrb[0].mxu0
    %v4887 = vadd.f32 0.0, %v4886
    %v4888 = vpop.f32.mrb[0].mxu0
    %4889 = vmatprep.mubr.f32.mxu0 0.0
    %4890 = vmatmul.mubr.f32.gmra.mrb[0].mxu0 %v4285
    %v4891 = vpop.f32.mrb[0].mxu0
    %v4892 = vadd.f32 0.0, %v4891
    %v4893 = vpop.f32.mrb[0].mxu0
    %4894 = vmatprep.mubr.f32.mxu0 0.0
    %4895 = vmatmul.mubr.f32.gmra.mrb[0].mxu0 %v4287
    %v4896 = vpop.f32.mrb[0].mxu0
    %v4897 = vadd.f32 0.0, %v4896
    %v4898 = vpop.f32.mrb[0].mxu0
    %4899 = vmatprep.mubr.f32.mxu0 0.0
    %4900 = vmatmul.mubr.f32.gmra.mrb[0].mxu0 %v4718
    %v4901 = vpop.f32.mrb[0].mxu0
    %v4902 = vadd.f32 0.0, %v4901
    %v4903 = vpop.f32.mrb[0].mxu0
    %4904 = vdwg.mxu0
    %v4905 = vadd.f32 %v4690, %v4787
    %v4906 = vadd.f32 %v4691, %v4792
    %v4907 = vadd.f32 %v4692, %v4797
    %v4908 = vadd.f32 %v4693, %v4802
    %v4909 = vadd.f32 %v4694, %v4807
    %v4910 = vadd.f32 %v4695, %v4812
    %v4911 = vadd.f32 %v4696, %v4817
    %v4912 = vadd.f32 %v4697, %v4822
    %v4913 = vadd.f32 %v4698, %v4827
    %v4914 = vadd.f32 %v4699, %v4832
    %v4915 = vadd.f32 %v4700, %v4837
    %v4916 = vadd.f32 %v4701, %v4842
    %v4917 = vadd.f32 %v4702, %v4847
    %v4918 = vadd.f32 %v4703, %v4852
    %v4919 = vadd.f32 %v4704, %v4857
    %v4920 = vadd.f32 %v4705, %v4862
    %v4921 = vadd.f32 %v4706, %v4867
    %v4922 = vadd.f32 %v4707, %v4872
    %v4923 = vadd.f32 %v4708, %v4877
    %v4924 = vadd.f32 %v4709, %v4882
    %v4925 = vadd.f32 %v4710, %v4887
    %v4926 = vadd.f32 %v4711, %v4892
    %v4927 = vadd.f32 %v4712, %v4897
    %v4928 = vadd.f32 %v4713, %v4902
    %v4929 = vld [vmem:[%s1 + $0x110] sm:$0xff]
    %v4930 = vld [vmem:[%s1 + $0x118] sm:$0xff]
    %v4931 = vrot.slane %v2882, 4
    %v4932 = vrot.slane %v2883, 4
    %v4933 = vsel %vm2269, %v4931, %v4932
    %v4934 = vrot.slane %v2884, 4
    %v4935 = vsel %vm2269, %v4932, %v4934
    %v4936 = vrot.slane %v2885, 4
    %v4937 = vsel %vm2269, %v4934, %v4936
    %v4938 = vrot.slane %v2886, 4
    %v4939 = vsel %vm2269, %v4936, %v4938
    %v4940 = vrot.slane %v2887, 4
    %v4941 = vsel %vm2269, %v4938, %v4940
    %v4942 = vrot.slane %v2888, 4
    %v4943 = vsel %vm2269, %v4940, %v4942
    %v4944 = vrot.slane %v2889, 4
    %v4945 = vsel %vm2269, %v4942, %v4944
    %v4946 = vrot.slane %v2890, 4
    %v4947 = vsel %vm2269, %v4944, %v4946
    %v4948 = vrot.slane %v2891, 4
    %v4949 = vsel %vm2269, %v4946, %v4948
    %v4950 = vrot.slane %v2892, 4
    %v4951 = vsel %vm2269, %v4948, %v4950
    %v4952 = vrot.slane %v2893, 4
    %v4953 = vsel %vm2269, %v4950, %v4952
    %v4954 = vrot.slane %v2894, 4
    %v4955 = vsel %vm2269, %v4952, %v4954
    %v4956 = vrot.slane %v2895, 4
    %v4957 = vsel %vm2269, %v4954, %v4956
    %v4958 = vrot.slane %v2896, 4
    %v4959 = vsel %vm2269, %v4956, %v4958
    %v4960 = vrot.slane %v2897, 4
    %v4961 = vsel %vm2269, %v4958, %v4960
    %v4962 = vrot.slane %v2898, 4
    %v4963 = vsel %vm2269, %v4960, %v4962
    %v4964 = vrot.slane %v2899, 4
    %v4965 = vsel %vm2269, %v4962, %v4964
    %v4966 = vrot.slane %v2900, 4
    %v4967 = vsel %vm2269, %v4964, %v4966
    %v4968 = vrot.slane %v2901, 4
    %v4969 = vsel %vm2269, %v4966, %v4968
    %v4970 = vrot.slane %v2902, 4
    %v4971 = vsel %vm2269, %v4968, %v4970
    %v4972 = vrot.slane %v2903, 4
    %v4973 = vsel %vm2269, %v4970, %v4972
    %v4974 = vrot.slane %v2904, 4
    %v4975 = vsel %vm2269, %v4972, %v4974
    %v4976 = vrot.slane %v2905, 4
    %v4977 = vsel %vm2269, %v4974, %v4976
    %v4978 = vrot.slane %v2906, 4
    %v4979 = vsel %vm2269, %v4976, %v4978
    %v4980 = vsel %vm146, %v4933, 0
    %v4982 = vsel %vm146, %v4935, 0
    %v4984 = vsel %vm146, %v4937, 0
    %v4986 = vsel %vm146, %v4939, 0
    %v4988 = vsel %vm146, %v4941, 0
    %v4990 = vsel %vm146, %v4943, 0
    %v4992 = vsel %vm146, %v4945, 0
    %v4994 = vsel %vm146, %v4947, 0
    %v4996 = vsel %vm146, %v4949, 0
    %v4998 = vsel %vm146, %v4951, 0
    %v5000 = vsel %vm146, %v4953, 0
    %v5002 = vsel %vm146, %v4955, 0
    %v5004 = vsel %vm146, %v4957, 0
    %v5006 = vsel %vm146, %v4959, 0
    %v5008 = vsel %vm146, %v4961, 0
    %v5010 = vsel %vm146, %v4963, 0
    %v5012 = vsel %vm146, %v4965, 0
    %v5014 = vsel %vm146, %v4967, 0
    %v5016 = vsel %vm146, %v4969, 0
    %v5018 = vsel %vm146, %v4971, 0
    %v5020 = vsel %vm146, %v4973, 0
    %v5022 = vsel %vm146, %v4975, 0
    %v5024 = vsel %vm146, %v4977, 0
    %v5026 = vsel %vm146, %v4979, 0
    %5028 = vmatprep.subr.mxu0 0.0
    %5029 = vmatpush1.msra.mxu0 %v4929
    %5030 = vmatprep.subr.mxu0 0.0
    %5031 = vmatpush1.msra.mxu0 %v4930
    %5032 = vmatprep.subr.mxu0 0.0
    %5033 = vmatpush1.msra.mxu0 0.0
    %5034 = vmatprep.subr.mxu0 0.0
    %5035 = vmatpush1.msra.mxu0 0.0
    %5036 = vmatprep.subr.mxu0 0.0
    %5037 = vmatpush1.msra.mxu0 0.0
    %5038 = vmatprep.subr.mxu0 0.0
    %5039 = vmatpush1.msra.mxu0 0.0
    %5040 = vmatprep.subr.mxu0 0.0
    %5041 = vmatpush1.msra.mxu0 0.0
    %5042 = vmatprep.subr.mxu0 0.0
    %5043 = vmatpush1.msra.mxu0 0.0
    %5044 = vmatprep.subr.mxu0 0.0
    %5045 = vmatpush1.msra.mxu0 0.0
    %5046 = vmatprep.subr.mxu0 0.0
    %5047 = vmatpush1.msra.mxu0 0.0
    %5048 = vmatprep.subr.mxu0 0.0
    %5049 = vmatpush1.msra.mxu0 0.0
    %5050 = vmatprep.subr.mxu0 0.0
    %5051 = vmatpush1.msra.mxu0 0.0
    %5052 = vmatprep.subr.mxu0 0.0
    %5053 = vmatpush1.msra.mxu0 0.0
    %5054 = vmatprep.subr.mxu0 0.0
    %5055 = vmatpush1.msra.mxu0 0.0
    %5056 = vmatprep.subr.mxu0 0.0
    %5057 = vmatpush1.msra.mxu0 0.0
    %5058 = vmatprep.subr.mxu0 0.0
    %5059 = vmatpush1.msra.mxu0 0.0
    %5060 = vmatprep.subr.mxu0 0.0
    %5061 = vmatpush1.msra.mxu0 0.0
    %5062 = vmatprep.subr.mxu0 0.0
    %5063 = vmatpush1.msra.mxu0 0.0
    %5064 = vmatprep.subr.mxu0 0.0
    %5065 = vmatpush1.msra.mxu0 0.0
    %5066 = vmatprep.subr.mxu0 0.0
    %5067 = vmatpush1.msra.mxu0 0.0
    %5068 = vmatprep.subr.mxu0 0.0
    %5069 = vmatpush1.msra.mxu0 0.0
    %5070 = vmatprep.subr.mxu0 0.0
    %5071 = vmatpush1.msra.mxu0 0.0
    %5072 = vmatprep.subr.mxu0 0.0
    %5073 = vmatpush1.msra.mxu0 0.0
    %5074 = vmatprep.subr.mxu0 0.0
    %5075 = vmatpush1.msra.mxu0 0.0
    %5076 = vmatprep.subr.mxu0 0.0
    %5077 = vmatpush1.msra.mxu0 0.0
    %5078 = vmatprep.subr.mxu0 0.0
    %5079 = vmatpush1.msra.mxu0 0.0
    %5080 = vmatprep.subr.mxu0 0.0
    %5081 = vmatpush1.msra.mxu0 0.0
    %5082 = vmatprep.subr.mxu0 0.0
    %5083 = vmatpush1.msra.mxu0 0.0
    %5084 = vmatprep.subr.mxu0 0.0
    %5085 = vmatpush1.msra.mxu0 0.0
    %5086 = vmatprep.subr.mxu0 0.0
    %5087 = vmatpush1.msra.mxu0 0.0
    %5088 = vmatprep.subr.mxu0 0.0
    %5089 = vmatpush1.msra.mxu0 0.0
    %5090 = vmatprep.subr.mxu0 0.0
    %5091 = vmatpush1.msra.mxu0 0.0
    %5092 = vmatprep.mubr.f32.mxu0 0.0
    %5093 = vmatmul.mubr.f32.gmra.mrb[0].mxu0 %v4980
    %v5094 = vpop.f32.mrb[0].mxu0
    %v5095 = vadd.f32 0.0, %v5094
    %v5096 = vpop.f32.mrb[0].mxu0
    %5097 = vmatprep.mubr.f32.mxu0 0.0
    %5098 = vmatmul.mubr.f32.gmra.mrb[0].mxu0 %v4982
    %v5099 = vpop.f32.mrb[0].mxu0
    %v5100 = vadd.f32 0.0, %v5099
    %v5101 = vpop.f32.mrb[0].mxu0
    %5102 = vmatprep.mubr.f32.mxu0 0.0
    %5103 = vmatmul.mubr.f32.gmra.mrb[0].mxu0 %v4984
    %v5104 = vpop.f32.mrb[0].mxu0
    %v5105 = vadd.f32 0.0, %v5104
    %v5106 = vpop.f32.mrb[0].mxu0
    %5107 = vmatprep.mubr.f32.mxu0 0.0
    %5108 = vmatmul.mubr.f32.gmra.mrb[0].mxu0 %v4986
    %v5109 = vpop.f32.mrb[0].mxu0
    %v5110 = vadd.f32 0.0, %v5109
    %v5111 = vpop.f32.mrb[0].mxu0
    %5112 = vmatprep.mubr.f32.mxu0 0.0
    %5113 = vmatmul.mubr.f32.gmra.mrb[0].mxu0 %v4988
    %v5114 = vpop.f32.mrb[0].mxu0
    %v5115 = vadd.f32 0.0, %v5114
    %v5116 = vpop.f32.mrb[0].mxu0
    %5117 = vmatprep.mubr.f32.mxu0 0.0
    %5118 = vmatmul.mubr.f32.gmra.mrb[0].mxu0 %v4990
    %v5119 = vpop.f32.mrb[0].mxu0
    %v5120 = vadd.f32 0.0, %v5119
    %v5121 = vpop.f32.mrb[0].mxu0
    %5122 = vmatprep.mubr.f32.mxu0 0.0
    %5123 = vmatmul.mubr.f32.gmra.mrb[0].mxu0 %v4992
    %v5124 = vpop.f32.mrb[0].mxu0
    %v5125 = vadd.f32 0.0, %v5124
    %v5126 = vpop.f32.mrb[0].mxu0
    %5127 = vmatprep.mubr.f32.mxu0 0.0
    %5128 = vmatmul.mubr.f32.gmra.mrb[0].mxu0 %v4994
    %v5129 = vpop.f32.mrb[0].mxu0
    %v5130 = vadd.f32 0.0, %v5129
    %v5131 = vpop.f32.mrb[0].mxu0
    %5132 = vmatprep.mubr.f32.mxu0 0.0
    %5133 = vmatmul.mubr.f32.gmra.mrb[0].mxu0 %v4996
    %v5134 = vpop.f32.mrb[0].mxu0
    %v5135 = vadd.f32 0.0, %v5134
    %v5136 = vpop.f32.mrb[0].mxu0
    %5137 = vmatprep.mubr.f32.mxu0 0.0
    %5138 = vmatmul.mubr.f32.gmra.mrb[0].mxu0 %v4998
    %v5139 = vpop.f32.mrb[0].mxu0
    %v5140 = vadd.f32 0.0, %v5139
    %v5141 = vpop.f32.mrb[0].mxu0
    %5142 = vmatprep.mubr.f32.mxu0 0.0
    %5143 = vmatmul.mubr.f32.gmra.mrb[0].mxu0 %v5000
    %v5144 = vpop.f32.mrb[0].mxu0
    %v5145 = vadd.f32 0.0, %v5144
    %v5146 = vpop.f32.mrb[0].mxu0
    %5147 = vmatprep.mubr.f32.mxu0 0.0
    %5148 = vmatmul.mubr.f32.gmra.mrb[0].mxu0 %v5002
    %v5149 = vpop.f32.mrb[0].mxu0
    %v5150 = vadd.f32 0.0, %v5149
    %v5151 = vpop.f32.mrb[0].mxu0
    %5152 = vmatprep.mubr.f32.mxu0 0.0
    %5153 = vmatmul.mubr.f32.gmra.mrb[0].mxu0 %v5004
    %v5154 = vpop.f32.mrb[0].mxu0
    %v5155 = vadd.f32 0.0, %v5154
    %v5156 = vpop.f32.mrb[0].mxu0
    %5157 = vmatprep.mubr.f32.mxu0 0.0
    %5158 = vmatmul.mubr.f32.gmra.mrb[0].mxu0 %v5006
    %v5159 = vpop.f32.mrb[0].mxu0
    %v5160 = vadd.f32 0.0, %v5159
    %v5161 = vpop.f32.mrb[0].mxu0
    %5162 = vmatprep.mubr.f32.mxu0 0.0
    %5163 = vmatmul.mubr.f32.gmra.mrb[0].mxu0 %v5008
    %v5164 = vpop.f32.mrb[0].mxu0
    %v5165 = vadd.f32 0.0, %v5164
    %v5166 = vpop.f32.mrb[0].mxu0
    %5167 = vmatprep.mubr.f32.mxu0 0.0
    %5168 = vmatmul.mubr.f32.gmra.mrb[0].mxu0 %v5010
    %v5169 = vpop.f32.mrb[0].mxu0
    %v5170 = vadd.f32 0.0, %v5169
    %v5171 = vpop.f32.mrb[0].mxu0
    %5172 = vmatprep.mubr.f32.mxu0 0.0
    %5173 = vmatmul.mubr.f32.gmra.mrb[0].mxu0 %v5012
    %v5174 = vpop.f32.mrb[0].mxu0
    %v5175 = vadd.f32 0.0, %v5174
    %v5176 = vpop.f32.mrb[0].mxu0
    %5177 = vmatprep.mubr.f32.mxu0 0.0
    %5178 = vmatmul.mubr.f32.gmra.mrb[0].mxu0 %v5014
    %v5179 = vpop.f32.mrb[0].mxu0
    %v5180 = vadd.f32 0.0, %v5179
    %v5181 = vpop.f32.mrb[0].mxu0
    %5182 = vmatprep.mubr.f32.mxu0 0.0
    %5183 = vmatmul.mubr.f32.gmra.mrb[0].mxu0 %v5016
    %v5184 = vpop.f32.mrb[0].mxu0
    %v5185 = vadd.f32 0.0, %v5184
    %v5186 = vpop.f32.mrb[0].mxu0
    %5187 = vmatprep.mubr.f32.mxu0 0.0
    %5188 = vmatmul.mubr.f32.gmra.mrb[0].mxu0 %v5018
    %v5189 = vpop.f32.mrb[0].mxu0
    %v5190 = vadd.f32 0.0, %v5189
    %v5191 = vpop.f32.mrb[0].mxu0
    %5192 = vmatprep.mubr.f32.mxu0 0.0
    %5193 = vmatmul.mubr.f32.gmra.mrb[0].mxu0 %v5020
    %v5194 = vpop.f32.mrb[0].mxu0
    %v5195 = vadd.f32 0.0, %v5194
    %v5196 = vpop.f32.mrb[0].mxu0
    %5197 = vmatprep.mubr.f32.mxu0 0.0
    %5198 = vmatmul.mubr.f32.gmra.mrb[0].mxu0 %v5022
    %v5199 = vpop.f32.mrb[0].mxu0
    %v5200 = vadd.f32 0.0, %v5199
    %v5201 = vpop.f32.mrb[0].mxu0
    %5202 = vmatprep.mubr.f32.mxu0 0.0
    %5203 = vmatmul.mubr.f32.gmra.mrb[0].mxu0 %v5024
    %v5204 = vpop.f32.mrb[0].mxu0
    %v5205 = vadd.f32 0.0, %v5204
    %v5206 = vpop.f32.mrb[0].mxu0
    %5207 = vmatprep.mubr.f32.mxu0 0.0
    %5208 = vmatmul.mubr.f32.gmra.mrb[0].mxu0 %v5026
    %v5209 = vpop.f32.mrb[0].mxu0
    %v5210 = vadd.f32 0.0, %v5209
    %v5211 = vpop.f32.mrb[0].mxu0
    %5212 = vdwg.mxu0
    %v5213 = vadd.f32 %v4905, %v5095
    %v5214 = vadd.f32 %v4906, %v5100
    %v5215 = vadd.f32 %v4907, %v5105
    %v5216 = vadd.f32 %v4908, %v5110
    %v5217 = vadd.f32 %v4909, %v5115
    %v5218 = vadd.f32 %v4910, %v5120
    %v5219 = vadd.f32 %v4911, %v5125
    %v5220 = vadd.f32 %v4912, %v5130
    %v5221 = vadd.f32 %v4913, %v5135
    %v5222 = vadd.f32 %v4914, %v5140
    %v5223 = vadd.f32 %v4915, %v5145
    %v5224 = vadd.f32 %v4916, %v5150
    %v5225 = vadd.f32 %v4917, %v5155
    %v5226 = vadd.f32 %v4918, %v5160
    %v5227 = vadd.f32 %v4919, %v5165
    %v5228 = vadd.f32 %v4920, %v5170
    %v5229 = vadd.f32 %v4921, %v5175
    %v5230 = vadd.f32 %v4922, %v5180
    %v5231 = vadd.f32 %v4923, %v5185
    %v5232 = vadd.f32 %v4924, %v5190
    %v5233 = vadd.f32 %v4925, %v5195
    %v5234 = vadd.f32 %v4926, %v5200
    %v5235 = vadd.f32 %v4927, %v5205
    %v5236 = vadd.f32 %v4928, %v5210
    %v5238 = vlaneseq
    %v5239 = vshrl.u32 %v5238, 7
    %v5240 = vsub.s32 0, %v5239
    %v5241 = vrot.slane %v17, %v5240
    %v5242 = vlaneseq
    %v5243 = vshrl.u32 %v5242, 7
    %v5244 = vsub.s32 1, %v5243
    %v5245 = vrot.slane %v17, %v5244
    %vm5247 = vcmask 523264
    %v5248 = vsel %vm5247, %v5245, 0
    %5250 = vmatprep.subr.mxu0 0.0
    %5251 = vmatpush1.msra.mxu0 %v5213
    %5252 = vmatprep.subr.mxu0 0.0
    %5253 = vmatpush1.msra.mxu0 %v5214
    %5254 = vmatprep.subr.mxu0 0.0
    %5255 = vmatpush1.msra.mxu0 %v5215
    %5256 = vmatprep.subr.mxu0 0.0
    %5257 = vmatpush1.msra.mxu0 %v5216
    %5258 = vmatprep.subr.mxu0 0.0
    %5259 = vmatpush1.msra.mxu0 %v5217
    %5260 = vmatprep.subr.mxu0 0.0
    %5261 = vmatpush1.msra.mxu0 %v5218
    %5262 = vmatprep.subr.mxu0 0.0
    %5263 = vmatpush1.msra.mxu0 %v5219
    %5264 = vmatprep.subr.mxu0 0.0
    %5265 = vmatpush1.msra.mxu0 %v5220
    %5266 = vmatprep.subr.mxu0 0.0
    %5267 = vmatpush1.msra.mxu0 %v5221
    %5268 = vmatprep.subr.mxu0 0.0
    %5269 = vmatpush1.msra.mxu0 %v5222
    %5270 = vmatprep.subr.mxu0 0.0
    %5271 = vmatpush1.msra.mxu0 %v5223
    %5272 = vmatprep.subr.mxu0 0.0
    %5273 = vmatpush1.msra.mxu0 %v5224
    %5274 = vmatprep.subr.mxu0 0.0
    %5275 = vmatpush1.msra.mxu0 %v5225
    %5276 = vmatprep.subr.mxu0 0.0
    %5277 = vmatpush1.msra.mxu0 %v5226
    %5278 = vmatprep.subr.mxu0 0.0
    %5279 = vmatpush1.msra.mxu0 %v5227
    %5280 = vmatprep.subr.mxu0 0.0
    %5281 = vmatpush1.msra.mxu0 %v5228
    %5282 = vmatprep.subr.mxu0 0.0
    %5283 = vmatpush1.msra.mxu0 %v5229
    %5284 = vmatprep.subr.mxu0 0.0
    %5285 = vmatpush1.msra.mxu0 %v5230
    %5286 = vmatprep.subr.mxu0 0.0
    %5287 = vmatpush1.msra.mxu0 %v5231
    %5288 = vmatprep.subr.mxu0 0.0
    %5289 = vmatpush1.msra.mxu0 %v5232
    %5290 = vmatprep.subr.mxu0 0.0
    %5291 = vmatpush1.msra.mxu0 %v5233
    %5292 = vmatprep.subr.mxu0 0.0
    %5293 = vmatpush1.msra.mxu0 %v5234
    %5294 = vmatprep.subr.mxu0 0.0
    %5295 = vmatpush1.msra.mxu0 %v5235
    %5296 = vmatprep.subr.mxu0 0.0
    %5297 = vmatpush1.msra.mxu0 %v5236
    %5298 = vmatprep.subr.mxu0 0.0
    %5299 = vmatpush1.msra.mxu0 0.0
    %5300 = vmatprep.subr.mxu0 0.0
    %5301 = vmatpush1.msra.mxu0 0.0
    %5302 = vmatprep.subr.mxu0 0.0
    %5303 = vmatpush1.msra.mxu0 0.0
    %5304 = vmatprep.subr.mxu0 0.0
    %5305 = vmatpush1.msra.mxu0 0.0
    %5306 = vmatprep.subr.mxu0 0.0
    %5307 = vmatpush1.msra.mxu0 0.0
    %5308 = vmatprep.subr.mxu0 0.0
    %5309 = vmatpush1.msra.mxu0 0.0
    %5310 = vmatprep.subr.mxu0 0.0
    %5311 = vmatpush1.msra.mxu0 0.0
    %5312 = vmatprep.subr.mxu0 0.0
    %5313 = vmatpush1.msra.mxu0 0.0
    %5314 = vmatprep.mubr.f32.mxu0 %v5248
    %5315 = vmatmul.mubr.f32.gmra.mrb[0].mxu0 %v5241
    %v5316 = vpop.f32.mrb[0].mxu0
    %v5317 = vadd.f32 0.0, %v5316
    %v5318 = vpop.f32.mrb[0].mxu0
    %5319 = vdwg.mxu0
    %v5320 = vmul.f32 %v5317, 0.02
    %v5321 = vlaneseq
    %v5322 = vshrl.u32 %v5321, 7
    %v5323 = vsub.s32 0, %v5322
    %v5324 = vrot.slane %v5320, %v5323
    %v5325 = vsub.f32 %v5213, %v5324
    %v5326 = vsub.f32 %v5214, %v5324
    %v5327 = vsub.f32 %v5215, %v5324
    %v5328 = vsub.f32 %v5216, %v5324
    %v5329 = vsub.f32 %v5217, %v5324
    %v5330 = vsub.f32 %v5218, %v5324
    %v5331 = vsub.f32 %v5219, %v5324
    %v5332 = vsub.f32 %v5220, %v5324
    %v5333 = vsub.f32 %v5221, %v5324
    %v5334 = vsub.f32 %v5222, %v5324
    %v5335 = vsub.f32 %v5223, %v5324
    %v5336 = vsub.f32 %v5224, %v5324
    %v5337 = vsub.f32 %v5225, %v5324
    %v5338 = vsub.f32 %v5226, %v5324
    %v5339 = vsub.f32 %v5227, %v5324
    %v5340 = vsub.f32 %v5228, %v5324
    %v5341 = vsub.f32 %v5229, %v5324
    %v5342 = vsub.f32 %v5230, %v5324
    %v5343 = vsub.f32 %v5231, %v5324
    %v5344 = vsub.f32 %v5232, %v5324
    %v5345 = vsub.f32 %v5233, %v5324
    %v5346 = vsub.f32 %v5234, %v5324
    %v5347 = vsub.f32 %v5235, %v5324
    %v5348 = vsub.f32 %v5236, %v5324
    %v5349 = vmul.f32 %v5325, %v5325
    %v5350 = vmul.f32 %v5326, %v5326
    %v5351 = vmul.f32 %v5327, %v5327
    %v5352 = vmul.f32 %v5328, %v5328
    %v5353 = vmul.f32 %v5329, %v5329
    %v5354 = vmul.f32 %v5330, %v5330
    %v5355 = vmul.f32 %v5331, %v5331
    %v5356 = vmul.f32 %v5332, %v5332
    %v5357 = vmul.f32 %v5333, %v5333
    %v5358 = vmul.f32 %v5334, %v5334
    %v5359 = vmul.f32 %v5335, %v5335
    %v5360 = vmul.f32 %v5336, %v5336
    %v5361 = vmul.f32 %v5337, %v5337
    %v5362 = vmul.f32 %v5338, %v5338
    %v5363 = vmul.f32 %v5339, %v5339
    %v5364 = vmul.f32 %v5340, %v5340
    %v5365 = vmul.f32 %v5341, %v5341
    %v5366 = vmul.f32 %v5342, %v5342
    %v5367 = vmul.f32 %v5343, %v5343
    %v5368 = vmul.f32 %v5344, %v5344
    %v5369 = vmul.f32 %v5345, %v5345
    %v5370 = vmul.f32 %v5346, %v5346
    %v5371 = vmul.f32 %v5347, %v5347
    %v5372 = vmul.f32 %v5348, %v5348
    %5373 = vmatprep.subr.mxu0 0.0
    %5374 = vmatpush1.msra.mxu0 %v5349
    %5375 = vmatprep.subr.mxu0 0.0
    %5376 = vmatpush1.msra.mxu0 %v5350
    %5377 = vmatprep.subr.mxu0 0.0
    %5378 = vmatpush1.msra.mxu0 %v5351
    %5379 = vmatprep.subr.mxu0 0.0
    %5380 = vmatpush1.msra.mxu0 %v5352
    %5381 = vmatprep.subr.mxu0 0.0
    %5382 = vmatpush1.msra.mxu0 %v5353
    %5383 = vmatprep.subr.mxu0 0.0
    %5384 = vmatpush1.msra.mxu0 %v5354
    %5385 = vmatprep.subr.mxu0 0.0
    %5386 = vmatpush1.msra.mxu0 %v5355
    %5387 = vmatprep.subr.mxu0 0.0
    %5388 = vmatpush1.msra.mxu0 %v5356
    %5389 = vmatprep.subr.mxu0 0.0
    %5390 = vmatpush1.msra.mxu0 %v5357
    %5391 = vmatprep.subr.mxu0 0.0
    %5392 = vmatpush1.msra.mxu0 %v5358
    %5393 = vmatprep.subr.mxu0 0.0
    %5394 = vmatpush1.msra.mxu0 %v5359
    %5395 = vmatprep.subr.mxu0 0.0
    %5396 = vmatpush1.msra.mxu0 %v5360
    %5397 = vmatprep.subr.mxu0 0.0
    %5398 = vmatpush1.msra.mxu0 %v5361
    %5399 = vmatprep.subr.mxu0 0.0
    %5400 = vmatpush1.msra.mxu0 %v5362
    %5401 = vmatprep.subr.mxu0 0.0
    %5402 = vmatpush1.msra.mxu0 %v5363
    %5403 = vmatprep.subr.mxu0 0.0
    %5404 = vmatpush1.msra.mxu0 %v5364
    %5405 = vmatprep.subr.mxu0 0.0
    %5406 = vmatpush1.msra.mxu0 %v5365
    %5407 = vmatprep.subr.mxu0 0.0
    %5408 = vmatpush1.msra.mxu0 %v5366
    %5409 = vmatprep.subr.mxu0 0.0
    %5410 = vmatpush1.msra.mxu0 %v5367
    %5411 = vmatprep.subr.mxu0 0.0
    %5412 = vmatpush1.msra.mxu0 %v5368
    %5413 = vmatprep.subr.mxu0 0.0
    %5414 = vmatpush1.msra.mxu0 %v5369
    %5415 = vmatprep.subr.mxu0 0.0
    %5416 = vmatpush1.msra.mxu0 %v5370
    %5417 = vmatprep.subr.mxu0 0.0
    %5418 = vmatpush1.msra.mxu0 %v5371
    %5419 = vmatprep.subr.mxu0 0.0
    %5420 = vmatpush1.msra.mxu0 %v5372
    %5421 = vmatprep.subr.mxu0 0.0
    %5422 = vmatpush1.msra.mxu0 0.0
    %5423 = vmatprep.subr.mxu0 0.0
    %5424 = vmatpush1.msra.mxu0 0.0
    %5425 = vmatprep.subr.mxu0 0.0
    %5426 = vmatpush1.msra.mxu0 0.0
    %5427 = vmatprep.subr.mxu0 0.0
    %5428 = vmatpush1.msra.mxu0 0.0
    %5429 = vmatprep.subr.mxu0 0.0
    %5430 = vmatpush1.msra.mxu0 0.0
    %5431 = vmatprep.subr.mxu0 0.0
    %5432 = vmatpush1.msra.mxu0 0.0
    %5433 = vmatprep.subr.mxu0 0.0
    %5434 = vmatpush1.msra.mxu0 0.0
    %5435 = vmatprep.subr.mxu0 0.0
    %5436 = vmatpush1.msra.mxu0 0.0
    %5437 = vmatprep.mubr.f32.mxu0 %v5248
    %5438 = vmatmul.mubr.f32.gmra.mrb[0].mxu0 %v5241
    %v5439 = vpop.f32.mrb[0].mxu0
    %v5440 = vadd.f32 0.0, %v5439
    %v5441 = vpop.f32.mrb[0].mxu0
    %5442 = vdwg.mxu0
    %v5443 = vmul.f32 %v5440, 0.02
    %v5444 = vadd.f32 %v5443, 1e-05
    %v5445 = vrsqrt.pop %v5444
    %v5446 = vmul.f32 %v22, %v5445
    %v5447 = vlaneseq
    %v5448 = vshrl.u32 %v5447, 7
    %v5449 = vsub.s32 0, %v5448
    %v5450 = vrot.slane %v5446, %v5449
    %v5451 = vmul.f32 %v5325, %v5450
    %v5452 = vmul.f32 %v5326, %v5450
    %v5453 = vmul.f32 %v5327, %v5450
    %v5454 = vmul.f32 %v5328, %v5450
    %v5455 = vmul.f32 %v5329, %v5450
    %v5456 = vmul.f32 %v5330, %v5450
    %v5457 = vmul.f32 %v5331, %v5450
    %v5458 = vmul.f32 %v5332, %v5450
    %v5459 = vmul.f32 %v5333, %v5450
    %v5460 = vmul.f32 %v5334, %v5450
    %v5461 = vmul.f32 %v5335, %v5450
    %v5462 = vmul.f32 %v5336, %v5450
    %v5463 = vmul.f32 %v5337, %v5450
    %v5464 = vmul.f32 %v5338, %v5450
    %v5465 = vmul.f32 %v5339, %v5450
    %v5466 = vmul.f32 %v5340, %v5450
    %v5467 = vmul.f32 %v5341, %v5450
    %v5468 = vmul.f32 %v5342, %v5450
    %v5469 = vmul.f32 %v5343, %v5450
    %v5470 = vmul.f32 %v5344, %v5450
    %v5471 = vmul.f32 %v5345, %v5450
    %v5472 = vmul.f32 %v5346, %v5450
    %v5473 = vmul.f32 %v5347, %v5450
    %v5474 = vmul.f32 %v5348, %v5450
    %v5475 = vadd.f32 %v5451, %v23
    %v5476 = vadd.f32 %v5452, %v23
    %v5477 = vadd.f32 %v5453, %v23
    %v5478 = vadd.f32 %v5454, %v23
    %v5479 = vadd.f32 %v5455, %v23
    %v5480 = vadd.f32 %v5456, %v23
    %v5481 = vadd.f32 %v5457, %v23
    %v5482 = vadd.f32 %v5458, %v23
    %v5483 = vadd.f32 %v5459, %v23
    %v5484 = vadd.f32 %v5460, %v23
    %v5485 = vadd.f32 %v5461, %v23
    %v5486 = vadd.f32 %v5462, %v23
    %v5487 = vadd.f32 %v5463, %v23
    %v5488 = vadd.f32 %v5464, %v23
    %v5489 = vadd.f32 %v5465, %v23
    %v5490 = vadd.f32 %v5466, %v23
    %v5491 = vadd.f32 %v5467, %v23
    %v5492 = vadd.f32 %v5468, %v23
    %v5493 = vadd.f32 %v5469, %v23
    %v5494 = vadd.f32 %v5470, %v23
    %v5495 = vadd.f32 %v5471, %v23
    %v5496 = vadd.f32 %v5472, %v23
    %v5497 = vadd.f32 %v5473, %v23
    %v5498 = vadd.f32 %v5474, %v23
    %v5499 = vmax.f32 %v5475, 0.0
    %v5500 = vmax.f32 %v5476, 0.0
    %v5501 = vmax.f32 %v5477, 0.0
    %v5502 = vmax.f32 %v5478, 0.0
    %v5503 = vmax.f32 %v5479, 0.0
    %v5504 = vmax.f32 %v5480, 0.0
    %v5505 = vmax.f32 %v5481, 0.0
    %v5506 = vmax.f32 %v5482, 0.0
    %v5507 = vmax.f32 %v5483, 0.0
    %v5508 = vmax.f32 %v5484, 0.0
    %v5509 = vmax.f32 %v5485, 0.0
    %v5510 = vmax.f32 %v5486, 0.0
    %v5511 = vmax.f32 %v5487, 0.0
    %v5512 = vmax.f32 %v5488, 0.0
    %v5513 = vmax.f32 %v5489, 0.0
    %v5514 = vmax.f32 %v5490, 0.0
    %v5515 = vmax.f32 %v5491, 0.0
    %v5516 = vmax.f32 %v5492, 0.0
    %v5517 = vmax.f32 %v5493, 0.0
    %v5518 = vmax.f32 %v5494, 0.0
    %v5519 = vmax.f32 %v5495, 0.0
    %v5520 = vmax.f32 %v5496, 0.0
    %v5521 = vmax.f32 %v5497, 0.0
    %v5522 = vmax.f32 %v5498, 0.0
    %v5523 = vld [vmem:[%s1 + $0x120] sm:$0xff]
    %v5524 = vld [vmem:[%s1 + $0x128] sm:$0xff]
    %v5525 = vld [vmem:[%s1 + $0x130] sm:$0xff]
    %v5526 = vld [vmem:[%s1 + $0x138] sm:$0xff]
    %v5527 = vld [vmem:[%s1 + $0x140] sm:$0xff]
    %v5528 = vld [vmem:[%s1 + $0x148] sm:$0xff]
    %v5529 = vld [vmem:[%s1 + $0x150] sm:$0xff]
    %v5530 = vld [vmem:[%s1 + $0x158] sm:$0xff]
    %v5553 = vrot.slane %v5499, 1
    %v5554 = vrot.slane %v5500, 1
    %v5555 = vsel %vm90, %v5553, %v5554
    %v5556 = vrot.slane %v5501, 1
    %v5557 = vsel %vm90, %v5554, %v5556
    %v5558 = vrot.slane %v5502, 1
    %v5559 = vsel %vm90, %v5556, %v5558
    %v5560 = vrot.slane %v5503, 1
    %v5561 = vsel %vm90, %v5558, %v5560
    %v5562 = vrot.slane %v5504, 1
    %v5563 = vsel %vm90, %v5560, %v5562
    %v5564 = vrot.slane %v5505, 1
    %v5565 = vsel %vm90, %v5562, %v5564
    %v5566 = vrot.slane %v5506, 1
    %v5567 = vsel %vm90, %v5564, %v5566
    %v5568 = vrot.slane %v5507, 1
    %v5569 = vsel %vm90, %v5566, %v5568
    %v5570 = vrot.slane %v5508, 1
    %v5571 = vsel %vm90, %v5568, %v5570
    %v5572 = vrot.slane %v5509, 1
    %v5573 = vsel %vm90, %v5570, %v5572
    %v5574 = vrot.slane %v5510, 1
    %v5575 = vsel %vm90, %v5572, %v5574
    %v5576 = vrot.slane %v5511, 1
    %v5577 = vsel %vm90, %v5574, %v5576
    %v5578 = vrot.slane %v5512, 1
    %v5579 = vsel %vm90, %v5576, %v5578
    %v5580 = vrot.slane %v5513, 1
    %v5581 = vsel %vm90, %v5578, %v5580
    %v5582 = vrot.slane %v5514, 1
    %v5583 = vsel %vm90, %v5580, %v5582
    %v5584 = vrot.slane %v5515, 1
    %v5585 = vsel %vm90, %v5582, %v5584
    %v5586 = vrot.slane %v5516, 1
    %v5587 = vsel %vm90, %v5584, %v5586
    %v5588 = vrot.slane %v5517, 1
    %v5589 = vsel %vm90, %v5586, %v5588
    %v5590 = vrot.slane %v5518, 1
    %v5591 = vsel %vm90, %v5588, %v5590
    %v5592 = vrot.slane %v5519, 1
    %v5593 = vsel %vm90, %v5590, %v5592
    %v5594 = vrot.slane %v5520, 1
    %v5595 = vsel %vm90, %v5592, %v5594
    %vm5596 = vcmask 261120
    %v5597 = vsel %vm5596, %v5555, 0
    %v5599 = vsel %vm5596, %v5557, 0
    %v5601 = vsel %vm5596, %v5559, 0
    %v5603 = vsel %vm5596, %v5561, 0
    %v5605 = vsel %vm5596, %v5563, 0
    %v5607 = vsel %vm5596, %v5565, 0
    %v5609 = vsel %vm5596, %v5567, 0
    %v5611 = vsel %vm5596, %v5569, 0
    %v5613 = vsel %vm5596, %v5571, 0
    %v5615 = vsel %vm5596, %v5573, 0
    %v5617 = vsel %vm5596, %v5575, 0
    %v5619 = vsel %vm5596, %v5577, 0
    %v5621 = vsel %vm5596, %v5579, 0
    %v5623 = vsel %vm5596, %v5581, 0
    %v5625 = vsel %vm5596, %v5583, 0
    %v5627 = vsel %vm5596, %v5585, 0
    %v5629 = vsel %vm5596, %v5587, 0
    %v5631 = vsel %vm5596, %v5589, 0
    %v5633 = vsel %vm5596, %v5591, 0
    %v5635 = vsel %vm5596, %v5593, 0
    %v5637 = vsel %vm5596, %v5595, 0
    %5639 = vmatprep.subr.mxu0 0.0
    %5640 = vmatpush1.msra.mxu0 %v5527
    %5641 = vmatprep.subr.mxu0 0.0
    %5642 = vmatpush1.msra.mxu0 %v5528
    %5643 = vmatprep.subr.mxu0 0.0
    %5644 = vmatpush1.msra.mxu0 %v5529
    %5645 = vmatprep.subr.mxu0 0.0
    %5646 = vmatpush1.msra.mxu0 %v5530
    %5647 = vmatprep.subr.mxu0 0.0
    %5648 = vmatpush1.msra.mxu0 0.0
    %5649 = vmatprep.subr.mxu0 0.0
    %5650 = vmatpush1.msra.mxu0 0.0
    %5651 = vmatprep.subr.mxu0 0.0
    %5652 = vmatpush1.msra.mxu0 0.0
    %5653 = vmatprep.subr.mxu0 0.0
    %5654 = vmatpush1.msra.mxu0 0.0
    %5655 = vmatprep.subr.mxu0 0.0
    %5656 = vmatpush1.msra.mxu0 0.0
    %5657 = vmatprep.subr.mxu0 0.0
    %5658 = vmatpush1.msra.mxu0 0.0
    %5659 = vmatprep.subr.mxu0 0.0
    %5660 = vmatpush1.msra.mxu0 0.0
    %5661 = vmatprep.subr.mxu0 0.0
    %5662 = vmatpush1.msra.mxu0 0.0
    %5663 = vmatprep.subr.mxu0 0.0
    %5664 = vmatpush1.msra.mxu0 0.0
    %5665 = vmatprep.subr.mxu0 0.0
    %5666 = vmatpush1.msra.mxu0 0.0
    %5667 = vmatprep.subr.mxu0 0.0
    %5668 = vmatpush1.msra.mxu0 0.0
    %5669 = vmatprep.subr.mxu0 0.0
    %5670 = vmatpush1.msra.mxu0 0.0
    %5671 = vmatprep.subr.mxu0 0.0
    %5672 = vmatpush1.msra.mxu0 0.0
    %5673 = vmatprep.subr.mxu0 0.0
    %5674 = vmatpush1.msra.mxu0 0.0
    %5675 = vmatprep.subr.mxu0 0.0
    %5676 = vmatpush1.msra.mxu0 0.0
    %5677 = vmatprep.subr.mxu0 0.0
    %5678 = vmatpush1.msra.mxu0 0.0
    %5679 = vmatprep.subr.mxu0 0.0
    %5680 = vmatpush1.msra.mxu0 0.0
    %5681 = vmatprep.subr.mxu0 0.0
    %5682 = vmatpush1.msra.mxu0 0.0
    %5683 = vmatprep.subr.mxu0 0.0
    %5684 = vmatpush1.msra.mxu0 0.0
    %5685 = vmatprep.subr.mxu0 0.0
    %5686 = vmatpush1.msra.mxu0 0.0
    %5687 = vmatprep.subr.mxu0 0.0
    %5688 = vmatpush1.msra.mxu0 0.0
    %5689 = vmatprep.subr.mxu0 0.0
    %5690 = vmatpush1.msra.mxu0 0.0
    %5691 = vmatprep.subr.mxu0 0.0
    %5692 = vmatpush1.msra.mxu0 0.0
    %5693 = vmatprep.subr.mxu0 0.0
    %5694 = vmatpush1.msra.mxu0 0.0
    %5695 = vmatprep.subr.mxu0 0.0
    %5696 = vmatpush1.msra.mxu0 0.0
    %5697 = vmatprep.subr.mxu0 0.0
    %5698 = vmatpush1.msra.mxu0 0.0
    %5699 = vmatprep.subr.mxu0 0.0
    %5700 = vmatpush1.msra.mxu0 0.0
    %5701 = vmatprep.subr.mxu0 0.0
    %5702 = vmatpush1.msra.mxu0 0.0
    %5703 = vmatprep.mubr.f32.mxu0 0.0
    %5704 = vmatmul.mubr.f32.gmra.mrb[0].mxu0 %v5597
    %v5705 = vpop.f32.mrb[0].mxu0
    %v5706 = vadd.f32 0.0, %v5705
    %v5707 = vpop.f32.mrb[0].mxu0
    %5708 = vmatprep.mubr.f32.mxu0 0.0
    %5709 = vmatmul.mubr.f32.gmra.mrb[0].mxu0 %v5599
    %v5710 = vpop.f32.mrb[0].mxu0
    %v5711 = vadd.f32 0.0, %v5710
    %v5712 = vpop.f32.mrb[0].mxu0
    %5713 = vmatprep.mubr.f32.mxu0 0.0
    %5714 = vmatmul.mubr.f32.gmra.mrb[0].mxu0 %v5601
    %v5715 = vpop.f32.mrb[0].mxu0
    %v5716 = vadd.f32 0.0, %v5715
    %v5717 = vpop.f32.mrb[0].mxu0
    %5718 = vmatprep.mubr.f32.mxu0 0.0
    %5719 = vmatmul.mubr.f32.gmra.mrb[0].mxu0 %v5603
    %v5720 = vpop.f32.mrb[0].mxu0
    %v5721 = vadd.f32 0.0, %v5720
    %v5722 = vpop.f32.mrb[0].mxu0
    %5723 = vmatprep.mubr.f32.mxu0 0.0
    %5724 = vmatmul.mubr.f32.gmra.mrb[0].mxu0 %v5605
    %v5725 = vpop.f32.mrb[0].mxu0
    %v5726 = vadd.f32 0.0, %v5725
    %v5727 = vpop.f32.mrb[0].mxu0
    %5728 = vmatprep.mubr.f32.mxu0 0.0
    %5729 = vmatmul.mubr.f32.gmra.mrb[0].mxu0 %v5607
    %v5730 = vpop.f32.mrb[0].mxu0
    %v5731 = vadd.f32 0.0, %v5730
    %v5732 = vpop.f32.mrb[0].mxu0
    %5733 = vmatprep.mubr.f32.mxu0 0.0
    %5734 = vmatmul.mubr.f32.gmra.mrb[0].mxu0 %v5609
    %v5735 = vpop.f32.mrb[0].mxu0
    %v5736 = vadd.f32 0.0, %v5735
    %v5737 = vpop.f32.mrb[0].mxu0
    %5738 = vmatprep.mubr.f32.mxu0 0.0
    %5739 = vmatmul.mubr.f32.gmra.mrb[0].mxu0 %v5611
    %v5740 = vpop.f32.mrb[0].mxu0
    %v5741 = vadd.f32 0.0, %v5740
    %v5742 = vpop.f32.mrb[0].mxu0
    %5743 = vmatprep.mubr.f32.mxu0 0.0
    %5744 = vmatmul.mubr.f32.gmra.mrb[0].mxu0 %v5613
    %v5745 = vpop.f32.mrb[0].mxu0
    %v5746 = vadd.f32 0.0, %v5745
    %v5747 = vpop.f32.mrb[0].mxu0
    %5748 = vmatprep.mubr.f32.mxu0 0.0
    %5749 = vmatmul.mubr.f32.gmra.mrb[0].mxu0 %v5615
    %v5750 = vpop.f32.mrb[0].mxu0
    %v5751 = vadd.f32 0.0, %v5750
    %v5752 = vpop.f32.mrb[0].mxu0
    %5753 = vmatprep.mubr.f32.mxu0 0.0
    %5754 = vmatmul.mubr.f32.gmra.mrb[0].mxu0 %v5617
    %v5755 = vpop.f32.mrb[0].mxu0
    %v5756 = vadd.f32 0.0, %v5755
    %v5757 = vpop.f32.mrb[0].mxu0
    %5758 = vmatprep.mubr.f32.mxu0 0.0
    %5759 = vmatmul.mubr.f32.gmra.mrb[0].mxu0 %v5619
    %v5760 = vpop.f32.mrb[0].mxu0
    %v5761 = vadd.f32 0.0, %v5760
    %v5762 = vpop.f32.mrb[0].mxu0
    %5763 = vmatprep.mubr.f32.mxu0 0.0
    %5764 = vmatmul.mubr.f32.gmra.mrb[0].mxu0 %v5621
    %v5765 = vpop.f32.mrb[0].mxu0
    %v5766 = vadd.f32 0.0, %v5765
    %v5767 = vpop.f32.mrb[0].mxu0
    %5768 = vmatprep.mubr.f32.mxu0 0.0
    %5769 = vmatmul.mubr.f32.gmra.mrb[0].mxu0 %v5623
    %v5770 = vpop.f32.mrb[0].mxu0
    %v5771 = vadd.f32 0.0, %v5770
    %v5772 = vpop.f32.mrb[0].mxu0
    %5773 = vmatprep.mubr.f32.mxu0 0.0
    %5774 = vmatmul.mubr.f32.gmra.mrb[0].mxu0 %v5625
    %v5775 = vpop.f32.mrb[0].mxu0
    %v5776 = vadd.f32 0.0, %v5775
    %v5777 = vpop.f32.mrb[0].mxu0
    %5778 = vmatprep.mubr.f32.mxu0 0.0
    %5779 = vmatmul.mubr.f32.gmra.mrb[0].mxu0 %v5627
    %v5780 = vpop.f32.mrb[0].mxu0
    %v5781 = vadd.f32 0.0, %v5780
    %v5782 = vpop.f32.mrb[0].mxu0
    %5783 = vmatprep.mubr.f32.mxu0 0.0
    %5784 = vmatmul.mubr.f32.gmra.mrb[0].mxu0 %v5629
    %v5785 = vpop.f32.mrb[0].mxu0
    %v5786 = vadd.f32 0.0, %v5785
    %v5787 = vpop.f32.mrb[0].mxu0
    %5788 = vmatprep.mubr.f32.mxu0 0.0
    %5789 = vmatmul.mubr.f32.gmra.mrb[0].mxu0 %v5631
    %v5790 = vpop.f32.mrb[0].mxu0
    %v5791 = vadd.f32 0.0, %v5790
    %v5792 = vpop.f32.mrb[0].mxu0
    %5793 = vmatprep.mubr.f32.mxu0 0.0
    %5794 = vmatmul.mubr.f32.gmra.mrb[0].mxu0 %v5633
    %v5795 = vpop.f32.mrb[0].mxu0
    %v5796 = vadd.f32 0.0, %v5795
    %v5797 = vpop.f32.mrb[0].mxu0
    %5798 = vmatprep.mubr.f32.mxu0 0.0
    %5799 = vmatmul.mubr.f32.gmra.mrb[0].mxu0 %v5635
    %v5800 = vpop.f32.mrb[0].mxu0
    %v5801 = vadd.f32 0.0, %v5800
    %v5802 = vpop.f32.mrb[0].mxu0
    %5803 = vmatprep.mubr.f32.mxu0 0.0
    %5804 = vmatmul.mubr.f32.gmra.mrb[0].mxu0 %v5637
    %v5805 = vpop.f32.mrb[0].mxu0
    %v5806 = vadd.f32 0.0, %v5805
    %v5807 = vpop.f32.mrb[0].mxu0
    %5808 = vdwg.mxu0
    %v5809 = vsel %vm5596, %v5499, 0
    %v5811 = vsel %vm5596, %v5500, 0
    %v5813 = vsel %vm5596, %v5501, 0
    %v5815 = vsel %vm5596, %v5502, 0
    %v5817 = vsel %vm5596, %v5503, 0
    %v5819 = vsel %vm5596, %v5504, 0
    %v5821 = vsel %vm5596, %v5505, 0
    %v5823 = vsel %vm5596, %v5506, 0
    %v5825 = vsel %vm5596, %v5507, 0
    %v5827 = vsel %vm5596, %v5508, 0
    %v5829 = vsel %vm5596, %v5509, 0
    %v5831 = vsel %vm5596, %v5510, 0
    %v5833 = vsel %vm5596, %v5511, 0
    %v5835 = vsel %vm5596, %v5512, 0
    %v5837 = vsel %vm5596, %v5513, 0
    %v5839 = vsel %vm5596, %v5514, 0
    %v5841 = vsel %vm5596, %v5515, 0
    %v5843 = vsel %vm5596, %v5516, 0
    %v5845 = vsel %vm5596, %v5517, 0
    %v5847 = vsel %vm5596, %v5518, 0
    %v5849 = vsel %vm5596, %v5519, 0
    %5851 = vmatprep.subr.mxu0 0.0
    %5852 = vmatpush1.msra.mxu0 %v5523
    %5853 = vmatprep.subr.mxu0 0.0
    %5854 = vmatpush1.msra.mxu0 %v5524
    %5855 = vmatprep.subr.mxu0 0.0
    %5856 = vmatpush1.msra.mxu0 %v5525
    %5857 = vmatprep.subr.mxu0 0.0
    %5858 = vmatpush1.msra.mxu0 %v5526
    %5859 = vmatprep.subr.mxu0 0.0
    %5860 = vmatpush1.msra.mxu0 0.0
    %5861 = vmatprep.subr.mxu0 0.0
    %5862 = vmatpush1.msra.mxu0 0.0
    %5863 = vmatprep.subr.mxu0 0.0
    %5864 = vmatpush1.msra.mxu0 0.0
    %5865 = vmatprep.subr.mxu0 0.0
    %5866 = vmatpush1.msra.mxu0 0.0
    %5867 = vmatprep.subr.mxu0 0.0
    %5868 = vmatpush1.msra.mxu0 0.0
    %5869 = vmatprep.subr.mxu0 0.0
    %5870 = vmatpush1.msra.mxu0 0.0
    %5871 = vmatprep.subr.mxu0 0.0
    %5872 = vmatpush1.msra.mxu0 0.0
    %5873 = vmatprep.subr.mxu0 0.0
    %5874 = vmatpush1.msra.mxu0 0.0
    %5875 = vmatprep.subr.mxu0 0.0
    %5876 = vmatpush1.msra.mxu0 0.0
    %5877 = vmatprep.subr.mxu0 0.0
    %5878 = vmatpush1.msra.mxu0 0.0
    %5879 = vmatprep.subr.mxu0 0.0
    %5880 = vmatpush1.msra.mxu0 0.0
    %5881 = vmatprep.subr.mxu0 0.0
    %5882 = vmatpush1.msra.mxu0 0.0
    %5883 = vmatprep.subr.mxu0 0.0
    %5884 = vmatpush1.msra.mxu0 0.0
    %5885 = vmatprep.subr.mxu0 0.0
    %5886 = vmatpush1.msra.mxu0 0.0
    %5887 = vmatprep.subr.mxu0 0.0
    %5888 = vmatpush1.msra.mxu0 0.0
    %5889 = vmatprep.subr.mxu0 0.0
    %5890 = vmatpush1.msra.mxu0 0.0
    %5891 = vmatprep.subr.mxu0 0.0
    %5892 = vmatpush1.msra.mxu0 0.0
    %5893 = vmatprep.subr.mxu0 0.0
    %5894 = vmatpush1.msra.mxu0 0.0
    %5895 = vmatprep.subr.mxu0 0.0
    %5896 = vmatpush1.msra.mxu0 0.0
    %5897 = vmatprep.subr.mxu0 0.0
    %5898 = vmatpush1.msra.mxu0 0.0
    %5899 = vmatprep.subr.mxu0 0.0
    %5900 = vmatpush1.msra.mxu0 0.0
    %5901 = vmatprep.subr.mxu0 0.0
    %5902 = vmatpush1.msra.mxu0 0.0
    %5903 = vmatprep.subr.mxu0 0.0
    %5904 = vmatpush1.msra.mxu0 0.0
    %5905 = vmatprep.subr.mxu0 0.0
    %5906 = vmatpush1.msra.mxu0 0.0
    %5907 = vmatprep.subr.mxu0 0.0
    %5908 = vmatpush1.msra.mxu0 0.0
    %5909 = vmatprep.subr.mxu0 0.0
    %5910 = vmatpush1.msra.mxu0 0.0
    %5911 = vmatprep.subr.mxu0 0.0
    %5912 = vmatpush1.msra.mxu0 0.0
    %5913 = vmatprep.subr.mxu0 0.0
    %5914 = vmatpush1.msra.mxu0 0.0
    %5915 = vmatprep.mubr.f32.mxu0 0.0
    %5916 = vmatmul.mubr.f32.gmra.mrb[0].mxu0 %v5809
    %v5917 = vpop.f32.mrb[0].mxu0
    %v5918 = vadd.f32 %v5706, %v5917
    %v5919 = vpop.f32.mrb[0].mxu0
    %5920 = vmatprep.mubr.f32.mxu0 0.0
    %5921 = vmatmul.mubr.f32.gmra.mrb[0].mxu0 %v5811
    %v5922 = vpop.f32.mrb[0].mxu0
    %v5923 = vadd.f32 %v5711, %v5922
    %v5924 = vpop.f32.mrb[0].mxu0
    %5925 = vmatprep.mubr.f32.mxu0 0.0
    %5926 = vmatmul.mubr.f32.gmra.mrb[0].mxu0 %v5813
    %v5927 = vpop.f32.mrb[0].mxu0
    %v5928 = vadd.f32 %v5716, %v5927
    %v5929 = vpop.f32.mrb[0].mxu0
    %5930 = vmatprep.mubr.f32.mxu0 0.0
    %5931 = vmatmul.mubr.f32.gmra.mrb[0].mxu0 %v5815
    %v5932 = vpop.f32.mrb[0].mxu0
    %v5933 = vadd.f32 %v5721, %v5932
    %v5934 = vpop.f32.mrb[0].mxu0
    %5935 = vmatprep.mubr.f32.mxu0 0.0
    %5936 = vmatmul.mubr.f32.gmra.mrb[0].mxu0 %v5817
    %v5937 = vpop.f32.mrb[0].mxu0
    %v5938 = vadd.f32 %v5726, %v5937
    %v5939 = vpop.f32.mrb[0].mxu0
    %5940 = vmatprep.mubr.f32.mxu0 0.0
    %5941 = vmatmul.mubr.f32.gmra.mrb[0].mxu0 %v5819
    %v5942 = vpop.f32.mrb[0].mxu0
    %v5943 = vadd.f32 %v5731, %v5942
    %v5944 = vpop.f32.mrb[0].mxu0
    %5945 = vmatprep.mubr.f32.mxu0 0.0
    %5946 = vmatmul.mubr.f32.gmra.mrb[0].mxu0 %v5821
    %v5947 = vpop.f32.mrb[0].mxu0
    %v5948 = vadd.f32 %v5736, %v5947
    %v5949 = vpop.f32.mrb[0].mxu0
    %5950 = vmatprep.mubr.f32.mxu0 0.0
    %5951 = vmatmul.mubr.f32.gmra.mrb[0].mxu0 %v5823
    %v5952 = vpop.f32.mrb[0].mxu0
    %v5953 = vadd.f32 %v5741, %v5952
    %v5954 = vpop.f32.mrb[0].mxu0
    %5955 = vmatprep.mubr.f32.mxu0 0.0
    %5956 = vmatmul.mubr.f32.gmra.mrb[0].mxu0 %v5825
    %v5957 = vpop.f32.mrb[0].mxu0
    %v5958 = vadd.f32 %v5746, %v5957
    %v5959 = vpop.f32.mrb[0].mxu0
    %5960 = vmatprep.mubr.f32.mxu0 0.0
    %5961 = vmatmul.mubr.f32.gmra.mrb[0].mxu0 %v5827
    %v5962 = vpop.f32.mrb[0].mxu0
    %v5963 = vadd.f32 %v5751, %v5962
    %v5964 = vpop.f32.mrb[0].mxu0
    %5965 = vmatprep.mubr.f32.mxu0 0.0
    %5966 = vmatmul.mubr.f32.gmra.mrb[0].mxu0 %v5829
    %v5967 = vpop.f32.mrb[0].mxu0
    %v5968 = vadd.f32 %v5756, %v5967
    %v5969 = vpop.f32.mrb[0].mxu0
    %5970 = vmatprep.mubr.f32.mxu0 0.0
    %5971 = vmatmul.mubr.f32.gmra.mrb[0].mxu0 %v5831
    %v5972 = vpop.f32.mrb[0].mxu0
    %v5973 = vadd.f32 %v5761, %v5972
    %v5974 = vpop.f32.mrb[0].mxu0
    %5975 = vmatprep.mubr.f32.mxu0 0.0
    %5976 = vmatmul.mubr.f32.gmra.mrb[0].mxu0 %v5833
    %v5977 = vpop.f32.mrb[0].mxu0
    %v5978 = vadd.f32 %v5766, %v5977
    %v5979 = vpop.f32.mrb[0].mxu0
    %5980 = vmatprep.mubr.f32.mxu0 0.0
    %5981 = vmatmul.mubr.f32.gmra.mrb[0].mxu0 %v5835
    %v5982 = vpop.f32.mrb[0].mxu0
    %v5983 = vadd.f32 %v5771, %v5982
    %v5984 = vpop.f32.mrb[0].mxu0
    %5985 = vmatprep.mubr.f32.mxu0 0.0
    %5986 = vmatmul.mubr.f32.gmra.mrb[0].mxu0 %v5837
    %v5987 = vpop.f32.mrb[0].mxu0
    %v5988 = vadd.f32 %v5776, %v5987
    %v5989 = vpop.f32.mrb[0].mxu0
    %5990 = vmatprep.mubr.f32.mxu0 0.0
    %5991 = vmatmul.mubr.f32.gmra.mrb[0].mxu0 %v5839
    %v5992 = vpop.f32.mrb[0].mxu0
    %v5993 = vadd.f32 %v5781, %v5992
    %v5994 = vpop.f32.mrb[0].mxu0
    %5995 = vmatprep.mubr.f32.mxu0 0.0
    %5996 = vmatmul.mubr.f32.gmra.mrb[0].mxu0 %v5841
    %v5997 = vpop.f32.mrb[0].mxu0
    %v5998 = vadd.f32 %v5786, %v5997
    %v5999 = vpop.f32.mrb[0].mxu0
    %6000 = vmatprep.mubr.f32.mxu0 0.0
    %6001 = vmatmul.mubr.f32.gmra.mrb[0].mxu0 %v5843
    %v6002 = vpop.f32.mrb[0].mxu0
    %v6003 = vadd.f32 %v5791, %v6002
    %v6004 = vpop.f32.mrb[0].mxu0
    %6005 = vmatprep.mubr.f32.mxu0 0.0
    %6006 = vmatmul.mubr.f32.gmra.mrb[0].mxu0 %v5845
    %v6007 = vpop.f32.mrb[0].mxu0
    %v6008 = vadd.f32 %v5796, %v6007
    %v6009 = vpop.f32.mrb[0].mxu0
    %6010 = vmatprep.mubr.f32.mxu0 0.0
    %6011 = vmatmul.mubr.f32.gmra.mrb[0].mxu0 %v5847
    %v6012 = vpop.f32.mrb[0].mxu0
    %v6013 = vadd.f32 %v5801, %v6012
    %v6014 = vpop.f32.mrb[0].mxu0
    %6015 = vmatprep.mubr.f32.mxu0 0.0
    %6016 = vmatmul.mubr.f32.gmra.mrb[0].mxu0 %v5849
    %v6017 = vpop.f32.mrb[0].mxu0
    %v6018 = vadd.f32 %v5806, %v6017
    %v6019 = vpop.f32.mrb[0].mxu0
    %6020 = vdwg.mxu0
    %v6021 = vld [vmem:[%s1 + $0x160] sm:$0xff]
    %v6022 = vld [vmem:[%s1 + $0x168] sm:$0xff]
    %v6023 = vld [vmem:[%s1 + $0x170] sm:$0xff]
    %v6024 = vld [vmem:[%s1 + $0x178] sm:$0xff]
    %v6025 = vrot.slane %v5499, 2
    %v6026 = vrot.slane %v5500, 2
    %v6027 = vsel %vm657, %v6025, %v6026
    %v6028 = vrot.slane %v5501, 2
    %v6029 = vsel %vm657, %v6026, %v6028
    %v6030 = vrot.slane %v5502, 2
    %v6031 = vsel %vm657, %v6028, %v6030
    %v6032 = vrot.slane %v5503, 2
    %v6033 = vsel %vm657, %v6030, %v6032
    %v6034 = vrot.slane %v5504, 2
    %v6035 = vsel %vm657, %v6032, %v6034
    %v6036 = vrot.slane %v5505, 2
    %v6037 = vsel %vm657, %v6034, %v6036
    %v6038 = vrot.slane %v5506, 2
    %v6039 = vsel %vm657, %v6036, %v6038
    %v6040 = vrot.slane %v5507, 2
    %v6041 = vsel %vm657, %v6038, %v6040
    %v6042 = vrot.slane %v5508, 2
    %v6043 = vsel %vm657, %v6040, %v6042
    %v6044 = vrot.slane %v5509, 2
    %v6045 = vsel %vm657, %v6042, %v6044
    %v6046 = vrot.slane %v5510, 2
    %v6047 = vsel %vm657, %v6044, %v6046
    %v6048 = vrot.slane %v5511, 2
    %v6049 = vsel %vm657, %v6046, %v6048
    %v6050 = vrot.slane %v5512, 2
    %v6051 = vsel %vm657, %v6048, %v6050
    %v6052 = vrot.slane %v5513, 2
    %v6053 = vsel %vm657, %v6050, %v6052
    %v6054 = vrot.slane %v5514, 2
    %v6055 = vsel %vm657, %v6052, %v6054
    %v6056 = vrot.slane %v5515, 2
    %v6057 = vsel %vm657, %v6054, %v6056
    %v6058 = vrot.slane %v5516, 2
    %v6059 = vsel %vm657, %v6056, %v6058
    %v6060 = vrot.slane %v5517, 2
    %v6061 = vsel %vm657, %v6058, %v6060
    %v6062 = vrot.slane %v5518, 2
    %v6063 = vsel %vm657, %v6060, %v6062
    %v6064 = vrot.slane %v5519, 2
    %v6065 = vsel %vm657, %v6062, %v6064
    %v6066 = vrot.slane %v5520, 2
    %v6067 = vsel %vm657, %v6064, %v6066
    %v6068 = vsel %vm5596, %v6027, 0
    %v6070 = vsel %vm5596, %v6029, 0
    %v6072 = vsel %vm5596, %v6031, 0
    %v6074 = vsel %vm5596, %v6033, 0
    %v6076 = vsel %vm5596, %v6035, 0
    %v6078 = vsel %vm5596, %v6037, 0
    %v6080 = vsel %vm5596, %v6039, 0
    %v6082 = vsel %vm5596, %v6041, 0
    %v6084 = vsel %vm5596, %v6043, 0
    %v6086 = vsel %vm5596, %v6045, 0
    %v6088 = vsel %vm5596, %v6047, 0
    %v6090 = vsel %vm5596, %v6049, 0
    %v6092 = vsel %vm5596, %v6051, 0
    %v6094 = vsel %vm5596, %v6053, 0
    %v6096 = vsel %vm5596, %v6055, 0
    %v6098 = vsel %vm5596, %v6057, 0
    %v6100 = vsel %vm5596, %v6059, 0
    %v6102 = vsel %vm5596, %v6061, 0
    %v6104 = vsel %vm5596, %v6063, 0
    %v6106 = vsel %vm5596, %v6065, 0
    %v6108 = vsel %vm5596, %v6067, 0
    %6110 = vmatprep.subr.mxu0 0.0
    %6111 = vmatpush1.msra.mxu0 %v6021
    %6112 = vmatprep.subr.mxu0 0.0
    %6113 = vmatpush1.msra.mxu0 %v6022
    %6114 = vmatprep.subr.mxu0 0.0
    %6115 = vmatpush1.msra.mxu0 %v6023
    %6116 = vmatprep.subr.mxu0 0.0
    %6117 = vmatpush1.msra.mxu0 %v6024
    %6118 = vmatprep.subr.mxu0 0.0
    %6119 = vmatpush1.msra.mxu0 0.0
    %6120 = vmatprep.subr.mxu0 0.0
    %6121 = vmatpush1.msra.mxu0 0.0
    %6122 = vmatprep.subr.mxu0 0.0
    %6123 = vmatpush1.msra.mxu0 0.0
    %6124 = vmatprep.subr.mxu0 0.0
    %6125 = vmatpush1.msra.mxu0 0.0
    %6126 = vmatprep.subr.mxu0 0.0
    %6127 = vmatpush1.msra.mxu0 0.0
    %6128 = vmatprep.subr.mxu0 0.0
    %6129 = vmatpush1.msra.mxu0 0.0
    %6130 = vmatprep.subr.mxu0 0.0
    %6131 = vmatpush1.msra.mxu0 0.0
    %6132 = vmatprep.subr.mxu0 0.0
    %6133 = vmatpush1.msra.mxu0 0.0
    %6134 = vmatprep.subr.mxu0 0.0
    %6135 = vmatpush1.msra.mxu0 0.0
    %6136 = vmatprep.subr.mxu0 0.0
    %6137 = vmatpush1.msra.mxu0 0.0
    %6138 = vmatprep.subr.mxu0 0.0
    %6139 = vmatpush1.msra.mxu0 0.0
    %6140 = vmatprep.subr.mxu0 0.0
    %6141 = vmatpush1.msra.mxu0 0.0
    %6142 = vmatprep.subr.mxu0 0.0
    %6143 = vmatpush1.msra.mxu0 0.0
    %6144 = vmatprep.subr.mxu0 0.0
    %6145 = vmatpush1.msra.mxu0 0.0
    %6146 = vmatprep.subr.mxu0 0.0
    %6147 = vmatpush1.msra.mxu0 0.0
    %6148 = vmatprep.subr.mxu0 0.0
    %6149 = vmatpush1.msra.mxu0 0.0
    %6150 = vmatprep.subr.mxu0 0.0
    %6151 = vmatpush1.msra.mxu0 0.0
    %6152 = vmatprep.subr.mxu0 0.0
    %6153 = vmatpush1.msra.mxu0 0.0
    %6154 = vmatprep.subr.mxu0 0.0
    %6155 = vmatpush1.msra.mxu0 0.0
    %6156 = vmatprep.subr.mxu0 0.0
    %6157 = vmatpush1.msra.mxu0 0.0
    %6158 = vmatprep.subr.mxu0 0.0
    %6159 = vmatpush1.msra.mxu0 0.0
    %6160 = vmatprep.subr.mxu0 0.0
    %6161 = vmatpush1.msra.mxu0 0.0
    %6162 = vmatprep.subr.mxu0 0.0
    %6163 = vmatpush1.msra.mxu0 0.0
    %6164 = vmatprep.subr.mxu0 0.0
    %6165 = vmatpush1.msra.mxu0 0.0
    %6166 = vmatprep.subr.mxu0 0.0
    %6167 = vmatpush1.msra.mxu0 0.0
    %6168 = vmatprep.subr.mxu0 0.0
    %6169 = vmatpush1.msra.mxu0 0.0
    %6170 = vmatprep.subr.mxu0 0.0
    %6171 = vmatpush1.msra.mxu0 0.0
    %6172 = vmatprep.subr.mxu0 0.0
    %6173 = vmatpush1.msra.mxu0 0.0
    %6174 = vmatprep.mubr.f32.mxu0 0.0
    %6175 = vmatmul.mubr.f32.gmra.mrb[0].mxu0 %v6068
    %v6176 = vpop.f32.mrb[0].mxu0
    %v6177 = vadd.f32 0.0, %v6176
    %v6178 = vpop.f32.mrb[0].mxu0
    %6179 = vmatprep.mubr.f32.mxu0 0.0
    %6180 = vmatmul.mubr.f32.gmra.mrb[0].mxu0 %v6070
    %v6181 = vpop.f32.mrb[0].mxu0
    %v6182 = vadd.f32 0.0, %v6181
    %v6183 = vpop.f32.mrb[0].mxu0
    %6184 = vmatprep.mubr.f32.mxu0 0.0
    %6185 = vmatmul.mubr.f32.gmra.mrb[0].mxu0 %v6072
    %v6186 = vpop.f32.mrb[0].mxu0
    %v6187 = vadd.f32 0.0, %v6186
    %v6188 = vpop.f32.mrb[0].mxu0
    %6189 = vmatprep.mubr.f32.mxu0 0.0
    %6190 = vmatmul.mubr.f32.gmra.mrb[0].mxu0 %v6074
    %v6191 = vpop.f32.mrb[0].mxu0
    %v6192 = vadd.f32 0.0, %v6191
    %v6193 = vpop.f32.mrb[0].mxu0
    %6194 = vmatprep.mubr.f32.mxu0 0.0
    %6195 = vmatmul.mubr.f32.gmra.mrb[0].mxu0 %v6076
    %v6196 = vpop.f32.mrb[0].mxu0
    %v6197 = vadd.f32 0.0, %v6196
    %v6198 = vpop.f32.mrb[0].mxu0
    %6199 = vmatprep.mubr.f32.mxu0 0.0
    %6200 = vmatmul.mubr.f32.gmra.mrb[0].mxu0 %v6078
    %v6201 = vpop.f32.mrb[0].mxu0
    %v6202 = vadd.f32 0.0, %v6201
    %v6203 = vpop.f32.mrb[0].mxu0
    %6204 = vmatprep.mubr.f32.mxu0 0.0
    %6205 = vmatmul.mubr.f32.gmra.mrb[0].mxu0 %v6080
    %v6206 = vpop.f32.mrb[0].mxu0
    %v6207 = vadd.f32 0.0, %v6206
    %v6208 = vpop.f32.mrb[0].mxu0
    %6209 = vmatprep.mubr.f32.mxu0 0.0
    %6210 = vmatmul.mubr.f32.gmra.mrb[0].mxu0 %v6082
    %v6211 = vpop.f32.mrb[0].mxu0
    %v6212 = vadd.f32 0.0, %v6211
    %v6213 = vpop.f32.mrb[0].mxu0
    %6214 = vmatprep.mubr.f32.mxu0 0.0
    %6215 = vmatmul.mubr.f32.gmra.mrb[0].mxu0 %v6084
    %v6216 = vpop.f32.mrb[0].mxu0
    %v6217 = vadd.f32 0.0, %v6216
    %v6218 = vpop.f32.mrb[0].mxu0
    %6219 = vmatprep.mubr.f32.mxu0 0.0
    %6220 = vmatmul.mubr.f32.gmra.mrb[0].mxu0 %v6086
    %v6221 = vpop.f32.mrb[0].mxu0
    %v6222 = vadd.f32 0.0, %v6221
    %v6223 = vpop.f32.mrb[0].mxu0
    %6224 = vmatprep.mubr.f32.mxu0 0.0
    %6225 = vmatmul.mubr.f32.gmra.mrb[0].mxu0 %v6088
    %v6226 = vpop.f32.mrb[0].mxu0
    %v6227 = vadd.f32 0.0, %v6226
    %v6228 = vpop.f32.mrb[0].mxu0
    %6229 = vmatprep.mubr.f32.mxu0 0.0
    %6230 = vmatmul.mubr.f32.gmra.mrb[0].mxu0 %v6090
    %v6231 = vpop.f32.mrb[0].mxu0
    %v6232 = vadd.f32 0.0, %v6231
    %v6233 = vpop.f32.mrb[0].mxu0
    %6234 = vmatprep.mubr.f32.mxu0 0.0
    %6235 = vmatmul.mubr.f32.gmra.mrb[0].mxu0 %v6092
    %v6236 = vpop.f32.mrb[0].mxu0
    %v6237 = vadd.f32 0.0, %v6236
    %v6238 = vpop.f32.mrb[0].mxu0
    %6239 = vmatprep.mubr.f32.mxu0 0.0
    %6240 = vmatmul.mubr.f32.gmra.mrb[0].mxu0 %v6094
    %v6241 = vpop.f32.mrb[0].mxu0
    %v6242 = vadd.f32 0.0, %v6241
    %v6243 = vpop.f32.mrb[0].mxu0
    %6244 = vmatprep.mubr.f32.mxu0 0.0
    %6245 = vmatmul.mubr.f32.gmra.mrb[0].mxu0 %v6096
    %v6246 = vpop.f32.mrb[0].mxu0
    %v6247 = vadd.f32 0.0, %v6246
    %v6248 = vpop.f32.mrb[0].mxu0
    %6249 = vmatprep.mubr.f32.mxu0 0.0
    %6250 = vmatmul.mubr.f32.gmra.mrb[0].mxu0 %v6098
    %v6251 = vpop.f32.mrb[0].mxu0
    %v6252 = vadd.f32 0.0, %v6251
    %v6253 = vpop.f32.mrb[0].mxu0
    %6254 = vmatprep.mubr.f32.mxu0 0.0
    %6255 = vmatmul.mubr.f32.gmra.mrb[0].mxu0 %v6100
    %v6256 = vpop.f32.mrb[0].mxu0
    %v6257 = vadd.f32 0.0, %v6256
    %v6258 = vpop.f32.mrb[0].mxu0
    %6259 = vmatprep.mubr.f32.mxu0 0.0
    %6260 = vmatmul.mubr.f32.gmra.mrb[0].mxu0 %v6102
    %v6261 = vpop.f32.mrb[0].mxu0
    %v6262 = vadd.f32 0.0, %v6261
    %v6263 = vpop.f32.mrb[0].mxu0
    %6264 = vmatprep.mubr.f32.mxu0 0.0
    %6265 = vmatmul.mubr.f32.gmra.mrb[0].mxu0 %v6104
    %v6266 = vpop.f32.mrb[0].mxu0
    %v6267 = vadd.f32 0.0, %v6266
    %v6268 = vpop.f32.mrb[0].mxu0
    %6269 = vmatprep.mubr.f32.mxu0 0.0
    %6270 = vmatmul.mubr.f32.gmra.mrb[0].mxu0 %v6106
    %v6271 = vpop.f32.mrb[0].mxu0
    %v6272 = vadd.f32 0.0, %v6271
    %v6273 = vpop.f32.mrb[0].mxu0
    %6274 = vmatprep.mubr.f32.mxu0 0.0
    %6275 = vmatmul.mubr.f32.gmra.mrb[0].mxu0 %v6108
    %v6276 = vpop.f32.mrb[0].mxu0
    %v6277 = vadd.f32 0.0, %v6276
    %v6278 = vpop.f32.mrb[0].mxu0
    %6279 = vdwg.mxu0
    %v6280 = vadd.f32 %v5918, %v6177
    %v6281 = vadd.f32 %v5923, %v6182
    %v6282 = vadd.f32 %v5928, %v6187
    %v6283 = vadd.f32 %v5933, %v6192
    %v6284 = vadd.f32 %v5938, %v6197
    %v6285 = vadd.f32 %v5943, %v6202
    %v6286 = vadd.f32 %v5948, %v6207
    %v6287 = vadd.f32 %v5953, %v6212
    %v6288 = vadd.f32 %v5958, %v6217
    %v6289 = vadd.f32 %v5963, %v6222
    %v6290 = vadd.f32 %v5968, %v6227
    %v6291 = vadd.f32 %v5973, %v6232
    %v6292 = vadd.f32 %v5978, %v6237
    %v6293 = vadd.f32 %v5983, %v6242
    %v6294 = vadd.f32 %v5988, %v6247
    %v6295 = vadd.f32 %v5993, %v6252
    %v6296 = vadd.f32 %v5998, %v6257
    %v6297 = vadd.f32 %v6003, %v6262
    %v6298 = vadd.f32 %v6008, %v6267
    %v6299 = vadd.f32 %v6013, %v6272
    %v6300 = vadd.f32 %v6018, %v6277
    %v6301 = vld [vmem:[%s1 + $0x180] sm:$0xff]
    %v6302 = vld [vmem:[%s1 + $0x188] sm:$0xff]
    %v6303 = vld [vmem:[%s1 + $0x190] sm:$0xff]
    %v6304 = vld [vmem:[%s1 + $0x198] sm:$0xff]
    %v6306 = vrot.slane %v5521, 1
    %v6307 = vsel %vm90, %v5594, %v6306
    %v6308 = vsel %vm5596, %v6307, 0
    %6310 = vmatprep.subr.mxu0 0.0
    %6311 = vmatpush1.msra.mxu0 %v6301
    %6312 = vmatprep.subr.mxu0 0.0
    %6313 = vmatpush1.msra.mxu0 %v6302
    %6314 = vmatprep.subr.mxu0 0.0
    %6315 = vmatpush1.msra.mxu0 %v6303
    %6316 = vmatprep.subr.mxu0 0.0
    %6317 = vmatpush1.msra.mxu0 %v6304
    %6318 = vmatprep.subr.mxu0 0.0
    %6319 = vmatpush1.msra.mxu0 0.0
    %6320 = vmatprep.subr.mxu0 0.0
    %6321 = vmatpush1.msra.mxu0 0.0
    %6322 = vmatprep.subr.mxu0 0.0
    %6323 = vmatpush1.msra.mxu0 0.0
    %6324 = vmatprep.subr.mxu0 0.0
    %6325 = vmatpush1.msra.mxu0 0.0
    %6326 = vmatprep.subr.mxu0 0.0
    %6327 = vmatpush1.msra.mxu0 0.0
    %6328 = vmatprep.subr.mxu0 0.0
    %6329 = vmatpush1.msra.mxu0 0.0
    %6330 = vmatprep.subr.mxu0 0.0
    %6331 = vmatpush1.msra.mxu0 0.0
    %6332 = vmatprep.subr.mxu0 0.0
    %6333 = vmatpush1.msra.mxu0 0.0
    %6334 = vmatprep.subr.mxu0 0.0
    %6335 = vmatpush1.msra.mxu0 0.0
    %6336 = vmatprep.subr.mxu0 0.0
    %6337 = vmatpush1.msra.mxu0 0.0
    %6338 = vmatprep.subr.mxu0 0.0
    %6339 = vmatpush1.msra.mxu0 0.0
    %6340 = vmatprep.subr.mxu0 0.0
    %6341 = vmatpush1.msra.mxu0 0.0
    %6342 = vmatprep.subr.mxu0 0.0
    %6343 = vmatpush1.msra.mxu0 0.0
    %6344 = vmatprep.subr.mxu0 0.0
    %6345 = vmatpush1.msra.mxu0 0.0
    %6346 = vmatprep.subr.mxu0 0.0
    %6347 = vmatpush1.msra.mxu0 0.0
    %6348 = vmatprep.subr.mxu0 0.0
    %6349 = vmatpush1.msra.mxu0 0.0
    %6350 = vmatprep.subr.mxu0 0.0
    %6351 = vmatpush1.msra.mxu0 0.0
    %6352 = vmatprep.subr.mxu0 0.0
    %6353 = vmatpush1.msra.mxu0 0.0
    %6354 = vmatprep.subr.mxu0 0.0
    %6355 = vmatpush1.msra.mxu0 0.0
    %6356 = vmatprep.subr.mxu0 0.0
    %6357 = vmatpush1.msra.mxu0 0.0
    %6358 = vmatprep.subr.mxu0 0.0
    %6359 = vmatpush1.msra.mxu0 0.0
    %6360 = vmatprep.subr.mxu0 0.0
    %6361 = vmatpush1.msra.mxu0 0.0
    %6362 = vmatprep.subr.mxu0 0.0
    %6363 = vmatpush1.msra.mxu0 0.0
    %6364 = vmatprep.subr.mxu0 0.0
    %6365 = vmatpush1.msra.mxu0 0.0
    %6366 = vmatprep.subr.mxu0 0.0
    %6367 = vmatpush1.msra.mxu0 0.0
    %6368 = vmatprep.subr.mxu0 0.0
    %6369 = vmatpush1.msra.mxu0 0.0
    %6370 = vmatprep.subr.mxu0 0.0
    %6371 = vmatpush1.msra.mxu0 0.0
    %6372 = vmatprep.subr.mxu0 0.0
    %6373 = vmatpush1.msra.mxu0 0.0
    %6374 = vmatprep.mubr.f32.mxu0 0.0
    %6375 = vmatmul.mubr.f32.gmra.mrb[0].mxu0 %v5599
    %v6376 = vpop.f32.mrb[0].mxu0
    %v6377 = vadd.f32 0.0, %v6376
    %v6378 = vpop.f32.mrb[0].mxu0
    %6379 = vmatprep.mubr.f32.mxu0 0.0
    %6380 = vmatmul.mubr.f32.gmra.mrb[0].mxu0 %v5601
    %v6381 = vpop.f32.mrb[0].mxu0
    %v6382 = vadd.f32 0.0, %v6381
    %v6383 = vpop.f32.mrb[0].mxu0
    %6384 = vmatprep.mubr.f32.mxu0 0.0
    %6385 = vmatmul.mubr.f32.gmra.mrb[0].mxu0 %v5603
    %v6386 = vpop.f32.mrb[0].mxu0
    %v6387 = vadd.f32 0.0, %v6386
    %v6388 = vpop.f32.mrb[0].mxu0
    %6389 = vmatprep.mubr.f32.mxu0 0.0
    %6390 = vmatmul.mubr.f32.gmra.mrb[0].mxu0 %v5605
    %v6391 = vpop.f32.mrb[0].mxu0
    %v6392 = vadd.f32 0.0, %v6391
    %v6393 = vpop.f32.mrb[0].mxu0
    %6394 = vmatprep.mubr.f32.mxu0 0.0
    %6395 = vmatmul.mubr.f32.gmra.mrb[0].mxu0 %v5607
    %v6396 = vpop.f32.mrb[0].mxu0
    %v6397 = vadd.f32 0.0, %v6396
    %v6398 = vpop.f32.mrb[0].mxu0
    %6399 = vmatprep.mubr.f32.mxu0 0.0
    %6400 = vmatmul.mubr.f32.gmra.mrb[0].mxu0 %v5609
    %v6401 = vpop.f32.mrb[0].mxu0
    %v6402 = vadd.f32 0.0, %v6401
    %v6403 = vpop.f32.mrb[0].mxu0
    %6404 = vmatprep.mubr.f32.mxu0 0.0
    %6405 = vmatmul.mubr.f32.gmra.mrb[0].mxu0 %v5611
    %v6406 = vpop.f32.mrb[0].mxu0
    %v6407 = vadd.f32 0.0, %v6406
    %v6408 = vpop.f32.mrb[0].mxu0
    %6409 = vmatprep.mubr.f32.mxu0 0.0
    %6410 = vmatmul.mubr.f32.gmra.mrb[0].mxu0 %v5613
    %v6411 = vpop.f32.mrb[0].mxu0
    %v6412 = vadd.f32 0.0, %v6411
    %v6413 = vpop.f32.mrb[0].mxu0
    %6414 = vmatprep.mubr.f32.mxu0 0.0
    %6415 = vmatmul.mubr.f32.gmra.mrb[0].mxu0 %v5615
    %v6416 = vpop.f32.mrb[0].mxu0
    %v6417 = vadd.f32 0.0, %v6416
    %v6418 = vpop.f32.mrb[0].mxu0
    %6419 = vmatprep.mubr.f32.mxu0 0.0
    %6420 = vmatmul.mubr.f32.gmra.mrb[0].mxu0 %v5617
    %v6421 = vpop.f32.mrb[0].mxu0
    %v6422 = vadd.f32 0.0, %v6421
    %v6423 = vpop.f32.mrb[0].mxu0
    %6424 = vmatprep.mubr.f32.mxu0 0.0
    %6425 = vmatmul.mubr.f32.gmra.mrb[0].mxu0 %v5619
    %v6426 = vpop.f32.mrb[0].mxu0
    %v6427 = vadd.f32 0.0, %v6426
    %v6428 = vpop.f32.mrb[0].mxu0
    %6429 = vmatprep.mubr.f32.mxu0 0.0
    %6430 = vmatmul.mubr.f32.gmra.mrb[0].mxu0 %v5621
    %v6431 = vpop.f32.mrb[0].mxu0
    %v6432 = vadd.f32 0.0, %v6431
    %v6433 = vpop.f32.mrb[0].mxu0
    %6434 = vmatprep.mubr.f32.mxu0 0.0
    %6435 = vmatmul.mubr.f32.gmra.mrb[0].mxu0 %v5623
    %v6436 = vpop.f32.mrb[0].mxu0
    %v6437 = vadd.f32 0.0, %v6436
    %v6438 = vpop.f32.mrb[0].mxu0
    %6439 = vmatprep.mubr.f32.mxu0 0.0
    %6440 = vmatmul.mubr.f32.gmra.mrb[0].mxu0 %v5625
    %v6441 = vpop.f32.mrb[0].mxu0
    %v6442 = vadd.f32 0.0, %v6441
    %v6443 = vpop.f32.mrb[0].mxu0
    %6444 = vmatprep.mubr.f32.mxu0 0.0
    %6445 = vmatmul.mubr.f32.gmra.mrb[0].mxu0 %v5627
    %v6446 = vpop.f32.mrb[0].mxu0
    %v6447 = vadd.f32 0.0, %v6446
    %v6448 = vpop.f32.mrb[0].mxu0
    %6449 = vmatprep.mubr.f32.mxu0 0.0
    %6450 = vmatmul.mubr.f32.gmra.mrb[0].mxu0 %v5629
    %v6451 = vpop.f32.mrb[0].mxu0
    %v6452 = vadd.f32 0.0, %v6451
    %v6453 = vpop.f32.mrb[0].mxu0
    %6454 = vmatprep.mubr.f32.mxu0 0.0
    %6455 = vmatmul.mubr.f32.gmra.mrb[0].mxu0 %v5631
    %v6456 = vpop.f32.mrb[0].mxu0
    %v6457 = vadd.f32 0.0, %v6456
    %v6458 = vpop.f32.mrb[0].mxu0
    %6459 = vmatprep.mubr.f32.mxu0 0.0
    %6460 = vmatmul.mubr.f32.gmra.mrb[0].mxu0 %v5633
    %v6461 = vpop.f32.mrb[0].mxu0
    %v6462 = vadd.f32 0.0, %v6461
    %v6463 = vpop.f32.mrb[0].mxu0
    %6464 = vmatprep.mubr.f32.mxu0 0.0
    %6465 = vmatmul.mubr.f32.gmra.mrb[0].mxu0 %v5635
    %v6466 = vpop.f32.mrb[0].mxu0
    %v6467 = vadd.f32 0.0, %v6466
    %v6468 = vpop.f32.mrb[0].mxu0
    %6469 = vmatprep.mubr.f32.mxu0 0.0
    %6470 = vmatmul.mubr.f32.gmra.mrb[0].mxu0 %v5637
    %v6471 = vpop.f32.mrb[0].mxu0
    %v6472 = vadd.f32 0.0, %v6471
    %v6473 = vpop.f32.mrb[0].mxu0
    %6474 = vmatprep.mubr.f32.mxu0 0.0
    %6475 = vmatmul.mubr.f32.gmra.mrb[0].mxu0 %v6308
    %v6476 = vpop.f32.mrb[0].mxu0
    %v6477 = vadd.f32 0.0, %v6476
    %v6478 = vpop.f32.mrb[0].mxu0
    %6479 = vdwg.mxu0
    %v6480 = vadd.f32 %v6280, %v6377
    %v6481 = vadd.f32 %v6281, %v6382
    %v6482 = vadd.f32 %v6282, %v6387
    %v6483 = vadd.f32 %v6283, %v6392
    %v6484 = vadd.f32 %v6284, %v6397
    %v6485 = vadd.f32 %v6285, %v6402
    %v6486 = vadd.f32 %v6286, %v6407
    %v6487 = vadd.f32 %v6287, %v6412
    %v6488 = vadd.f32 %v6288, %v6417
    %v6489 = vadd.f32 %v6289, %v6422
    %v6490 = vadd.f32 %v6290, %v6427
    %v6491 = vadd.f32 %v6291, %v6432
    %v6492 = vadd.f32 %v6292, %v6437
    %v6493 = vadd.f32 %v6293, %v6442
    %v6494 = vadd.f32 %v6294, %v6447
    %v6495 = vadd.f32 %v6295, %v6452
    %v6496 = vadd.f32 %v6296, %v6457
    %v6497 = vadd.f32 %v6297, %v6462
    %v6498 = vadd.f32 %v6298, %v6467
    %v6499 = vadd.f32 %v6299, %v6472
    %v6500 = vadd.f32 %v6300, %v6477
    %v6501 = vld [vmem:[%s1 + $0x1a0] sm:$0xff]
    %v6502 = vld [vmem:[%s1 + $0x1a8] sm:$0xff]
    %v6503 = vld [vmem:[%s1 + $0x1b0] sm:$0xff]
    %v6504 = vld [vmem:[%s1 + $0x1b8] sm:$0xff]
    %v6505 = vrot.slane %v5521, 2
    %v6506 = vsel %vm657, %v6066, %v6505
    %v6507 = vsel %vm5596, %v6506, 0
    %6509 = vmatprep.subr.mxu0 0.0
    %6510 = vmatpush1.msra.mxu0 %v6501
    %6511 = vmatprep.subr.mxu0 0.0
    %6512 = vmatpush1.msra.mxu0 %v6502
    %6513 = vmatprep.subr.mxu0 0.0
    %6514 = vmatpush1.msra.mxu0 %v6503
    %6515 = vmatprep.subr.mxu0 0.0
    %6516 = vmatpush1.msra.mxu0 %v6504
    %6517 = vmatprep.subr.mxu0 0.0
    %6518 = vmatpush1.msra.mxu0 0.0
    %6519 = vmatprep.subr.mxu0 0.0
    %6520 = vmatpush1.msra.mxu0 0.0
    %6521 = vmatprep.subr.mxu0 0.0
    %6522 = vmatpush1.msra.mxu0 0.0
    %6523 = vmatprep.subr.mxu0 0.0
    %6524 = vmatpush1.msra.mxu0 0.0
    %6525 = vmatprep.subr.mxu0 0.0
    %6526 = vmatpush1.msra.mxu0 0.0
    %6527 = vmatprep.subr.mxu0 0.0
    %6528 = vmatpush1.msra.mxu0 0.0
    %6529 = vmatprep.subr.mxu0 0.0
    %6530 = vmatpush1.msra.mxu0 0.0
    %6531 = vmatprep.subr.mxu0 0.0
    %6532 = vmatpush1.msra.mxu0 0.0
    %6533 = vmatprep.subr.mxu0 0.0
    %6534 = vmatpush1.msra.mxu0 0.0
    %6535 = vmatprep.subr.mxu0 0.0
    %6536 = vmatpush1.msra.mxu0 0.0
    %6537 = vmatprep.subr.mxu0 0.0
    %6538 = vmatpush1.msra.mxu0 0.0
    %6539 = vmatprep.subr.mxu0 0.0
    %6540 = vmatpush1.msra.mxu0 0.0
    %6541 = vmatprep.subr.mxu0 0.0
    %6542 = vmatpush1.msra.mxu0 0.0
    %6543 = vmatprep.subr.mxu0 0.0
    %6544 = vmatpush1.msra.mxu0 0.0
    %6545 = vmatprep.subr.mxu0 0.0
    %6546 = vmatpush1.msra.mxu0 0.0
    %6547 = vmatprep.subr.mxu0 0.0
    %6548 = vmatpush1.msra.mxu0 0.0
    %6549 = vmatprep.subr.mxu0 0.0
    %6550 = vmatpush1.msra.mxu0 0.0
    %6551 = vmatprep.subr.mxu0 0.0
    %6552 = vmatpush1.msra.mxu0 0.0
    %6553 = vmatprep.subr.mxu0 0.0
    %6554 = vmatpush1.msra.mxu0 0.0
    %6555 = vmatprep.subr.mxu0 0.0
    %6556 = vmatpush1.msra.mxu0 0.0
    %6557 = vmatprep.subr.mxu0 0.0
    %6558 = vmatpush1.msra.mxu0 0.0
    %6559 = vmatprep.subr.mxu0 0.0
    %6560 = vmatpush1.msra.mxu0 0.0
    %6561 = vmatprep.subr.mxu0 0.0
    %6562 = vmatpush1.msra.mxu0 0.0
    %6563 = vmatprep.subr.mxu0 0.0
    %6564 = vmatpush1.msra.mxu0 0.0
    %6565 = vmatprep.subr.mxu0 0.0
    %6566 = vmatpush1.msra.mxu0 0.0
    %6567 = vmatprep.subr.mxu0 0.0
    %6568 = vmatpush1.msra.mxu0 0.0
    %6569 = vmatprep.subr.mxu0 0.0
    %6570 = vmatpush1.msra.mxu0 0.0
    %6571 = vmatprep.subr.mxu0 0.0
    %6572 = vmatpush1.msra.mxu0 0.0
    %6573 = vmatprep.mubr.f32.mxu0 0.0
    %6574 = vmatmul.mubr.f32.gmra.mrb[0].mxu0 %v6070
    %v6575 = vpop.f32.mrb[0].mxu0
    %v6576 = vadd.f32 0.0, %v6575
    %v6577 = vpop.f32.mrb[0].mxu0
    %6578 = vmatprep.mubr.f32.mxu0 0.0
    %6579 = vmatmul.mubr.f32.gmra.mrb[0].mxu0 %v6072
    %v6580 = vpop.f32.mrb[0].mxu0
    %v6581 = vadd.f32 0.0, %v6580
    %v6582 = vpop.f32.mrb[0].mxu0
    %6583 = vmatprep.mubr.f32.mxu0 0.0
    %6584 = vmatmul.mubr.f32.gmra.mrb[0].mxu0 %v6074
    %v6585 = vpop.f32.mrb[0].mxu0
    %v6586 = vadd.f32 0.0, %v6585
    %v6587 = vpop.f32.mrb[0].mxu0
    %6588 = vmatprep.mubr.f32.mxu0 0.0
    %6589 = vmatmul.mubr.f32.gmra.mrb[0].mxu0 %v6076
    %v6590 = vpop.f32.mrb[0].mxu0
    %v6591 = vadd.f32 0.0, %v6590
    %v6592 = vpop.f32.mrb[0].mxu0
    %6593 = vmatprep.mubr.f32.mxu0 0.0
    %6594 = vmatmul.mubr.f32.gmra.mrb[0].mxu0 %v6078
    %v6595 = vpop.f32.mrb[0].mxu0
    %v6596 = vadd.f32 0.0, %v6595
    %v6597 = vpop.f32.mrb[0].mxu0
    %6598 = vmatprep.mubr.f32.mxu0 0.0
    %6599 = vmatmul.mubr.f32.gmra.mrb[0].mxu0 %v6080
    %v6600 = vpop.f32.mrb[0].mxu0
    %v6601 = vadd.f32 0.0, %v6600
    %v6602 = vpop.f32.mrb[0].mxu0
    %6603 = vmatprep.mubr.f32.mxu0 0.0
    %6604 = vmatmul.mubr.f32.gmra.mrb[0].mxu0 %v6082
    %v6605 = vpop.f32.mrb[0].mxu0
    %v6606 = vadd.f32 0.0, %v6605
    %v6607 = vpop.f32.mrb[0].mxu0
    %6608 = vmatprep.mubr.f32.mxu0 0.0
    %6609 = vmatmul.mubr.f32.gmra.mrb[0].mxu0 %v6084
    %v6610 = vpop.f32.mrb[0].mxu0
    %v6611 = vadd.f32 0.0, %v6610
    %v6612 = vpop.f32.mrb[0].mxu0
    %6613 = vmatprep.mubr.f32.mxu0 0.0
    %6614 = vmatmul.mubr.f32.gmra.mrb[0].mxu0 %v6086
    %v6615 = vpop.f32.mrb[0].mxu0
    %v6616 = vadd.f32 0.0, %v6615
    %v6617 = vpop.f32.mrb[0].mxu0
    %6618 = vmatprep.mubr.f32.mxu0 0.0
    %6619 = vmatmul.mubr.f32.gmra.mrb[0].mxu0 %v6088
    %v6620 = vpop.f32.mrb[0].mxu0
    %v6621 = vadd.f32 0.0, %v6620
    %v6622 = vpop.f32.mrb[0].mxu0
    %6623 = vmatprep.mubr.f32.mxu0 0.0
    %6624 = vmatmul.mubr.f32.gmra.mrb[0].mxu0 %v6090
    %v6625 = vpop.f32.mrb[0].mxu0
    %v6626 = vadd.f32 0.0, %v6625
    %v6627 = vpop.f32.mrb[0].mxu0
    %6628 = vmatprep.mubr.f32.mxu0 0.0
    %6629 = vmatmul.mubr.f32.gmra.mrb[0].mxu0 %v6092
    %v6630 = vpop.f32.mrb[0].mxu0
    %v6631 = vadd.f32 0.0, %v6630
    %v6632 = vpop.f32.mrb[0].mxu0
    %6633 = vmatprep.mubr.f32.mxu0 0.0
    %6634 = vmatmul.mubr.f32.gmra.mrb[0].mxu0 %v6094
    %v6635 = vpop.f32.mrb[0].mxu0
    %v6636 = vadd.f32 0.0, %v6635
    %v6637 = vpop.f32.mrb[0].mxu0
    %6638 = vmatprep.mubr.f32.mxu0 0.0
    %6639 = vmatmul.mubr.f32.gmra.mrb[0].mxu0 %v6096
    %v6640 = vpop.f32.mrb[0].mxu0
    %v6641 = vadd.f32 0.0, %v6640
    %v6642 = vpop.f32.mrb[0].mxu0
    %6643 = vmatprep.mubr.f32.mxu0 0.0
    %6644 = vmatmul.mubr.f32.gmra.mrb[0].mxu0 %v6098
    %v6645 = vpop.f32.mrb[0].mxu0
    %v6646 = vadd.f32 0.0, %v6645
    %v6647 = vpop.f32.mrb[0].mxu0
    %6648 = vmatprep.mubr.f32.mxu0 0.0
    %6649 = vmatmul.mubr.f32.gmra.mrb[0].mxu0 %v6100
    %v6650 = vpop.f32.mrb[0].mxu0
    %v6651 = vadd.f32 0.0, %v6650
    %v6652 = vpop.f32.mrb[0].mxu0
    %6653 = vmatprep.mubr.f32.mxu0 0.0
    %6654 = vmatmul.mubr.f32.gmra.mrb[0].mxu0 %v6102
    %v6655 = vpop.f32.mrb[0].mxu0
    %v6656 = vadd.f32 0.0, %v6655
    %v6657 = vpop.f32.mrb[0].mxu0
    %6658 = vmatprep.mubr.f32.mxu0 0.0
    %6659 = vmatmul.mubr.f32.gmra.mrb[0].mxu0 %v6104
    %v6660 = vpop.f32.mrb[0].mxu0
    %v6661 = vadd.f32 0.0, %v6660
    %v6662 = vpop.f32.mrb[0].mxu0
    %6663 = vmatprep.mubr.f32.mxu0 0.0
    %6664 = vmatmul.mubr.f32.gmra.mrb[0].mxu0 %v6106
    %v6665 = vpop.f32.mrb[0].mxu0
    %v6666 = vadd.f32 0.0, %v6665
    %v6667 = vpop.f32.mrb[0].mxu0
    %6668 = vmatprep.mubr.f32.mxu0 0.0
    %6669 = vmatmul.mubr.f32.gmra.mrb[0].mxu0 %v6108
    %v6670 = vpop.f32.mrb[0].mxu0
    %v6671 = vadd.f32 0.0, %v6670
    %v6672 = vpop.f32.mrb[0].mxu0
    %6673 = vmatprep.mubr.f32.mxu0 0.0
    %6674 = vmatmul.mubr.f32.gmra.mrb[0].mxu0 %v6507
    %v6675 = vpop.f32.mrb[0].mxu0
    %v6676 = vadd.f32 0.0, %v6675
    %v6677 = vpop.f32.mrb[0].mxu0
    %6678 = vdwg.mxu0
    %v6679 = vadd.f32 %v6480, %v6576
    %v6680 = vadd.f32 %v6481, %v6581
    %v6681 = vadd.f32 %v6482, %v6586
    %v6682 = vadd.f32 %v6483, %v6591
    %v6683 = vadd.f32 %v6484, %v6596
    %v6684 = vadd.f32 %v6485, %v6601
    %v6685 = vadd.f32 %v6486, %v6606
    %v6686 = vadd.f32 %v6487, %v6611
    %v6687 = vadd.f32 %v6488, %v6616
    %v6688 = vadd.f32 %v6489, %v6621
    %v6689 = vadd.f32 %v6490, %v6626
    %v6690 = vadd.f32 %v6491, %v6631
    %v6691 = vadd.f32 %v6492, %v6636
    %v6692 = vadd.f32 %v6493, %v6641
    %v6693 = vadd.f32 %v6494, %v6646
    %v6694 = vadd.f32 %v6495, %v6651
    %v6695 = vadd.f32 %v6496, %v6656
    %v6696 = vadd.f32 %v6497, %v6661
    %v6697 = vadd.f32 %v6498, %v6666
    %v6698 = vadd.f32 %v6499, %v6671
    %v6699 = vadd.f32 %v6500, %v6676
    %v6700 = vld [vmem:[%s1 + $0x1c0] sm:$0xff]
    %v6701 = vld [vmem:[%s1 + $0x1c8] sm:$0xff]
    %v6702 = vld [vmem:[%s1 + $0x1d0] sm:$0xff]
    %v6703 = vld [vmem:[%s1 + $0x1d8] sm:$0xff]
    %v6704 = vrot.slane %v5500, 3
    %v6705 = vrot.slane %v5501, 3
    %v6706 = vsel %vm1463, %v6704, %v6705
    %v6707 = vrot.slane %v5502, 3
    %v6708 = vsel %vm1463, %v6705, %v6707
    %v6709 = vrot.slane %v5503, 3
    %v6710 = vsel %vm1463, %v6707, %v6709
    %v6711 = vrot.slane %v5504, 3
    %v6712 = vsel %vm1463, %v6709, %v6711
    %v6713 = vrot.slane %v5505, 3
    %v6714 = vsel %vm1463, %v6711, %v6713
    %v6715 = vrot.slane %v5506, 3
    %v6716 = vsel %vm1463, %v6713, %v6715
    %v6717 = vrot.slane %v5507, 3
    %v6718 = vsel %vm1463, %v6715, %v6717
    %v6719 = vrot.slane %v5508, 3
    %v6720 = vsel %vm1463, %v6717, %v6719
    %v6721 = vrot.slane %v5509, 3
    %v6722 = vsel %vm1463, %v6719, %v6721
    %v6723 = vrot.slane %v5510, 3
    %v6724 = vsel %vm1463, %v6721, %v6723
    %v6725 = vrot.slane %v5511, 3
    %v6726 = vsel %vm1463, %v6723, %v6725
    %v6727 = vrot.slane %v5512, 3
    %v6728 = vsel %vm1463, %v6725, %v6727
    %v6729 = vrot.slane %v5513, 3
    %v6730 = vsel %vm1463, %v6727, %v6729
    %v6731 = vrot.slane %v5514, 3
    %v6732 = vsel %vm1463, %v6729, %v6731
    %v6733 = vrot.slane %v5515, 3
    %v6734 = vsel %vm1463, %v6731, %v6733
    %v6735 = vrot.slane %v5516, 3
    %v6736 = vsel %vm1463, %v6733, %v6735
    %v6737 = vrot.slane %v5517, 3
    %v6738 = vsel %vm1463, %v6735, %v6737
    %v6739 = vrot.slane %v5518, 3
    %v6740 = vsel %vm1463, %v6737, %v6739
    %v6741 = vrot.slane %v5519, 3
    %v6742 = vsel %vm1463, %v6739, %v6741
    %v6743 = vrot.slane %v5520, 3
    %v6744 = vsel %vm1463, %v6741, %v6743
    %v6745 = vrot.slane %v5521, 3
    %v6746 = vsel %vm1463, %v6743, %v6745
    %v6747 = vsel %vm5596, %v6706, 0
    %v6749 = vsel %vm5596, %v6708, 0
    %v6751 = vsel %vm5596, %v6710, 0
    %v6753 = vsel %vm5596, %v6712, 0
    %v6755 = vsel %vm5596, %v6714, 0
    %v6757 = vsel %vm5596, %v6716, 0
    %v6759 = vsel %vm5596, %v6718, 0
    %v6761 = vsel %vm5596, %v6720, 0
    %v6763 = vsel %vm5596, %v6722, 0
    %v6765 = vsel %vm5596, %v6724, 0
    %v6767 = vsel %vm5596, %v6726, 0
    %v6769 = vsel %vm5596, %v6728, 0
    %v6771 = vsel %vm5596, %v6730, 0
    %v6773 = vsel %vm5596, %v6732, 0
    %v6775 = vsel %vm5596, %v6734, 0
    %v6777 = vsel %vm5596, %v6736, 0
    %v6779 = vsel %vm5596, %v6738, 0
    %v6781 = vsel %vm5596, %v6740, 0
    %v6783 = vsel %vm5596, %v6742, 0
    %v6785 = vsel %vm5596, %v6744, 0
    %v6787 = vsel %vm5596, %v6746, 0
    %6789 = vmatprep.subr.mxu0 0.0
    %6790 = vmatpush1.msra.mxu0 %v6700
    %6791 = vmatprep.subr.mxu0 0.0
    %6792 = vmatpush1.msra.mxu0 %v6701
    %6793 = vmatprep.subr.mxu0 0.0
    %6794 = vmatpush1.msra.mxu0 %v6702
    %6795 = vmatprep.subr.mxu0 0.0
    %6796 = vmatpush1.msra.mxu0 %v6703
    %6797 = vmatprep.subr.mxu0 0.0
    %6798 = vmatpush1.msra.mxu0 0.0
    %6799 = vmatprep.subr.mxu0 0.0
    %6800 = vmatpush1.msra.mxu0 0.0
    %6801 = vmatprep.subr.mxu0 0.0
    %6802 = vmatpush1.msra.mxu0 0.0
    %6803 = vmatprep.subr.mxu0 0.0
    %6804 = vmatpush1.msra.mxu0 0.0
    %6805 = vmatprep.subr.mxu0 0.0
    %6806 = vmatpush1.msra.mxu0 0.0
    %6807 = vmatprep.subr.mxu0 0.0
    %6808 = vmatpush1.msra.mxu0 0.0
    %6809 = vmatprep.subr.mxu0 0.0
    %6810 = vmatpush1.msra.mxu0 0.0
    %6811 = vmatprep.subr.mxu0 0.0
    %6812 = vmatpush1.msra.mxu0 0.0
    %6813 = vmatprep.subr.mxu0 0.0
    %6814 = vmatpush1.msra.mxu0 0.0
    %6815 = vmatprep.subr.mxu0 0.0
    %6816 = vmatpush1.msra.mxu0 0.0
    %6817 = vmatprep.subr.mxu0 0.0
    %6818 = vmatpush1.msra.mxu0 0.0
    %6819 = vmatprep.subr.mxu0 0.0
    %6820 = vmatpush1.msra.mxu0 0.0
    %6821 = vmatprep.subr.mxu0 0.0
    %6822 = vmatpush1.msra.mxu0 0.0
    %6823 = vmatprep.subr.mxu0 0.0
    %6824 = vmatpush1.msra.mxu0 0.0
    %6825 = vmatprep.subr.mxu0 0.0
    %6826 = vmatpush1.msra.mxu0 0.0
    %6827 = vmatprep.subr.mxu0 0.0
    %6828 = vmatpush1.msra.mxu0 0.0
    %6829 = vmatprep.subr.mxu0 0.0
    %6830 = vmatpush1.msra.mxu0 0.0
    %6831 = vmatprep.subr.mxu0 0.0
    %6832 = vmatpush1.msra.mxu0 0.0
    %6833 = vmatprep.subr.mxu0 0.0
    %6834 = vmatpush1.msra.mxu0 0.0
    %6835 = vmatprep.subr.mxu0 0.0
    %6836 = vmatpush1.msra.mxu0 0.0
    %6837 = vmatprep.subr.mxu0 0.0
    %6838 = vmatpush1.msra.mxu0 0.0
    %6839 = vmatprep.subr.mxu0 0.0
    %6840 = vmatpush1.msra.mxu0 0.0
    %6841 = vmatprep.subr.mxu0 0.0
    %6842 = vmatpush1.msra.mxu0 0.0
    %6843 = vmatprep.subr.mxu0 0.0
    %6844 = vmatpush1.msra.mxu0 0.0
    %6845 = vmatprep.subr.mxu0 0.0
    %6846 = vmatpush1.msra.mxu0 0.0
    %6847 = vmatprep.subr.mxu0 0.0
    %6848 = vmatpush1.msra.mxu0 0.0
    %6849 = vmatprep.subr.mxu0 0.0
    %6850 = vmatpush1.msra.mxu0 0.0
    %6851 = vmatprep.subr.mxu0 0.0
    %6852 = vmatpush1.msra.mxu0 0.0
    %6853 = vmatprep.mubr.f32.mxu0 0.0
    %6854 = vmatmul.mubr.f32.gmra.mrb[0].mxu0 %v6747
    %v6855 = vpop.f32.mrb[0].mxu0
    %v6856 = vadd.f32 0.0, %v6855
    %v6857 = vpop.f32.mrb[0].mxu0
    %6858 = vmatprep.mubr.f32.mxu0 0.0
    %6859 = vmatmul.mubr.f32.gmra.mrb[0].mxu0 %v6749
    %v6860 = vpop.f32.mrb[0].mxu0
    %v6861 = vadd.f32 0.0, %v6860
    %v6862 = vpop.f32.mrb[0].mxu0
    %6863 = vmatprep.mubr.f32.mxu0 0.0
    %6864 = vmatmul.mubr.f32.gmra.mrb[0].mxu0 %v6751
    %v6865 = vpop.f32.mrb[0].mxu0
    %v6866 = vadd.f32 0.0, %v6865
    %v6867 = vpop.f32.mrb[0].mxu0
    %6868 = vmatprep.mubr.f32.mxu0 0.0
    %6869 = vmatmul.mubr.f32.gmra.mrb[0].mxu0 %v6753
    %v6870 = vpop.f32.mrb[0].mxu0
    %v6871 = vadd.f32 0.0, %v6870
    %v6872 = vpop.f32.mrb[0].mxu0
    %6873 = vmatprep.mubr.f32.mxu0 0.0
    %6874 = vmatmul.mubr.f32.gmra.mrb[0].mxu0 %v6755
    %v6875 = vpop.f32.mrb[0].mxu0
    %v6876 = vadd.f32 0.0, %v6875
    %v6877 = vpop.f32.mrb[0].mxu0
    %6878 = vmatprep.mubr.f32.mxu0 0.0
    %6879 = vmatmul.mubr.f32.gmra.mrb[0].mxu0 %v6757
    %v6880 = vpop.f32.mrb[0].mxu0
    %v6881 = vadd.f32 0.0, %v6880
    %v6882 = vpop.f32.mrb[0].mxu0
    %6883 = vmatprep.mubr.f32.mxu0 0.0
    %6884 = vmatmul.mubr.f32.gmra.mrb[0].mxu0 %v6759
    %v6885 = vpop.f32.mrb[0].mxu0
    %v6886 = vadd.f32 0.0, %v6885
    %v6887 = vpop.f32.mrb[0].mxu0
    %6888 = vmatprep.mubr.f32.mxu0 0.0
    %6889 = vmatmul.mubr.f32.gmra.mrb[0].mxu0 %v6761
    %v6890 = vpop.f32.mrb[0].mxu0
    %v6891 = vadd.f32 0.0, %v6890
    %v6892 = vpop.f32.mrb[0].mxu0
    %6893 = vmatprep.mubr.f32.mxu0 0.0
    %6894 = vmatmul.mubr.f32.gmra.mrb[0].mxu0 %v6763
    %v6895 = vpop.f32.mrb[0].mxu0
    %v6896 = vadd.f32 0.0, %v6895
    %v6897 = vpop.f32.mrb[0].mxu0
    %6898 = vmatprep.mubr.f32.mxu0 0.0
    %6899 = vmatmul.mubr.f32.gmra.mrb[0].mxu0 %v6765
    %v6900 = vpop.f32.mrb[0].mxu0
    %v6901 = vadd.f32 0.0, %v6900
    %v6902 = vpop.f32.mrb[0].mxu0
    %6903 = vmatprep.mubr.f32.mxu0 0.0
    %6904 = vmatmul.mubr.f32.gmra.mrb[0].mxu0 %v6767
    %v6905 = vpop.f32.mrb[0].mxu0
    %v6906 = vadd.f32 0.0, %v6905
    %v6907 = vpop.f32.mrb[0].mxu0
    %6908 = vmatprep.mubr.f32.mxu0 0.0
    %6909 = vmatmul.mubr.f32.gmra.mrb[0].mxu0 %v6769
    %v6910 = vpop.f32.mrb[0].mxu0
    %v6911 = vadd.f32 0.0, %v6910
    %v6912 = vpop.f32.mrb[0].mxu0
    %6913 = vmatprep.mubr.f32.mxu0 0.0
    %6914 = vmatmul.mubr.f32.gmra.mrb[0].mxu0 %v6771
    %v6915 = vpop.f32.mrb[0].mxu0
    %v6916 = vadd.f32 0.0, %v6915
    %v6917 = vpop.f32.mrb[0].mxu0
    %6918 = vmatprep.mubr.f32.mxu0 0.0
    %6919 = vmatmul.mubr.f32.gmra.mrb[0].mxu0 %v6773
    %v6920 = vpop.f32.mrb[0].mxu0
    %v6921 = vadd.f32 0.0, %v6920
    %v6922 = vpop.f32.mrb[0].mxu0
    %6923 = vmatprep.mubr.f32.mxu0 0.0
    %6924 = vmatmul.mubr.f32.gmra.mrb[0].mxu0 %v6775
    %v6925 = vpop.f32.mrb[0].mxu0
    %v6926 = vadd.f32 0.0, %v6925
    %v6927 = vpop.f32.mrb[0].mxu0
    %6928 = vmatprep.mubr.f32.mxu0 0.0
    %6929 = vmatmul.mubr.f32.gmra.mrb[0].mxu0 %v6777
    %v6930 = vpop.f32.mrb[0].mxu0
    %v6931 = vadd.f32 0.0, %v6930
    %v6932 = vpop.f32.mrb[0].mxu0
    %6933 = vmatprep.mubr.f32.mxu0 0.0
    %6934 = vmatmul.mubr.f32.gmra.mrb[0].mxu0 %v6779
    %v6935 = vpop.f32.mrb[0].mxu0
    %v6936 = vadd.f32 0.0, %v6935
    %v6937 = vpop.f32.mrb[0].mxu0
    %6938 = vmatprep.mubr.f32.mxu0 0.0
    %6939 = vmatmul.mubr.f32.gmra.mrb[0].mxu0 %v6781
    %v6940 = vpop.f32.mrb[0].mxu0
    %v6941 = vadd.f32 0.0, %v6940
    %v6942 = vpop.f32.mrb[0].mxu0
    %6943 = vmatprep.mubr.f32.mxu0 0.0
    %6944 = vmatmul.mubr.f32.gmra.mrb[0].mxu0 %v6783
    %v6945 = vpop.f32.mrb[0].mxu0
    %v6946 = vadd.f32 0.0, %v6945
    %v6947 = vpop.f32.mrb[0].mxu0
    %6948 = vmatprep.mubr.f32.mxu0 0.0
    %6949 = vmatmul.mubr.f32.gmra.mrb[0].mxu0 %v6785
    %v6950 = vpop.f32.mrb[0].mxu0
    %v6951 = vadd.f32 0.0, %v6950
    %v6952 = vpop.f32.mrb[0].mxu0
    %6953 = vmatprep.mubr.f32.mxu0 0.0
    %6954 = vmatmul.mubr.f32.gmra.mrb[0].mxu0 %v6787
    %v6955 = vpop.f32.mrb[0].mxu0
    %v6956 = vadd.f32 0.0, %v6955
    %v6957 = vpop.f32.mrb[0].mxu0
    %6958 = vdwg.mxu0
    %v6959 = vadd.f32 %v6679, %v6856
    %v6960 = vadd.f32 %v6680, %v6861
    %v6961 = vadd.f32 %v6681, %v6866
    %v6962 = vadd.f32 %v6682, %v6871
    %v6963 = vadd.f32 %v6683, %v6876
    %v6964 = vadd.f32 %v6684, %v6881
    %v6965 = vadd.f32 %v6685, %v6886
    %v6966 = vadd.f32 %v6686, %v6891
    %v6967 = vadd.f32 %v6687, %v6896
    %v6968 = vadd.f32 %v6688, %v6901
    %v6969 = vadd.f32 %v6689, %v6906
    %v6970 = vadd.f32 %v6690, %v6911
    %v6971 = vadd.f32 %v6691, %v6916
    %v6972 = vadd.f32 %v6692, %v6921
    %v6973 = vadd.f32 %v6693, %v6926
    %v6974 = vadd.f32 %v6694, %v6931
    %v6975 = vadd.f32 %v6695, %v6936
    %v6976 = vadd.f32 %v6696, %v6941
    %v6977 = vadd.f32 %v6697, %v6946
    %v6978 = vadd.f32 %v6698, %v6951
    %v6979 = vadd.f32 %v6699, %v6956
    %v6980 = vld [vmem:[%s1 + $0x1e0] sm:$0xff]
    %v6981 = vld [vmem:[%s1 + $0x1e8] sm:$0xff]
    %v6982 = vld [vmem:[%s1 + $0x1f0] sm:$0xff]
    %v6983 = vld [vmem:[%s1 + $0x1f8] sm:$0xff]
    %v6985 = vrot.slane %v5522, 2
    %v6986 = vsel %vm657, %v6505, %v6985
    %v6987 = vsel %vm5596, %v6986, 0
    %6989 = vmatprep.subr.mxu0 0.0
    %6990 = vmatpush1.msra.mxu0 %v6980
    %6991 = vmatprep.subr.mxu0 0.0
    %6992 = vmatpush1.msra.mxu0 %v6981
    %6993 = vmatprep.subr.mxu0 0.0
    %6994 = vmatpush1.msra.mxu0 %v6982
    %6995 = vmatprep.subr.mxu0 0.0
    %6996 = vmatpush1.msra.mxu0 %v6983
    %6997 = vmatprep.subr.mxu0 0.0
    %6998 = vmatpush1.msra.mxu0 0.0
    %6999 = vmatprep.subr.mxu0 0.0
    %7000 = vmatpush1.msra.mxu0 0.0
    %7001 = vmatprep.subr.mxu0 0.0
    %7002 = vmatpush1.msra.mxu0 0.0
    %7003 = vmatprep.subr.mxu0 0.0
    %7004 = vmatpush1.msra.mxu0 0.0
    %7005 = vmatprep.subr.mxu0 0.0
    %7006 = vmatpush1.msra.mxu0 0.0
    %7007 = vmatprep.subr.mxu0 0.0
    %7008 = vmatpush1.msra.mxu0 0.0
    %7009 = vmatprep.subr.mxu0 0.0
    %7010 = vmatpush1.msra.mxu0 0.0
    %7011 = vmatprep.subr.mxu0 0.0
    %7012 = vmatpush1.msra.mxu0 0.0
    %7013 = vmatprep.subr.mxu0 0.0
    %7014 = vmatpush1.msra.mxu0 0.0
    %7015 = vmatprep.subr.mxu0 0.0
    %7016 = vmatpush1.msra.mxu0 0.0
    %7017 = vmatprep.subr.mxu0 0.0
    %7018 = vmatpush1.msra.mxu0 0.0
    %7019 = vmatprep.subr.mxu0 0.0
    %7020 = vmatpush1.msra.mxu0 0.0
    %7021 = vmatprep.subr.mxu0 0.0
    %7022 = vmatpush1.msra.mxu0 0.0
    %7023 = vmatprep.subr.mxu0 0.0
    %7024 = vmatpush1.msra.mxu0 0.0
    %7025 = vmatprep.subr.mxu0 0.0
    %7026 = vmatpush1.msra.mxu0 0.0
    %7027 = vmatprep.subr.mxu0 0.0
    %7028 = vmatpush1.msra.mxu0 0.0
    %7029 = vmatprep.subr.mxu0 0.0
    %7030 = vmatpush1.msra.mxu0 0.0
    %7031 = vmatprep.subr.mxu0 0.0
    %7032 = vmatpush1.msra.mxu0 0.0
    %7033 = vmatprep.subr.mxu0 0.0
    %7034 = vmatpush1.msra.mxu0 0.0
    %7035 = vmatprep.subr.mxu0 0.0
    %7036 = vmatpush1.msra.mxu0 0.0
    %7037 = vmatprep.subr.mxu0 0.0
    %7038 = vmatpush1.msra.mxu0 0.0
    %7039 = vmatprep.subr.mxu0 0.0
    %7040 = vmatpush1.msra.mxu0 0.0
    %7041 = vmatprep.subr.mxu0 0.0
    %7042 = vmatpush1.msra.mxu0 0.0
    %7043 = vmatprep.subr.mxu0 0.0
    %7044 = vmatpush1.msra.mxu0 0.0
    %7045 = vmatprep.subr.mxu0 0.0
    %7046 = vmatpush1.msra.mxu0 0.0
    %7047 = vmatprep.subr.mxu0 0.0
    %7048 = vmatpush1.msra.mxu0 0.0
    %7049 = vmatprep.subr.mxu0 0.0
    %7050 = vmatpush1.msra.mxu0 0.0
    %7051 = vmatprep.subr.mxu0 0.0
    %7052 = vmatpush1.msra.mxu0 0.0
    %7053 = vmatprep.mubr.f32.mxu0 0.0
    %7054 = vmatmul.mubr.f32.gmra.mrb[0].mxu0 %v6072
    %v7055 = vpop.f32.mrb[0].mxu0
    %v7056 = vadd.f32 0.0, %v7055
    %v7057 = vpop.f32.mrb[0].mxu0
    %7058 = vmatprep.mubr.f32.mxu0 0.0
    %7059 = vmatmul.mubr.f32.gmra.mrb[0].mxu0 %v6074
    %v7060 = vpop.f32.mrb[0].mxu0
    %v7061 = vadd.f32 0.0, %v7060
    %v7062 = vpop.f32.mrb[0].mxu0
    %7063 = vmatprep.mubr.f32.mxu0 0.0
    %7064 = vmatmul.mubr.f32.gmra.mrb[0].mxu0 %v6076
    %v7065 = vpop.f32.mrb[0].mxu0
    %v7066 = vadd.f32 0.0, %v7065
    %v7067 = vpop.f32.mrb[0].mxu0
    %7068 = vmatprep.mubr.f32.mxu0 0.0
    %7069 = vmatmul.mubr.f32.gmra.mrb[0].mxu0 %v6078
    %v7070 = vpop.f32.mrb[0].mxu0
    %v7071 = vadd.f32 0.0, %v7070
    %v7072 = vpop.f32.mrb[0].mxu0
    %7073 = vmatprep.mubr.f32.mxu0 0.0
    %7074 = vmatmul.mubr.f32.gmra.mrb[0].mxu0 %v6080
    %v7075 = vpop.f32.mrb[0].mxu0
    %v7076 = vadd.f32 0.0, %v7075
    %v7077 = vpop.f32.mrb[0].mxu0
    %7078 = vmatprep.mubr.f32.mxu0 0.0
    %7079 = vmatmul.mubr.f32.gmra.mrb[0].mxu0 %v6082
    %v7080 = vpop.f32.mrb[0].mxu0
    %v7081 = vadd.f32 0.0, %v7080
    %v7082 = vpop.f32.mrb[0].mxu0
    %7083 = vmatprep.mubr.f32.mxu0 0.0
    %7084 = vmatmul.mubr.f32.gmra.mrb[0].mxu0 %v6084
    %v7085 = vpop.f32.mrb[0].mxu0
    %v7086 = vadd.f32 0.0, %v7085
    %v7087 = vpop.f32.mrb[0].mxu0
    %7088 = vmatprep.mubr.f32.mxu0 0.0
    %7089 = vmatmul.mubr.f32.gmra.mrb[0].mxu0 %v6086
    %v7090 = vpop.f32.mrb[0].mxu0
    %v7091 = vadd.f32 0.0, %v7090
    %v7092 = vpop.f32.mrb[0].mxu0
    %7093 = vmatprep.mubr.f32.mxu0 0.0
    %7094 = vmatmul.mubr.f32.gmra.mrb[0].mxu0 %v6088
    %v7095 = vpop.f32.mrb[0].mxu0
    %v7096 = vadd.f32 0.0, %v7095
    %v7097 = vpop.f32.mrb[0].mxu0
    %7098 = vmatprep.mubr.f32.mxu0 0.0
    %7099 = vmatmul.mubr.f32.gmra.mrb[0].mxu0 %v6090
    %v7100 = vpop.f32.mrb[0].mxu0
    %v7101 = vadd.f32 0.0, %v7100
    %v7102 = vpop.f32.mrb[0].mxu0
    %7103 = vmatprep.mubr.f32.mxu0 0.0
    %7104 = vmatmul.mubr.f32.gmra.mrb[0].mxu0 %v6092
    %v7105 = vpop.f32.mrb[0].mxu0
    %v7106 = vadd.f32 0.0, %v7105
    %v7107 = vpop.f32.mrb[0].mxu0
    %7108 = vmatprep.mubr.f32.mxu0 0.0
    %7109 = vmatmul.mubr.f32.gmra.mrb[0].mxu0 %v6094
    %v7110 = vpop.f32.mrb[0].mxu0
    %v7111 = vadd.f32 0.0, %v7110
    %v7112 = vpop.f32.mrb[0].mxu0
    %7113 = vmatprep.mubr.f32.mxu0 0.0
    %7114 = vmatmul.mubr.f32.gmra.mrb[0].mxu0 %v6096
    %v7115 = vpop.f32.mrb[0].mxu0
    %v7116 = vadd.f32 0.0, %v7115
    %v7117 = vpop.f32.mrb[0].mxu0
    %7118 = vmatprep.mubr.f32.mxu0 0.0
    %7119 = vmatmul.mubr.f32.gmra.mrb[0].mxu0 %v6098
    %v7120 = vpop.f32.mrb[0].mxu0
    %v7121 = vadd.f32 0.0, %v7120
    %v7122 = vpop.f32.mrb[0].mxu0
    %7123 = vmatprep.mubr.f32.mxu0 0.0
    %7124 = vmatmul.mubr.f32.gmra.mrb[0].mxu0 %v6100
    %v7125 = vpop.f32.mrb[0].mxu0
    %v7126 = vadd.f32 0.0, %v7125
    %v7127 = vpop.f32.mrb[0].mxu0
    %7128 = vmatprep.mubr.f32.mxu0 0.0
    %7129 = vmatmul.mubr.f32.gmra.mrb[0].mxu0 %v6102
    %v7130 = vpop.f32.mrb[0].mxu0
    %v7131 = vadd.f32 0.0, %v7130
    %v7132 = vpop.f32.mrb[0].mxu0
    %7133 = vmatprep.mubr.f32.mxu0 0.0
    %7134 = vmatmul.mubr.f32.gmra.mrb[0].mxu0 %v6104
    %v7135 = vpop.f32.mrb[0].mxu0
    %v7136 = vadd.f32 0.0, %v7135
    %v7137 = vpop.f32.mrb[0].mxu0
    %7138 = vmatprep.mubr.f32.mxu0 0.0
    %7139 = vmatmul.mubr.f32.gmra.mrb[0].mxu0 %v6106
    %v7140 = vpop.f32.mrb[0].mxu0
    %v7141 = vadd.f32 0.0, %v7140
    %v7142 = vpop.f32.mrb[0].mxu0
    %7143 = vmatprep.mubr.f32.mxu0 0.0
    %7144 = vmatmul.mubr.f32.gmra.mrb[0].mxu0 %v6108
    %v7145 = vpop.f32.mrb[0].mxu0
    %v7146 = vadd.f32 0.0, %v7145
    %v7147 = vpop.f32.mrb[0].mxu0
    %7148 = vmatprep.mubr.f32.mxu0 0.0
    %7149 = vmatmul.mubr.f32.gmra.mrb[0].mxu0 %v6507
    %v7150 = vpop.f32.mrb[0].mxu0
    %v7151 = vadd.f32 0.0, %v7150
    %v7152 = vpop.f32.mrb[0].mxu0
    %7153 = vmatprep.mubr.f32.mxu0 0.0
    %7154 = vmatmul.mubr.f32.gmra.mrb[0].mxu0 %v6987
    %v7155 = vpop.f32.mrb[0].mxu0
    %v7156 = vadd.f32 0.0, %v7155
    %v7157 = vpop.f32.mrb[0].mxu0
    %7158 = vdwg.mxu0
    %v7159 = vadd.f32 %v6959, %v7056
    %v7160 = vadd.f32 %v6960, %v7061
    %v7161 = vadd.f32 %v6961, %v7066
    %v7162 = vadd.f32 %v6962, %v7071
    %v7163 = vadd.f32 %v6963, %v7076
    %v7164 = vadd.f32 %v6964, %v7081
    %v7165 = vadd.f32 %v6965, %v7086
    %v7166 = vadd.f32 %v6966, %v7091
    %v7167 = vadd.f32 %v6967, %v7096
    %v7168 = vadd.f32 %v6968, %v7101
    %v7169 = vadd.f32 %v6969, %v7106
    %v7170 = vadd.f32 %v6970, %v7111
    %v7171 = vadd.f32 %v6971, %v7116
    %v7172 = vadd.f32 %v6972, %v7121
    %v7173 = vadd.f32 %v6973, %v7126
    %v7174 = vadd.f32 %v6974, %v7131
    %v7175 = vadd.f32 %v6975, %v7136
    %v7176 = vadd.f32 %v6976, %v7141
    %v7177 = vadd.f32 %v6977, %v7146
    %v7178 = vadd.f32 %v6978, %v7151
    %v7179 = vadd.f32 %v6979, %v7156
    %v7180 = vld [vmem:[%s1 + $0x200] sm:$0xff]
    %v7181 = vld [vmem:[%s1 + $0x208] sm:$0xff]
    %v7182 = vld [vmem:[%s1 + $0x210] sm:$0xff]
    %v7183 = vld [vmem:[%s1 + $0x218] sm:$0xff]
    %v7184 = vrot.slane %v5522, 3
    %v7185 = vsel %vm1463, %v6745, %v7184
    %v7186 = vsel %vm5596, %v7185, 0
    %7188 = vmatprep.subr.mxu0 0.0
    %7189 = vmatpush1.msra.mxu0 %v7180
    %7190 = vmatprep.subr.mxu0 0.0
    %7191 = vmatpush1.msra.mxu0 %v7181
    %7192 = vmatprep.subr.mxu0 0.0
    %7193 = vmatpush1.msra.mxu0 %v7182
    %7194 = vmatprep.subr.mxu0 0.0
    %7195 = vmatpush1.msra.mxu0 %v7183
    %7196 = vmatprep.subr.mxu0 0.0
    %7197 = vmatpush1.msra.mxu0 0.0
    %7198 = vmatprep.subr.mxu0 0.0
    %7199 = vmatpush1.msra.mxu0 0.0
    %7200 = vmatprep.subr.mxu0 0.0
    %7201 = vmatpush1.msra.mxu0 0.0
    %7202 = vmatprep.subr.mxu0 0.0
    %7203 = vmatpush1.msra.mxu0 0.0
    %7204 = vmatprep.subr.mxu0 0.0
    %7205 = vmatpush1.msra.mxu0 0.0
    %7206 = vmatprep.subr.mxu0 0.0
    %7207 = vmatpush1.msra.mxu0 0.0
    %7208 = vmatprep.subr.mxu0 0.0
    %7209 = vmatpush1.msra.mxu0 0.0
    %7210 = vmatprep.subr.mxu0 0.0
    %7211 = vmatpush1.msra.mxu0 0.0
    %7212 = vmatprep.subr.mxu0 0.0
    %7213 = vmatpush1.msra.mxu0 0.0
    %7214 = vmatprep.subr.mxu0 0.0
    %7215 = vmatpush1.msra.mxu0 0.0
    %7216 = vmatprep.subr.mxu0 0.0
    %7217 = vmatpush1.msra.mxu0 0.0
    %7218 = vmatprep.subr.mxu0 0.0
    %7219 = vmatpush1.msra.mxu0 0.0
    %7220 = vmatprep.subr.mxu0 0.0
    %7221 = vmatpush1.msra.mxu0 0.0
    %7222 = vmatprep.subr.mxu0 0.0
    %7223 = vmatpush1.msra.mxu0 0.0
    %7224 = vmatprep.subr.mxu0 0.0
    %7225 = vmatpush1.msra.mxu0 0.0
    %7226 = vmatprep.subr.mxu0 0.0
    %7227 = vmatpush1.msra.mxu0 0.0
    %7228 = vmatprep.subr.mxu0 0.0
    %7229 = vmatpush1.msra.mxu0 0.0
    %7230 = vmatprep.subr.mxu0 0.0
    %7231 = vmatpush1.msra.mxu0 0.0
    %7232 = vmatprep.subr.mxu0 0.0
    %7233 = vmatpush1.msra.mxu0 0.0
    %7234 = vmatprep.subr.mxu0 0.0
    %7235 = vmatpush1.msra.mxu0 0.0
    %7236 = vmatprep.subr.mxu0 0.0
    %7237 = vmatpush1.msra.mxu0 0.0
    %7238 = vmatprep.subr.mxu0 0.0
    %7239 = vmatpush1.msra.mxu0 0.0
    %7240 = vmatprep.subr.mxu0 0.0
    %7241 = vmatpush1.msra.mxu0 0.0
    %7242 = vmatprep.subr.mxu0 0.0
    %7243 = vmatpush1.msra.mxu0 0.0
    %7244 = vmatprep.subr.mxu0 0.0
    %7245 = vmatpush1.msra.mxu0 0.0
    %7246 = vmatprep.subr.mxu0 0.0
    %7247 = vmatpush1.msra.mxu0 0.0
    %7248 = vmatprep.subr.mxu0 0.0
    %7249 = vmatpush1.msra.mxu0 0.0
    %7250 = vmatprep.subr.mxu0 0.0
    %7251 = vmatpush1.msra.mxu0 0.0
    %7252 = vmatprep.mubr.f32.mxu0 0.0
    %7253 = vmatmul.mubr.f32.gmra.mrb[0].mxu0 %v6749
    %v7254 = vpop.f32.mrb[0].mxu0
    %v7255 = vadd.f32 0.0, %v7254
    %v7256 = vpop.f32.mrb[0].mxu0
    %7257 = vmatprep.mubr.f32.mxu0 0.0
    %7258 = vmatmul.mubr.f32.gmra.mrb[0].mxu0 %v6751
    %v7259 = vpop.f32.mrb[0].mxu0
    %v7260 = vadd.f32 0.0, %v7259
    %v7261 = vpop.f32.mrb[0].mxu0
    %7262 = vmatprep.mubr.f32.mxu0 0.0
    %7263 = vmatmul.mubr.f32.gmra.mrb[0].mxu0 %v6753
    %v7264 = vpop.f32.mrb[0].mxu0
    %v7265 = vadd.f32 0.0, %v7264
    %v7266 = vpop.f32.mrb[0].mxu0
    %7267 = vmatprep.mubr.f32.mxu0 0.0
    %7268 = vmatmul.mubr.f32.gmra.mrb[0].mxu0 %v6755
    %v7269 = vpop.f32.mrb[0].mxu0
    %v7270 = vadd.f32 0.0, %v7269
    %v7271 = vpop.f32.mrb[0].mxu0
    %7272 = vmatprep.mubr.f32.mxu0 0.0
    %7273 = vmatmul.mubr.f32.gmra.mrb[0].mxu0 %v6757
    %v7274 = vpop.f32.mrb[0].mxu0
    %v7275 = vadd.f32 0.0, %v7274
    %v7276 = vpop.f32.mrb[0].mxu0
    %7277 = vmatprep.mubr.f32.mxu0 0.0
    %7278 = vmatmul.mubr.f32.gmra.mrb[0].mxu0 %v6759
    %v7279 = vpop.f32.mrb[0].mxu0
    %v7280 = vadd.f32 0.0, %v7279
    %v7281 = vpop.f32.mrb[0].mxu0
    %7282 = vmatprep.mubr.f32.mxu0 0.0
    %7283 = vmatmul.mubr.f32.gmra.mrb[0].mxu0 %v6761
    %v7284 = vpop.f32.mrb[0].mxu0
    %v7285 = vadd.f32 0.0, %v7284
    %v7286 = vpop.f32.mrb[0].mxu0
    %7287 = vmatprep.mubr.f32.mxu0 0.0
    %7288 = vmatmul.mubr.f32.gmra.mrb[0].mxu0 %v6763
    %v7289 = vpop.f32.mrb[0].mxu0
    %v7290 = vadd.f32 0.0, %v7289
    %v7291 = vpop.f32.mrb[0].mxu0
    %7292 = vmatprep.mubr.f32.mxu0 0.0
    %7293 = vmatmul.mubr.f32.gmra.mrb[0].mxu0 %v6765
    %v7294 = vpop.f32.mrb[0].mxu0
    %v7295 = vadd.f32 0.0, %v7294
    %v7296 = vpop.f32.mrb[0].mxu0
    %7297 = vmatprep.mubr.f32.mxu0 0.0
    %7298 = vmatmul.mubr.f32.gmra.mrb[0].mxu0 %v6767
    %v7299 = vpop.f32.mrb[0].mxu0
    %v7300 = vadd.f32 0.0, %v7299
    %v7301 = vpop.f32.mrb[0].mxu0
    %7302 = vmatprep.mubr.f32.mxu0 0.0
    %7303 = vmatmul.mubr.f32.gmra.mrb[0].mxu0 %v6769
    %v7304 = vpop.f32.mrb[0].mxu0
    %v7305 = vadd.f32 0.0, %v7304
    %v7306 = vpop.f32.mrb[0].mxu0
    %7307 = vmatprep.mubr.f32.mxu0 0.0
    %7308 = vmatmul.mubr.f32.gmra.mrb[0].mxu0 %v6771
    %v7309 = vpop.f32.mrb[0].mxu0
    %v7310 = vadd.f32 0.0, %v7309
    %v7311 = vpop.f32.mrb[0].mxu0
    %7312 = vmatprep.mubr.f32.mxu0 0.0
    %7313 = vmatmul.mubr.f32.gmra.mrb[0].mxu0 %v6773
    %v7314 = vpop.f32.mrb[0].mxu0
    %v7315 = vadd.f32 0.0, %v7314
    %v7316 = vpop.f32.mrb[0].mxu0
    %7317 = vmatprep.mubr.f32.mxu0 0.0
    %7318 = vmatmul.mubr.f32.gmra.mrb[0].mxu0 %v6775
    %v7319 = vpop.f32.mrb[0].mxu0
    %v7320 = vadd.f32 0.0, %v7319
    %v7321 = vpop.f32.mrb[0].mxu0
    %7322 = vmatprep.mubr.f32.mxu0 0.0
    %7323 = vmatmul.mubr.f32.gmra.mrb[0].mxu0 %v6777
    %v7324 = vpop.f32.mrb[0].mxu0
    %v7325 = vadd.f32 0.0, %v7324
    %v7326 = vpop.f32.mrb[0].mxu0
    %7327 = vmatprep.mubr.f32.mxu0 0.0
    %7328 = vmatmul.mubr.f32.gmra.mrb[0].mxu0 %v6779
    %v7329 = vpop.f32.mrb[0].mxu0
    %v7330 = vadd.f32 0.0, %v7329
    %v7331 = vpop.f32.mrb[0].mxu0
    %7332 = vmatprep.mubr.f32.mxu0 0.0
    %7333 = vmatmul.mubr.f32.gmra.mrb[0].mxu0 %v6781
    %v7334 = vpop.f32.mrb[0].mxu0
    %v7335 = vadd.f32 0.0, %v7334
    %v7336 = vpop.f32.mrb[0].mxu0
    %7337 = vmatprep.mubr.f32.mxu0 0.0
    %7338 = vmatmul.mubr.f32.gmra.mrb[0].mxu0 %v6783
    %v7339 = vpop.f32.mrb[0].mxu0
    %v7340 = vadd.f32 0.0, %v7339
    %v7341 = vpop.f32.mrb[0].mxu0
    %7342 = vmatprep.mubr.f32.mxu0 0.0
    %7343 = vmatmul.mubr.f32.gmra.mrb[0].mxu0 %v6785
    %v7344 = vpop.f32.mrb[0].mxu0
    %v7345 = vadd.f32 0.0, %v7344
    %v7346 = vpop.f32.mrb[0].mxu0
    %7347 = vmatprep.mubr.f32.mxu0 0.0
    %7348 = vmatmul.mubr.f32.gmra.mrb[0].mxu0 %v6787
    %v7349 = vpop.f32.mrb[0].mxu0
    %v7350 = vadd.f32 0.0, %v7349
    %v7351 = vpop.f32.mrb[0].mxu0
    %7352 = vmatprep.mubr.f32.mxu0 0.0
    %7353 = vmatmul.mubr.f32.gmra.mrb[0].mxu0 %v7186
    %v7354 = vpop.f32.mrb[0].mxu0
    %v7355 = vadd.f32 0.0, %v7354
    %v7356 = vpop.f32.mrb[0].mxu0
    %7357 = vdwg.mxu0
    %v7358 = vadd.f32 %v7159, %v7255
    %v7359 = vadd.f32 %v7160, %v7260
    %v7360 = vadd.f32 %v7161, %v7265
    %v7361 = vadd.f32 %v7162, %v7270
    %v7362 = vadd.f32 %v7163, %v7275
    %v7363 = vadd.f32 %v7164, %v7280
    %v7364 = vadd.f32 %v7165, %v7285
    %v7365 = vadd.f32 %v7166, %v7290
    %v7366 = vadd.f32 %v7167, %v7295
    %v7367 = vadd.f32 %v7168, %v7300
    %v7368 = vadd.f32 %v7169, %v7305
    %v7369 = vadd.f32 %v7170, %v7310
    %v7370 = vadd.f32 %v7171, %v7315
    %v7371 = vadd.f32 %v7172, %v7320
    %v7372 = vadd.f32 %v7173, %v7325
    %v7373 = vadd.f32 %v7174, %v7330
    %v7374 = vadd.f32 %v7175, %v7335
    %v7375 = vadd.f32 %v7176, %v7340
    %v7376 = vadd.f32 %v7177, %v7345
    %v7377 = vadd.f32 %v7178, %v7350
    %v7378 = vadd.f32 %v7179, %v7355
    %v7379 = vld [vmem:[%s1 + $0x220] sm:$0xff]
    %v7380 = vld [vmem:[%s1 + $0x228] sm:$0xff]
    %v7381 = vld [vmem:[%s1 + $0x230] sm:$0xff]
    %v7382 = vld [vmem:[%s1 + $0x238] sm:$0xff]
    %v7383 = vrot.slane %v5501, 4
    %v7384 = vrot.slane %v5502, 4
    %v7385 = vsel %vm2269, %v7383, %v7384
    %v7386 = vrot.slane %v5503, 4
    %v7387 = vsel %vm2269, %v7384, %v7386
    %v7388 = vrot.slane %v5504, 4
    %v7389 = vsel %vm2269, %v7386, %v7388
    %v7390 = vrot.slane %v5505, 4
    %v7391 = vsel %vm2269, %v7388, %v7390
    %v7392 = vrot.slane %v5506, 4
    %v7393 = vsel %vm2269, %v7390, %v7392
    %v7394 = vrot.slane %v5507, 4
    %v7395 = vsel %vm2269, %v7392, %v7394
    %v7396 = vrot.slane %v5508, 4
    %v7397 = vsel %vm2269, %v7394, %v7396
    %v7398 = vrot.slane %v5509, 4
    %v7399 = vsel %vm2269, %v7396, %v7398
    %v7400 = vrot.slane %v5510, 4
    %v7401 = vsel %vm2269, %v7398, %v7400
    %v7402 = vrot.slane %v5511, 4
    %v7403 = vsel %vm2269, %v7400, %v7402
    %v7404 = vrot.slane %v5512, 4
    %v7405 = vsel %vm2269, %v7402, %v7404
    %v7406 = vrot.slane %v5513, 4
    %v7407 = vsel %vm2269, %v7404, %v7406
    %v7408 = vrot.slane %v5514, 4
    %v7409 = vsel %vm2269, %v7406, %v7408
    %v7410 = vrot.slane %v5515, 4
    %v7411 = vsel %vm2269, %v7408, %v7410
    %v7412 = vrot.slane %v5516, 4
    %v7413 = vsel %vm2269, %v7410, %v7412
    %v7414 = vrot.slane %v5517, 4
    %v7415 = vsel %vm2269, %v7412, %v7414
    %v7416 = vrot.slane %v5518, 4
    %v7417 = vsel %vm2269, %v7414, %v7416
    %v7418 = vrot.slane %v5519, 4
    %v7419 = vsel %vm2269, %v7416, %v7418
    %v7420 = vrot.slane %v5520, 4
    %v7421 = vsel %vm2269, %v7418, %v7420
    %v7422 = vrot.slane %v5521, 4
    %v7423 = vsel %vm2269, %v7420, %v7422
    %v7424 = vrot.slane %v5522, 4
    %v7425 = vsel %vm2269, %v7422, %v7424
    %v7426 = vsel %vm5596, %v7385, 0
    %v7428 = vsel %vm5596, %v7387, 0
    %v7430 = vsel %vm5596, %v7389, 0
    %v7432 = vsel %vm5596, %v7391, 0
    %v7434 = vsel %vm5596, %v7393, 0
    %v7436 = vsel %vm5596, %v7395, 0
    %v7438 = vsel %vm5596, %v7397, 0
    %v7440 = vsel %vm5596, %v7399, 0
    %v7442 = vsel %vm5596, %v7401, 0
    %v7444 = vsel %vm5596, %v7403, 0
    %v7446 = vsel %vm5596, %v7405, 0
    %v7448 = vsel %vm5596, %v7407, 0
    %v7450 = vsel %vm5596, %v7409, 0
    %v7452 = vsel %vm5596, %v7411, 0
    %v7454 = vsel %vm5596, %v7413, 0
    %v7456 = vsel %vm5596, %v7415, 0
    %v7458 = vsel %vm5596, %v7417, 0
    %v7460 = vsel %vm5596, %v7419, 0
    %v7462 = vsel %vm5596, %v7421, 0
    %v7464 = vsel %vm5596, %v7423, 0
    %v7466 = vsel %vm5596, %v7425, 0
    %7468 = vmatprep.subr.mxu0 0.0
    %7469 = vmatpush1.msra.mxu0 %v7379
    %7470 = vmatprep.subr.mxu0 0.0
    %7471 = vmatpush1.msra.mxu0 %v7380
    %7472 = vmatprep.subr.mxu0 0.0
    %7473 = vmatpush1.msra.mxu0 %v7381
    %7474 = vmatprep.subr.mxu0 0.0
    %7475 = vmatpush1.msra.mxu0 %v7382
    %7476 = vmatprep.subr.mxu0 0.0
    %7477 = vmatpush1.msra.mxu0 0.0
    %7478 = vmatprep.subr.mxu0 0.0
    %7479 = vmatpush1.msra.mxu0 0.0
    %7480 = vmatprep.subr.mxu0 0.0
    %7481 = vmatpush1.msra.mxu0 0.0
    %7482 = vmatprep.subr.mxu0 0.0
    %7483 = vmatpush1.msra.mxu0 0.0
    %7484 = vmatprep.subr.mxu0 0.0
    %7485 = vmatpush1.msra.mxu0 0.0
    %7486 = vmatprep.subr.mxu0 0.0
    %7487 = vmatpush1.msra.mxu0 0.0
    %7488 = vmatprep.subr.mxu0 0.0
    %7489 = vmatpush1.msra.mxu0 0.0
    %7490 = vmatprep.subr.mxu0 0.0
    %7491 = vmatpush1.msra.mxu0 0.0
    %7492 = vmatprep.subr.mxu0 0.0
    %7493 = vmatpush1.msra.mxu0 0.0
    %7494 = vmatprep.subr.mxu0 0.0
    %7495 = vmatpush1.msra.mxu0 0.0
    %7496 = vmatprep.subr.mxu0 0.0
    %7497 = vmatpush1.msra.mxu0 0.0
    %7498 = vmatprep.subr.mxu0 0.0
    %7499 = vmatpush1.msra.mxu0 0.0
    %7500 = vmatprep.subr.mxu0 0.0
    %7501 = vmatpush1.msra.mxu0 0.0
    %7502 = vmatprep.subr.mxu0 0.0
    %7503 = vmatpush1.msra.mxu0 0.0
    %7504 = vmatprep.subr.mxu0 0.0
    %7505 = vmatpush1.msra.mxu0 0.0
    %7506 = vmatprep.subr.mxu0 0.0
    %7507 = vmatpush1.msra.mxu0 0.0
    %7508 = vmatprep.subr.mxu0 0.0
    %7509 = vmatpush1.msra.mxu0 0.0
    %7510 = vmatprep.subr.mxu0 0.0
    %7511 = vmatpush1.msra.mxu0 0.0
    %7512 = vmatprep.subr.mxu0 0.0
    %7513 = vmatpush1.msra.mxu0 0.0
    %7514 = vmatprep.subr.mxu0 0.0
    %7515 = vmatpush1.msra.mxu0 0.0
    %7516 = vmatprep.subr.mxu0 0.0
    %7517 = vmatpush1.msra.mxu0 0.0
    %7518 = vmatprep.subr.mxu0 0.0
    %7519 = vmatpush1.msra.mxu0 0.0
    %7520 = vmatprep.subr.mxu0 0.0
    %7521 = vmatpush1.msra.mxu0 0.0
    %7522 = vmatprep.subr.mxu0 0.0
    %7523 = vmatpush1.msra.mxu0 0.0
    %7524 = vmatprep.subr.mxu0 0.0
    %7525 = vmatpush1.msra.mxu0 0.0
    %7526 = vmatprep.subr.mxu0 0.0
    %7527 = vmatpush1.msra.mxu0 0.0
    %7528 = vmatprep.subr.mxu0 0.0
    %7529 = vmatpush1.msra.mxu0 0.0
    %7530 = vmatprep.subr.mxu0 0.0
    %7531 = vmatpush1.msra.mxu0 0.0
    %7532 = vmatprep.mubr.f32.mxu0 0.0
    %7533 = vmatmul.mubr.f32.gmra.mrb[0].mxu0 %v7426
    %v7534 = vpop.f32.mrb[0].mxu0
    %v7535 = vadd.f32 0.0, %v7534
    %v7536 = vpop.f32.mrb[0].mxu0
    %7537 = vmatprep.mubr.f32.mxu0 0.0
    %7538 = vmatmul.mubr.f32.gmra.mrb[0].mxu0 %v7428
    %v7539 = vpop.f32.mrb[0].mxu0
    %v7540 = vadd.f32 0.0, %v7539
    %v7541 = vpop.f32.mrb[0].mxu0
    %7542 = vmatprep.mubr.f32.mxu0 0.0
    %7543 = vmatmul.mubr.f32.gmra.mrb[0].mxu0 %v7430
    %v7544 = vpop.f32.mrb[0].mxu0
    %v7545 = vadd.f32 0.0, %v7544
    %v7546 = vpop.f32.mrb[0].mxu0
    %7547 = vmatprep.mubr.f32.mxu0 0.0
    %7548 = vmatmul.mubr.f32.gmra.mrb[0].mxu0 %v7432
    %v7549 = vpop.f32.mrb[0].mxu0
    %v7550 = vadd.f32 0.0, %v7549
    %v7551 = vpop.f32.mrb[0].mxu0
    %7552 = vmatprep.mubr.f32.mxu0 0.0
    %7553 = vmatmul.mubr.f32.gmra.mrb[0].mxu0 %v7434
    %v7554 = vpop.f32.mrb[0].mxu0
    %v7555 = vadd.f32 0.0, %v7554
    %v7556 = vpop.f32.mrb[0].mxu0
    %7557 = vmatprep.mubr.f32.mxu0 0.0
    %7558 = vmatmul.mubr.f32.gmra.mrb[0].mxu0 %v7436
    %v7559 = vpop.f32.mrb[0].mxu0
    %v7560 = vadd.f32 0.0, %v7559
    %v7561 = vpop.f32.mrb[0].mxu0
    %7562 = vmatprep.mubr.f32.mxu0 0.0
    %7563 = vmatmul.mubr.f32.gmra.mrb[0].mxu0 %v7438
    %v7564 = vpop.f32.mrb[0].mxu0
    %v7565 = vadd.f32 0.0, %v7564
    %v7566 = vpop.f32.mrb[0].mxu0
    %7567 = vmatprep.mubr.f32.mxu0 0.0
    %7568 = vmatmul.mubr.f32.gmra.mrb[0].mxu0 %v7440
    %v7569 = vpop.f32.mrb[0].mxu0
    %v7570 = vadd.f32 0.0, %v7569
    %v7571 = vpop.f32.mrb[0].mxu0
    %7572 = vmatprep.mubr.f32.mxu0 0.0
    %7573 = vmatmul.mubr.f32.gmra.mrb[0].mxu0 %v7442
    %v7574 = vpop.f32.mrb[0].mxu0
    %v7575 = vadd.f32 0.0, %v7574
    %v7576 = vpop.f32.mrb[0].mxu0
    %7577 = vmatprep.mubr.f32.mxu0 0.0
    %7578 = vmatmul.mubr.f32.gmra.mrb[0].mxu0 %v7444
    %v7579 = vpop.f32.mrb[0].mxu0
    %v7580 = vadd.f32 0.0, %v7579
    %v7581 = vpop.f32.mrb[0].mxu0
    %7582 = vmatprep.mubr.f32.mxu0 0.0
    %7583 = vmatmul.mubr.f32.gmra.mrb[0].mxu0 %v7446
    %v7584 = vpop.f32.mrb[0].mxu0
    %v7585 = vadd.f32 0.0, %v7584
    %v7586 = vpop.f32.mrb[0].mxu0
    %7587 = vmatprep.mubr.f32.mxu0 0.0
    %7588 = vmatmul.mubr.f32.gmra.mrb[0].mxu0 %v7448
    %v7589 = vpop.f32.mrb[0].mxu0
    %v7590 = vadd.f32 0.0, %v7589
    %v7591 = vpop.f32.mrb[0].mxu0
    %7592 = vmatprep.mubr.f32.mxu0 0.0
    %7593 = vmatmul.mubr.f32.gmra.mrb[0].mxu0 %v7450
    %v7594 = vpop.f32.mrb[0].mxu0
    %v7595 = vadd.f32 0.0, %v7594
    %v7596 = vpop.f32.mrb[0].mxu0
    %7597 = vmatprep.mubr.f32.mxu0 0.0
    %7598 = vmatmul.mubr.f32.gmra.mrb[0].mxu0 %v7452
    %v7599 = vpop.f32.mrb[0].mxu0
    %v7600 = vadd.f32 0.0, %v7599
    %v7601 = vpop.f32.mrb[0].mxu0
    %7602 = vmatprep.mubr.f32.mxu0 0.0
    %7603 = vmatmul.mubr.f32.gmra.mrb[0].mxu0 %v7454
    %v7604 = vpop.f32.mrb[0].mxu0
    %v7605 = vadd.f32 0.0, %v7604
    %v7606 = vpop.f32.mrb[0].mxu0
    %7607 = vmatprep.mubr.f32.mxu0 0.0
    %7608 = vmatmul.mubr.f32.gmra.mrb[0].mxu0 %v7456
    %v7609 = vpop.f32.mrb[0].mxu0
    %v7610 = vadd.f32 0.0, %v7609
    %v7611 = vpop.f32.mrb[0].mxu0
    %7612 = vmatprep.mubr.f32.mxu0 0.0
    %7613 = vmatmul.mubr.f32.gmra.mrb[0].mxu0 %v7458
    %v7614 = vpop.f32.mrb[0].mxu0
    %v7615 = vadd.f32 0.0, %v7614
    %v7616 = vpop.f32.mrb[0].mxu0
    %7617 = vmatprep.mubr.f32.mxu0 0.0
    %7618 = vmatmul.mubr.f32.gmra.mrb[0].mxu0 %v7460
    %v7619 = vpop.f32.mrb[0].mxu0
    %v7620 = vadd.f32 0.0, %v7619
    %v7621 = vpop.f32.mrb[0].mxu0
    %7622 = vmatprep.mubr.f32.mxu0 0.0
    %7623 = vmatmul.mubr.f32.gmra.mrb[0].mxu0 %v7462
    %v7624 = vpop.f32.mrb[0].mxu0
    %v7625 = vadd.f32 0.0, %v7624
    %v7626 = vpop.f32.mrb[0].mxu0
    %7627 = vmatprep.mubr.f32.mxu0 0.0
    %7628 = vmatmul.mubr.f32.gmra.mrb[0].mxu0 %v7464
    %v7629 = vpop.f32.mrb[0].mxu0
    %v7630 = vadd.f32 0.0, %v7629
    %v7631 = vpop.f32.mrb[0].mxu0
    %7632 = vmatprep.mubr.f32.mxu0 0.0
    %7633 = vmatmul.mubr.f32.gmra.mrb[0].mxu0 %v7466
    %v7634 = vpop.f32.mrb[0].mxu0
    %v7635 = vadd.f32 0.0, %v7634
    %v7636 = vpop.f32.mrb[0].mxu0
    %7637 = vdwg.mxu0
    %v7638 = vadd.f32 %v7358, %v7535
    %v7639 = vadd.f32 %v7359, %v7540
    %v7640 = vadd.f32 %v7360, %v7545
    %v7641 = vadd.f32 %v7361, %v7550
    %v7642 = vadd.f32 %v7362, %v7555
    %v7643 = vadd.f32 %v7363, %v7560
    %v7644 = vadd.f32 %v7364, %v7565
    %v7645 = vadd.f32 %v7365, %v7570
    %v7646 = vadd.f32 %v7366, %v7575
    %v7647 = vadd.f32 %v7367, %v7580
    %v7648 = vadd.f32 %v7368, %v7585
    %v7649 = vadd.f32 %v7369, %v7590
    %v7650 = vadd.f32 %v7370, %v7595
    %v7651 = vadd.f32 %v7371, %v7600
    %v7652 = vadd.f32 %v7372, %v7605
    %v7653 = vadd.f32 %v7373, %v7610
    %v7654 = vadd.f32 %v7374, %v7615
    %v7655 = vadd.f32 %v7375, %v7620
    %v7656 = vadd.f32 %v7376, %v7625
    %v7657 = vadd.f32 %v7377, %v7630
    %v7658 = vadd.f32 %v7378, %v7635
    %v7660 = vlaneseq
    %v7661 = vshrl.u32 %v7660, 7
    %v7662 = vsub.s32 0, %v7661
    %v7663 = vrot.slane %v19, %v7662
    %v7664 = vlaneseq
    %v7665 = vshrl.u32 %v7664, 7
    %v7666 = vsub.s32 1, %v7665
    %v7667 = vrot.slane %v19, %v7666
    %vm7669 = vcmask 326656
    %v7670 = vsel %vm7669, %v7667, 0
    %7672 = vmatprep.subr.mxu0 0.0
    %7673 = vmatpush1.msra.mxu0 %v7638
    %7674 = vmatprep.subr.mxu0 0.0
    %7675 = vmatpush1.msra.mxu0 %v7639
    %7676 = vmatprep.subr.mxu0 0.0
    %7677 = vmatpush1.msra.mxu0 %v7640
    %7678 = vmatprep.subr.mxu0 0.0
    %7679 = vmatpush1.msra.mxu0 %v7641
    %7680 = vmatprep.subr.mxu0 0.0
    %7681 = vmatpush1.msra.mxu0 %v7642
    %7682 = vmatprep.subr.mxu0 0.0
    %7683 = vmatpush1.msra.mxu0 %v7643
    %7684 = vmatprep.subr.mxu0 0.0
    %7685 = vmatpush1.msra.mxu0 %v7644
    %7686 = vmatprep.subr.mxu0 0.0
    %7687 = vmatpush1.msra.mxu0 %v7645
    %7688 = vmatprep.subr.mxu0 0.0
    %7689 = vmatpush1.msra.mxu0 %v7646
    %7690 = vmatprep.subr.mxu0 0.0
    %7691 = vmatpush1.msra.mxu0 %v7647
    %7692 = vmatprep.subr.mxu0 0.0
    %7693 = vmatpush1.msra.mxu0 %v7648
    %7694 = vmatprep.subr.mxu0 0.0
    %7695 = vmatpush1.msra.mxu0 %v7649
    %7696 = vmatprep.subr.mxu0 0.0
    %7697 = vmatpush1.msra.mxu0 %v7650
    %7698 = vmatprep.subr.mxu0 0.0
    %7699 = vmatpush1.msra.mxu0 %v7651
    %7700 = vmatprep.subr.mxu0 0.0
    %7701 = vmatpush1.msra.mxu0 %v7652
    %7702 = vmatprep.subr.mxu0 0.0
    %7703 = vmatpush1.msra.mxu0 %v7653
    %7704 = vmatprep.subr.mxu0 0.0
    %7705 = vmatpush1.msra.mxu0 %v7654
    %7706 = vmatprep.subr.mxu0 0.0
    %7707 = vmatpush1.msra.mxu0 %v7655
    %7708 = vmatprep.subr.mxu0 0.0
    %7709 = vmatpush1.msra.mxu0 %v7656
    %7710 = vmatprep.subr.mxu0 0.0
    %7711 = vmatpush1.msra.mxu0 %v7657
    %7712 = vmatprep.subr.mxu0 0.0
    %7713 = vmatpush1.msra.mxu0 %v7658
    %7714 = vmatprep.subr.mxu0 0.0
    %7715 = vmatpush1.msra.mxu0 0.0
    %7716 = vmatprep.subr.mxu0 0.0
    %7717 = vmatpush1.msra.mxu0 0.0
    %7718 = vmatprep.subr.mxu0 0.0
    %7719 = vmatpush1.msra.mxu0 0.0
    %7720 = vmatprep.subr.mxu0 0.0
    %7721 = vmatpush1.msra.mxu0 0.0
    %7722 = vmatprep.subr.mxu0 0.0
    %7723 = vmatpush1.msra.mxu0 0.0
    %7724 = vmatprep.subr.mxu0 0.0
    %7725 = vmatpush1.msra.mxu0 0.0
    %7726 = vmatprep.subr.mxu0 0.0
    %7727 = vmatpush1.msra.mxu0 0.0
    %7728 = vmatprep.subr.mxu0 0.0
    %7729 = vmatpush1.msra.mxu0 0.0
    %7730 = vmatprep.subr.mxu0 0.0
    %7731 = vmatpush1.msra.mxu0 0.0
    %7732 = vmatprep.subr.mxu0 0.0
    %7733 = vmatpush1.msra.mxu0 0.0
    %7734 = vmatprep.subr.mxu0 0.0
    %7735 = vmatpush1.msra.mxu0 0.0
    %7736 = vmatprep.mubr.f32.mxu0 %v7670
    %7737 = vmatmul.mubr.f32.gmra.mrb[0].mxu0 %v7663
    %v7738 = vpop.f32.mrb[0].mxu0
    %v7739 = vadd.f32 0.0, %v7738
    %v7740 = vpop.f32.mrb[0].mxu0
    %7741 = vdwg.mxu0
    %v7742 = vmul.f32 %v7739, 0.055555556
    %v7743 = vlaneseq
    %v7744 = vshrl.u32 %v7743, 7
    %v7745 = vsub.s32 0, %v7744
    %v7746 = vrot.slane %v7742, %v7745
    %v7747 = vsub.f32 %v7638, %v7746
    %v7748 = vsub.f32 %v7639, %v7746
    %v7749 = vsub.f32 %v7640, %v7746
    %v7750 = vsub.f32 %v7641, %v7746
    %v7751 = vsub.f32 %v7642, %v7746
    %v7752 = vsub.f32 %v7643, %v7746
    %v7753 = vsub.f32 %v7644, %v7746
    %v7754 = vsub.f32 %v7645, %v7746
    %v7755 = vsub.f32 %v7646, %v7746
    %v7756 = vsub.f32 %v7647, %v7746
    %v7757 = vsub.f32 %v7648, %v7746
    %v7758 = vsub.f32 %v7649, %v7746
    %v7759 = vsub.f32 %v7650, %v7746
    %v7760 = vsub.f32 %v7651, %v7746
    %v7761 = vsub.f32 %v7652, %v7746
    %v7762 = vsub.f32 %v7653, %v7746
    %v7763 = vsub.f32 %v7654, %v7746
    %v7764 = vsub.f32 %v7655, %v7746
    %v7765 = vsub.f32 %v7656, %v7746
    %v7766 = vsub.f32 %v7657, %v7746
    %v7767 = vsub.f32 %v7658, %v7746
    %v7768 = vmul.f32 %v7747, %v7747
    %v7769 = vmul.f32 %v7748, %v7748
    %v7770 = vmul.f32 %v7749, %v7749
    %v7771 = vmul.f32 %v7750, %v7750
    %v7772 = vmul.f32 %v7751, %v7751
    %v7773 = vmul.f32 %v7752, %v7752
    %v7774 = vmul.f32 %v7753, %v7753
    %v7775 = vmul.f32 %v7754, %v7754
    %v7776 = vmul.f32 %v7755, %v7755
    %v7777 = vmul.f32 %v7756, %v7756
    %v7778 = vmul.f32 %v7757, %v7757
    %v7779 = vmul.f32 %v7758, %v7758
    %v7780 = vmul.f32 %v7759, %v7759
    %v7781 = vmul.f32 %v7760, %v7760
    %v7782 = vmul.f32 %v7761, %v7761
    %v7783 = vmul.f32 %v7762, %v7762
    %v7784 = vmul.f32 %v7763, %v7763
    %v7785 = vmul.f32 %v7764, %v7764
    %v7786 = vmul.f32 %v7765, %v7765
    %v7787 = vmul.f32 %v7766, %v7766
    %v7788 = vmul.f32 %v7767, %v7767
    %7789 = vmatprep.subr.mxu0 0.0
    %7790 = vmatpush1.msra.mxu0 %v7768
    %7791 = vmatprep.subr.mxu0 0.0
    %7792 = vmatpush1.msra.mxu0 %v7769
    %7793 = vmatprep.subr.mxu0 0.0
    %7794 = vmatpush1.msra.mxu0 %v7770
    %7795 = vmatprep.subr.mxu0 0.0
    %7796 = vmatpush1.msra.mxu0 %v7771
    %7797 = vmatprep.subr.mxu0 0.0
    %7798 = vmatpush1.msra.mxu0 %v7772
    %7799 = vmatprep.subr.mxu0 0.0
    %7800 = vmatpush1.msra.mxu0 %v7773
    %7801 = vmatprep.subr.mxu0 0.0
    %7802 = vmatpush1.msra.mxu0 %v7774
    %7803 = vmatprep.subr.mxu0 0.0
    %7804 = vmatpush1.msra.mxu0 %v7775
    %7805 = vmatprep.subr.mxu0 0.0
    %7806 = vmatpush1.msra.mxu0 %v7776
    %7807 = vmatprep.subr.mxu0 0.0
    %7808 = vmatpush1.msra.mxu0 %v7777
    %7809 = vmatprep.subr.mxu0 0.0
    %7810 = vmatpush1.msra.mxu0 %v7778
    %7811 = vmatprep.subr.mxu0 0.0
    %7812 = vmatpush1.msra.mxu0 %v7779
    %7813 = vmatprep.subr.mxu0 0.0
    %7814 = vmatpush1.msra.mxu0 %v7780
    %7815 = vmatprep.subr.mxu0 0.0
    %7816 = vmatpush1.msra.mxu0 %v7781
    %7817 = vmatprep.subr.mxu0 0.0
    %7818 = vmatpush1.msra.mxu0 %v7782
    %7819 = vmatprep.subr.mxu0 0.0
    %7820 = vmatpush1.msra.mxu0 %v7783
    %7821 = vmatprep.subr.mxu0 0.0
    %7822 = vmatpush1.msra.mxu0 %v7784
    %7823 = vmatprep.subr.mxu0 0.0
    %7824 = vmatpush1.msra.mxu0 %v7785
    %7825 = vmatprep.subr.mxu0 0.0
    %7826 = vmatpush1.msra.mxu0 %v7786
    %7827 = vmatprep.subr.mxu0 0.0
    %7828 = vmatpush1.msra.mxu0 %v7787
    %7829 = vmatprep.subr.mxu0 0.0
    %7830 = vmatpush1.msra.mxu0 %v7788
    %7831 = vmatprep.subr.mxu0 0.0
    %7832 = vmatpush1.msra.mxu0 0.0
    %7833 = vmatprep.subr.mxu0 0.0
    %7834 = vmatpush1.msra.mxu0 0.0
    %7835 = vmatprep.subr.mxu0 0.0
    %7836 = vmatpush1.msra.mxu0 0.0
    %7837 = vmatprep.subr.mxu0 0.0
    %7838 = vmatpush1.msra.mxu0 0.0
    %7839 = vmatprep.subr.mxu0 0.0
    %7840 = vmatpush1.msra.mxu0 0.0
    %7841 = vmatprep.subr.mxu0 0.0
    %7842 = vmatpush1.msra.mxu0 0.0
    %7843 = vmatprep.subr.mxu0 0.0
    %7844 = vmatpush1.msra.mxu0 0.0
    %7845 = vmatprep.subr.mxu0 0.0
    %7846 = vmatpush1.msra.mxu0 0.0
    %7847 = vmatprep.subr.mxu0 0.0
    %7848 = vmatpush1.msra.mxu0 0.0
    %7849 = vmatprep.subr.mxu0 0.0
    %7850 = vmatpush1.msra.mxu0 0.0
    %7851 = vmatprep.subr.mxu0 0.0
    %7852 = vmatpush1.msra.mxu0 0.0
    %7853 = vmatprep.mubr.f32.mxu0 %v7670
    %7854 = vmatmul.mubr.f32.gmra.mrb[0].mxu0 %v7663
    %v7855 = vpop.f32.mrb[0].mxu0
    %v7856 = vadd.f32 0.0, %v7855
    %v7857 = vpop.f32.mrb[0].mxu0
    %7858 = vdwg.mxu0
    %v7859 = vmul.f32 %v7856, 0.055555556
    %v7860 = vadd.f32 %v7859, 1e-05
    %v7861 = vrsqrt.pop %v7860
    %v7862 = vmul.f32 %v24, %v7861
    %v7863 = vlaneseq
    %v7864 = vshrl.u32 %v7863, 7
    %v7865 = vsub.s32 0, %v7864
    %v7866 = vrot.slane %v7862, %v7865
    %v7867 = vmul.f32 %v7747, %v7866
    %v7868 = vmul.f32 %v7748, %v7866
    %v7869 = vmul.f32 %v7749, %v7866
    %v7870 = vmul.f32 %v7750, %v7866
    %v7871 = vmul.f32 %v7751, %v7866
    %v7872 = vmul.f32 %v7752, %v7866
    %v7873 = vmul.f32 %v7753, %v7866
    %v7874 = vmul.f32 %v7754, %v7866
    %v7875 = vmul.f32 %v7755, %v7866
    %v7876 = vmul.f32 %v7756, %v7866
    %v7877 = vmul.f32 %v7757, %v7866
    %v7878 = vmul.f32 %v7758, %v7866
    %v7879 = vmul.f32 %v7759, %v7866
    %v7880 = vmul.f32 %v7760, %v7866
    %v7881 = vadd.f32 %v7867, %v25
    %v7882 = vadd.f32 %v7868, %v25
    %v7883 = vadd.f32 %v7869, %v25
    %v7884 = vadd.f32 %v7870, %v25
    %v7885 = vadd.f32 %v7871, %v25
    %v7886 = vadd.f32 %v7872, %v25
    %v7887 = vadd.f32 %v7873, %v25
    %v7888 = vadd.f32 %v7874, %v25
    %v7889 = vadd.f32 %v7875, %v25
    %v7890 = vadd.f32 %v7876, %v25
    %v7891 = vadd.f32 %v7877, %v25
    %v7892 = vadd.f32 %v7878, %v25
    %v7893 = vadd.f32 %v7879, %v25
    %v7894 = vadd.f32 %v7880, %v25
    %v7895 = vmax.f32 %v7881, 0.0
    %v7896 = vmax.f32 %v7882, 0.0
    %v7897 = vmax.f32 %v7883, 0.0
    %v7898 = vmax.f32 %v7884, 0.0
    %v7899 = vmax.f32 %v7885, 0.0
    %v7900 = vmax.f32 %v7886, 0.0
    %v7901 = vmax.f32 %v7887, 0.0
    %v7902 = vmax.f32 %v7888, 0.0
    %v7903 = vmax.f32 %v7889, 0.0
    %v7904 = vmax.f32 %v7890, 0.0
    %v7905 = vmax.f32 %v7891, 0.0
    %v7906 = vmax.f32 %v7892, 0.0
    %v7907 = vmax.f32 %v7893, 0.0
    %v7908 = vmax.f32 %v7894, 0.0
    %v7909 = vld [vmem:[%s1 + $0x240] sm:$0xff]
    %v7910 = vld [vmem:[%s1 + $0x248] sm:$0xff]
    %v7911 = vld [vmem:[%s1 + $0x250] sm:$0xff]
    %v7912 = vld [vmem:[%s1 + $0x258] sm:$0xff]
    %v7913 = vld [vmem:[%s1 + $0x260] sm:$0xff]
    %v7914 = vld [vmem:[%s1 + $0x268] sm:$0xff]
    %v7915 = vld [vmem:[%s1 + $0x270] sm:$0xff]
    %v7916 = vld [vmem:[%s1 + $0x278] sm:$0xff]
    %v7929 = vrot.slane %v7895, 1
    %v7930 = vrot.slane %v7896, 1
    %v7931 = vsel %vm90, %v7929, %v7930
    %v7932 = vrot.slane %v7897, 1
    %v7933 = vsel %vm90, %v7930, %v7932
    %v7934 = vrot.slane %v7898, 1
    %v7935 = vsel %vm90, %v7932, %v7934
    %v7936 = vrot.slane %v7899, 1
    %v7937 = vsel %vm90, %v7934, %v7936
    %v7938 = vrot.slane %v7900, 1
    %v7939 = vsel %vm90, %v7936, %v7938
    %v7940 = vrot.slane %v7901, 1
    %v7941 = vsel %vm90, %v7938, %v7940
    %v7942 = vrot.slane %v7902, 1
    %v7943 = vsel %vm90, %v7940, %v7942
    %v7944 = vrot.slane %v7903, 1
    %v7945 = vsel %vm90, %v7942, %v7944
    %v7946 = vrot.slane %v7904, 1
    %v7947 = vsel %vm90, %v7944, %v7946
    %v7948 = vrot.slane %v7905, 1
    %v7949 = vsel %vm90, %v7946, %v7948
    %v7950 = vrot.slane %v7906, 1
    %v7951 = vsel %vm90, %v7948, %v7950
    %v7952 = vsel %vm5596, %v7931, 0
    %v7954 = vsel %vm5596, %v7933, 0
    %v7956 = vsel %vm5596, %v7935, 0
    %v7958 = vsel %vm5596, %v7937, 0
    %v7960 = vsel %vm5596, %v7939, 0
    %v7962 = vsel %vm5596, %v7941, 0
    %v7964 = vsel %vm5596, %v7943, 0
    %v7966 = vsel %vm5596, %v7945, 0
    %v7968 = vsel %vm5596, %v7947, 0
    %v7970 = vsel %vm5596, %v7949, 0
    %v7972 = vsel %vm5596, %v7951, 0
    %7974 = vmatprep.subr.mxu0 0.0
    %7975 = vmatpush1.msra.mxu0 %v7913
    %7976 = vmatprep.subr.mxu0 0.0
    %7977 = vmatpush1.msra.mxu0 %v7914
    %7978 = vmatprep.subr.mxu0 0.0
    %7979 = vmatpush1.msra.mxu0 %v7915
    %7980 = vmatprep.subr.mxu0 0.0
    %7981 = vmatpush1.msra.mxu0 %v7916
    %7982 = vmatprep.subr.mxu0 0.0
    %7983 = vmatpush1.msra.mxu0 0.0
    %7984 = vmatprep.subr.mxu0 0.0
    %7985 = vmatpush1.msra.mxu0 0.0
    %7986 = vmatprep.subr.mxu0 0.0
    %7987 = vmatpush1.msra.mxu0 0.0
    %7988 = vmatprep.subr.mxu0 0.0
    %7989 = vmatpush1.msra.mxu0 0.0
    %7990 = vmatprep.subr.mxu0 0.0
    %7991 = vmatpush1.msra.mxu0 0.0
    %7992 = vmatprep.subr.mxu0 0.0
    %7993 = vmatpush1.msra.mxu0 0.0
    %7994 = vmatprep.subr.mxu0 0.0
    %7995 = vmatpush1.msra.mxu0 0.0
    %7996 = vmatprep.subr.mxu0 0.0
    %7997 = vmatpush1.msra.mxu0 0.0
    %7998 = vmatprep.subr.mxu0 0.0
    %7999 = vmatpush1.msra.mxu0 0.0
    %8000 = vmatprep.subr.mxu0 0.0
    %8001 = vmatpush1.msra.mxu0 0.0
    %8002 = vmatprep.subr.mxu0 0.0
    %8003 = vmatpush1.msra.mxu0 0.0
    %8004 = vmatprep.subr.mxu0 0.0
    %8005 = vmatpush1.msra.mxu0 0.0
    %8006 = vmatprep.subr.mxu0 0.0
    %8007 = vmatpush1.msra.mxu0 0.0
    %8008 = vmatprep.subr.mxu0 0.0
    %8009 = vmatpush1.msra.mxu0 0.0
    %8010 = vmatprep.subr.mxu0 0.0
    %8011 = vmatpush1.msra.mxu0 0.0
    %8012 = vmatprep.subr.mxu0 0.0
    %8013 = vmatpush1.msra.mxu0 0.0
    %8014 = vmatprep.subr.mxu0 0.0
    %8015 = vmatpush1.msra.mxu0 0.0
    %8016 = vmatprep.subr.mxu0 0.0
    %8017 = vmatpush1.msra.mxu0 0.0
    %8018 = vmatprep.subr.mxu0 0.0
    %8019 = vmatpush1.msra.mxu0 0.0
    %8020 = vmatprep.subr.mxu0 0.0
    %8021 = vmatpush1.msra.mxu0 0.0
    %8022 = vmatprep.subr.mxu0 0.0
    %8023 = vmatpush1.msra.mxu0 0.0
    %8024 = vmatprep.subr.mxu0 0.0
    %8025 = vmatpush1.msra.mxu0 0.0
    %8026 = vmatprep.subr.mxu0 0.0
    %8027 = vmatpush1.msra.mxu0 0.0
    %8028 = vmatprep.subr.mxu0 0.0
    %8029 = vmatpush1.msra.mxu0 0.0
    %8030 = vmatprep.subr.mxu0 0.0
    %8031 = vmatpush1.msra.mxu0 0.0
    %8032 = vmatprep.subr.mxu0 0.0
    %8033 = vmatpush1.msra.mxu0 0.0
    %8034 = vmatprep.subr.mxu0 0.0
    %8035 = vmatpush1.msra.mxu0 0.0
    %8036 = vmatprep.subr.mxu0 0.0
    %8037 = vmatpush1.msra.mxu0 0.0
    %8038 = vmatprep.mubr.f32.mxu0 0.0
    %8039 = vmatmul.mubr.f32.gmra.mrb[0].mxu0 %v7952
    %v8040 = vpop.f32.mrb[0].mxu0
    %v8041 = vadd.f32 0.0, %v8040
    %v8042 = vpop.f32.mrb[0].mxu0
    %8043 = vmatprep.mubr.f32.mxu0 0.0
    %8044 = vmatmul.mubr.f32.gmra.mrb[0].mxu0 %v7954
    %v8045 = vpop.f32.mrb[0].mxu0
    %v8046 = vadd.f32 0.0, %v8045
    %v8047 = vpop.f32.mrb[0].mxu0
    %8048 = vmatprep.mubr.f32.mxu0 0.0
    %8049 = vmatmul.mubr.f32.gmra.mrb[0].mxu0 %v7956
    %v8050 = vpop.f32.mrb[0].mxu0
    %v8051 = vadd.f32 0.0, %v8050
    %v8052 = vpop.f32.mrb[0].mxu0
    %8053 = vmatprep.mubr.f32.mxu0 0.0
    %8054 = vmatmul.mubr.f32.gmra.mrb[0].mxu0 %v7958
    %v8055 = vpop.f32.mrb[0].mxu0
    %v8056 = vadd.f32 0.0, %v8055
    %v8057 = vpop.f32.mrb[0].mxu0
    %8058 = vmatprep.mubr.f32.mxu0 0.0
    %8059 = vmatmul.mubr.f32.gmra.mrb[0].mxu0 %v7960
    %v8060 = vpop.f32.mrb[0].mxu0
    %v8061 = vadd.f32 0.0, %v8060
    %v8062 = vpop.f32.mrb[0].mxu0
    %8063 = vmatprep.mubr.f32.mxu0 0.0
    %8064 = vmatmul.mubr.f32.gmra.mrb[0].mxu0 %v7962
    %v8065 = vpop.f32.mrb[0].mxu0
    %v8066 = vadd.f32 0.0, %v8065
    %v8067 = vpop.f32.mrb[0].mxu0
    %8068 = vmatprep.mubr.f32.mxu0 0.0
    %8069 = vmatmul.mubr.f32.gmra.mrb[0].mxu0 %v7964
    %v8070 = vpop.f32.mrb[0].mxu0
    %v8071 = vadd.f32 0.0, %v8070
    %v8072 = vpop.f32.mrb[0].mxu0
    %8073 = vmatprep.mubr.f32.mxu0 0.0
    %8074 = vmatmul.mubr.f32.gmra.mrb[0].mxu0 %v7966
    %v8075 = vpop.f32.mrb[0].mxu0
    %v8076 = vadd.f32 0.0, %v8075
    %v8077 = vpop.f32.mrb[0].mxu0
    %8078 = vmatprep.mubr.f32.mxu0 0.0
    %8079 = vmatmul.mubr.f32.gmra.mrb[0].mxu0 %v7968
    %v8080 = vpop.f32.mrb[0].mxu0
    %v8081 = vadd.f32 0.0, %v8080
    %v8082 = vpop.f32.mrb[0].mxu0
    %8083 = vmatprep.mubr.f32.mxu0 0.0
    %8084 = vmatmul.mubr.f32.gmra.mrb[0].mxu0 %v7970
    %v8085 = vpop.f32.mrb[0].mxu0
    %v8086 = vadd.f32 0.0, %v8085
    %v8087 = vpop.f32.mrb[0].mxu0
    %8088 = vmatprep.mubr.f32.mxu0 0.0
    %8089 = vmatmul.mubr.f32.gmra.mrb[0].mxu0 %v7972
    %v8090 = vpop.f32.mrb[0].mxu0
    %v8091 = vadd.f32 0.0, %v8090
    %v8092 = vpop.f32.mrb[0].mxu0
    %8093 = vdwg.mxu0
    %v8094 = vsel %vm5596, %v7895, 0
    %v8096 = vsel %vm5596, %v7896, 0
    %v8098 = vsel %vm5596, %v7897, 0
    %v8100 = vsel %vm5596, %v7898, 0
    %v8102 = vsel %vm5596, %v7899, 0
    %v8104 = vsel %vm5596, %v7900, 0
    %v8106 = vsel %vm5596, %v7901, 0
    %v8108 = vsel %vm5596, %v7902, 0
    %v8110 = vsel %vm5596, %v7903, 0
    %v8112 = vsel %vm5596, %v7904, 0
    %v8114 = vsel %vm5596, %v7905, 0
    %8116 = vmatprep.subr.mxu0 0.0
    %8117 = vmatpush1.msra.mxu0 %v7909
    %8118 = vmatprep.subr.mxu0 0.0
    %8119 = vmatpush1.msra.mxu0 %v7910
    %8120 = vmatprep.subr.mxu0 0.0
    %8121 = vmatpush1.msra.mxu0 %v7911
    %8122 = vmatprep.subr.mxu0 0.0
    %8123 = vmatpush1.msra.mxu0 %v7912
    %8124 = vmatprep.subr.mxu0 0.0
    %8125 = vmatpush1.msra.mxu0 0.0
    %8126 = vmatprep.subr.mxu0 0.0
    %8127 = vmatpush1.msra.mxu0 0.0
    %8128 = vmatprep.subr.mxu0 0.0
    %8129 = vmatpush1.msra.mxu0 0.0
    %8130 = vmatprep.subr.mxu0 0.0
    %8131 = vmatpush1.msra.mxu0 0.0
    %8132 = vmatprep.subr.mxu0 0.0
    %8133 = vmatpush1.msra.mxu0 0.0
    %8134 = vmatprep.subr.mxu0 0.0
    %8135 = vmatpush1.msra.mxu0 0.0
    %8136 = vmatprep.subr.mxu0 0.0
    %8137 = vmatpush1.msra.mxu0 0.0
    %8138 = vmatprep.subr.mxu0 0.0
    %8139 = vmatpush1.msra.mxu0 0.0
    %8140 = vmatprep.subr.mxu0 0.0
    %8141 = vmatpush1.msra.mxu0 0.0
    %8142 = vmatprep.subr.mxu0 0.0
    %8143 = vmatpush1.msra.mxu0 0.0
    %8144 = vmatprep.subr.mxu0 0.0
    %8145 = vmatpush1.msra.mxu0 0.0
    %8146 = vmatprep.subr.mxu0 0.0
    %8147 = vmatpush1.msra.mxu0 0.0
    %8148 = vmatprep.subr.mxu0 0.0
    %8149 = vmatpush1.msra.mxu0 0.0
    %8150 = vmatprep.subr.mxu0 0.0
    %8151 = vmatpush1.msra.mxu0 0.0
    %8152 = vmatprep.subr.mxu0 0.0
    %8153 = vmatpush1.msra.mxu0 0.0
    %8154 = vmatprep.subr.mxu0 0.0
    %8155 = vmatpush1.msra.mxu0 0.0
    %8156 = vmatprep.subr.mxu0 0.0
    %8157 = vmatpush1.msra.mxu0 0.0
    %8158 = vmatprep.subr.mxu0 0.0
    %8159 = vmatpush1.msra.mxu0 0.0
    %8160 = vmatprep.subr.mxu0 0.0
    %8161 = vmatpush1.msra.mxu0 0.0
    %8162 = vmatprep.subr.mxu0 0.0
    %8163 = vmatpush1.msra.mxu0 0.0
    %8164 = vmatprep.subr.mxu0 0.0
    %8165 = vmatpush1.msra.mxu0 0.0
    %8166 = vmatprep.subr.mxu0 0.0
    %8167 = vmatpush1.msra.mxu0 0.0
    %8168 = vmatprep.subr.mxu0 0.0
    %8169 = vmatpush1.msra.mxu0 0.0
    %8170 = vmatprep.subr.mxu0 0.0
    %8171 = vmatpush1.msra.mxu0 0.0
    %8172 = vmatprep.subr.mxu0 0.0
    %8173 = vmatpush1.msra.mxu0 0.0
    %8174 = vmatprep.subr.mxu0 0.0
    %8175 = vmatpush1.msra.mxu0 0.0
    %8176 = vmatprep.subr.mxu0 0.0
    %8177 = vmatpush1.msra.mxu0 0.0
    %8178 = vmatprep.subr.mxu0 0.0
    %8179 = vmatpush1.msra.mxu0 0.0
    %8180 = vmatprep.mubr.f32.mxu0 0.0
    %8181 = vmatmul.mubr.f32.gmra.mrb[0].mxu0 %v8094
    %v8182 = vpop.f32.mrb[0].mxu0
    %v8183 = vadd.f32 %v8041, %v8182
    %v8184 = vpop.f32.mrb[0].mxu0
    %8185 = vmatprep.mubr.f32.mxu0 0.0
    %8186 = vmatmul.mubr.f32.gmra.mrb[0].mxu0 %v8096
    %v8187 = vpop.f32.mrb[0].mxu0
    %v8188 = vadd.f32 %v8046, %v8187
    %v8189 = vpop.f32.mrb[0].mxu0
    %8190 = vmatprep.mubr.f32.mxu0 0.0
    %8191 = vmatmul.mubr.f32.gmra.mrb[0].mxu0 %v8098
    %v8192 = vpop.f32.mrb[0].mxu0
    %v8193 = vadd.f32 %v8051, %v8192
    %v8194 = vpop.f32.mrb[0].mxu0
    %8195 = vmatprep.mubr.f32.mxu0 0.0
    %8196 = vmatmul.mubr.f32.gmra.mrb[0].mxu0 %v8100
    %v8197 = vpop.f32.mrb[0].mxu0
    %v8198 = vadd.f32 %v8056, %v8197
    %v8199 = vpop.f32.mrb[0].mxu0
    %8200 = vmatprep.mubr.f32.mxu0 0.0
    %8201 = vmatmul.mubr.f32.gmra.mrb[0].mxu0 %v8102
    %v8202 = vpop.f32.mrb[0].mxu0
    %v8203 = vadd.f32 %v8061, %v8202
    %v8204 = vpop.f32.mrb[0].mxu0
    %8205 = vmatprep.mubr.f32.mxu0 0.0
    %8206 = vmatmul.mubr.f32.gmra.mrb[0].mxu0 %v8104
    %v8207 = vpop.f32.mrb[0].mxu0
    %v8208 = vadd.f32 %v8066, %v8207
    %v8209 = vpop.f32.mrb[0].mxu0
    %8210 = vmatprep.mubr.f32.mxu0 0.0
    %8211 = vmatmul.mubr.f32.gmra.mrb[0].mxu0 %v8106
    %v8212 = vpop.f32.mrb[0].mxu0
    %v8213 = vadd.f32 %v8071, %v8212
    %v8214 = vpop.f32.mrb[0].mxu0
    %8215 = vmatprep.mubr.f32.mxu0 0.0
    %8216 = vmatmul.mubr.f32.gmra.mrb[0].mxu0 %v8108
    %v8217 = vpop.f32.mrb[0].mxu0
    %v8218 = vadd.f32 %v8076, %v8217
    %v8219 = vpop.f32.mrb[0].mxu0
    %8220 = vmatprep.mubr.f32.mxu0 0.0
    %8221 = vmatmul.mubr.f32.gmra.mrb[0].mxu0 %v8110
    %v8222 = vpop.f32.mrb[0].mxu0
    %v8223 = vadd.f32 %v8081, %v8222
    %v8224 = vpop.f32.mrb[0].mxu0
    %8225 = vmatprep.mubr.f32.mxu0 0.0
    %8226 = vmatmul.mubr.f32.gmra.mrb[0].mxu0 %v8112
    %v8227 = vpop.f32.mrb[0].mxu0
    %v8228 = vadd.f32 %v8086, %v8227
    %v8229 = vpop.f32.mrb[0].mxu0
    %8230 = vmatprep.mubr.f32.mxu0 0.0
    %8231 = vmatmul.mubr.f32.gmra.mrb[0].mxu0 %v8114
    %v8232 = vpop.f32.mrb[0].mxu0
    %v8233 = vadd.f32 %v8091, %v8232
    %v8234 = vpop.f32.mrb[0].mxu0
    %8235 = vdwg.mxu0
    %v8236 = vld [vmem:[%s1 + $0x280] sm:$0xff]
    %v8237 = vld [vmem:[%s1 + $0x288] sm:$0xff]
    %v8238 = vld [vmem:[%s1 + $0x290] sm:$0xff]
    %v8239 = vld [vmem:[%s1 + $0x298] sm:$0xff]
    %v8240 = vrot.slane %v7895, 2
    %v8241 = vrot.slane %v7896, 2
    %v8242 = vsel %vm657, %v8240, %v8241
    %v8243 = vrot.slane %v7897, 2
    %v8244 = vsel %vm657, %v8241, %v8243
    %v8245 = vrot.slane %v7898, 2
    %v8246 = vsel %vm657, %v8243, %v8245
    %v8247 = vrot.slane %v7899, 2
    %v8248 = vsel %vm657, %v8245, %v8247
    %v8249 = vrot.slane %v7900, 2
    %v8250 = vsel %vm657, %v8247, %v8249
    %v8251 = vrot.slane %v7901, 2
    %v8252 = vsel %vm657, %v8249, %v8251
    %v8253 = vrot.slane %v7902, 2
    %v8254 = vsel %vm657, %v8251, %v8253
    %v8255 = vrot.slane %v7903, 2
    %v8256 = vsel %vm657, %v8253, %v8255
    %v8257 = vrot.slane %v7904, 2
    %v8258 = vsel %vm657, %v8255, %v8257
    %v8259 = vrot.slane %v7905, 2
    %v8260 = vsel %vm657, %v8257, %v8259
    %v8261 = vrot.slane %v7906, 2
    %v8262 = vsel %vm657, %v8259, %v8261
    %v8263 = vsel %vm5596, %v8242, 0
    %v8265 = vsel %vm5596, %v8244, 0
    %v8267 = vsel %vm5596, %v8246, 0
    %v8269 = vsel %vm5596, %v8248, 0
    %v8271 = vsel %vm5596, %v8250, 0
    %v8273 = vsel %vm5596, %v8252, 0
    %v8275 = vsel %vm5596, %v8254, 0
    %v8277 = vsel %vm5596, %v8256, 0
    %v8279 = vsel %vm5596, %v8258, 0
    %v8281 = vsel %vm5596, %v8260, 0
    %v8283 = vsel %vm5596, %v8262, 0
    %8285 = vmatprep.subr.mxu0 0.0
    %8286 = vmatpush1.msra.mxu0 %v8236
    %8287 = vmatprep.subr.mxu0 0.0
    %8288 = vmatpush1.msra.mxu0 %v8237
    %8289 = vmatprep.subr.mxu0 0.0
    %8290 = vmatpush1.msra.mxu0 %v8238
    %8291 = vmatprep.subr.mxu0 0.0
    %8292 = vmatpush1.msra.mxu0 %v8239
    %8293 = vmatprep.subr.mxu0 0.0
    %8294 = vmatpush1.msra.mxu0 0.0
    %8295 = vmatprep.subr.mxu0 0.0
    %8296 = vmatpush1.msra.mxu0 0.0
    %8297 = vmatprep.subr.mxu0 0.0
    %8298 = vmatpush1.msra.mxu0 0.0
    %8299 = vmatprep.subr.mxu0 0.0
    %8300 = vmatpush1.msra.mxu0 0.0
    %8301 = vmatprep.subr.mxu0 0.0
    %8302 = vmatpush1.msra.mxu0 0.0
    %8303 = vmatprep.subr.mxu0 0.0
    %8304 = vmatpush1.msra.mxu0 0.0
    %8305 = vmatprep.subr.mxu0 0.0
    %8306 = vmatpush1.msra.mxu0 0.0
    %8307 = vmatprep.subr.mxu0 0.0
    %8308 = vmatpush1.msra.mxu0 0.0
    %8309 = vmatprep.subr.mxu0 0.0
    %8310 = vmatpush1.msra.mxu0 0.0
    %8311 = vmatprep.subr.mxu0 0.0
    %8312 = vmatpush1.msra.mxu0 0.0
    %8313 = vmatprep.subr.mxu0 0.0
    %8314 = vmatpush1.msra.mxu0 0.0
    %8315 = vmatprep.subr.mxu0 0.0
    %8316 = vmatpush1.msra.mxu0 0.0
    %8317 = vmatprep.subr.mxu0 0.0
    %8318 = vmatpush1.msra.mxu0 0.0
    %8319 = vmatprep.subr.mxu0 0.0
    %8320 = vmatpush1.msra.mxu0 0.0
    %8321 = vmatprep.subr.mxu0 0.0
    %8322 = vmatpush1.msra.mxu0 0.0
    %8323 = vmatprep.subr.mxu0 0.0
    %8324 = vmatpush1.msra.mxu0 0.0
    %8325 = vmatprep.subr.mxu0 0.0
    %8326 = vmatpush1.msra.mxu0 0.0
    %8327 = vmatprep.subr.mxu0 0.0
    %8328 = vmatpush1.msra.mxu0 0.0
    %8329 = vmatprep.subr.mxu0 0.0
    %8330 = vmatpush1.msra.mxu0 0.0
    %8331 = vmatprep.subr.mxu0 0.0
    %8332 = vmatpush1.msra.mxu0 0.0
    %8333 = vmatprep.subr.mxu0 0.0
    %8334 = vmatpush1.msra.mxu0 0.0
    %8335 = vmatprep.subr.mxu0 0.0
    %8336 = vmatpush1.msra.mxu0 0.0
    %8337 = vmatprep.subr.mxu0 0.0
    %8338 = vmatpush1.msra.mxu0 0.0
    %8339 = vmatprep.subr.mxu0 0.0
    %8340 = vmatpush1.msra.mxu0 0.0
    %8341 = vmatprep.subr.mxu0 0.0
    %8342 = vmatpush1.msra.mxu0 0.0
    %8343 = vmatprep.subr.mxu0 0.0
    %8344 = vmatpush1.msra.mxu0 0.0
    %8345 = vmatprep.subr.mxu0 0.0
    %8346 = vmatpush1.msra.mxu0 0.0
    %8347 = vmatprep.subr.mxu0 0.0
    %8348 = vmatpush1.msra.mxu0 0.0
    %8349 = vmatprep.mubr.f32.mxu0 0.0
    %8350 = vmatmul.mubr.f32.gmra.mrb[0].mxu0 %v8263
    %v8351 = vpop.f32.mrb[0].mxu0
    %v8352 = vadd.f32 0.0, %v8351
    %v8353 = vpop.f32.mrb[0].mxu0
    %8354 = vmatprep.mubr.f32.mxu0 0.0
    %8355 = vmatmul.mubr.f32.gmra.mrb[0].mxu0 %v8265
    %v8356 = vpop.f32.mrb[0].mxu0
    %v8357 = vadd.f32 0.0, %v8356
    %v8358 = vpop.f32.mrb[0].mxu0
    %8359 = vmatprep.mubr.f32.mxu0 0.0
    %8360 = vmatmul.mubr.f32.gmra.mrb[0].mxu0 %v8267
    %v8361 = vpop.f32.mrb[0].mxu0
    %v8362 = vadd.f32 0.0, %v8361
    %v8363 = vpop.f32.mrb[0].mxu0
    %8364 = vmatprep.mubr.f32.mxu0 0.0
    %8365 = vmatmul.mubr.f32.gmra.mrb[0].mxu0 %v8269
    %v8366 = vpop.f32.mrb[0].mxu0
    %v8367 = vadd.f32 0.0, %v8366
    %v8368 = vpop.f32.mrb[0].mxu0
    %8369 = vmatprep.mubr.f32.mxu0 0.0
    %8370 = vmatmul.mubr.f32.gmra.mrb[0].mxu0 %v8271
    %v8371 = vpop.f32.mrb[0].mxu0
    %v8372 = vadd.f32 0.0, %v8371
    %v8373 = vpop.f32.mrb[0].mxu0
    %8374 = vmatprep.mubr.f32.mxu0 0.0
    %8375 = vmatmul.mubr.f32.gmra.mrb[0].mxu0 %v8273
    %v8376 = vpop.f32.mrb[0].mxu0
    %v8377 = vadd.f32 0.0, %v8376
    %v8378 = vpop.f32.mrb[0].mxu0
    %8379 = vmatprep.mubr.f32.mxu0 0.0
    %8380 = vmatmul.mubr.f32.gmra.mrb[0].mxu0 %v8275
    %v8381 = vpop.f32.mrb[0].mxu0
    %v8382 = vadd.f32 0.0, %v8381
    %v8383 = vpop.f32.mrb[0].mxu0
    %8384 = vmatprep.mubr.f32.mxu0 0.0
    %8385 = vmatmul.mubr.f32.gmra.mrb[0].mxu0 %v8277
    %v8386 = vpop.f32.mrb[0].mxu0
    %v8387 = vadd.f32 0.0, %v8386
    %v8388 = vpop.f32.mrb[0].mxu0
    %8389 = vmatprep.mubr.f32.mxu0 0.0
    %8390 = vmatmul.mubr.f32.gmra.mrb[0].mxu0 %v8279
    %v8391 = vpop.f32.mrb[0].mxu0
    %v8392 = vadd.f32 0.0, %v8391
    %v8393 = vpop.f32.mrb[0].mxu0
    %8394 = vmatprep.mubr.f32.mxu0 0.0
    %8395 = vmatmul.mubr.f32.gmra.mrb[0].mxu0 %v8281
    %v8396 = vpop.f32.mrb[0].mxu0
    %v8397 = vadd.f32 0.0, %v8396
    %v8398 = vpop.f32.mrb[0].mxu0
    %8399 = vmatprep.mubr.f32.mxu0 0.0
    %8400 = vmatmul.mubr.f32.gmra.mrb[0].mxu0 %v8283
    %v8401 = vpop.f32.mrb[0].mxu0
    %v8402 = vadd.f32 0.0, %v8401
    %v8403 = vpop.f32.mrb[0].mxu0
    %8404 = vdwg.mxu0
    %v8405 = vadd.f32 %v8183, %v8352
    %v8406 = vadd.f32 %v8188, %v8357
    %v8407 = vadd.f32 %v8193, %v8362
    %v8408 = vadd.f32 %v8198, %v8367
    %v8409 = vadd.f32 %v8203, %v8372
    %v8410 = vadd.f32 %v8208, %v8377
    %v8411 = vadd.f32 %v8213, %v8382
    %v8412 = vadd.f32 %v8218, %v8387
    %v8413 = vadd.f32 %v8223, %v8392
    %v8414 = vadd.f32 %v8228, %v8397
    %v8415 = vadd.f32 %v8233, %v8402
    %v8416 = vld [vmem:[%s1 + $0x2a0] sm:$0xff]
    %v8417 = vld [vmem:[%s1 + $0x2a8] sm:$0xff]
    %v8418 = vld [vmem:[%s1 + $0x2b0] sm:$0xff]
    %v8419 = vld [vmem:[%s1 + $0x2b8] sm:$0xff]
    %v8421 = vrot.slane %v7907, 1
    %v8422 = vsel %vm90, %v7950, %v8421
    %v8423 = vsel %vm5596, %v8422, 0
    %8425 = vmatprep.subr.mxu0 0.0
    %8426 = vmatpush1.msra.mxu0 %v8416
    %8427 = vmatprep.subr.mxu0 0.0
    %8428 = vmatpush1.msra.mxu0 %v8417
    %8429 = vmatprep.subr.mxu0 0.0
    %8430 = vmatpush1.msra.mxu0 %v8418
    %8431 = vmatprep.subr.mxu0 0.0
    %8432 = vmatpush1.msra.mxu0 %v8419
    %8433 = vmatprep.subr.mxu0 0.0
    %8434 = vmatpush1.msra.mxu0 0.0
    %8435 = vmatprep.subr.mxu0 0.0
    %8436 = vmatpush1.msra.mxu0 0.0
    %8437 = vmatprep.subr.mxu0 0.0
    %8438 = vmatpush1.msra.mxu0 0.0
    %8439 = vmatprep.subr.mxu0 0.0
    %8440 = vmatpush1.msra.mxu0 0.0
    %8441 = vmatprep.subr.mxu0 0.0
    %8442 = vmatpush1.msra.mxu0 0.0
    %8443 = vmatprep.subr.mxu0 0.0
    %8444 = vmatpush1.msra.mxu0 0.0
    %8445 = vmatprep.subr.mxu0 0.0
    %8446 = vmatpush1.msra.mxu0 0.0
    %8447 = vmatprep.subr.mxu0 0.0
    %8448 = vmatpush1.msra.mxu0 0.0
    %8449 = vmatprep.subr.mxu0 0.0
    %8450 = vmatpush1.msra.mxu0 0.0
    %8451 = vmatprep.subr.mxu0 0.0
    %8452 = vmatpush1.msra.mxu0 0.0
    %8453 = vmatprep.subr.mxu0 0.0
    %8454 = vmatpush1.msra.mxu0 0.0
    %8455 = vmatprep.subr.mxu0 0.0
    %8456 = vmatpush1.msra.mxu0 0.0
    %8457 = vmatprep.subr.mxu0 0.0
    %8458 = vmatpush1.msra.mxu0 0.0
    %8459 = vmatprep.subr.mxu0 0.0
    %8460 = vmatpush1.msra.mxu0 0.0
    %8461 = vmatprep.subr.mxu0 0.0
    %8462 = vmatpush1.msra.mxu0 0.0
    %8463 = vmatprep.subr.mxu0 0.0
    %8464 = vmatpush1.msra.mxu0 0.0
    %8465 = vmatprep.subr.mxu0 0.0
    %8466 = vmatpush1.msra.mxu0 0.0
    %8467 = vmatprep.subr.mxu0 0.0
    %8468 = vmatpush1.msra.mxu0 0.0
    %8469 = vmatprep.subr.mxu0 0.0
    %8470 = vmatpush1.msra.mxu0 0.0
    %8471 = vmatprep.subr.mxu0 0.0
    %8472 = vmatpush1.msra.mxu0 0.0
    %8473 = vmatprep.subr.mxu0 0.0
    %8474 = vmatpush1.msra.mxu0 0.0
    %8475 = vmatprep.subr.mxu0 0.0
    %8476 = vmatpush1.msra.mxu0 0.0
    %8477 = vmatprep.subr.mxu0 0.0
    %8478 = vmatpush1.msra.mxu0 0.0
    %8479 = vmatprep.subr.mxu0 0.0
    %8480 = vmatpush1.msra.mxu0 0.0
    %8481 = vmatprep.subr.mxu0 0.0
    %8482 = vmatpush1.msra.mxu0 0.0
    %8483 = vmatprep.subr.mxu0 0.0
    %8484 = vmatpush1.msra.mxu0 0.0
    %8485 = vmatprep.subr.mxu0 0.0
    %8486 = vmatpush1.msra.mxu0 0.0
    %8487 = vmatprep.subr.mxu0 0.0
    %8488 = vmatpush1.msra.mxu0 0.0
    %8489 = vmatprep.mubr.f32.mxu0 0.0
    %8490 = vmatmul.mubr.f32.gmra.mrb[0].mxu0 %v7954
    %v8491 = vpop.f32.mrb[0].mxu0
    %v8492 = vadd.f32 0.0, %v8491
    %v8493 = vpop.f32.mrb[0].mxu0
    %8494 = vmatprep.mubr.f32.mxu0 0.0
    %8495 = vmatmul.mubr.f32.gmra.mrb[0].mxu0 %v7956
    %v8496 = vpop.f32.mrb[0].mxu0
    %v8497 = vadd.f32 0.0, %v8496
    %v8498 = vpop.f32.mrb[0].mxu0
    %8499 = vmatprep.mubr.f32.mxu0 0.0
    %8500 = vmatmul.mubr.f32.gmra.mrb[0].mxu0 %v7958
    %v8501 = vpop.f32.mrb[0].mxu0
    %v8502 = vadd.f32 0.0, %v8501
    %v8503 = vpop.f32.mrb[0].mxu0
    %8504 = vmatprep.mubr.f32.mxu0 0.0
    %8505 = vmatmul.mubr.f32.gmra.mrb[0].mxu0 %v7960
    %v8506 = vpop.f32.mrb[0].mxu0
    %v8507 = vadd.f32 0.0, %v8506
    %v8508 = vpop.f32.mrb[0].mxu0
    %8509 = vmatprep.mubr.f32.mxu0 0.0
    %8510 = vmatmul.mubr.f32.gmra.mrb[0].mxu0 %v7962
    %v8511 = vpop.f32.mrb[0].mxu0
    %v8512 = vadd.f32 0.0, %v8511
    %v8513 = vpop.f32.mrb[0].mxu0
    %8514 = vmatprep.mubr.f32.mxu0 0.0
    %8515 = vmatmul.mubr.f32.gmra.mrb[0].mxu0 %v7964
    %v8516 = vpop.f32.mrb[0].mxu0
    %v8517 = vadd.f32 0.0, %v8516
    %v8518 = vpop.f32.mrb[0].mxu0
    %8519 = vmatprep.mubr.f32.mxu0 0.0
    %8520 = vmatmul.mubr.f32.gmra.mrb[0].mxu0 %v7966
    %v8521 = vpop.f32.mrb[0].mxu0
    %v8522 = vadd.f32 0.0, %v8521
    %v8523 = vpop.f32.mrb[0].mxu0
    %8524 = vmatprep.mubr.f32.mxu0 0.0
    %8525 = vmatmul.mubr.f32.gmra.mrb[0].mxu0 %v7968
    %v8526 = vpop.f32.mrb[0].mxu0
    %v8527 = vadd.f32 0.0, %v8526
    %v8528 = vpop.f32.mrb[0].mxu0
    %8529 = vmatprep.mubr.f32.mxu0 0.0
    %8530 = vmatmul.mubr.f32.gmra.mrb[0].mxu0 %v7970
    %v8531 = vpop.f32.mrb[0].mxu0
    %v8532 = vadd.f32 0.0, %v8531
    %v8533 = vpop.f32.mrb[0].mxu0
    %8534 = vmatprep.mubr.f32.mxu0 0.0
    %8535 = vmatmul.mubr.f32.gmra.mrb[0].mxu0 %v7972
    %v8536 = vpop.f32.mrb[0].mxu0
    %v8537 = vadd.f32 0.0, %v8536
    %v8538 = vpop.f32.mrb[0].mxu0
    %8539 = vmatprep.mubr.f32.mxu0 0.0
    %8540 = vmatmul.mubr.f32.gmra.mrb[0].mxu0 %v8423
    %v8541 = vpop.f32.mrb[0].mxu0
    %v8542 = vadd.f32 0.0, %v8541
    %v8543 = vpop.f32.mrb[0].mxu0
    %8544 = vdwg.mxu0
    %v8545 = vadd.f32 %v8405, %v8492
    %v8546 = vadd.f32 %v8406, %v8497
    %v8547 = vadd.f32 %v8407, %v8502
    %v8548 = vadd.f32 %v8408, %v8507
    %v8549 = vadd.f32 %v8409, %v8512
    %v8550 = vadd.f32 %v8410, %v8517
    %v8551 = vadd.f32 %v8411, %v8522
    %v8552 = vadd.f32 %v8412, %v8527
    %v8553 = vadd.f32 %v8413, %v8532
    %v8554 = vadd.f32 %v8414, %v8537
    %v8555 = vadd.f32 %v8415, %v8542
    %v8556 = vld [vmem:[%s1 + $0x2c0] sm:$0xff]
    %v8557 = vld [vmem:[%s1 + $0x2c8] sm:$0xff]
    %v8558 = vld [vmem:[%s1 + $0x2d0] sm:$0xff]
    %v8559 = vld [vmem:[%s1 + $0x2d8] sm:$0xff]
    %v8560 = vrot.slane %v7907, 2
    %v8561 = vsel %vm657, %v8261, %v8560
    %v8562 = vsel %vm5596, %v8561, 0
    %8564 = vmatprep.subr.mxu0 0.0
    %8565 = vmatpush1.msra.mxu0 %v8556
    %8566 = vmatprep.subr.mxu0 0.0
    %8567 = vmatpush1.msra.mxu0 %v8557
    %8568 = vmatprep.subr.mxu0 0.0
    %8569 = vmatpush1.msra.mxu0 %v8558
    %8570 = vmatprep.subr.mxu0 0.0
    %8571 = vmatpush1.msra.mxu0 %v8559
    %8572 = vmatprep.subr.mxu0 0.0
    %8573 = vmatpush1.msra.mxu0 0.0
    %8574 = vmatprep.subr.mxu0 0.0
    %8575 = vmatpush1.msra.mxu0 0.0
    %8576 = vmatprep.subr.mxu0 0.0
    %8577 = vmatpush1.msra.mxu0 0.0
    %8578 = vmatprep.subr.mxu0 0.0
    %8579 = vmatpush1.msra.mxu0 0.0
    %8580 = vmatprep.subr.mxu0 0.0
    %8581 = vmatpush1.msra.mxu0 0.0
    %8582 = vmatprep.subr.mxu0 0.0
    %8583 = vmatpush1.msra.mxu0 0.0
    %8584 = vmatprep.subr.mxu0 0.0
    %8585 = vmatpush1.msra.mxu0 0.0
    %8586 = vmatprep.subr.mxu0 0.0
    %8587 = vmatpush1.msra.mxu0 0.0
    %8588 = vmatprep.subr.mxu0 0.0
    %8589 = vmatpush1.msra.mxu0 0.0
    %8590 = vmatprep.subr.mxu0 0.0
    %8591 = vmatpush1.msra.mxu0 0.0
    %8592 = vmatprep.subr.mxu0 0.0
    %8593 = vmatpush1.msra.mxu0 0.0
    %8594 = vmatprep.subr.mxu0 0.0
    %8595 = vmatpush1.msra.mxu0 0.0
    %8596 = vmatprep.subr.mxu0 0.0
    %8597 = vmatpush1.msra.mxu0 0.0
    %8598 = vmatprep.subr.mxu0 0.0
    %8599 = vmatpush1.msra.mxu0 0.0
    %8600 = vmatprep.subr.mxu0 0.0
    %8601 = vmatpush1.msra.mxu0 0.0
    %8602 = vmatprep.subr.mxu0 0.0
    %8603 = vmatpush1.msra.mxu0 0.0
    %8604 = vmatprep.subr.mxu0 0.0
    %8605 = vmatpush1.msra.mxu0 0.0
    %8606 = vmatprep.subr.mxu0 0.0
    %8607 = vmatpush1.msra.mxu0 0.0
    %8608 = vmatprep.subr.mxu0 0.0
    %8609 = vmatpush1.msra.mxu0 0.0
    %8610 = vmatprep.subr.mxu0 0.0
    %8611 = vmatpush1.msra.mxu0 0.0
    %8612 = vmatprep.subr.mxu0 0.0
    %8613 = vmatpush1.msra.mxu0 0.0
    %8614 = vmatprep.subr.mxu0 0.0
    %8615 = vmatpush1.msra.mxu0 0.0
    %8616 = vmatprep.subr.mxu0 0.0
    %8617 = vmatpush1.msra.mxu0 0.0
    %8618 = vmatprep.subr.mxu0 0.0
    %8619 = vmatpush1.msra.mxu0 0.0
    %8620 = vmatprep.subr.mxu0 0.0
    %8621 = vmatpush1.msra.mxu0 0.0
    %8622 = vmatprep.subr.mxu0 0.0
    %8623 = vmatpush1.msra.mxu0 0.0
    %8624 = vmatprep.subr.mxu0 0.0
    %8625 = vmatpush1.msra.mxu0 0.0
    %8626 = vmatprep.subr.mxu0 0.0
    %8627 = vmatpush1.msra.mxu0 0.0
    %8628 = vmatprep.mubr.f32.mxu0 0.0
    %8629 = vmatmul.mubr.f32.gmra.mrb[0].mxu0 %v8265
    %v8630 = vpop.f32.mrb[0].mxu0
    %v8631 = vadd.f32 0.0, %v8630
    %v8632 = vpop.f32.mrb[0].mxu0
    %8633 = vmatprep.mubr.f32.mxu0 0.0
    %8634 = vmatmul.mubr.f32.gmra.mrb[0].mxu0 %v8267
    %v8635 = vpop.f32.mrb[0].mxu0
    %v8636 = vadd.f32 0.0, %v8635
    %v8637 = vpop.f32.mrb[0].mxu0
    %8638 = vmatprep.mubr.f32.mxu0 0.0
    %8639 = vmatmul.mubr.f32.gmra.mrb[0].mxu0 %v8269
    %v8640 = vpop.f32.mrb[0].mxu0
    %v8641 = vadd.f32 0.0, %v8640
    %v8642 = vpop.f32.mrb[0].mxu0
    %8643 = vmatprep.mubr.f32.mxu0 0.0
    %8644 = vmatmul.mubr.f32.gmra.mrb[0].mxu0 %v8271
    %v8645 = vpop.f32.mrb[0].mxu0
    %v8646 = vadd.f32 0.0, %v8645
    %v8647 = vpop.f32.mrb[0].mxu0
    %8648 = vmatprep.mubr.f32.mxu0 0.0
    %8649 = vmatmul.mubr.f32.gmra.mrb[0].mxu0 %v8273
    %v8650 = vpop.f32.mrb[0].mxu0
    %v8651 = vadd.f32 0.0, %v8650
    %v8652 = vpop.f32.mrb[0].mxu0
    %8653 = vmatprep.mubr.f32.mxu0 0.0
    %8654 = vmatmul.mubr.f32.gmra.mrb[0].mxu0 %v8275
    %v8655 = vpop.f32.mrb[0].mxu0
    %v8656 = vadd.f32 0.0, %v8655
    %v8657 = vpop.f32.mrb[0].mxu0
    %8658 = vmatprep.mubr.f32.mxu0 0.0
    %8659 = vmatmul.mubr.f32.gmra.mrb[0].mxu0 %v8277
    %v8660 = vpop.f32.mrb[0].mxu0
    %v8661 = vadd.f32 0.0, %v8660
    %v8662 = vpop.f32.mrb[0].mxu0
    %8663 = vmatprep.mubr.f32.mxu0 0.0
    %8664 = vmatmul.mubr.f32.gmra.mrb[0].mxu0 %v8279
    %v8665 = vpop.f32.mrb[0].mxu0
    %v8666 = vadd.f32 0.0, %v8665
    %v8667 = vpop.f32.mrb[0].mxu0
    %8668 = vmatprep.mubr.f32.mxu0 0.0
    %8669 = vmatmul.mubr.f32.gmra.mrb[0].mxu0 %v8281
    %v8670 = vpop.f32.mrb[0].mxu0
    %v8671 = vadd.f32 0.0, %v8670
    %v8672 = vpop.f32.mrb[0].mxu0
    %8673 = vmatprep.mubr.f32.mxu0 0.0
    %8674 = vmatmul.mubr.f32.gmra.mrb[0].mxu0 %v8283
    %v8675 = vpop.f32.mrb[0].mxu0
    %v8676 = vadd.f32 0.0, %v8675
    %v8677 = vpop.f32.mrb[0].mxu0
    %8678 = vmatprep.mubr.f32.mxu0 0.0
    %8679 = vmatmul.mubr.f32.gmra.mrb[0].mxu0 %v8562
    %v8680 = vpop.f32.mrb[0].mxu0
    %v8681 = vadd.f32 0.0, %v8680
    %v8682 = vpop.f32.mrb[0].mxu0
    %8683 = vdwg.mxu0
    %v8684 = vadd.f32 %v8545, %v8631
    %v8685 = vadd.f32 %v8546, %v8636
    %v8686 = vadd.f32 %v8547, %v8641
    %v8687 = vadd.f32 %v8548, %v8646
    %v8688 = vadd.f32 %v8549, %v8651
    %v8689 = vadd.f32 %v8550, %v8656
    %v8690 = vadd.f32 %v8551, %v8661
    %v8691 = vadd.f32 %v8552, %v8666
    %v8692 = vadd.f32 %v8553, %v8671
    %v8693 = vadd.f32 %v8554, %v8676
    %v8694 = vadd.f32 %v8555, %v8681
    %v8695 = vld [vmem:[%s1 + $0x2e0] sm:$0xff]
    %v8696 = vld [vmem:[%s1 + $0x2e8] sm:$0xff]
    %v8697 = vld [vmem:[%s1 + $0x2f0] sm:$0xff]
    %v8698 = vld [vmem:[%s1 + $0x2f8] sm:$0xff]
    %v8699 = vrot.slane %v7896, 3
    %v8700 = vrot.slane %v7897, 3
    %v8701 = vsel %vm1463, %v8699, %v8700
    %v8702 = vrot.slane %v7898, 3
    %v8703 = vsel %vm1463, %v8700, %v8702
    %v8704 = vrot.slane %v7899, 3
    %v8705 = vsel %vm1463, %v8702, %v8704
    %v8706 = vrot.slane %v7900, 3
    %v8707 = vsel %vm1463, %v8704, %v8706
    %v8708 = vrot.slane %v7901, 3
    %v8709 = vsel %vm1463, %v8706, %v8708
    %v8710 = vrot.slane %v7902, 3
    %v8711 = vsel %vm1463, %v8708, %v8710
    %v8712 = vrot.slane %v7903, 3
    %v8713 = vsel %vm1463, %v8710, %v8712
    %v8714 = vrot.slane %v7904, 3
    %v8715 = vsel %vm1463, %v8712, %v8714
    %v8716 = vrot.slane %v7905, 3
    %v8717 = vsel %vm1463, %v8714, %v8716
    %v8718 = vrot.slane %v7906, 3
    %v8719 = vsel %vm1463, %v8716, %v8718
    %v8720 = vrot.slane %v7907, 3
    %v8721 = vsel %vm1463, %v8718, %v8720
    %v8722 = vsel %vm5596, %v8701, 0
    %v8724 = vsel %vm5596, %v8703, 0
    %v8726 = vsel %vm5596, %v8705, 0
    %v8728 = vsel %vm5596, %v8707, 0
    %v8730 = vsel %vm5596, %v8709, 0
    %v8732 = vsel %vm5596, %v8711, 0
    %v8734 = vsel %vm5596, %v8713, 0
    %v8736 = vsel %vm5596, %v8715, 0
    %v8738 = vsel %vm5596, %v8717, 0
    %v8740 = vsel %vm5596, %v8719, 0
    %v8742 = vsel %vm5596, %v8721, 0
    %8744 = vmatprep.subr.mxu0 0.0
    %8745 = vmatpush1.msra.mxu0 %v8695
    %8746 = vmatprep.subr.mxu0 0.0
    %8747 = vmatpush1.msra.mxu0 %v8696
    %8748 = vmatprep.subr.mxu0 0.0
    %8749 = vmatpush1.msra.mxu0 %v8697
    %8750 = vmatprep.subr.mxu0 0.0
    %8751 = vmatpush1.msra.mxu0 %v8698
    %8752 = vmatprep.subr.mxu0 0.0
    %8753 = vmatpush1.msra.mxu0 0.0
    %8754 = vmatprep.subr.mxu0 0.0
    %8755 = vmatpush1.msra.mxu0 0.0
    %8756 = vmatprep.subr.mxu0 0.0
    %8757 = vmatpush1.msra.mxu0 0.0
    %8758 = vmatprep.subr.mxu0 0.0
    %8759 = vmatpush1.msra.mxu0 0.0
    %8760 = vmatprep.subr.mxu0 0.0
    %8761 = vmatpush1.msra.mxu0 0.0
    %8762 = vmatprep.subr.mxu0 0.0
    %8763 = vmatpush1.msra.mxu0 0.0
    %8764 = vmatprep.subr.mxu0 0.0
    %8765 = vmatpush1.msra.mxu0 0.0
    %8766 = vmatprep.subr.mxu0 0.0
    %8767 = vmatpush1.msra.mxu0 0.0
    %8768 = vmatprep.subr.mxu0 0.0
    %8769 = vmatpush1.msra.mxu0 0.0
    %8770 = vmatprep.subr.mxu0 0.0
    %8771 = vmatpush1.msra.mxu0 0.0
    %8772 = vmatprep.subr.mxu0 0.0
    %8773 = vmatpush1.msra.mxu0 0.0
    %8774 = vmatprep.subr.mxu0 0.0
    %8775 = vmatpush1.msra.mxu0 0.0
    %8776 = vmatprep.subr.mxu0 0.0
    %8777 = vmatpush1.msra.mxu0 0.0
    %8778 = vmatprep.subr.mxu0 0.0
    %8779 = vmatpush1.msra.mxu0 0.0
    %8780 = vmatprep.subr.mxu0 0.0
    %8781 = vmatpush1.msra.mxu0 0.0
    %8782 = vmatprep.subr.mxu0 0.0
    %8783 = vmatpush1.msra.mxu0 0.0
    %8784 = vmatprep.subr.mxu0 0.0
    %8785 = vmatpush1.msra.mxu0 0.0
    %8786 = vmatprep.subr.mxu0 0.0
    %8787 = vmatpush1.msra.mxu0 0.0
    %8788 = vmatprep.subr.mxu0 0.0
    %8789 = vmatpush1.msra.mxu0 0.0
    %8790 = vmatprep.subr.mxu0 0.0
    %8791 = vmatpush1.msra.mxu0 0.0
    %8792 = vmatprep.subr.mxu0 0.0
    %8793 = vmatpush1.msra.mxu0 0.0
    %8794 = vmatprep.subr.mxu0 0.0
    %8795 = vmatpush1.msra.mxu0 0.0
    %8796 = vmatprep.subr.mxu0 0.0
    %8797 = vmatpush1.msra.mxu0 0.0
    %8798 = vmatprep.subr.mxu0 0.0
    %8799 = vmatpush1.msra.mxu0 0.0
    %8800 = vmatprep.subr.mxu0 0.0
    %8801 = vmatpush1.msra.mxu0 0.0
    %8802 = vmatprep.subr.mxu0 0.0
    %8803 = vmatpush1.msra.mxu0 0.0
    %8804 = vmatprep.subr.mxu0 0.0
    %8805 = vmatpush1.msra.mxu0 0.0
    %8806 = vmatprep.subr.mxu0 0.0
    %8807 = vmatpush1.msra.mxu0 0.0
    %8808 = vmatprep.mubr.f32.mxu0 0.0
    %8809 = vmatmul.mubr.f32.gmra.mrb[0].mxu0 %v8722
    %v8810 = vpop.f32.mrb[0].mxu0
    %v8811 = vadd.f32 0.0, %v8810
    %v8812 = vpop.f32.mrb[0].mxu0
    %8813 = vmatprep.mubr.f32.mxu0 0.0
    %8814 = vmatmul.mubr.f32.gmra.mrb[0].mxu0 %v8724
    %v8815 = vpop.f32.mrb[0].mxu0
    %v8816 = vadd.f32 0.0, %v8815
    %v8817 = vpop.f32.mrb[0].mxu0
    %8818 = vmatprep.mubr.f32.mxu0 0.0
    %8819 = vmatmul.mubr.f32.gmra.mrb[0].mxu0 %v8726
    %v8820 = vpop.f32.mrb[0].mxu0
    %v8821 = vadd.f32 0.0, %v8820
    %v8822 = vpop.f32.mrb[0].mxu0
    %8823 = vmatprep.mubr.f32.mxu0 0.0
    %8824 = vmatmul.mubr.f32.gmra.mrb[0].mxu0 %v8728
    %v8825 = vpop.f32.mrb[0].mxu0
    %v8826 = vadd.f32 0.0, %v8825
    %v8827 = vpop.f32.mrb[0].mxu0
    %8828 = vmatprep.mubr.f32.mxu0 0.0
    %8829 = vmatmul.mubr.f32.gmra.mrb[0].mxu0 %v8730
    %v8830 = vpop.f32.mrb[0].mxu0
    %v8831 = vadd.f32 0.0, %v8830
    %v8832 = vpop.f32.mrb[0].mxu0
    %8833 = vmatprep.mubr.f32.mxu0 0.0
    %8834 = vmatmul.mubr.f32.gmra.mrb[0].mxu0 %v8732
    %v8835 = vpop.f32.mrb[0].mxu0
    %v8836 = vadd.f32 0.0, %v8835
    %v8837 = vpop.f32.mrb[0].mxu0
    %8838 = vmatprep.mubr.f32.mxu0 0.0
    %8839 = vmatmul.mubr.f32.gmra.mrb[0].mxu0 %v8734
    %v8840 = vpop.f32.mrb[0].mxu0
    %v8841 = vadd.f32 0.0, %v8840
    %v8842 = vpop.f32.mrb[0].mxu0
    %8843 = vmatprep.mubr.f32.mxu0 0.0
    %8844 = vmatmul.mubr.f32.gmra.mrb[0].mxu0 %v8736
    %v8845 = vpop.f32.mrb[0].mxu0
    %v8846 = vadd.f32 0.0, %v8845
    %v8847 = vpop.f32.mrb[0].mxu0
    %8848 = vmatprep.mubr.f32.mxu0 0.0
    %8849 = vmatmul.mubr.f32.gmra.mrb[0].mxu0 %v8738
    %v8850 = vpop.f32.mrb[0].mxu0
    %v8851 = vadd.f32 0.0, %v8850
    %v8852 = vpop.f32.mrb[0].mxu0
    %8853 = vmatprep.mubr.f32.mxu0 0.0
    %8854 = vmatmul.mubr.f32.gmra.mrb[0].mxu0 %v8740
    %v8855 = vpop.f32.mrb[0].mxu0
    %v8856 = vadd.f32 0.0, %v8855
    %v8857 = vpop.f32.mrb[0].mxu0
    %8858 = vmatprep.mubr.f32.mxu0 0.0
    %8859 = vmatmul.mubr.f32.gmra.mrb[0].mxu0 %v8742
    %v8860 = vpop.f32.mrb[0].mxu0
    %v8861 = vadd.f32 0.0, %v8860
    %v8862 = vpop.f32.mrb[0].mxu0
    %8863 = vdwg.mxu0
    %v8864 = vadd.f32 %v8684, %v8811
    %v8865 = vadd.f32 %v8685, %v8816
    %v8866 = vadd.f32 %v8686, %v8821
    %v8867 = vadd.f32 %v8687, %v8826
    %v8868 = vadd.f32 %v8688, %v8831
    %v8869 = vadd.f32 %v8689, %v8836
    %v8870 = vadd.f32 %v8690, %v8841
    %v8871 = vadd.f32 %v8691, %v8846
    %v8872 = vadd.f32 %v8692, %v8851
    %v8873 = vadd.f32 %v8693, %v8856
    %v8874 = vadd.f32 %v8694, %v8861
    %v8875 = vld [vmem:[%s1 + $0x300] sm:$0xff]
    %v8876 = vld [vmem:[%s1 + $0x308] sm:$0xff]
    %v8877 = vld [vmem:[%s1 + $0x310] sm:$0xff]
    %v8878 = vld [vmem:[%s1 + $0x318] sm:$0xff]
    %v8880 = vrot.slane %v7908, 2
    %v8881 = vsel %vm657, %v8560, %v8880
    %v8882 = vsel %vm5596, %v8881, 0
    %8884 = vmatprep.subr.mxu0 0.0
    %8885 = vmatpush1.msra.mxu0 %v8875
    %8886 = vmatprep.subr.mxu0 0.0
    %8887 = vmatpush1.msra.mxu0 %v8876
    %8888 = vmatprep.subr.mxu0 0.0
    %8889 = vmatpush1.msra.mxu0 %v8877
    %8890 = vmatprep.subr.mxu0 0.0
    %8891 = vmatpush1.msra.mxu0 %v8878
    %8892 = vmatprep.subr.mxu0 0.0
    %8893 = vmatpush1.msra.mxu0 0.0
    %8894 = vmatprep.subr.mxu0 0.0
    %8895 = vmatpush1.msra.mxu0 0.0
    %8896 = vmatprep.subr.mxu0 0.0
    %8897 = vmatpush1.msra.mxu0 0.0
    %8898 = vmatprep.subr.mxu0 0.0
    %8899 = vmatpush1.msra.mxu0 0.0
    %8900 = vmatprep.subr.mxu0 0.0
    %8901 = vmatpush1.msra.mxu0 0.0
    %8902 = vmatprep.subr.mxu0 0.0
    %8903 = vmatpush1.msra.mxu0 0.0
    %8904 = vmatprep.subr.mxu0 0.0
    %8905 = vmatpush1.msra.mxu0 0.0
    %8906 = vmatprep.subr.mxu0 0.0
    %8907 = vmatpush1.msra.mxu0 0.0
    %8908 = vmatprep.subr.mxu0 0.0
    %8909 = vmatpush1.msra.mxu0 0.0
    %8910 = vmatprep.subr.mxu0 0.0
    %8911 = vmatpush1.msra.mxu0 0.0
    %8912 = vmatprep.subr.mxu0 0.0
    %8913 = vmatpush1.msra.mxu0 0.0
    %8914 = vmatprep.subr.mxu0 0.0
    %8915 = vmatpush1.msra.mxu0 0.0
    %8916 = vmatprep.subr.mxu0 0.0
    %8917 = vmatpush1.msra.mxu0 0.0
    %8918 = vmatprep.subr.mxu0 0.0
    %8919 = vmatpush1.msra.mxu0 0.0
    %8920 = vmatprep.subr.mxu0 0.0
    %8921 = vmatpush1.msra.mxu0 0.0
    %8922 = vmatprep.subr.mxu0 0.0
    %8923 = vmatpush1.msra.mxu0 0.0
    %8924 = vmatprep.subr.mxu0 0.0
    %8925 = vmatpush1.msra.mxu0 0.0
    %8926 = vmatprep.subr.mxu0 0.0
    %8927 = vmatpush1.msra.mxu0 0.0
    %8928 = vmatprep.subr.mxu0 0.0
    %8929 = vmatpush1.msra.mxu0 0.0
    %8930 = vmatprep.subr.mxu0 0.0
    %8931 = vmatpush1.msra.mxu0 0.0
    %8932 = vmatprep.subr.mxu0 0.0
    %8933 = vmatpush1.msra.mxu0 0.0
    %8934 = vmatprep.subr.mxu0 0.0
    %8935 = vmatpush1.msra.mxu0 0.0
    %8936 = vmatprep.subr.mxu0 0.0
    %8937 = vmatpush1.msra.mxu0 0.0
    %8938 = vmatprep.subr.mxu0 0.0
    %8939 = vmatpush1.msra.mxu0 0.0
    %8940 = vmatprep.subr.mxu0 0.0
    %8941 = vmatpush1.msra.mxu0 0.0
    %8942 = vmatprep.subr.mxu0 0.0
    %8943 = vmatpush1.msra.mxu0 0.0
    %8944 = vmatprep.subr.mxu0 0.0
    %8945 = vmatpush1.msra.mxu0 0.0
    %8946 = vmatprep.subr.mxu0 0.0
    %8947 = vmatpush1.msra.mxu0 0.0
    %8948 = vmatprep.mubr.f32.mxu0 0.0
    %8949 = vmatmul.mubr.f32.gmra.mrb[0].mxu0 %v8267
    %v8950 = vpop.f32.mrb[0].mxu0
    %v8951 = vadd.f32 0.0, %v8950
    %v8952 = vpop.f32.mrb[0].mxu0
    %8953 = vmatprep.mubr.f32.mxu0 0.0
    %8954 = vmatmul.mubr.f32.gmra.mrb[0].mxu0 %v8269
    %v8955 = vpop.f32.mrb[0].mxu0
    %v8956 = vadd.f32 0.0, %v8955
    %v8957 = vpop.f32.mrb[0].mxu0
    %8958 = vmatprep.mubr.f32.mxu0 0.0
    %8959 = vmatmul.mubr.f32.gmra.mrb[0].mxu0 %v8271
    %v8960 = vpop.f32.mrb[0].mxu0
    %v8961 = vadd.f32 0.0, %v8960
    %v8962 = vpop.f32.mrb[0].mxu0
    %8963 = vmatprep.mubr.f32.mxu0 0.0
    %8964 = vmatmul.mubr.f32.gmra.mrb[0].mxu0 %v8273
    %v8965 = vpop.f32.mrb[0].mxu0
    %v8966 = vadd.f32 0.0, %v8965
    %v8967 = vpop.f32.mrb[0].mxu0
    %8968 = vmatprep.mubr.f32.mxu0 0.0
    %8969 = vmatmul.mubr.f32.gmra.mrb[0].mxu0 %v8275
    %v8970 = vpop.f32.mrb[0].mxu0
    %v8971 = vadd.f32 0.0, %v8970
    %v8972 = vpop.f32.mrb[0].mxu0
    %8973 = vmatprep.mubr.f32.mxu0 0.0
    %8974 = vmatmul.mubr.f32.gmra.mrb[0].mxu0 %v8277
    %v8975 = vpop.f32.mrb[0].mxu0
    %v8976 = vadd.f32 0.0, %v8975
    %v8977 = vpop.f32.mrb[0].mxu0
    %8978 = vmatprep.mubr.f32.mxu0 0.0
    %8979 = vmatmul.mubr.f32.gmra.mrb[0].mxu0 %v8279
    %v8980 = vpop.f32.mrb[0].mxu0
    %v8981 = vadd.f32 0.0, %v8980
    %v8982 = vpop.f32.mrb[0].mxu0
    %8983 = vmatprep.mubr.f32.mxu0 0.0
    %8984 = vmatmul.mubr.f32.gmra.mrb[0].mxu0 %v8281
    %v8985 = vpop.f32.mrb[0].mxu0
    %v8986 = vadd.f32 0.0, %v8985
    %v8987 = vpop.f32.mrb[0].mxu0
    %8988 = vmatprep.mubr.f32.mxu0 0.0
    %8989 = vmatmul.mubr.f32.gmra.mrb[0].mxu0 %v8283
    %v8990 = vpop.f32.mrb[0].mxu0
    %v8991 = vadd.f32 0.0, %v8990
    %v8992 = vpop.f32.mrb[0].mxu0
    %8993 = vmatprep.mubr.f32.mxu0 0.0
    %8994 = vmatmul.mubr.f32.gmra.mrb[0].mxu0 %v8562
    %v8995 = vpop.f32.mrb[0].mxu0
    %v8996 = vadd.f32 0.0, %v8995
    %v8997 = vpop.f32.mrb[0].mxu0
    %8998 = vmatprep.mubr.f32.mxu0 0.0
    %8999 = vmatmul.mubr.f32.gmra.mrb[0].mxu0 %v8882
    %v9000 = vpop.f32.mrb[0].mxu0
    %v9001 = vadd.f32 0.0, %v9000
    %v9002 = vpop.f32.mrb[0].mxu0
    %9003 = vdwg.mxu0
    %v9004 = vadd.f32 %v8864, %v8951
    %v9005 = vadd.f32 %v8865, %v8956
    %v9006 = vadd.f32 %v8866, %v8961
    %v9007 = vadd.f32 %v8867, %v8966
    %v9008 = vadd.f32 %v8868, %v8971
    %v9009 = vadd.f32 %v8869, %v8976
    %v9010 = vadd.f32 %v8870, %v8981
    %v9011 = vadd.f32 %v8871, %v8986
    %v9012 = vadd.f32 %v8872, %v8991
    %v9013 = vadd.f32 %v8873, %v8996
    %v9014 = vadd.f32 %v8874, %v9001
    %v9015 = vld [vmem:[%s1 + $0x320] sm:$0xff]
    %v9016 = vld [vmem:[%s1 + $0x328] sm:$0xff]
    %v9017 = vld [vmem:[%s1 + $0x330] sm:$0xff]
    %v9018 = vld [vmem:[%s1 + $0x338] sm:$0xff]
    %v9019 = vrot.slane %v7908, 3
    %v9020 = vsel %vm1463, %v8720, %v9019
    %v9021 = vsel %vm5596, %v9020, 0
    %9023 = vmatprep.subr.mxu0 0.0
    %9024 = vmatpush1.msra.mxu0 %v9015
    %9025 = vmatprep.subr.mxu0 0.0
    %9026 = vmatpush1.msra.mxu0 %v9016
    %9027 = vmatprep.subr.mxu0 0.0
    %9028 = vmatpush1.msra.mxu0 %v9017
    %9029 = vmatprep.subr.mxu0 0.0
    %9030 = vmatpush1.msra.mxu0 %v9018
    %9031 = vmatprep.subr.mxu0 0.0
    %9032 = vmatpush1.msra.mxu0 0.0
    %9033 = vmatprep.subr.mxu0 0.0
    %9034 = vmatpush1.msra.mxu0 0.0
    %9035 = vmatprep.subr.mxu0 0.0
    %9036 = vmatpush1.msra.mxu0 0.0
    %9037 = vmatprep.subr.mxu0 0.0
    %9038 = vmatpush1.msra.mxu0 0.0
    %9039 = vmatprep.subr.mxu0 0.0
    %9040 = vmatpush1.msra.mxu0 0.0
    %9041 = vmatprep.subr.mxu0 0.0
    %9042 = vmatpush1.msra.mxu0 0.0
    %9043 = vmatprep.subr.mxu0 0.0
    %9044 = vmatpush1.msra.mxu0 0.0
    %9045 = vmatprep.subr.mxu0 0.0
    %9046 = vmatpush1.msra.mxu0 0.0
    %9047 = vmatprep.subr.mxu0 0.0
    %9048 = vmatpush1.msra.mxu0 0.0
    %9049 = vmatprep.subr.mxu0 0.0
    %9050 = vmatpush1.msra.mxu0 0.0
    %9051 = vmatprep.subr.mxu0 0.0
    %9052 = vmatpush1.msra.mxu0 0.0
    %9053 = vmatprep.subr.mxu0 0.0
    %9054 = vmatpush1.msra.mxu0 0.0
    %9055 = vmatprep.subr.mxu0 0.0
    %9056 = vmatpush1.msra.mxu0 0.0
    %9057 = vmatprep.subr.mxu0 0.0
    %9058 = vmatpush1.msra.mxu0 0.0
    %9059 = vmatprep.subr.mxu0 0.0
    %9060 = vmatpush1.msra.mxu0 0.0
    %9061 = vmatprep.subr.mxu0 0.0
    %9062 = vmatpush1.msra.mxu0 0.0
    %9063 = vmatprep.subr.mxu0 0.0
    %9064 = vmatpush1.msra.mxu0 0.0
    %9065 = vmatprep.subr.mxu0 0.0
    %9066 = vmatpush1.msra.mxu0 0.0
    %9067 = vmatprep.subr.mxu0 0.0
    %9068 = vmatpush1.msra.mxu0 0.0
    %9069 = vmatprep.subr.mxu0 0.0
    %9070 = vmatpush1.msra.mxu0 0.0
    %9071 = vmatprep.subr.mxu0 0.0
    %9072 = vmatpush1.msra.mxu0 0.0
    %9073 = vmatprep.subr.mxu0 0.0
    %9074 = vmatpush1.msra.mxu0 0.0
    %9075 = vmatprep.subr.mxu0 0.0
    %9076 = vmatpush1.msra.mxu0 0.0
    %9077 = vmatprep.subr.mxu0 0.0
    %9078 = vmatpush1.msra.mxu0 0.0
    %9079 = vmatprep.subr.mxu0 0.0
    %9080 = vmatpush1.msra.mxu0 0.0
    %9081 = vmatprep.subr.mxu0 0.0
    %9082 = vmatpush1.msra.mxu0 0.0
    %9083 = vmatprep.subr.mxu0 0.0
    %9084 = vmatpush1.msra.mxu0 0.0
    %9085 = vmatprep.subr.mxu0 0.0
    %9086 = vmatpush1.msra.mxu0 0.0
    %9087 = vmatprep.mubr.f32.mxu0 0.0
    %9088 = vmatmul.mubr.f32.gmra.mrb[0].mxu0 %v8724
    %v9089 = vpop.f32.mrb[0].mxu0
    %v9090 = vadd.f32 0.0, %v9089
    %v9091 = vpop.f32.mrb[0].mxu0
    %9092 = vmatprep.mubr.f32.mxu0 0.0
    %9093 = vmatmul.mubr.f32.gmra.mrb[0].mxu0 %v8726
    %v9094 = vpop.f32.mrb[0].mxu0
    %v9095 = vadd.f32 0.0, %v9094
    %v9096 = vpop.f32.mrb[0].mxu0
    %9097 = vmatprep.mubr.f32.mxu0 0.0
    %9098 = vmatmul.mubr.f32.gmra.mrb[0].mxu0 %v8728
    %v9099 = vpop.f32.mrb[0].mxu0
    %v9100 = vadd.f32 0.0, %v9099
    %v9101 = vpop.f32.mrb[0].mxu0
    %9102 = vmatprep.mubr.f32.mxu0 0.0
    %9103 = vmatmul.mubr.f32.gmra.mrb[0].mxu0 %v8730
    %v9104 = vpop.f32.mrb[0].mxu0
    %v9105 = vadd.f32 0.0, %v9104
    %v9106 = vpop.f32.mrb[0].mxu0
    %9107 = vmatprep.mubr.f32.mxu0 0.0
    %9108 = vmatmul.mubr.f32.gmra.mrb[0].mxu0 %v8732
    %v9109 = vpop.f32.mrb[0].mxu0
    %v9110 = vadd.f32 0.0, %v9109
    %v9111 = vpop.f32.mrb[0].mxu0
    %9112 = vmatprep.mubr.f32.mxu0 0.0
    %9113 = vmatmul.mubr.f32.gmra.mrb[0].mxu0 %v8734
    %v9114 = vpop.f32.mrb[0].mxu0
    %v9115 = vadd.f32 0.0, %v9114
    %v9116 = vpop.f32.mrb[0].mxu0
    %9117 = vmatprep.mubr.f32.mxu0 0.0
    %9118 = vmatmul.mubr.f32.gmra.mrb[0].mxu0 %v8736
    %v9119 = vpop.f32.mrb[0].mxu0
    %v9120 = vadd.f32 0.0, %v9119
    %v9121 = vpop.f32.mrb[0].mxu0
    %9122 = vmatprep.mubr.f32.mxu0 0.0
    %9123 = vmatmul.mubr.f32.gmra.mrb[0].mxu0 %v8738
    %v9124 = vpop.f32.mrb[0].mxu0
    %v9125 = vadd.f32 0.0, %v9124
    %v9126 = vpop.f32.mrb[0].mxu0
    %9127 = vmatprep.mubr.f32.mxu0 0.0
    %9128 = vmatmul.mubr.f32.gmra.mrb[0].mxu0 %v8740
    %v9129 = vpop.f32.mrb[0].mxu0
    %v9130 = vadd.f32 0.0, %v9129
    %v9131 = vpop.f32.mrb[0].mxu0
    %9132 = vmatprep.mubr.f32.mxu0 0.0
    %9133 = vmatmul.mubr.f32.gmra.mrb[0].mxu0 %v8742
    %v9134 = vpop.f32.mrb[0].mxu0
    %v9135 = vadd.f32 0.0, %v9134
    %v9136 = vpop.f32.mrb[0].mxu0
    %9137 = vmatprep.mubr.f32.mxu0 0.0
    %9138 = vmatmul.mubr.f32.gmra.mrb[0].mxu0 %v9021
    %v9139 = vpop.f32.mrb[0].mxu0
    %v9140 = vadd.f32 0.0, %v9139
    %v9141 = vpop.f32.mrb[0].mxu0
    %9142 = vdwg.mxu0
    %v9143 = vadd.f32 %v9004, %v9090
    %v9144 = vadd.f32 %v9005, %v9095
    %v9145 = vadd.f32 %v9006, %v9100
    %v9146 = vadd.f32 %v9007, %v9105
    %v9147 = vadd.f32 %v9008, %v9110
    %v9148 = vadd.f32 %v9009, %v9115
    %v9149 = vadd.f32 %v9010, %v9120
    %v9150 = vadd.f32 %v9011, %v9125
    %v9151 = vadd.f32 %v9012, %v9130
    %v9152 = vadd.f32 %v9013, %v9135
    %v9153 = vadd.f32 %v9014, %v9140
    %v9154 = vld [vmem:[%s1 + $0x340] sm:$0xff]
    %v9155 = vld [vmem:[%s1 + $0x348] sm:$0xff]
    %v9156 = vld [vmem:[%s1 + $0x350] sm:$0xff]
    %v9157 = vld [vmem:[%s1 + $0x358] sm:$0xff]
    %v9158 = vrot.slane %v7897, 4
    %v9159 = vrot.slane %v7898, 4
    %v9160 = vsel %vm2269, %v9158, %v9159
    %v9161 = vrot.slane %v7899, 4
    %v9162 = vsel %vm2269, %v9159, %v9161
    %v9163 = vrot.slane %v7900, 4
    %v9164 = vsel %vm2269, %v9161, %v9163
    %v9165 = vrot.slane %v7901, 4
    %v9166 = vsel %vm2269, %v9163, %v9165
    %v9167 = vrot.slane %v7902, 4
    %v9168 = vsel %vm2269, %v9165, %v9167
    %v9169 = vrot.slane %v7903, 4
    %v9170 = vsel %vm2269, %v9167, %v9169
    %v9171 = vrot.slane %v7904, 4
    %v9172 = vsel %vm2269, %v9169, %v9171
    %v9173 = vrot.slane %v7905, 4
    %v9174 = vsel %vm2269, %v9171, %v9173
    %v9175 = vrot.slane %v7906, 4
    %v9176 = vsel %vm2269, %v9173, %v9175
    %v9177 = vrot.slane %v7907, 4
    %v9178 = vsel %vm2269, %v9175, %v9177
    %v9179 = vrot.slane %v7908, 4
    %v9180 = vsel %vm2269, %v9177, %v9179
    %v9181 = vsel %vm5596, %v9160, 0
    %v9183 = vsel %vm5596, %v9162, 0
    %v9185 = vsel %vm5596, %v9164, 0
    %v9187 = vsel %vm5596, %v9166, 0
    %v9189 = vsel %vm5596, %v9168, 0
    %v9191 = vsel %vm5596, %v9170, 0
    %v9193 = vsel %vm5596, %v9172, 0
    %v9195 = vsel %vm5596, %v9174, 0
    %v9197 = vsel %vm5596, %v9176, 0
    %v9199 = vsel %vm5596, %v9178, 0
    %v9201 = vsel %vm5596, %v9180, 0
    %9203 = vmatprep.subr.mxu0 0.0
    %9204 = vmatpush1.msra.mxu0 %v9154
    %9205 = vmatprep.subr.mxu0 0.0
    %9206 = vmatpush1.msra.mxu0 %v9155
    %9207 = vmatprep.subr.mxu0 0.0
    %9208 = vmatpush1.msra.mxu0 %v9156
    %9209 = vmatprep.subr.mxu0 0.0
    %9210 = vmatpush1.msra.mxu0 %v9157
    %9211 = vmatprep.subr.mxu0 0.0
    %9212 = vmatpush1.msra.mxu0 0.0
    %9213 = vmatprep.subr.mxu0 0.0
    %9214 = vmatpush1.msra.mxu0 0.0
    %9215 = vmatprep.subr.mxu0 0.0
    %9216 = vmatpush1.msra.mxu0 0.0
    %9217 = vmatprep.subr.mxu0 0.0
    %9218 = vmatpush1.msra.mxu0 0.0
    %9219 = vmatprep.subr.mxu0 0.0
    %9220 = vmatpush1.msra.mxu0 0.0
    %9221 = vmatprep.subr.mxu0 0.0
    %9222 = vmatpush1.msra.mxu0 0.0
    %9223 = vmatprep.subr.mxu0 0.0
    %9224 = vmatpush1.msra.mxu0 0.0
    %9225 = vmatprep.subr.mxu0 0.0
    %9226 = vmatpush1.msra.mxu0 0.0
    %9227 = vmatprep.subr.mxu0 0.0
    %9228 = vmatpush1.msra.mxu0 0.0
    %9229 = vmatprep.subr.mxu0 0.0
    %9230 = vmatpush1.msra.mxu0 0.0
    %9231 = vmatprep.subr.mxu0 0.0
    %9232 = vmatpush1.msra.mxu0 0.0
    %9233 = vmatprep.subr.mxu0 0.0
    %9234 = vmatpush1.msra.mxu0 0.0
    %9235 = vmatprep.subr.mxu0 0.0
    %9236 = vmatpush1.msra.mxu0 0.0
    %9237 = vmatprep.subr.mxu0 0.0
    %9238 = vmatpush1.msra.mxu0 0.0
    %9239 = vmatprep.subr.mxu0 0.0
    %9240 = vmatpush1.msra.mxu0 0.0
    %9241 = vmatprep.subr.mxu0 0.0
    %9242 = vmatpush1.msra.mxu0 0.0
    %9243 = vmatprep.subr.mxu0 0.0
    %9244 = vmatpush1.msra.mxu0 0.0
    %9245 = vmatprep.subr.mxu0 0.0
    %9246 = vmatpush1.msra.mxu0 0.0
    %9247 = vmatprep.subr.mxu0 0.0
    %9248 = vmatpush1.msra.mxu0 0.0
    %9249 = vmatprep.subr.mxu0 0.0
    %9250 = vmatpush1.msra.mxu0 0.0
    %9251 = vmatprep.subr.mxu0 0.0
    %9252 = vmatpush1.msra.mxu0 0.0
    %9253 = vmatprep.subr.mxu0 0.0
    %9254 = vmatpush1.msra.mxu0 0.0
    %9255 = vmatprep.subr.mxu0 0.0
    %9256 = vmatpush1.msra.mxu0 0.0
    %9257 = vmatprep.subr.mxu0 0.0
    %9258 = vmatpush1.msra.mxu0 0.0
    %9259 = vmatprep.subr.mxu0 0.0
    %9260 = vmatpush1.msra.mxu0 0.0
    %9261 = vmatprep.subr.mxu0 0.0
    %9262 = vmatpush1.msra.mxu0 0.0
    %9263 = vmatprep.subr.mxu0 0.0
    %9264 = vmatpush1.msra.mxu0 0.0
    %9265 = vmatprep.subr.mxu0 0.0
    %9266 = vmatpush1.msra.mxu0 0.0
    %9267 = vmatprep.mubr.f32.mxu0 0.0
    %9268 = vmatmul.mubr.f32.gmra.mrb[0].mxu0 %v9181
    %v9269 = vpop.f32.mrb[0].mxu0
    %v9270 = vadd.f32 0.0, %v9269
    %v9271 = vpop.f32.mrb[0].mxu0
    %9272 = vmatprep.mubr.f32.mxu0 0.0
    %9273 = vmatmul.mubr.f32.gmra.mrb[0].mxu0 %v9183
    %v9274 = vpop.f32.mrb[0].mxu0
    %v9275 = vadd.f32 0.0, %v9274
    %v9276 = vpop.f32.mrb[0].mxu0
    %9277 = vmatprep.mubr.f32.mxu0 0.0
    %9278 = vmatmul.mubr.f32.gmra.mrb[0].mxu0 %v9185
    %v9279 = vpop.f32.mrb[0].mxu0
    %v9280 = vadd.f32 0.0, %v9279
    %v9281 = vpop.f32.mrb[0].mxu0
    %9282 = vmatprep.mubr.f32.mxu0 0.0
    %9283 = vmatmul.mubr.f32.gmra.mrb[0].mxu0 %v9187
    %v9284 = vpop.f32.mrb[0].mxu0
    %v9285 = vadd.f32 0.0, %v9284
    %v9286 = vpop.f32.mrb[0].mxu0
    %9287 = vmatprep.mubr.f32.mxu0 0.0
    %9288 = vmatmul.mubr.f32.gmra.mrb[0].mxu0 %v9189
    %v9289 = vpop.f32.mrb[0].mxu0
    %v9290 = vadd.f32 0.0, %v9289
    %v9291 = vpop.f32.mrb[0].mxu0
    %9292 = vmatprep.mubr.f32.mxu0 0.0
    %9293 = vmatmul.mubr.f32.gmra.mrb[0].mxu0 %v9191
    %v9294 = vpop.f32.mrb[0].mxu0
    %v9295 = vadd.f32 0.0, %v9294
    %v9296 = vpop.f32.mrb[0].mxu0
    %9297 = vmatprep.mubr.f32.mxu0 0.0
    %9298 = vmatmul.mubr.f32.gmra.mrb[0].mxu0 %v9193
    %v9299 = vpop.f32.mrb[0].mxu0
    %v9300 = vadd.f32 0.0, %v9299
    %v9301 = vpop.f32.mrb[0].mxu0
    %9302 = vmatprep.mubr.f32.mxu0 0.0
    %9303 = vmatmul.mubr.f32.gmra.mrb[0].mxu0 %v9195
    %v9304 = vpop.f32.mrb[0].mxu0
    %v9305 = vadd.f32 0.0, %v9304
    %v9306 = vpop.f32.mrb[0].mxu0
    %9307 = vmatprep.mubr.f32.mxu0 0.0
    %9308 = vmatmul.mubr.f32.gmra.mrb[0].mxu0 %v9197
    %v9309 = vpop.f32.mrb[0].mxu0
    %v9310 = vadd.f32 0.0, %v9309
    %v9311 = vpop.f32.mrb[0].mxu0
    %9312 = vmatprep.mubr.f32.mxu0 0.0
    %9313 = vmatmul.mubr.f32.gmra.mrb[0].mxu0 %v9199
    %v9314 = vpop.f32.mrb[0].mxu0
    %v9315 = vadd.f32 0.0, %v9314
    %v9316 = vpop.f32.mrb[0].mxu0
    %9317 = vmatprep.mubr.f32.mxu0 0.0
    %9318 = vmatmul.mubr.f32.gmra.mrb[0].mxu0 %v9201
    %v9319 = vpop.f32.mrb[0].mxu0
    %v9320 = vadd.f32 0.0, %v9319
    %v9321 = vpop.f32.mrb[0].mxu0
    %9322 = vdwg.mxu0
    %v9323 = vadd.f32 %v9143, %v9270
    %v9324 = vadd.f32 %v9144, %v9275
    %v9325 = vadd.f32 %v9145, %v9280
    %v9326 = vadd.f32 %v9146, %v9285
    %v9327 = vadd.f32 %v9147, %v9290
    %v9328 = vadd.f32 %v9148, %v9295
    %v9329 = vadd.f32 %v9149, %v9300
    %v9330 = vadd.f32 %v9150, %v9305
    %v9331 = vadd.f32 %v9151, %v9310
    %v9332 = vadd.f32 %v9152, %v9315
    %v9333 = vadd.f32 %v9153, %v9320
    %v9335 = vrot.slane %v27, 2
    %v9336 = vsel %vm2616, %v9335, 0
    %9338 = vmatprep.subr.mxu0 0.0
    %9339 = vmatpush1.msra.mxu0 %v9323
    %9340 = vmatprep.subr.mxu0 0.0
    %9341 = vmatpush1.msra.mxu0 %v9324
    %9342 = vmatprep.subr.mxu0 0.0
    %9343 = vmatpush1.msra.mxu0 %v9325
    %9344 = vmatprep.subr.mxu0 0.0
    %9345 = vmatpush1.msra.mxu0 %v9326
    %9346 = vmatprep.subr.mxu0 0.0
    %9347 = vmatpush1.msra.mxu0 %v9327
    %9348 = vmatprep.subr.mxu0 0.0
    %9349 = vmatpush1.msra.mxu0 %v9328
    %9350 = vmatprep.subr.mxu0 0.0
    %9351 = vmatpush1.msra.mxu0 %v9329
    %9352 = vmatprep.subr.mxu0 0.0
    %9353 = vmatpush1.msra.mxu0 %v9330
    %9354 = vmatprep.subr.mxu0 0.0
    %9355 = vmatpush1.msra.mxu0 %v9331
    %9356 = vmatprep.subr.mxu0 0.0
    %9357 = vmatpush1.msra.mxu0 %v9332
    %9358 = vmatprep.subr.mxu0 0.0
    %9359 = vmatpush1.msra.mxu0 %v9333
    %9360 = vmatprep.subr.mxu0 0.0
    %9361 = vmatpush1.msra.mxu0 0.0
    %9362 = vmatprep.subr.mxu0 0.0
    %9363 = vmatpush1.msra.mxu0 0.0
    %9364 = vmatprep.subr.mxu0 0.0
    %9365 = vmatpush1.msra.mxu0 0.0
    %9366 = vmatprep.subr.mxu0 0.0
    %9367 = vmatpush1.msra.mxu0 0.0
    %9368 = vmatprep.subr.mxu0 0.0
    %9369 = vmatpush1.msra.mxu0 0.0
    %9370 = vmatprep.subr.mxu0 0.0
    %9371 = vmatpush1.msra.mxu0 0.0
    %9372 = vmatprep.subr.mxu0 0.0
    %9373 = vmatpush1.msra.mxu0 0.0
    %9374 = vmatprep.subr.mxu0 0.0
    %9375 = vmatpush1.msra.mxu0 0.0
    %9376 = vmatprep.subr.mxu0 0.0
    %9377 = vmatpush1.msra.mxu0 0.0
    %9378 = vmatprep.subr.mxu0 0.0
    %9379 = vmatpush1.msra.mxu0 0.0
    %9380 = vmatprep.subr.mxu0 0.0
    %9381 = vmatpush1.msra.mxu0 0.0
    %9382 = vmatprep.subr.mxu0 0.0
    %9383 = vmatpush1.msra.mxu0 0.0
    %9384 = vmatprep.subr.mxu0 0.0
    %9385 = vmatpush1.msra.mxu0 0.0
    %9386 = vmatprep.subr.mxu0 0.0
    %9387 = vmatpush1.msra.mxu0 0.0
    %9388 = vmatprep.subr.mxu0 0.0
    %9389 = vmatpush1.msra.mxu0 0.0
    %9390 = vmatprep.subr.mxu0 0.0
    %9391 = vmatpush1.msra.mxu0 0.0
    %9392 = vmatprep.subr.mxu0 0.0
    %9393 = vmatpush1.msra.mxu0 0.0
    %9394 = vmatprep.subr.mxu0 0.0
    %9395 = vmatpush1.msra.mxu0 0.0
    %9396 = vmatprep.subr.mxu0 0.0
    %9397 = vmatpush1.msra.mxu0 0.0
    %9398 = vmatprep.subr.mxu0 0.0
    %9399 = vmatpush1.msra.mxu0 0.0
    %9400 = vmatprep.subr.mxu0 0.0
    %9401 = vmatpush1.msra.mxu0 0.0
    %9402 = vmatprep.mubr.f32.mxu0 0.0
    %9403 = vmatmul.mubr.f32.gmra.mrb[0].mxu0 %v9336
    %v9404 = vpop.f32.mrb[0].mxu0
    %v9405 = vadd.f32 %v26, %v9404
    %v9406 = vpop.f32.mrb[0].mxu0
    %9407 = vdwg.mxu0
    %vm9408 = vcmask 17408
    %9409 = vst.msk [vmem:[#allocation2] sm:$0x3] %vm9408, %v9405
    // Predicated region
    $region14: #{tpu_custom_call.1} parent=1 // pred_check
      _
    $region15: #{tpu_custom_call.1} parent=1 // pred_check_branch
      %9411 = sbr.rel (0) target = $region17
    $region16: #{tpu_custom_call.1} parent=1 // pred_region
      %s9413 = ssub.s32 32, 32
      %9414 = vsyncadd [#allocation3], %s9413
      %s9416 = sshll.u32 [#allocation2], 4
      %s9417 = int_to_ptr.vmem [resolvable:$true] %s9416
      %9419 = dma.vmem_to_hbm [thread:$0]  %s9417, 32, %s3, [#allocation3]
    $region17: #{tpu_custom_call.1} parent=1 // pred_fallthru
      _
    // Predicated region
    $region18: #{tpu_custom_call.1} parent=1 // pred_check
      _
    $region19: #{tpu_custom_call.1} parent=1 // pred_check_branch
      %9421 = sbr.rel (0) target = $region21
    $region20: #{tpu_custom_call.1} parent=1 // pred_region
      %9422 = dma.done [#allocation3], 32
    $region21: #{tpu_custom_call.1} parent=1 // pred_fallthru
      _
    %9423 = vsyncpa [#allocation3], 1

</llo_original>
